<compile_context>
chip_gen: v7x
topology: tpu7x:2x2x1
jax: 0.10.0
libtpu: 0.0.40
codegen_flags: <defaults>
</compile_context>

<pallas_src>
import jax
import jax.numpy as jnp
from jax import lax
from jax.experimental import pallas as pl
from jax.experimental.pallas import tpu as pltpu

LATENT = 50
NF = 32                      # num_filters
H0 = 35                      # spatial size after the fc reshape
FC_OUT = NF * H0 * H0        # 39200
FC_TILE = 39 * 128           # 4992, lane-dense fc output tile
FC_PAD = ((FC_OUT + FC_TILE - 1) // FC_TILE) * FC_TILE   # 39936


def _sigmoid(v):
    return 1.0 / (1.0 + jnp.exp(-v))


# ---------------------------------------------------------------------------
# Kernel A: y = relu(z @ W + b), N-tiled (lane-dense 128-multiple blocks)
# ---------------------------------------------------------------------------
def _fc_relu_kernel(z_ref, w_ref, b_ref, o_ref):
    acc = jnp.dot(z_ref[...], w_ref[...], preferred_element_type=jnp.float32)
    o_ref[...] = jnp.maximum(acc + b_ref[...], 0.0)


def fc_relu(z, w_pad, b_pad):
    B = z.shape[0]
    grid = FC_PAD // FC_TILE
    return pl.pallas_call(
        _fc_relu_kernel,
        out_shape=jax.ShapeDtypeStruct((B, FC_PAD), jnp.float32),
        grid_spec=pltpu.PrefetchScalarGridSpec(
            num_scalar_prefetch=0,
            grid=(grid,),
            in_specs=[
                pl.BlockSpec((B, LATENT), lambda j: (0, 0)),
                pl.BlockSpec((LATENT, FC_TILE), lambda j: (0, j)),
                pl.BlockSpec((1, FC_TILE), lambda j: (0, j)),
            ],
            out_specs=pl.BlockSpec((B, FC_TILE), lambda j: (0, j)),
        ),
        compiler_params=pltpu.CompilerParams(
            dimension_semantics=("parallel",),
        ),
    )(z, w_pad, b_pad)


# ---------------------------------------------------------------------------
# Kernel B: fused deconv stack (3x stride-1 deconv+ReLU, then the stride-2
#           deconv + sigmoid via its 4-phase decomposition).
# All intermediates live in VMEM scratch; grid is over the batch ("parallel").
# ---------------------------------------------------------------------------
def _deconv_s1(in_pad, out_pad, w_ref, b_ref, ho, wo, off):
    """Full 3x3 conv (== stride-1 transposed conv with flipped weights) over a
    zero-padded VMEM buffer, one output row per loop step (9 shifted matmuls).
    The ReLU'd result is written straight into the interior of the NEXT
    layer's padded buffer (offset `off`)."""
    bias = b_ref[...]                                       # (1, NF)

    def row(i, carry):
        acc = jnp.zeros((wo, NF), jnp.float32)
        for p in range(3):
            for q in range(3):
                a = in_pad[i + p, q:q + wo, :]              # (wo, NF)
                acc = acc + jnp.dot(a, w_ref[p, q],
                                    preferred_element_type=jnp.float32)
        out_pad[i + off, off:off + wo, :] = jnp.maximum(acc + bias, 0.0)
        return carry

    lax.fori_loop(0, ho, row, 0)


def _deconv_s2_final(xp_ref, w4_ref, b4_ref, oee, oeo, ooe, ooo):
    """ConvTranspose2d(32->3, 3x3, stride=2, output_padding=1) + sigmoid via the
    exact 4-phase (sub-pixel) decomposition.  xp_ref holds the 41x41 input
    zero-padded by 1 on every side (43x43x32).  Each phase output is (42,42,3);
    the wrapper interleaves them into the 84x84 image."""
    bias = b4_ref[...]                                      # (1, 3)
    n = 42

    def row(a, carry):
        def tap(dr, dc, p, q):
            x = xp_ref[a + dr, dc:dc + n, :]                # (42, NF)
            return jnp.dot(x, w4_ref[p, q], preferred_element_type=jnp.float32)

        # even output row 2a:  x[a-1] pairs with kernel row 2, x[a] with row 0
        ee = tap(0, 0, 2, 2) + tap(0, 1, 2, 0) + tap(1, 0, 0, 2) + tap(1, 1, 0, 0)
        eo = tap(0, 1, 2, 1) + tap(1, 1, 0, 1)
        # odd output row 2a+1: only kernel row 1, input x[a]
        oe = tap(1, 0, 1, 2) + tap(1, 1, 1, 0)
        oo = tap(1, 1, 1, 1)

        oee[0, a, :, :] = _sigmoid(ee + bias)
        oeo[0, a, :, :] = _sigmoid(eo + bias)
        ooe[0, a, :, :] = _sigmoid(oe + bias)
        ooo[0, a, :, :] = _sigmoid(oo + bias)
        return carry

    lax.fori_loop(0, n, row, 0)


def _decoder_stack_kernel(x_ref, w1, b1, w2, b2, w3, b3, w4, b4,
                          oee, oeo, ooe, ooo,
                          pad1, pad2, pad3, xp4):
    # Zero the padded buffers (borders must be zero; interiors get overwritten).
    pad1[...] = jnp.zeros_like(pad1)
    pad2[...] = jnp.zeros_like(pad2)
    pad3[...] = jnp.zeros_like(pad3)
    xp4[...] = jnp.zeros_like(xp4)

    # Copy the 35x35x32 input into the interior of pad1 (pad = 2 each side).
    def cp(i, carry):
        pad1[i + 2, 2:2 + H0, :] = x_ref[0, i]
        return carry
    lax.fori_loop(0, H0, cp, 0)

    _deconv_s1(pad1, pad2, w1, b1, ho=37, wo=37, off=2)   # 35 -> 37
    _deconv_s1(pad2, pad3, w2, b2, ho=39, wo=39, off=2)   # 37 -> 39
    _deconv_s1(pad3, xp4, w3, b3, ho=41, wo=41, off=1)    # 39 -> 41 (pad-1 buf)
    _deconv_s2_final(xp4, w4, b4, oee, oeo, ooe, ooo)     # 41 -> 84 (phases)


def deconv_stack(x_nhwc, params):
    B = x_nhwc.shape[0]
    out_sd = jax.ShapeDtypeStruct((B, 42, 42, 3), jnp.float32)
    wspec = pl.BlockSpec((3, 3, NF, NF), lambda b: (0, 0, 0, 0))
    bspec = pl.BlockSpec((1, NF), lambda b: (0, 0))
    w4spec = pl.BlockSpec((3, 3, NF, 3), lambda b: (0, 0, 0, 0))
    b4spec = pl.BlockSpec((1, 3), lambda b: (0, 0))
    ospec = pl.BlockSpec((1, 42, 42, 3), lambda b: (b, 0, 0, 0))

    return pl.pallas_call(
        _decoder_stack_kernel,
        out_shape=(out_sd, out_sd, out_sd, out_sd),
        grid_spec=pltpu.PrefetchScalarGridSpec(
            num_scalar_prefetch=0,
            grid=(B,),
            in_specs=[
                pl.BlockSpec((1, H0, H0, NF), lambda b: (b, 0, 0, 0)),
                wspec, bspec, wspec, bspec, wspec, bspec,
                w4spec, b4spec,
            ],
            out_specs=(ospec, ospec, ospec, ospec),
            scratch_shapes=[
                pltpu.VMEM((39, 39, NF), jnp.float32),   # layer-1 input, pad 2
                pltpu.VMEM((41, 41, NF), jnp.float32),   # layer-2 input, pad 2
                pltpu.VMEM((43, 43, NF), jnp.float32),   # layer-3 input, pad 2
                pltpu.VMEM((43, 43, NF), jnp.float32),   # layer-4 input, pad 1
            ],
        ),
        compiler_params=pltpu.CompilerParams(
            dimension_semantics=("parallel",),
            vmem_limit_bytes=32 * 1024 * 1024,
        ),
    )(x_nhwc, params["w1"], params["b1"], params["w2"], params["b2"],
      params["w3"], params["b3"], params["w4"], params["b4"])


# ---------------------------------------------------------------------------
# Full forward
# ---------------------------------------------------------------------------
def decoder_forward(params, z):
    B = z.shape[0]
    h = fc_relu(z, params["fc_w"], params["fc_b"])          # (B, FC_PAD)
    x = h[:, :FC_OUT].reshape(B, H0, H0, NF)                # NHWC (weights pre-permuted)
    ee, eo, oe, oo = deconv_stack(x, params)                # 4 x (B,42,42,3)
    # Interleave the 4 sub-pixel phases: out[b, c, 2a+py, 2b2+px]
    even = jnp.stack([ee, eo], axis=3)                      # (B,42,42,2,3)  px for py=0
    odd = jnp.stack([oe, oo], axis=3)                       # (B,42,42,2,3)  px for py=1
    ph = jnp.stack([even, odd], axis=3)                     # (B,42,42,2,2,3) = (b,a,bb,py,px,c)
    out = ph.transpose(0, 5, 1, 3, 2, 4).reshape(B, 3, 84, 84)
    return out


# ---------------------------------------------------------------------------
# Parameters: PyTorch-layout "raw" params + one-time repack to kernel layout
# ---------------------------------------------------------------------------
def init_raw_params(key):
    ks = jax.random.split(key, 12)
    p = {}
    bnd = 1.0 / (LATENT ** 0.5)
    p["fc_w"] = jax.random.uniform(ks[0], (FC_OUT, LATENT), jnp.float32, -bnd, bnd)
    p["fc_b"] = jax.random.uniform(ks[1], (FC_OUT,), jnp.float32, -bnd, bnd)
    chans = [(NF, NF), (NF, NF), (NF, NF), (NF, 3)]
    for i, (cin, cout) in enumerate(chans, start=1):
        bnd = 1.0 / ((cin * 9) ** 0.5)
        p[f"dc{i}_w"] = jax.random.uniform(ks[2 * i], (cin, cout, 3, 3),
                                           jnp.float32, -bnd, bnd)
        p[f"dc{i}_b"] = jax.random.uniform(ks[2 * i + 1], (cout,),
                                           jnp.float32, -bnd, bnd)
    return p


def prepare_params(raw):
    """One-time (trace-time) repack of PyTorch-layout params to kernel layout."""
    k = {}
    # fc: (out,in) -> (in,out), permute output columns NCHW-flat -> NHWC-flat,
    # zero-pad N to a multiple of the lane-dense tile.
    w = raw["fc_w"].T                                                     # (50, 39200)
    w = w.reshape(LATENT, NF, H0, H0).transpose(0, 2, 3, 1).reshape(LATENT, FC_OUT)
    k["fc_w"] = jnp.pad(w, ((0, 0), (0, FC_PAD - FC_OUT)))
    b = raw["fc_b"].reshape(NF, H0, H0).transpose(1, 2, 0).reshape(1, FC_OUT)
    k["fc_b"] = jnp.pad(b, ((0, 0), (0, FC_PAD - FC_OUT)))
    # stride-1 transposed convs == full conv with spatially flipped kernels.
    for i in (1, 2, 3):
        wt = raw[f"dc{i}_w"]                                              # (in,out,3,3)
        k[f"w{i}"] = wt[:, :, ::-1, ::-1].transpose(2, 3, 0, 1)           # (3,3,in,out)
        k[f"b{i}"] = raw[f"dc{i}_b"].reshape(1, NF)
    # stride-2 transposed conv: keep taps, just reorder to (kh,kw,in,out).
    k["w4"] = raw["dc4_w"].transpose(2, 3, 0, 1)                          # (3,3,32,3)
    k["b4"] = raw["dc4_b"].reshape(1, 3)
    return k


# ---------------------------------------------------------------------------
# Pure-JAX reference of the original PyTorch module (for the self-check)
# ---------------------------------------------------------------------------
def reference_forward(raw, z):
    hp = jax.lax.Precision.HIGHEST
    B = z.shape[0]
    h = jnp.maximum(jnp.dot(z, raw["fc_w"].T, precision=hp) + raw["fc_b"], 0.0)
    x = h.reshape(B, NF, H0, H0).transpose(0, 2, 3, 1)                    # NHWC
    for l in (1, 2, 3):
        W, b = raw[f"dc{l}_w"], raw[f"dc{l}_b"]
        _, Hh, Ww, _ = x.shape
        out = jnp.zeros((B, Hh + 2, Ww + 2, NF), jnp.float32)
        for p in range(3):
            for q in range(3):
                out = out.at[:, p:p + Hh, q:q + Ww, :].add(
                    jnp.einsum('bhwc,co->bhwo', x, W[:, :, p, q], precision=hp))
        x = jnp.maximum(out + b, 0.0)
    W4, b4 = raw["dc4_w"], raw["dc4_b"]
    _, Hh, Ww, _ = x.shape                                                # (B,41,41,32)
    out = jnp.zeros((B, 2 * Hh + 2, 2 * Ww + 2, 3), jnp.float32)
    for p in range(3):
        for q in range(3):
            out = out.at[:, p:p + 2 * Hh:2, q:q + 2 * Ww:2, :].add(
                jnp.einsum('bhwc,co->bhwo', x, W4[:, :, p, q], precision=hp))
    out = jax.nn.sigmoid(out + b4)
    return out.transpose(0, 3, 1, 2)                                      # NCHW


if __name__ == "__main__":
    key = jax.random.PRNGKey(0)
    kz, kp = jax.random.split(key)
    B = 2
    z = jax.random.normal(kz, (B, LATENT), jnp.float32)

    raw = init_raw_params(kp)
    params = prepare_params(raw)

    fwd = jax.jit(decoder_forward)
    out = fwd(params, z)
    jax.block_until_ready(out)

    assert out.shape == (B, 3, 84, 84), out.shape
    assert bool(jnp.all(jnp.isfinite(out)))

    ref = jax.jit(reference_forward)(raw, z)
    jax.block_until_ready(ref)
    err = float(jnp.max(jnp.abs(out - ref)))
    assert err < 1e-2, f"mismatch vs reference: {err}"

    print("KERNEL_OK")
</pallas_src>

<mosaic_0001>
module attributes {stable_mosaic.version = 11 : i64} {
  func.func @_fc_relu_kernel(%arg0: i32, %arg1: memref<2x50xf32, #tpu.memory_space<vmem>>, %arg2: memref<50x4992xf32, #tpu.memory_space<vmem>>, %arg3: memref<1x4992xf32, #tpu.memory_space<vmem>>, %arg4: memref<2x4992xf32, #tpu.memory_space<vmem>>) attributes {dimension_semantics = [#tpu.dimension_semantics<parallel>], iteration_bounds = array<i64: 8>, scalar_prefetch = 0 : i64, scratch_operands = 0 : i64, tpu.core_type = #tpu.core_type<tc>, window_params = [{pipeline_mode = #tpu.pipeline_mode<synchronous>, transform_indices = @transform_0, window_bounds = array<i64: 2, 50>}, {transform_indices = @transform_1, window_bounds = array<i64: 50, 4992>}, {transform_indices = @transform_2, window_bounds = array<i64: 1, 4992>}, {transform_indices = @transform_3, window_bounds = array<i64: 2, 4992>}]} {
    %c0 = arith.constant 0 : index
    %c0_0 = arith.constant 0 : index
    %0 = vector.load %arg1[%c0, %c0_0] : memref<2x50xf32, #tpu.memory_space<vmem>>, vector<2x50xf32>
    %c0_1 = arith.constant 0 : index
    %c0_2 = arith.constant 0 : index
    %1 = vector.load %arg2[%c0_1, %c0_2] : memref<50x4992xf32, #tpu.memory_space<vmem>>, vector<50x4992xf32>
    %cst = arith.constant dense<0.000000e+00> : vector<2x4992xf32>
    %2 = tpu.matmul %0, %1, %cst {dimension_numbers = #tpu.dot_dimension_numbers<[1], [0], [0], [1], [0, 0, 1, 1], [], []>} : vector<2x50xf32>, vector<50x4992xf32>, vector<2x4992xf32> -> vector<2x4992xf32>
    %c0_3 = arith.constant 0 : index
    %c0_4 = arith.constant 0 : index
    %3 = vector.load %arg3[%c0_3, %c0_4] : memref<1x4992xf32, #tpu.memory_space<vmem>>, vector<1x4992xf32>
    %4 = vector.broadcast %3 : vector<1x4992xf32> to vector<2x4992xf32>
    %5 = arith.addf %2, %4 : vector<2x4992xf32>
    %cst_5 = arith.constant 0.000000e+00 : f32
    %6 = vector.broadcast %cst_5 : f32 to vector<2x4992xf32>
    %7 = arith.maximumf %5, %6 : vector<2x4992xf32>
    %c0_6 = arith.constant 0 : index
    %c0_7 = arith.constant 0 : index
    %8 = vector.load %arg4[%c0_6, %c0_7] : memref<2x4992xf32, #tpu.memory_space<vmem>>, vector<2x4992xf32>
    tpu.vector_store %arg4[%c0_6, %c0_7], %7 {strides = array<i32>} : memref<2x4992xf32, #tpu.memory_space<vmem>>, vector<2x4992xf32>,
    return
  }
  func.func @transform_0(%arg0: i32) -> (i32, i32) {
    %c0_i32 = arith.constant 0 : i32
    %c0_i32_0 = arith.constant 0 : i32
    %c0_i32_1 = arith.constant 0 : i32
    return %c0_i32, %c0_i32_0 : i32, i32
  }
  func.func @transform_1(%arg0: i32) -> (i32, i32) {
    %c0_i32 = arith.constant 0 : i32
    %c0_i32_0 = arith.constant 0 : i32
    return %c0_i32, %arg0 : i32, i32
  }
  func.func @transform_2(%arg0: i32) -> (i32, i32) {
    %c0_i32 = arith.constant 0 : i32
    %c0_i32_0 = arith.constant 0 : i32
    return %c0_i32, %arg0 : i32, i32
  }
  func.func @transform_3(%arg0: i32) -> (i32, i32) {
    %c0_i32 = arith.constant 0 : i32
    %c0_i32_0 = arith.constant 0 : i32
    return %c0_i32, %arg0 : i32, i32
  }
}

module attributes {stable_mosaic.version = 11 : i64} {
  func.func @_decoder_stack_kernel(%arg0: i32, %arg1: memref<1x35x35x32xf32, #tpu.memory_space<vmem>>, %arg2: memref<3x3x32x32xf32, #tpu.memory_space<vmem>>, %arg3: memref<1x32xf32, #tpu.memory_space<vmem>>, %arg4: memref<3x3x32x32xf32, #tpu.memory_space<vmem>>, %arg5: memref<1x32xf32, #tpu.memory_space<vmem>>, %arg6: memref<3x3x32x32xf32, #tpu.memory_space<vmem>>, %arg7: memref<1x32xf32, #tpu.memory_space<vmem>>, %arg8: memref<3x3x32x3xf32, #tpu.memory_space<vmem>>, %arg9: memref<1x3xf32, #tpu.memory_space<vmem>>, %arg10: memref<1x42x42x3xf32, #tpu.memory_space<vmem>>, %arg11: memref<1x42x42x3xf32, #tpu.memory_space<vmem>>, %arg12: memref<1x42x42x3xf32, #tpu.memory_space<vmem>>, %arg13: memref<1x42x42x3xf32, #tpu.memory_space<vmem>>, %arg14: memref<39x39x32xf32, #tpu.memory_space<vmem>>, %arg15: memref<41x41x32xf32, #tpu.memory_space<vmem>>, %arg16: memref<43x43x32xf32, #tpu.memory_space<vmem>>, %arg17: memref<43x43x32xf32, #tpu.memory_space<vmem>>) attributes {dimension_semantics = [#tpu.dimension_semantics<parallel>], iteration_bounds = array<i64: 2>, scalar_prefetch = 0 : i64, scratch_operands = 4 : i64, tpu.core_type = #tpu.core_type<tc>, window_params = [{transform_indices = @transform_0, window_bounds = array<i64: 1, 35, 35, 32>}, {pipeline_mode = #tpu.pipeline_mode<synchronous>, transform_indices = @transform_1, window_bounds = array<i64: 3, 3, 32, 32>}, {pipeline_mode = #tpu.pipeline_mode<synchronous>, transform_indices = @transform_2, window_bounds = array<i64: 1, 32>}, {pipeline_mode = #tpu.pipeline_mode<synchronous>, transform_indices = @transform_3, window_bounds = array<i64: 3, 3, 32, 32>}, {pipeline_mode = #tpu.pipeline_mode<synchronous>, transform_indices = @transform_4, window_bounds = array<i64: 1, 32>}, {pipeline_mode = #tpu.pipeline_mode<synchronous>, transform_indices = @transform_5, window_bounds = array<i64: 3, 3, 32, 32>}, {pipeline_mode = #tpu.pipeline_mode<synchronous>, transform_indices = @transform_6, window_bounds = array<i64: 1, 32>}, {pipeline_mode = #tpu.pipeline_mode<synchronous>, transform_indices = @transform_7, window_bounds = array<i64: 3, 3, 32, 3>}, {pipeline_mode = #tpu.pipeline_mode<synchronous>, transform_indices = @transform_8, window_bounds = array<i64: 1, 3>}, {transform_indices = @transform_9, window_bounds = array<i64: 1, 42, 42, 3>}, {transform_indices = @transform_10, window_bounds = array<i64: 1, 42, 42, 3>}, {transform_indices = @transform_11, window_bounds = array<i64: 1, 42, 42, 3>}, {transform_indices = @transform_12, window_bounds = array<i64: 1, 42, 42, 3>}]} {
    %cst = arith.constant 0.000000e+00 : f32
    %0 = vector.broadcast %cst : f32 to vector<39x39x32xf32>
    %c0 = arith.constant 0 : index
    %c0_0 = arith.constant 0 : index
    %c0_1 = arith.constant 0 : index
    %1 = vector.load %arg14[%c0, %c0_0, %c0_1] : memref<39x39x32xf32, #tpu.memory_space<vmem>>, vector<39x39x32xf32>
    tpu.vector_store %arg14[%c0, %c0_0, %c0_1], %0 {strides = array<i32>} : memref<39x39x32xf32, #tpu.memory_space<vmem>>, vector<39x39x32xf32>,
    %cst_2 = arith.constant 0.000000e+00 : f32
    %2 = vector.broadcast %cst_2 : f32 to vector<41x41x32xf32>
    %c0_3 = arith.constant 0 : index
    %c0_4 = arith.constant 0 : index
    %c0_5 = arith.constant 0 : index
    %3 = vector.load %arg15[%c0_3, %c0_4, %c0_5] : memref<41x41x32xf32, #tpu.memory_space<vmem>>, vector<41x41x32xf32>
    tpu.vector_store %arg15[%c0_3, %c0_4, %c0_5], %2 {strides = array<i32>} : memref<41x41x32xf32, #tpu.memory_space<vmem>>, vector<41x41x32xf32>,
    %cst_6 = arith.constant 0.000000e+00 : f32
    %4 = vector.broadcast %cst_6 : f32 to vector<43x43x32xf32>
    %c0_7 = arith.constant 0 : index
    %c0_8 = arith.constant 0 : index
    %c0_9 = arith.constant 0 : index
    %5 = vector.load %arg16[%c0_7, %c0_8, %c0_9] : memref<43x43x32xf32, #tpu.memory_space<vmem>>, vector<43x43x32xf32>
    tpu.vector_store %arg16[%c0_7, %c0_8, %c0_9], %4 {strides = array<i32>} : memref<43x43x32xf32, #tpu.memory_space<vmem>>, vector<43x43x32xf32>,
    %cst_10 = arith.constant 0.000000e+00 : f32
    %6 = vector.broadcast %cst_10 : f32 to vector<43x43x32xf32>
    %c0_11 = arith.constant 0 : index
    %c0_12 = arith.constant 0 : index
    %c0_13 = arith.constant 0 : index
    %7 = vector.load %arg17[%c0_11, %c0_12, %c0_13] : memref<43x43x32xf32, #tpu.memory_space<vmem>>, vector<43x43x32xf32>
    tpu.vector_store %arg17[%c0_11, %c0_12, %c0_13], %6 {strides = array<i32>} : memref<43x43x32xf32, #tpu.memory_space<vmem>>, vector<43x43x32xf32>,
    %c0_i32 = arith.constant 0 : i32
    %c35_i32 = arith.constant 35 : i32
    %8 = arith.addi %c0_i32, %c35_i32 : i32
    %c1_i32 = arith.constant 1 : i32
    scf.for %arg18 = %c0_i32 to %8 step %c1_i32  : i32 {
      %c0_35 = arith.constant 0 : index
      %17 = arith.index_cast %arg18 : i32 to index
      %c0_36 = arith.constant 0 : index
      %c0_37 = arith.constant 0 : index
      %18 = vector.load %arg1[%c0_35, %17, %c0_36, %c0_37] : memref<1x35x35x32xf32, #tpu.memory_space<vmem>>, vector<1x1x35x32xf32>
      %19 = vector.shape_cast %18 : vector<1x1x35x32xf32> to vector<35x32xf32>
      %c2_i32 = arith.constant 2 : i32
      %20 = arith.addi %arg18, %c2_i32 : i32
      %21 = arith.index_cast %20 : i32 to index
      %c2 = arith.constant 2 : index
      %c0_38 = arith.constant 0 : index
      %22 = vector.load %arg14[%21, %c2, %c0_38] : memref<39x39x32xf32, #tpu.memory_space<vmem>>, vector<1x35x32xf32>
      %23 = vector.shape_cast %22 : vector<1x35x32xf32> to vector<35x32xf32>
      %24 = vector.shape_cast %19 : vector<35x32xf32> to vector<1x35x32xf32>
      tpu.vector_store %arg14[%21, %c2, %c0_38], %24 {strides = array<i32>} : memref<39x39x32xf32, #tpu.memory_space<vmem>>, vector<1x35x32xf32>,
    }
    %c35_i32_14 = arith.constant 35 : i32
    %c0_15 = arith.constant 0 : index
    %c0_16 = arith.constant 0 : index
    %9 = vector.load %arg3[%c0_15, %c0_16] : memref<1x32xf32, #tpu.memory_space<vmem>>, vector<1x32xf32>
    %c0_i32_17 = arith.constant 0 : i32
    %c37_i32 = arith.constant 37 : i32
    %10 = arith.addi %c0_i32_17, %c37_i32 : i32
    %c1_i32_18 = arith.constant 1 : i32
    scf.for %arg18 = %c0_i32_17 to %10 step %c1_i32_18  : i32 {
      %cst_35 = arith.constant 0.000000e+00 : f32
      %17 = vector.broadcast %cst_35 : f32 to vector<37x32xf32>
      %c0_i32_36 = arith.constant 0 : i32
      %18 = arith.addi %arg18, %c0_i32_36 : i32
      %19 = arith.index_cast %18 : i32 to index
      %c0_37 = arith.constant 0 : index
      %c0_38 = arith.constant 0 : index
      %20 = vector.load %arg14[%19, %c0_37, %c0_38] : memref<39x39x32xf32, #tpu.memory_space<vmem>>, vector<1x37x32xf32>
      %21 = vector.shape_cast %20 : vector<1x37x32xf32> to vector<37x32xf32>
      %c0_39 = arith.constant 0 : index
      %c0_40 = arith.constant 0 : index
      %c0_41 = arith.constant 0 : index
      %c0_42 = arith.constant 0 : index
      %22 = vector.load %arg2[%c0_39, %c0_40, %c0_41, %c0_42] : memref<3x3x32x32xf32, #tpu.memory_space<vmem>>, vector<1x1x32x32xf32>
      %23 = vector.shape_cast %22 : vector<1x1x32x32xf32> to vector<32x32xf32>
      %cst_43 = arith.constant dense<0.000000e+00> : vector<37x32xf32>
      %24 = tpu.matmul %21, %23, %cst_43 {dimension_numbers = #tpu.dot_dimension_numbers<[1], [0], [0], [1], [0, 0, 1, 1], [], []>} : vector<37x32xf32>, vector<32x32xf32>, vector<37x32xf32> -> vector<37x32xf32>
      %25 = arith.addf %17, %24 : vector<37x32xf32>
      %c0_i32_44 = arith.constant 0 : i32
      %26 = arith.addi %arg18, %c0_i32_44 : i32
      %27 = arith.index_cast %26 : i32 to index
      %c1 = arith.constant 1 : index
      %c0_45 = arith.constant 0 : index
      %28 = vector.load %arg14[%27, %c1, %c0_45] : memref<39x39x32xf32, #tpu.memory_space<vmem>>, vector<1x37x32xf32>
      %29 = vector.shape_cast %28 : vector<1x37x32xf32> to vector<37x32xf32>
      %c0_46 = arith.constant 0 : index
      %c1_47 = arith.constant 1 : index
      %c0_48 = arith.constant 0 : index
      %c0_49 = arith.constant 0 : index
      %30 = vector.load %arg2[%c0_46, %c1_47, %c0_48, %c0_49] : memref<3x3x32x32xf32, #tpu.memory_space<vmem>>, vector<1x1x32x32xf32>
      %31 = vector.shape_cast %30 : vector<1x1x32x32xf32> to vector<32x32xf32>
      %cst_50 = arith.constant dense<0.000000e+00> : vector<37x32xf32>
      %32 = tpu.matmul %29, %31, %cst_50 {dimension_numbers = #tpu.dot_dimension_numbers<[1], [0], [0], [1], [0, 0, 1, 1], [], []>} : vector<37x32xf32>, vector<32x32xf32>, vector<37x32xf32> -> vector<37x32xf32>
      %33 = arith.addf %25, %32 : vector<37x32xf32>
      %c0_i32_51 = arith.constant 0 : i32
      %34 = arith.addi %arg18, %c0_i32_51 : i32
      %35 = arith.index_cast %34 : i32 to index
      %c2 = arith.constant 2 : index
      %c0_52 = arith.constant 0 : index
      %36 = vector.load %arg14[%35, %c2, %c0_52] : memref<39x39x32xf32, #tpu.memory_space<vmem>>, vector<1x37x32xf32>
      %37 = vector.shape_cast %36 : vector<1x37x32xf32> to vector<37x32xf32>
      %c0_53 = arith.constant 0 : index
      %c2_54 = arith.constant 2 : index
      %c0_55 = arith.constant 0 : index
      %c0_56 = arith.constant 0 : index
      %38 = vector.load %arg2[%c0_53, %c2_54, %c0_55, %c0_56] : memref<3x3x32x32xf32, #tpu.memory_space<vmem>>, vector<1x1x32x32xf32>
      %39 = vector.shape_cast %38 : vector<1x1x32x32xf32> to vector<32x32xf32>
      %cst_57 = arith.constant dense<0.000000e+00> : vector<37x32xf32>
      %40 = tpu.matmul %37, %39, %cst_57 {dimension_numbers = #tpu.dot_dimension_numbers<[1], [0], [0], [1], [0, 0, 1, 1], [], []>} : vector<37x32xf32>, vector<32x32xf32>, vector<37x32xf32> -> vector<37x32xf32>
      %41 = arith.addf %33, %40 : vector<37x32xf32>
      %c1_i32_58 = arith.constant 1 : i32
      %42 = arith.addi %arg18, %c1_i32_58 : i32
      %43 = arith.index_cast %42 : i32 to index
      %c0_59 = arith.constant 0 : index
      %c0_60 = arith.constant 0 : index
      %44 = vector.load %arg14[%43, %c0_59, %c0_60] : memref<39x39x32xf32, #tpu.memory_space<vmem>>, vector<1x37x32xf32>
      %45 = vector.shape_cast %44 : vector<1x37x32xf32> to vector<37x32xf32>
      %c1_61 = arith.constant 1 : index
      %c0_62 = arith.constant 0 : index
      %c0_63 = arith.constant 0 : index
      %c0_64 = arith.constant 0 : index
      %46 = vector.load %arg2[%c1_61, %c0_62, %c0_63, %c0_64] : memref<3x3x32x32xf32, #tpu.memory_space<vmem>>, vector<1x1x32x32xf32>
      %47 = vector.shape_cast %46 : vector<1x1x32x32xf32> to vector<32x32xf32>
      %cst_65 = arith.constant dense<0.000000e+00> : vector<37x32xf32>
      %48 = tpu.matmul %45, %47, %cst_65 {dimension_numbers = #tpu.dot_dimension_numbers<[1], [0], [0], [1], [0, 0, 1, 1], [], []>} : vector<37x32xf32>, vector<32x32xf32>, vector<37x32xf32> -> vector<37x32xf32>
      %49 = arith.addf %41, %48 : vector<37x32xf32>
      %c1_i32_66 = arith.constant 1 : i32
      %50 = arith.addi %arg18, %c1_i32_66 : i32
      %51 = arith.index_cast %50 : i32 to index
      %c1_67 = arith.constant 1 : index
      %c0_68 = arith.constant 0 : index
      %52 = vector.load %arg14[%51, %c1_67, %c0_68] : memref<39x39x32xf32, #tpu.memory_space<vmem>>, vector<1x37x32xf32>
      %53 = vector.shape_cast %52 : vector<1x37x32xf32> to vector<37x32xf32>
      %c1_69 = arith.constant 1 : index
      %c1_70 = arith.constant 1 : index
      %c0_71 = arith.constant 0 : index
      %c0_72 = arith.constant 0 : index
      %54 = vector.load %arg2[%c1_69, %c1_70, %c0_71, %c0_72] : memref<3x3x32x32xf32, #tpu.memory_space<vmem>>, vector<1x1x32x32xf32>
      %55 = vector.shape_cast %54 : vector<1x1x32x32xf32> to vector<32x32xf32>
      %cst_73 = arith.constant dense<0.000000e+00> : vector<37x32xf32>
      %56 = tpu.matmul %53, %55, %cst_73 {dimension_numbers = #tpu.dot_dimension_numbers<[1], [0], [0], [1], [0, 0, 1, 1], [], []>} : vector<37x32xf32>, vector<32x32xf32>, vector<37x32xf32> -> vector<37x32xf32>
      %57 = arith.addf %49, %56 : vector<37x32xf32>
      %c1_i32_74 = arith.constant 1 : i32
      %58 = arith.addi %arg18, %c1_i32_74 : i32
      %59 = arith.index_cast %58 : i32 to index
      %c2_75 = arith.constant 2 : index
      %c0_76 = arith.constant 0 : index
      %60 = vector.load %arg14[%59, %c2_75, %c0_76] : memref<39x39x32xf32, #tpu.memory_space<vmem>>, vector<1x37x32xf32>
      %61 = vector.shape_cast %60 : vector<1x37x32xf32> to vector<37x32xf32>
      %c1_77 = arith.constant 1 : index
      %c2_78 = arith.constant 2 : index
      %c0_79 = arith.constant 0 : index
      %c0_80 = arith.constant 0 : index
      %62 = vector.load %arg2[%c1_77, %c2_78, %c0_79, %c0_80] : memref<3x3x32x32xf32, #tpu.memory_space<vmem>>, vector<1x1x32x32xf32>
      %63 = vector.shape_cast %62 : vector<1x1x32x32xf32> to vector<32x32xf32>
      %cst_81 = arith.constant dense<0.000000e+00> : vector<37x32xf32>
      %64 = tpu.matmul %61, %63, %cst_81 {dimension_numbers = #tpu.dot_dimension_numbers<[1], [0], [0], [1], [0, 0, 1, 1], [], []>} : vector<37x32xf32>, vector<32x32xf32>, vector<37x32xf32> -> vector<37x32xf32>
      %65 = arith.addf %57, %64 : vector<37x32xf32>
      %c2_i32 = arith.constant 2 : i32
      %66 = arith.addi %arg18, %c2_i32 : i32
      %67 = arith.index_cast %66 : i32 to index
      %c0_82 = arith.constant 0 : index
      %c0_83 = arith.constant 0 : index
      %68 = vector.load %arg14[%67, %c0_82, %c0_83] : memref<39x39x32xf32, #tpu.memory_space<vmem>>, vector<1x37x32xf32>
      %69 = vector.shape_cast %68 : vector<1x37x32xf32> to vector<37x32xf32>
      %c2_84 = arith.constant 2 : index
      %c0_85 = arith.constant 0 : index
      %c0_86 = arith.constant 0 : index
      %c0_87 = arith.constant 0 : index
      %70 = vector.load %arg2[%c2_84, %c0_85, %c0_86, %c0_87] : memref<3x3x32x32xf32, #tpu.memory_space<vmem>>, vector<1x1x32x32xf32>
      %71 = vector.shape_cast %70 : vector<1x1x32x32xf32> to vector<32x32xf32>
      %cst_88 = arith.constant dense<0.000000e+00> : vector<37x32xf32>
      %72 = tpu.matmul %69, %71, %cst_88 {dimension_numbers = #tpu.dot_dimension_numbers<[1], [0], [0], [1], [0, 0, 1, 1], [], []>} : vector<37x32xf32>, vector<32x32xf32>, vector<37x32xf32> -> vector<37x32xf32>
      %73 = arith.addf %65, %72 : vector<37x32xf32>
      %c2_i32_89 = arith.constant 2 : i32
      %74 = arith.addi %arg18, %c2_i32_89 : i32
      %75 = arith.index_cast %74 : i32 to index
      %c1_90 = arith.constant 1 : index
      %c0_91 = arith.constant 0 : index
      %76 = vector.load %arg14[%75, %c1_90, %c0_91] : memref<39x39x32xf32, #tpu.memory_space<vmem>>, vector<1x37x32xf32>
      %77 = vector.shape_cast %76 : vector<1x37x32xf32> to vector<37x32xf32>
      %c2_92 = arith.constant 2 : index
      %c1_93 = arith.constant 1 : index
      %c0_94 = arith.constant 0 : index
      %c0_95 = arith.constant 0 : index
      %78 = vector.load %arg2[%c2_92, %c1_93, %c0_94, %c0_95] : memref<3x3x32x32xf32, #tpu.memory_space<vmem>>, vector<1x1x32x32xf32>
      %79 = vector.shape_cast %78 : vector<1x1x32x32xf32> to vector<32x32xf32>
      %cst_96 = arith.constant dense<0.000000e+00> : vector<37x32xf32>
      %80 = tpu.matmul %77, %79, %cst_96 {dimension_numbers = #tpu.dot_dimension_numbers<[1], [0], [0], [1], [0, 0, 1, 1], [], []>} : vector<37x32xf32>, vector<32x32xf32>, vector<37x32xf32> -> vector<37x32xf32>
      %81 = arith.addf %73, %80 : vector<37x32xf32>
      %c2_i32_97 = arith.constant 2 : i32
      %82 = arith.addi %arg18, %c2_i32_97 : i32
      %83 = arith.index_cast %82 : i32 to index
      %c2_98 = arith.constant 2 : index
      %c0_99 = arith.constant 0 : index
      %84 = vector.load %arg14[%83, %c2_98, %c0_99] : memref<39x39x32xf32, #tpu.memory_space<vmem>>, vector<1x37x32xf32>
      %85 = vector.shape_cast %84 : vector<1x37x32xf32> to vector<37x32xf32>
      %c2_100 = arith.constant 2 : index
      %c2_101 = arith.constant 2 : index
      %c0_102 = arith.constant 0 : index
      %c0_103 = arith.constant 0 : index
      %86 = vector.load %arg2[%c2_100, %c2_101, %c0_102, %c0_103] : memref<3x3x32x32xf32, #tpu.memory_space<vmem>>, vector<1x1x32x32xf32>
      %87 = vector.shape_cast %86 : vector<1x1x32x32xf32> to vector<32x32xf32>
      %cst_104 = arith.constant dense<0.000000e+00> : vector<37x32xf32>
      %88 = tpu.matmul %85, %87, %cst_104 {dimension_numbers = #tpu.dot_dimension_numbers<[1], [0], [0], [1], [0, 0, 1, 1], [], []>} : vector<37x32xf32>, vector<32x32xf32>, vector<37x32xf32> -> vector<37x32xf32>
      %89 = arith.addf %81, %88 : vector<37x32xf32>
      %90 = vector.broadcast %9 : vector<1x32xf32> to vector<37x32xf32>
      %91 = arith.addf %89, %90 : vector<37x32xf32>
      %cst_105 = arith.constant 0.000000e+00 : f32
      %92 = vector.broadcast %cst_105 : f32 to vector<37x32xf32>
      %93 = arith.maximumf %91, %92 : vector<37x32xf32>
      %c2_i32_106 = arith.constant 2 : i32
      %94 = arith.addi %arg18, %c2_i32_106 : i32
      %95 = arith.index_cast %94 : i32 to index
      %c2_107 = arith.constant 2 : index
      %c0_108 = arith.constant 0 : index
      %96 = vector.load %arg15[%95, %c2_107, %c0_108] : memref<41x41x32xf32, #tpu.memory_space<vmem>>, vector<1x37x32xf32>
      %97 = vector.shape_cast %96 : vector<1x37x32xf32> to vector<37x32xf32>
      %98 = vector.shape_cast %93 : vector<37x32xf32> to vector<1x37x32xf32>
      tpu.vector_store %arg15[%95, %c2_107, %c0_108], %98 {strides = array<i32>} : memref<41x41x32xf32, #tpu.memory_space<vmem>>, vector<1x37x32xf32>,
    }
    %c37_i32_19 = arith.constant 37 : i32
    %c0_20 = arith.constant 0 : index
    %c0_21 = arith.constant 0 : index
    %11 = vector.load %arg5[%c0_20, %c0_21] : memref<1x32xf32, #tpu.memory_space<vmem>>, vector<1x32xf32>
    %c0_i32_22 = arith.constant 0 : i32
    %c39_i32 = arith.constant 39 : i32
    %12 = arith.addi %c0_i32_22, %c39_i32 : i32
    %c1_i32_23 = arith.constant 1 : i32
    scf.for %arg18 = %c0_i32_22 to %12 step %c1_i32_23  : i32 {
      %cst_35 = arith.constant 0.000000e+00 : f32
      %17 = vector.broadcast %cst_35 : f32 to vector<39x32xf32>
      %c0_i32_36 = arith.constant 0 : i32
      %18 = arith.addi %arg18, %c0_i32_36 : i32
      %19 = arith.index_cast %18 : i32 to index
      %c0_37 = arith.constant 0 : index
      %c0_38 = arith.constant 0 : index
      %20 = vector.load %arg15[%19, %c0_37, %c0_38] : memref<41x41x32xf32, #tpu.memory_space<vmem>>, vector<1x39x32xf32>
      %21 = vector.shape_cast %20 : vector<1x39x32xf32> to vector<39x32xf32>
      %c0_39 = arith.constant 0 : index
      %c0_40 = arith.constant 0 : index
      %c0_41 = arith.constant 0 : index
      %c0_42 = arith.constant 0 : index
      %22 = vector.load %arg4[%c0_39, %c0_40, %c0_41, %c0_42] : memref<3x3x32x32xf32, #tpu.memory_space<vmem>>, vector<1x1x32x32xf32>
      %23 = vector.shape_cast %22 : vector<1x1x32x32xf32> to vector<32x32xf32>
      %cst_43 = arith.constant dense<0.000000e+00> : vector<39x32xf32>
      %24 = tpu.matmul %21, %23, %cst_43 {dimension_numbers = #tpu.dot_dimension_numbers<[1], [0], [0], [1], [0, 0, 1, 1], [], []>} : vector<39x32xf32>, vector<32x32xf32>, vector<39x32xf32> -> vector<39x32xf32>
      %25 = arith.addf %17, %24 : vector<39x32xf32>
      %c0_i32_44 = arith.constant 0 : i32
      %26 = arith.addi %arg18, %c0_i32_44 : i32
      %27 = arith.index_cast %26 : i32 to index
      %c1 = arith.constant 1 : index
      %c0_45 = arith.constant 0 : index
      %28 = vector.load %arg15[%27, %c1, %c0_45] : memref<41x41x32xf32, #tpu.memory_space<vmem>>, vector<1x39x32xf32>
      %29 = vector.shape_cast %28 : vector<1x39x32xf32> to vector<39x32xf32>
      %c0_46 = arith.constant 0 : index
      %c1_47 = arith.constant 1 : index
      %c0_48 = arith.constant 0 : index
      %c0_49 = arith.constant 0 : index
      %30 = vector.load %arg4[%c0_46, %c1_47, %c0_48, %c0_49] : memref<3x3x32x32xf32, #tpu.memory_space<vmem>>, vector<1x1x32x32xf32>
      %31 = vector.shape_cast %30 : vector<1x1x32x32xf32> to vector<32x32xf32>
      %cst_50 = arith.constant dense<0.000000e+00> : vector<39x32xf32>
      %32 = tpu.matmul %29, %31, %cst_50 {dimension_numbers = #tpu.dot_dimension_numbers<[1], [0], [0], [1], [0, 0, 1, 1], [], []>} : vector<39x32xf32>, vector<32x32xf32>, vector<39x32xf32> -> vector<39x32xf32>
      %33 = arith.addf %25, %32 : vector<39x32xf32>
      %c0_i32_51 = arith.constant 0 : i32
      %34 = arith.addi %arg18, %c0_i32_51 : i32
      %35 = arith.index_cast %34 : i32 to index
      %c2 = arith.constant 2 : index
      %c0_52 = arith.constant 0 : index
      %36 = vector.load %arg15[%35, %c2, %c0_52] : memref<41x41x32xf32, #tpu.memory_space<vmem>>, vector<1x39x32xf32>
      %37 = vector.shape_cast %36 : vector<1x39x32xf32> to vector<39x32xf32>
      %c0_53 = arith.constant 0 : index
      %c2_54 = arith.constant 2 : index
      %c0_55 = arith.constant 0 : index
      %c0_56 = arith.constant 0 : index
      %38 = vector.load %arg4[%c0_53, %c2_54, %c0_55, %c0_56] : memref<3x3x32x32xf32, #tpu.memory_space<vmem>>, vector<1x1x32x32xf32>
      %39 = vector.shape_cast %38 : vector<1x1x32x32xf32> to vector<32x32xf32>
      %cst_57 = arith.constant dense<0.000000e+00> : vector<39x32xf32>
      %40 = tpu.matmul %37, %39, %cst_57 {dimension_numbers = #tpu.dot_dimension_numbers<[1], [0], [0], [1], [0, 0, 1, 1], [], []>} : vector<39x32xf32>, vector<32x32xf32>, vector<39x32xf32> -> vector<39x32xf32>
      %41 = arith.addf %33, %40 : vector<39x32xf32>
      %c1_i32_58 = arith.constant 1 : i32
      %42 = arith.addi %arg18, %c1_i32_58 : i32
      %43 = arith.index_cast %42 : i32 to index
      %c0_59 = arith.constant 0 : index
      %c0_60 = arith.constant 0 : index
      %44 = vector.load %arg15[%43, %c0_59, %c0_60] : memref<41x41x32xf32, #tpu.memory_space<vmem>>, vector<1x39x32xf32>
      %45 = vector.shape_cast %44 : vector<1x39x32xf32> to vector<39x32xf32>
      %c1_61 = arith.constant 1 : index
      %c0_62 = arith.constant 0 : index
      %c0_63 = arith.constant 0 : index
      %c0_64 = arith.constant 0 : index
      %46 = vector.load %arg4[%c1_61, %c0_62, %c0_63, %c0_64] : memref<3x3x32x32xf32, #tpu.memory_space<vmem>>, vector<1x1x32x32xf32>
      %47 = vector.shape_cast %46 : vector<1x1x32x32xf32> to vector<32x32xf32>
      %cst_65 = arith.constant dense<0.000000e+00> : vector<39x32xf32>
      %48 = tpu.matmul %45, %47, %cst_65 {dimension_numbers = #tpu.dot_dimension_numbers<[1], [0], [0], [1], [0, 0, 1, 1], [], []>} : vector<39x32xf32>, vector<32x32xf32>, vector<39x32xf32> -> vector<39x32xf32>
      %49 = arith.addf %41, %48 : vector<39x32xf32>
      %c1_i32_66 = arith.constant 1 : i32
      %50 = arith.addi %arg18, %c1_i32_66 : i32
      %51 = arith.index_cast %50 : i32 to index
      %c1_67 = arith.constant 1 : index
      %c0_68 = arith.constant 0 : index
      %52 = vector.load %arg15[%51, %c1_67, %c0_68] : memref<41x41x32xf32, #tpu.memory_space<vmem>>, vector<1x39x32xf32>
      %53 = vector.shape_cast %52 : vector<1x39x32xf32> to vector<39x32xf32>
      %c1_69 = arith.constant 1 : index
      %c1_70 = arith.constant 1 : index
      %c0_71 = arith.constant 0 : index
      %c0_72 = arith.constant 0 : index
      %54 = vector.load %arg4[%c1_69, %c1_70, %c0_71, %c0_72] : memref<3x3x32x32xf32, #tpu.memory_space<vmem>>, vector<1x1x32x32xf32>
      %55 = vector.shape_cast %54 : vector<1x1x32x32xf32> to vector<32x32xf32>
      %cst_73 = arith.constant dense<0.000000e+00> : vector<39x32xf32>
      %56 = tpu.matmul %53, %55, %cst_73 {dimension_numbers = #tpu.dot_dimension_numbers<[1], [0], [0], [1], [0, 0, 1, 1], [], []>} : vector<39x32xf32>, vector<32x32xf32>, vector<39x32xf32> -> vector<39x32xf32>
      %57 = arith.addf %49, %56 : vector<39x32xf32>
      %c1_i32_74 = arith.constant 1 : i32
      %58 = arith.addi %arg18, %c1_i32_74 : i32
      %59 = arith.index_cast %58 : i32 to index
      %c2_75 = arith.constant 2 : index
      %c0_76 = arith.constant 0 : index
      %60 = vector.load %arg15[%59, %c2_75, %c0_76] : memref<41x41x32xf32, #tpu.memory_space<vmem>>, vector<1x39x32xf32>
      %61 = vector.shape_cast %60 : vector<1x39x32xf32> to vector<39x32xf32>
      %c1_77 = arith.constant 1 : index
      %c2_78 = arith.constant 2 : index
      %c0_79 = arith.constant 0 : index
      %c0_80 = arith.constant 0 : index
      %62 = vector.load %arg4[%c1_77, %c2_78, %c0_79, %c0_80] : memref<3x3x32x32xf32, #tpu.memory_space<vmem>>, vector<1x1x32x32xf32>
      %63 = vector.shape_cast %62 : vector<1x1x32x32xf32> to vector<32x32xf32>
      %cst_81 = arith.constant dense<0.000000e+00> : vector<39x32xf32>
      %64 = tpu.matmul %61, %63, %cst_81 {dimension_numbers = #tpu.dot_dimension_numbers<[1], [0], [0], [1], [0, 0, 1, 1], [], []>} : vector<39x32xf32>, vector<32x32xf32>, vector<39x32xf32> -> vector<39x32xf32>
      %65 = arith.addf %57, %64 : vector<39x32xf32>
      %c2_i32 = arith.constant 2 : i32
      %66 = arith.addi %arg18, %c2_i32 : i32
      %67 = arith.index_cast %66 : i32 to index
      %c0_82 = arith.constant 0 : index
      %c0_83 = arith.constant 0 : index
      %68 = vector.load %arg15[%67, %c0_82, %c0_83] : memref<41x41x32xf32, #tpu.memory_space<vmem>>, vector<1x39x32xf32>
      %69 = vector.shape_cast %68 : vector<1x39x32xf32> to vector<39x32xf32>
      %c2_84 = arith.constant 2 : index
      %c0_85 = arith.constant 0 : index
      %c0_86 = arith.constant 0 : index
      %c0_87 = arith.constant 0 : index
      %70 = vector.load %arg4[%c2_84, %c0_85, %c0_86, %c0_87] : memref<3x3x32x32xf32, #tpu.memory_space<vmem>>, vector<1x1x32x32xf32>
      %71 = vector.shape_cast %70 : vector<1x1x32x32xf32> to vector<32x32xf32>
      %cst_88 = arith.constant dense<0.000000e+00> : vector<39x32xf32>
      %72 = tpu.matmul %69, %71, %cst_88 {dimension_numbers = #tpu.dot_dimension_numbers<[1], [0], [0], [1], [0, 0, 1, 1], [], []>} : vector<39x32xf32>, vector<32x32xf32>, vector<39x32xf32> -> vector<39x32xf32>
      %73 = arith.addf %65, %72 : vector<39x32xf32>
      %c2_i32_89 = arith.constant 2 : i32
      %74 = arith.addi %arg18, %c2_i32_89 : i32
      %75 = arith.index_cast %74 : i32 to index
      %c1_90 = arith.constant 1 : index
      %c0_91 = arith.constant 0 : index
      %76 = vector.load %arg15[%75, %c1_90, %c0_91] : memref<41x41x32xf32, #tpu.memory_space<vmem>>, vector<1x39x32xf32>
      %77 = vector.shape_cast %76 : vector<1x39x32xf32> to vector<39x32xf32>
      %c2_92 = arith.constant 2 : index
      %c1_93 = arith.constant 1 : index
      %c0_94 = arith.constant 0 : index
      %c0_95 = arith.constant 0 : index
      %78 = vector.load %arg4[%c2_92, %c1_93, %c0_94, %c0_95] : memref<3x3x32x32xf32, #tpu.memory_space<vmem>>, vector<1x1x32x32xf32>
      %79 = vector.shape_cast %78 : vector<1x1x32x32xf32> to vector<32x32xf32>
      %cst_96 = arith.constant dense<0.000000e+00> : vector<39x32xf32>
      %80 = tpu.matmul %77, %79, %cst_96 {dimension_numbers = #tpu.dot_dimension_numbers<[1], [0], [0], [1], [0, 0, 1, 1], [], []>} : vector<39x32xf32>, vector<32x32xf32>, vector<39x32xf32> -> vector<39x32xf32>
      %81 = arith.addf %73, %80 : vector<39x32xf32>
      %c2_i32_97 = arith.constant 2 : i32
      %82 = arith.addi %arg18, %c2_i32_97 : i32
      %83 = arith.index_cast %82 : i32 to index
      %c2_98 = arith.constant 2 : index
      %c0_99 = arith.constant 0 : index
      %84 = vector.load %arg15[%83, %c2_98, %c0_99] : memref<41x41x32xf32, #tpu.memory_space<vmem>>, vector<1x39x32xf32>
      %85 = vector.shape_cast %84 : vector<1x39x32xf32> to vector<39x32xf32>
      %c2_100 = arith.constant 2 : index
      %c2_101 = arith.constant 2 : index
      %c0_102 = arith.constant 0 : index
      %c0_103 = arith.constant 0 : index
      %86 = vector.load %arg4[%c2_100, %c2_101, %c0_102, %c0_103] : memref<3x3x32x32xf32, #tpu.memory_space<vmem>>, vector<1x1x32x32xf32>
      %87 = vector.shape_cast %86 : vector<1x1x32x32xf32> to vector<32x32xf32>
      %cst_104 = arith.constant dense<0.000000e+00> : vector<39x32xf32>
      %88 = tpu.matmul %85, %87, %cst_104 {dimension_numbers = #tpu.dot_dimension_numbers<[1], [0], [0], [1], [0, 0, 1, 1], [], []>} : vector<39x32xf32>, vector<32x32xf32>, vector<39x32xf32> -> vector<39x32xf32>
      %89 = arith.addf %81, %88 : vector<39x32xf32>
      %90 = vector.broadcast %11 : vector<1x32xf32> to vector<39x32xf32>
      %91 = arith.addf %89, %90 : vector<39x32xf32>
      %cst_105 = arith.constant 0.000000e+00 : f32
      %92 = vector.broadcast %cst_105 : f32 to vector<39x32xf32>
      %93 = arith.maximumf %91, %92 : vector<39x32xf32>
      %c2_i32_106 = arith.constant 2 : i32
      %94 = arith.addi %arg18, %c2_i32_106 : i32
      %95 = arith.index_cast %94 : i32 to index
      %c2_107 = arith.constant 2 : index
      %c0_108 = arith.constant 0 : index
      %96 = vector.load %arg16[%95, %c2_107, %c0_108] : memref<43x43x32xf32, #tpu.memory_space<vmem>>, vector<1x39x32xf32>
      %97 = vector.shape_cast %96 : vector<1x39x32xf32> to vector<39x32xf32>
      %98 = vector.shape_cast %93 : vector<39x32xf32> to vector<1x39x32xf32>
      tpu.vector_store %arg16[%95, %c2_107, %c0_108], %98 {strides = array<i32>} : memref<43x43x32xf32, #tpu.memory_space<vmem>>, vector<1x39x32xf32>,
    }
    %c39_i32_24 = arith.constant 39 : i32
    %c0_25 = arith.constant 0 : index
    %c0_26 = arith.constant 0 : index
    %13 = vector.load %arg7[%c0_25, %c0_26] : memref<1x32xf32, #tpu.memory_space<vmem>>, vector<1x32xf32>
    %c0_i32_27 = arith.constant 0 : i32
    %c41_i32 = arith.constant 41 : i32
    %14 = arith.addi %c0_i32_27, %c41_i32 : i32
    %c1_i32_28 = arith.constant 1 : i32
    scf.for %arg18 = %c0_i32_27 to %14 step %c1_i32_28  : i32 {
      %cst_35 = arith.constant 0.000000e+00 : f32
      %17 = vector.broadcast %cst_35 : f32 to vector<41x32xf32>
      %c0_i32_36 = arith.constant 0 : i32
      %18 = arith.addi %arg18, %c0_i32_36 : i32
      %19 = arith.index_cast %18 : i32 to index
      %c0_37 = arith.constant 0 : index
      %c0_38 = arith.constant 0 : index
      %20 = vector.load %arg16[%19, %c0_37, %c0_38] : memref<43x43x32xf32, #tpu.memory_space<vmem>>, vector<1x41x32xf32>
      %21 = vector.shape_cast %20 : vector<1x41x32xf32> to vector<41x32xf32>
      %c0_39 = arith.constant 0 : index
      %c0_40 = arith.constant 0 : index
      %c0_41 = arith.constant 0 : index
      %c0_42 = arith.constant 0 : index
      %22 = vector.load %arg6[%c0_39, %c0_40, %c0_41, %c0_42] : memref<3x3x32x32xf32, #tpu.memory_space<vmem>>, vector<1x1x32x32xf32>
      %23 = vector.shape_cast %22 : vector<1x1x32x32xf32> to vector<32x32xf32>
      %cst_43 = arith.constant dense<0.000000e+00> : vector<41x32xf32>
      %24 = tpu.matmul %21, %23, %cst_43 {dimension_numbers = #tpu.dot_dimension_numbers<[1], [0], [0], [1], [0, 0, 1, 1], [], []>} : vector<41x32xf32>, vector<32x32xf32>, vector<41x32xf32> -> vector<41x32xf32>
      %25 = arith.addf %17, %24 : vector<41x32xf32>
      %c0_i32_44 = arith.constant 0 : i32
      %26 = arith.addi %arg18, %c0_i32_44 : i32
      %27 = arith.index_cast %26 : i32 to index
      %c1 = arith.constant 1 : index
      %c0_45 = arith.constant 0 : index
      %28 = vector.load %arg16[%27, %c1, %c0_45] : memref<43x43x32xf32, #tpu.memory_space<vmem>>, vector<1x41x32xf32>
      %29 = vector.shape_cast %28 : vector<1x41x32xf32> to vector<41x32xf32>
      %c0_46 = arith.constant 0 : index
      %c1_47 = arith.constant 1 : index
      %c0_48 = arith.constant 0 : index
      %c0_49 = arith.constant 0 : index
      %30 = vector.load %arg6[%c0_46, %c1_47, %c0_48, %c0_49] : memref<3x3x32x32xf32, #tpu.memory_space<vmem>>, vector<1x1x32x32xf32>
      %31 = vector.shape_cast %30 : vector<1x1x32x32xf32> to vector<32x32xf32>
      %cst_50 = arith.constant dense<0.000000e+00> : vector<41x32xf32>
      %32 = tpu.matmul %29, %31, %cst_50 {dimension_numbers = #tpu.dot_dimension_numbers<[1], [0], [0], [1], [0, 0, 1, 1], [], []>} : vector<41x32xf32>, vector<32x32xf32>, vector<41x32xf32> -> vector<41x32xf32>
      %33 = arith.addf %25, %32 : vector<41x32xf32>
      %c0_i32_51 = arith.constant 0 : i32
      %34 = arith.addi %arg18, %c0_i32_51 : i32
      %35 = arith.index_cast %34 : i32 to index
      %c2 = arith.constant 2 : index
      %c0_52 = arith.constant 0 : index
      %36 = vector.load %arg16[%35, %c2, %c0_52] : memref<43x43x32xf32, #tpu.memory_space<vmem>>, vector<1x41x32xf32>
      %37 = vector.shape_cast %36 : vector<1x41x32xf32> to vector<41x32xf32>
      %c0_53 = arith.constant 0 : index
      %c2_54 = arith.constant 2 : index
      %c0_55 = arith.constant 0 : index
      %c0_56 = arith.constant 0 : index
      %38 = vector.load %arg6[%c0_53, %c2_54, %c0_55, %c0_56] : memref<3x3x32x32xf32, #tpu.memory_space<vmem>>, vector<1x1x32x32xf32>
      %39 = vector.shape_cast %38 : vector<1x1x32x32xf32> to vector<32x32xf32>
      %cst_57 = arith.constant dense<0.000000e+00> : vector<41x32xf32>
      %40 = tpu.matmul %37, %39, %cst_57 {dimension_numbers = #tpu.dot_dimension_numbers<[1], [0], [0], [1], [0, 0, 1, 1], [], []>} : vector<41x32xf32>, vector<32x32xf32>, vector<41x32xf32> -> vector<41x32xf32>
      %41 = arith.addf %33, %40 : vector<41x32xf32>
      %c1_i32_58 = arith.constant 1 : i32
      %42 = arith.addi %arg18, %c1_i32_58 : i32
      %43 = arith.index_cast %42 : i32 to index
      %c0_59 = arith.constant 0 : index
      %c0_60 = arith.constant 0 : index
      %44 = vector.load %arg16[%43, %c0_59, %c0_60] : memref<43x43x32xf32, #tpu.memory_space<vmem>>, vector<1x41x32xf32>
      %45 = vector.shape_cast %44 : vector<1x41x32xf32> to vector<41x32xf32>
      %c1_61 = arith.constant 1 : index
      %c0_62 = arith.constant 0 : index
      %c0_63 = arith.constant 0 : index
      %c0_64 = arith.constant 0 : index
      %46 = vector.load %arg6[%c1_61, %c0_62, %c0_63, %c0_64] : memref<3x3x32x32xf32, #tpu.memory_space<vmem>>, vector<1x1x32x32xf32>
      %47 = vector.shape_cast %46 : vector<1x1x32x32xf32> to vector<32x32xf32>
      %cst_65 = arith.constant dense<0.000000e+00> : vector<41x32xf32>
      %48 = tpu.matmul %45, %47, %cst_65 {dimension_numbers = #tpu.dot_dimension_numbers<[1], [0], [0], [1], [0, 0, 1, 1], [], []>} : vector<41x32xf32>, vector<32x32xf32>, vector<41x32xf32> -> vector<41x32xf32>
      %49 = arith.addf %41, %48 : vector<41x32xf32>
      %c1_i32_66 = arith.constant 1 : i32
      %50 = arith.addi %arg18, %c1_i32_66 : i32
      %51 = arith.index_cast %50 : i32 to index
      %c1_67 = arith.constant 1 : index
      %c0_68 = arith.constant 0 : index
      %52 = vector.load %arg16[%51, %c1_67, %c0_68] : memref<43x43x32xf32, #tpu.memory_space<vmem>>, vector<1x41x32xf32>
      %53 = vector.shape_cast %52 : vector<1x41x32xf32> to vector<41x32xf32>
      %c1_69 = arith.constant 1 : index
      %c1_70 = arith.constant 1 : index
      %c0_71 = arith.constant 0 : index
      %c0_72 = arith.constant 0 : index
      %54 = vector.load %arg6[%c1_69, %c1_70, %c0_71, %c0_72] : memref<3x3x32x32xf32, #tpu.memory_space<vmem>>, vector<1x1x32x32xf32>
      %55 = vector.shape_cast %54 : vector<1x1x32x32xf32> to vector<32x32xf32>
      %cst_73 = arith.constant dense<0.000000e+00> : vector<41x32xf32>
      %56 = tpu.matmul %53, %55, %cst_73 {dimension_numbers = #tpu.dot_dimension_numbers<[1], [0], [0], [1], [0, 0, 1, 1], [], []>} : vector<41x32xf32>, vector<32x32xf32>, vector<41x32xf32> -> vector<41x32xf32>
      %57 = arith.addf %49, %56 : vector<41x32xf32>
      %c1_i32_74 = arith.constant 1 : i32
      %58 = arith.addi %arg18, %c1_i32_74 : i32
      %59 = arith.index_cast %58 : i32 to index
      %c2_75 = arith.constant 2 : index
      %c0_76 = arith.constant 0 : index
      %60 = vector.load %arg16[%59, %c2_75, %c0_76] : memref<43x43x32xf32, #tpu.memory_space<vmem>>, vector<1x41x32xf32>
      %61 = vector.shape_cast %60 : vector<1x41x32xf32> to vector<41x32xf32>
      %c1_77 = arith.constant 1 : index
      %c2_78 = arith.constant 2 : index
      %c0_79 = arith.constant 0 : index
      %c0_80 = arith.constant 0 : index
      %62 = vector.load %arg6[%c1_77, %c2_78, %c0_79, %c0_80] : memref<3x3x32x32xf32, #tpu.memory_space<vmem>>, vector<1x1x32x32xf32>
      %63 = vector.shape_cast %62 : vector<1x1x32x32xf32> to vector<32x32xf32>
      %cst_81 = arith.constant dense<0.000000e+00> : vector<41x32xf32>
      %64 = tpu.matmul %61, %63, %cst_81 {dimension_numbers = #tpu.dot_dimension_numbers<[1], [0], [0], [1], [0, 0, 1, 1], [], []>} : vector<41x32xf32>, vector<32x32xf32>, vector<41x32xf32> -> vector<41x32xf32>
      %65 = arith.addf %57, %64 : vector<41x32xf32>
      %c2_i32 = arith.constant 2 : i32
      %66 = arith.addi %arg18, %c2_i32 : i32
      %67 = arith.index_cast %66 : i32 to index
      %c0_82 = arith.constant 0 : index
      %c0_83 = arith.constant 0 : index
      %68 = vector.load %arg16[%67, %c0_82, %c0_83] : memref<43x43x32xf32, #tpu.memory_space<vmem>>, vector<1x41x32xf32>
      %69 = vector.shape_cast %68 : vector<1x41x32xf32> to vector<41x32xf32>
      %c2_84 = arith.constant 2 : index
      %c0_85 = arith.constant 0 : index
      %c0_86 = arith.constant 0 : index
      %c0_87 = arith.constant 0 : index
      %70 = vector.load %arg6[%c2_84, %c0_85, %c0_86, %c0_87] : memref<3x3x32x32xf32, #tpu.memory_space<vmem>>, vector<1x1x32x32xf32>
      %71 = vector.shape_cast %70 : vector<1x1x32x32xf32> to vector<32x32xf32>
      %cst_88 = arith.constant dense<0.000000e+00> : vector<41x32xf32>
      %72 = tpu.matmul %69, %71, %cst_88 {dimension_numbers = #tpu.dot_dimension_numbers<[1], [0], [0], [1], [0, 0, 1, 1], [], []>} : vector<41x32xf32>, vector<32x32xf32>, vector<41x32xf32> -> vector<41x32xf32>
      %73 = arith.addf %65, %72 : vector<41x32xf32>
      %c2_i32_89 = arith.constant 2 : i32
      %74 = arith.addi %arg18, %c2_i32_89 : i32
      %75 = arith.index_cast %74 : i32 to index
      %c1_90 = arith.constant 1 : index
      %c0_91 = arith.constant 0 : index
      %76 = vector.load %arg16[%75, %c1_90, %c0_91] : memref<43x43x32xf32, #tpu.memory_space<vmem>>, vector<1x41x32xf32>
      %77 = vector.shape_cast %76 : vector<1x41x32xf32> to vector<41x32xf32>
      %c2_92 = arith.constant 2 : index
      %c1_93 = arith.constant 1 : index
      %c0_94 = arith.constant 0 : index
      %c0_95 = arith.constant 0 : index
      %78 = vector.load %arg6[%c2_92, %c1_93, %c0_94, %c0_95] : memref<3x3x32x32xf32, #tpu.memory_space<vmem>>, vector<1x1x32x32xf32>
      %79 = vector.shape_cast %78 : vector<1x1x32x32xf32> to vector<32x32xf32>
      %cst_96 = arith.constant dense<0.000000e+00> : vector<41x32xf32>
      %80 = tpu.matmul %77, %79, %cst_96 {dimension_numbers = #tpu.dot_dimension_numbers<[1], [0], [0], [1], [0, 0, 1, 1], [], []>} : vector<41x32xf32>, vector<32x32xf32>, vector<41x32xf32> -> vector<41x32xf32>
      %81 = arith.addf %73, %80 : vector<41x32xf32>
      %c2_i32_97 = arith.constant 2 : i32
      %82 = arith.addi %arg18, %c2_i32_97 : i32
      %83 = arith.index_cast %82 : i32 to index
      %c2_98 = arith.constant 2 : index
      %c0_99 = arith.constant 0 : index
      %84 = vector.load %arg16[%83, %c2_98, %c0_99] : memref<43x43x32xf32, #tpu.memory_space<vmem>>, vector<1x41x32xf32>
      %85 = vector.shape_cast %84 : vector<1x41x32xf32> to vector<41x32xf32>
      %c2_100 = arith.constant 2 : index
      %c2_101 = arith.constant 2 : index
      %c0_102 = arith.constant 0 : index
      %c0_103 = arith.constant 0 : index
      %86 = vector.load %arg6[%c2_100, %c2_101, %c0_102, %c0_103] : memref<3x3x32x32xf32, #tpu.memory_space<vmem>>, vector<1x1x32x32xf32>
      %87 = vector.shape_cast %86 : vector<1x1x32x32xf32> to vector<32x32xf32>
      %cst_104 = arith.constant dense<0.000000e+00> : vector<41x32xf32>
      %88 = tpu.matmul %85, %87, %cst_104 {dimension_numbers = #tpu.dot_dimension_numbers<[1], [0], [0], [1], [0, 0, 1, 1], [], []>} : vector<41x32xf32>, vector<32x32xf32>, vector<41x32xf32> -> vector<41x32xf32>
      %89 = arith.addf %81, %88 : vector<41x32xf32>
      %90 = vector.broadcast %13 : vector<1x32xf32> to vector<41x32xf32>
      %91 = arith.addf %89, %90 : vector<41x32xf32>
      %cst_105 = arith.constant 0.000000e+00 : f32
      %92 = vector.broadcast %cst_105 : f32 to vector<41x32xf32>
      %93 = arith.maximumf %91, %92 : vector<41x32xf32>
      %c1_i32_106 = arith.constant 1 : i32
      %94 = arith.addi %arg18, %c1_i32_106 : i32
      %95 = arith.index_cast %94 : i32 to index
      %c1_107 = arith.constant 1 : index
      %c0_108 = arith.constant 0 : index
      %96 = vector.load %arg17[%95, %c1_107, %c0_108] : memref<43x43x32xf32, #tpu.memory_space<vmem>>, vector<1x41x32xf32>
      %97 = vector.shape_cast %96 : vector<1x41x32xf32> to vector<41x32xf32>
      %98 = vector.shape_cast %93 : vector<41x32xf32> to vector<1x41x32xf32>
      tpu.vector_store %arg17[%95, %c1_107, %c0_108], %98 {strides = array<i32>} : memref<43x43x32xf32, #tpu.memory_space<vmem>>, vector<1x41x32xf32>,
    }
    %c41_i32_29 = arith.constant 41 : i32
    %c0_30 = arith.constant 0 : index
    %c0_31 = arith.constant 0 : index
    %15 = vector.load %arg9[%c0_30, %c0_31] : memref<1x3xf32, #tpu.memory_space<vmem>>, vector<1x3xf32>
    %c0_i32_32 = arith.constant 0 : i32
    %c42_i32 = arith.constant 42 : i32
    %16 = arith.addi %c0_i32_32, %c42_i32 : i32
    %c1_i32_33 = arith.constant 1 : i32
    scf.for %arg18 = %c0_i32_32 to %16 step %c1_i32_33  : i32 {
      %c0_i32_35 = arith.constant 0 : i32
      %17 = arith.addi %arg18, %c0_i32_35 : i32
      %18 = arith.index_cast %17 : i32 to index
      %c0_36 = arith.constant 0 : index
      %c0_37 = arith.constant 0 : index
      %19 = vector.load %arg17[%18, %c0_36, %c0_37] : memref<43x43x32xf32, #tpu.memory_space<vmem>>, vector<1x42x32xf32>
      %20 = vector.shape_cast %19 : vector<1x42x32xf32> to vector<42x32xf32>
      %c2 = arith.constant 2 : index
      %c2_38 = arith.constant 2 : index
      %c0_39 = arith.constant 0 : index
      %c0_40 = arith.constant 0 : index
      %21 = vector.load %arg8[%c2, %c2_38, %c0_39, %c0_40] : memref<3x3x32x3xf32, #tpu.memory_space<vmem>>, vector<1x1x32x3xf32>
      %22 = vector.shape_cast %21 : vector<1x1x32x3xf32> to vector<32x3xf32>
      %cst_41 = arith.constant dense<0.000000e+00> : vector<42x3xf32>
      %23 = tpu.matmul %20, %22, %cst_41 {dimension_numbers = #tpu.dot_dimension_numbers<[1], [0], [0], [1], [0, 0, 1, 1], [], []>} : vector<42x32xf32>, vector<32x3xf32>, vector<42x3xf32> -> vector<42x3xf32>
      %c0_i32_42 = arith.constant 0 : i32
      %24 = arith.addi %arg18, %c0_i32_42 : i32
      %25 = arith.index_cast %24 : i32 to index
      %c1 = arith.constant 1 : index
      %c0_43 = arith.constant 0 : index
      %26 = vector.load %arg17[%25, %c1, %c0_43] : memref<43x43x32xf32, #tpu.memory_space<vmem>>, vector<1x42x32xf32>
      %27 = vector.shape_cast %26 : vector<1x42x32xf32> to vector<42x32xf32>
      %c2_44 = arith.constant 2 : index
      %c0_45 = arith.constant 0 : index
      %c0_46 = arith.constant 0 : index
      %c0_47 = arith.constant 0 : index
      %28 = vector.load %arg8[%c2_44, %c0_45, %c0_46, %c0_47] : memref<3x3x32x3xf32, #tpu.memory_space<vmem>>, vector<1x1x32x3xf32>
      %29 = vector.shape_cast %28 : vector<1x1x32x3xf32> to vector<32x3xf32>
      %cst_48 = arith.constant dense<0.000000e+00> : vector<42x3xf32>
      %30 = tpu.matmul %27, %29, %cst_48 {dimension_numbers = #tpu.dot_dimension_numbers<[1], [0], [0], [1], [0, 0, 1, 1], [], []>} : vector<42x32xf32>, vector<32x3xf32>, vector<42x3xf32> -> vector<42x3xf32>
      %31 = arith.addf %23, %30 : vector<42x3xf32>
      %c1_i32_49 = arith.constant 1 : i32
      %32 = arith.addi %arg18, %c1_i32_49 : i32
      %33 = arith.index_cast %32 : i32 to index
      %c0_50 = arith.constant 0 : index
      %c0_51 = arith.constant 0 : index
      %34 = vector.load %arg17[%33, %c0_50, %c0_51] : memref<43x43x32xf32, #tpu.memory_space<vmem>>, vector<1x42x32xf32>
      %35 = vector.shape_cast %34 : vector<1x42x32xf32> to vector<42x32xf32>
      %c0_52 = arith.constant 0 : index
      %c2_53 = arith.constant 2 : index
      %c0_54 = arith.constant 0 : index
      %c0_55 = arith.constant 0 : index
      %36 = vector.load %arg8[%c0_52, %c2_53, %c0_54, %c0_55] : memref<3x3x32x3xf32, #tpu.memory_space<vmem>>, vector<1x1x32x3xf32>
      %37 = vector.shape_cast %36 : vector<1x1x32x3xf32> to vector<32x3xf32>
      %cst_56 = arith.constant dense<0.000000e+00> : vector<42x3xf32>
      %38 = tpu.matmul %35, %37, %cst_56 {dimension_numbers = #tpu.dot_dimension_numbers<[1], [0], [0], [1], [0, 0, 1, 1], [], []>} : vector<42x32xf32>, vector<32x3xf32>, vector<42x3xf32> -> vector<42x3xf32>
      %39 = arith.addf %31, %38 : vector<42x3xf32>
      %c1_i32_57 = arith.constant 1 : i32
      %40 = arith.addi %arg18, %c1_i32_57 : i32
      %41 = arith.index_cast %40 : i32 to index
      %c1_58 = arith.constant 1 : index
      %c0_59 = arith.constant 0 : index
      %42 = vector.load %arg17[%41, %c1_58, %c0_59] : memref<43x43x32xf32, #tpu.memory_space<vmem>>, vector<1x42x32xf32>
      %43 = vector.shape_cast %42 : vector<1x42x32xf32> to vector<42x32xf32>
      %c0_60 = arith.constant 0 : index
      %c0_61 = arith.constant 0 : index
      %c0_62 = arith.constant 0 : index
      %c0_63 = arith.constant 0 : index
      %44 = vector.load %arg8[%c0_60, %c0_61, %c0_62, %c0_63] : memref<3x3x32x3xf32, #tpu.memory_space<vmem>>, vector<1x1x32x3xf32>
      %45 = vector.shape_cast %44 : vector<1x1x32x3xf32> to vector<32x3xf32>
      %cst_64 = arith.constant dense<0.000000e+00> : vector<42x3xf32>
      %46 = tpu.matmul %43, %45, %cst_64 {dimension_numbers = #tpu.dot_dimension_numbers<[1], [0], [0], [1], [0, 0, 1, 1], [], []>} : vector<42x32xf32>, vector<32x3xf32>, vector<42x3xf32> -> vector<42x3xf32>
      %47 = arith.addf %39, %46 : vector<42x3xf32>
      %c0_i32_65 = arith.constant 0 : i32
      %48 = arith.addi %arg18, %c0_i32_65 : i32
      %49 = arith.index_cast %48 : i32 to index
      %c1_66 = arith.constant 1 : index
      %c0_67 = arith.constant 0 : index
      %50 = vector.load %arg17[%49, %c1_66, %c0_67] : memref<43x43x32xf32, #tpu.memory_space<vmem>>, vector<1x42x32xf32>
      %51 = vector.shape_cast %50 : vector<1x42x32xf32> to vector<42x32xf32>
      %c2_68 = arith.constant 2 : index
      %c1_69 = arith.constant 1 : index
      %c0_70 = arith.constant 0 : index
      %c0_71 = arith.constant 0 : index
      %52 = vector.load %arg8[%c2_68, %c1_69, %c0_70, %c0_71] : memref<3x3x32x3xf32, #tpu.memory_space<vmem>>, vector<1x1x32x3xf32>
      %53 = vector.shape_cast %52 : vector<1x1x32x3xf32> to vector<32x3xf32>
      %cst_72 = arith.constant dense<0.000000e+00> : vector<42x3xf32>
      %54 = tpu.matmul %51, %53, %cst_72 {dimension_numbers = #tpu.dot_dimension_numbers<[1], [0], [0], [1], [0, 0, 1, 1], [], []>} : vector<42x32xf32>, vector<32x3xf32>, vector<42x3xf32> -> vector<42x3xf32>
      %c1_i32_73 = arith.constant 1 : i32
      %55 = arith.addi %arg18, %c1_i32_73 : i32
      %56 = arith.index_cast %55 : i32 to index
      %c1_74 = arith.constant 1 : index
      %c0_75 = arith.constant 0 : index
      %57 = vector.load %arg17[%56, %c1_74, %c0_75] : memref<43x43x32xf32, #tpu.memory_space<vmem>>, vector<1x42x32xf32>
      %58 = vector.shape_cast %57 : vector<1x42x32xf32> to vector<42x32xf32>
      %c0_76 = arith.constant 0 : index
      %c1_77 = arith.constant 1 : index
      %c0_78 = arith.constant 0 : index
      %c0_79 = arith.constant 0 : index
      %59 = vector.load %arg8[%c0_76, %c1_77, %c0_78, %c0_79] : memref<3x3x32x3xf32, #tpu.memory_space<vmem>>, vector<1x1x32x3xf32>
      %60 = vector.shape_cast %59 : vector<1x1x32x3xf32> to vector<32x3xf32>
      %cst_80 = arith.constant dense<0.000000e+00> : vector<42x3xf32>
      %61 = tpu.matmul %58, %60, %cst_80 {dimension_numbers = #tpu.dot_dimension_numbers<[1], [0], [0], [1], [0, 0, 1, 1], [], []>} : vector<42x32xf32>, vector<32x3xf32>, vector<42x3xf32> -> vector<42x3xf32>
      %62 = arith.addf %54, %61 : vector<42x3xf32>
      %c1_i32_81 = arith.constant 1 : i32
      %63 = arith.addi %arg18, %c1_i32_81 : i32
      %64 = arith.index_cast %63 : i32 to index
      %c0_82 = arith.constant 0 : index
      %c0_83 = arith.constant 0 : index
      %65 = vector.load %arg17[%64, %c0_82, %c0_83] : memref<43x43x32xf32, #tpu.memory_space<vmem>>, vector<1x42x32xf32>
      %66 = vector.shape_cast %65 : vector<1x42x32xf32> to vector<42x32xf32>
      %c1_84 = arith.constant 1 : index
      %c2_85 = arith.constant 2 : index
      %c0_86 = arith.constant 0 : index
      %c0_87 = arith.constant 0 : index
      %67 = vector.load %arg8[%c1_84, %c2_85, %c0_86, %c0_87] : memref<3x3x32x3xf32, #tpu.memory_space<vmem>>, vector<1x1x32x3xf32>
      %68 = vector.shape_cast %67 : vector<1x1x32x3xf32> to vector<32x3xf32>
      %cst_88 = arith.constant dense<0.000000e+00> : vector<42x3xf32>
      %69 = tpu.matmul %66, %68, %cst_88 {dimension_numbers = #tpu.dot_dimension_numbers<[1], [0], [0], [1], [0, 0, 1, 1], [], []>} : vector<42x32xf32>, vector<32x3xf32>, vector<42x3xf32> -> vector<42x3xf32>
      %c1_i32_89 = arith.constant 1 : i32
      %70 = arith.addi %arg18, %c1_i32_89 : i32
      %71 = arith.index_cast %70 : i32 to index
      %c1_90 = arith.constant 1 : index
      %c0_91 = arith.constant 0 : index
      %72 = vector.load %arg17[%71, %c1_90, %c0_91] : memref<43x43x32xf32, #tpu.memory_space<vmem>>, vector<1x42x32xf32>
      %73 = vector.shape_cast %72 : vector<1x42x32xf32> to vector<42x32xf32>
      %c1_92 = arith.constant 1 : index
      %c0_93 = arith.constant 0 : index
      %c0_94 = arith.constant 0 : index
      %c0_95 = arith.constant 0 : index
      %74 = vector.load %arg8[%c1_92, %c0_93, %c0_94, %c0_95] : memref<3x3x32x3xf32, #tpu.memory_space<vmem>>, vector<1x1x32x3xf32>
      %75 = vector.shape_cast %74 : vector<1x1x32x3xf32> to vector<32x3xf32>
      %cst_96 = arith.constant dense<0.000000e+00> : vector<42x3xf32>
      %76 = tpu.matmul %73, %75, %cst_96 {dimension_numbers = #tpu.dot_dimension_numbers<[1], [0], [0], [1], [0, 0, 1, 1], [], []>} : vector<42x32xf32>, vector<32x3xf32>, vector<42x3xf32> -> vector<42x3xf32>
      %77 = arith.addf %69, %76 : vector<42x3xf32>
      %c1_i32_97 = arith.constant 1 : i32
      %78 = arith.addi %arg18, %c1_i32_97 : i32
      %79 = arith.index_cast %78 : i32 to index
      %c1_98 = arith.constant 1 : index
      %c0_99 = arith.constant 0 : index
      %80 = vector.load %arg17[%79, %c1_98, %c0_99] : memref<43x43x32xf32, #tpu.memory_space<vmem>>, vector<1x42x32xf32>
      %81 = vector.shape_cast %80 : vector<1x42x32xf32> to vector<42x32xf32>
      %c1_100 = arith.constant 1 : index
      %c1_101 = arith.constant 1 : index
      %c0_102 = arith.constant 0 : index
      %c0_103 = arith.constant 0 : index
      %82 = vector.load %arg8[%c1_100, %c1_101, %c0_102, %c0_103] : memref<3x3x32x3xf32, #tpu.memory_space<vmem>>, vector<1x1x32x3xf32>
      %83 = vector.shape_cast %82 : vector<1x1x32x3xf32> to vector<32x3xf32>
      %cst_104 = arith.constant dense<0.000000e+00> : vector<42x3xf32>
      %84 = tpu.matmul %81, %83, %cst_104 {dimension_numbers = #tpu.dot_dimension_numbers<[1], [0], [0], [1], [0, 0, 1, 1], [], []>} : vector<42x32xf32>, vector<32x3xf32>, vector<42x3xf32> -> vector<42x3xf32>
      %85 = vector.broadcast %15 : vector<1x3xf32> to vector<42x3xf32>
      %86 = arith.addf %47, %85 : vector<42x3xf32>
      %cst_105 = arith.constant 0.000000e+00 : f32
      %87 = vector.broadcast %cst_105 : f32 to vector<42x3xf32>
      %88 = arith.subf %87, %86 : vector<42x3xf32>
      %89 = math.exp %88 : vector<42x3xf32>
      %cst_106 = arith.constant 1.000000e+00 : f32
      %90 = vector.broadcast %cst_106 : f32 to vector<42x3xf32>
      %91 = arith.addf %90, %89 : vector<42x3xf32>
      %cst_107 = arith.constant 1.000000e+00 : f32
      %92 = vector.broadcast %cst_107 : f32 to vector<42x3xf32>
      %93 = arith.divf %92, %91 : vector<42x3xf32>
      %c0_108 = arith.constant 0 : index
      %94 = arith.index_cast %arg18 : i32 to index
      %c0_109 = arith.constant 0 : index
      %c0_110 = arith.constant 0 : index
      %95 = vector.load %arg10[%c0_108, %94, %c0_109, %c0_110] : memref<1x42x42x3xf32, #tpu.memory_space<vmem>>, vector<1x1x42x3xf32>
      %96 = vector.shape_cast %95 : vector<1x1x42x3xf32> to vector<42x3xf32>
      %97 = vector.shape_cast %93 : vector<42x3xf32> to vector<1x1x42x3xf32>
      tpu.vector_store %arg10[%c0_108, %94, %c0_109, %c0_110], %97 {strides = array<i32>} : memref<1x42x42x3xf32, #tpu.memory_space<vmem>>, vector<1x1x42x3xf32>,
      %98 = vector.broadcast %15 : vector<1x3xf32> to vector<42x3xf32>
      %99 = arith.addf %62, %98 : vector<42x3xf32>
      %cst_111 = arith.constant 0.000000e+00 : f32
      %100 = vector.broadcast %cst_111 : f32 to vector<42x3xf32>
      %101 = arith.subf %100, %99 : vector<42x3xf32>
      %102 = math.exp %101 : vector<42x3xf32>
      %cst_112 = arith.constant 1.000000e+00 : f32
      %103 = vector.broadcast %cst_112 : f32 to vector<42x3xf32>
      %104 = arith.addf %103, %102 : vector<42x3xf32>
      %cst_113 = arith.constant 1.000000e+00 : f32
      %105 = vector.broadcast %cst_113 : f32 to vector<42x3xf32>
      %106 = arith.divf %105, %104 : vector<42x3xf32>
      %c0_114 = arith.constant 0 : index
      %107 = arith.index_cast %arg18 : i32 to index
      %c0_115 = arith.constant 0 : index
      %c0_116 = arith.constant 0 : index
      %108 = vector.load %arg11[%c0_114, %107, %c0_115, %c0_116] : memref<1x42x42x3xf32, #tpu.memory_space<vmem>>, vector<1x1x42x3xf32>
      %109 = vector.shape_cast %108 : vector<1x1x42x3xf32> to vector<42x3xf32>
      %110 = vector.shape_cast %106 : vector<42x3xf32> to vector<1x1x42x3xf32>
      tpu.vector_store %arg11[%c0_114, %107, %c0_115, %c0_116], %110 {strides = array<i32>} : memref<1x42x42x3xf32, #tpu.memory_space<vmem>>, vector<1x1x42x3xf32>,
      %111 = vector.broadcast %15 : vector<1x3xf32> to vector<42x3xf32>
      %112 = arith.addf %77, %111 : vector<42x3xf32>
      %cst_117 = arith.constant 0.000000e+00 : f32
      %113 = vector.broadcast %cst_117 : f32 to vector<42x3xf32>
      %114 = arith.subf %113, %112 : vector<42x3xf32>
      %115 = math.exp %114 : vector<42x3xf32>
      %cst_118 = arith.constant 1.000000e+00 : f32
      %116 = vector.broadcast %cst_118 : f32 to vector<42x3xf32>
      %117 = arith.addf %116, %115 : vector<42x3xf32>
      %cst_119 = arith.constant 1.000000e+00 : f32
      %118 = vector.broadcast %cst_119 : f32 to vector<42x3xf32>
      %119 = arith.divf %118, %117 : vector<42x3xf32>
      %c0_120 = arith.constant 0 : index
      %120 = arith.index_cast %arg18 : i32 to index
      %c0_121 = arith.constant 0 : index
      %c0_122 = arith.constant 0 : index
      %121 = vector.load %arg12[%c0_120, %120, %c0_121, %c0_122] : memref<1x42x42x3xf32, #tpu.memory_space<vmem>>, vector<1x1x42x3xf32>
      %122 = vector.shape_cast %121 : vector<1x1x42x3xf32> to vector<42x3xf32>
      %123 = vector.shape_cast %119 : vector<42x3xf32> to vector<1x1x42x3xf32>
      tpu.vector_store %arg12[%c0_120, %120, %c0_121, %c0_122], %123 {strides = array<i32>} : memref<1x42x42x3xf32, #tpu.memory_space<vmem>>, vector<1x1x42x3xf32>,
      %124 = vector.broadcast %15 : vector<1x3xf32> to vector<42x3xf32>
      %125 = arith.addf %84, %124 : vector<42x3xf32>
      %cst_123 = arith.constant 0.000000e+00 : f32
      %126 = vector.broadcast %cst_123 : f32 to vector<42x3xf32>
      %127 = arith.subf %126, %125 : vector<42x3xf32>
      %128 = math.exp %127 : vector<42x3xf32>
      %cst_124 = arith.constant 1.000000e+00 : f32
      %129 = vector.broadcast %cst_124 : f32 to vector<42x3xf32>
      %130 = arith.addf %129, %128 : vector<42x3xf32>
      %cst_125 = arith.constant 1.000000e+00 : f32
      %131 = vector.broadcast %cst_125 : f32 to vector<42x3xf32>
      %132 = arith.divf %131, %130 : vector<42x3xf32>
      %c0_126 = arith.constant 0 : index
      %133 = arith.index_cast %arg18 : i32 to index
      %c0_127 = arith.constant 0 : index
      %c0_128 = arith.constant 0 : index
      %134 = vector.load %arg13[%c0_126, %133, %c0_127, %c0_128] : memref<1x42x42x3xf32, #tpu.memory_space<vmem>>, vector<1x1x42x3xf32>
      %135 = vector.shape_cast %134 : vector<1x1x42x3xf32> to vector<42x3xf32>
      %136 = vector.shape_cast %132 : vector<42x3xf32> to vector<1x1x42x3xf32>
      tpu.vector_store %arg13[%c0_126, %133, %c0_127, %c0_128], %136 {strides = array<i32>} : memref<1x42x42x3xf32, #tpu.memory_space<vmem>>, vector<1x1x42x3xf32>,
    }
    %c42_i32_34 = arith.constant 42 : i32
    return
  }
  func.func @transform_0(%arg0: i32) -> (i32, i32, i32, i32) {
    %c0_i32 = arith.constant 0 : i32
    %c0_i32_0 = arith.constant 0 : i32
    %c0_i32_1 = arith.constant 0 : i32
    %c0_i32_2 = arith.constant 0 : i32
    return %arg0, %c0_i32, %c0_i32_0, %c0_i32_1 : i32, i32, i32, i32
  }
  func.func @transform_1(%arg0: i32) -> (i32, i32, i32, i32) {
    %c0_i32 = arith.constant 0 : i32
    %c0_i32_0 = arith.constant 0 : i32
    %c0_i32_1 = arith.constant 0 : i32
    %c0_i32_2 = arith.constant 0 : i32
    %c0_i32_3 = arith.constant 0 : i32
    return %c0_i32, %c0_i32_0, %c0_i32_1, %c0_i32_2 : i32, i32, i32, i32
  }
  func.func @transform_2(%arg0: i32) -> (i32, i32) {
    %c0_i32 = arith.constant 0 : i32
    %c0_i32_0 = arith.constant 0 : i32
    %c0_i32_1 = arith.constant 0 : i32
    return %c0_i32, %c0_i32_0 : i32, i32
  }
  func.func @transform_3(%arg0: i32) -> (i32, i32, i32, i32) {
    %c0_i32 = arith.constant 0 : i32
    %c0_i32_0 = arith.constant 0 : i32
    %c0_i32_1 = arith.constant 0 : i32
    %c0_i32_2 = arith.constant 0 : i32
    %c0_i32_3 = arith.constant 0 : i32
    return %c0_i32, %c0_i32_0, %c0_i32_1, %c0_i32_2 : i32, i32, i32, i32
  }
  func.func @transform_4(%arg0: i32) -> (i32, i32) {
    %c0_i32 = arith.constant 0 : i32
    %c0_i32_0 = arith.constant 0 : i32
    %c0_i32_1 = arith.constant 0 : i32
    return %c0_i32, %c0_i32_0 : i32, i32
  }
  func.func @transform_5(%arg0: i32) -> (i32, i32, i32, i32) {
    %c0_i32 = arith.constant 0 : i32
    %c0_i32_0 = arith.constant 0 : i32
    %c0_i32_1 = arith.constant 0 : i32
    %c0_i32_2 = arith.constant 0 : i32
    %c0_i32_3 = arith.constant 0 : i32
    return %c0_i32, %c0_i32_0, %c0_i32_1, %c0_i32_2 : i32, i32, i32, i32
  }
  func.func @transform_6(%arg0: i32) -> (i32, i32) {
    %c0_i32 = arith.constant 0 : i32
    %c0_i32_0 = arith.constant 0 : i32
    %c0_i32_1 = arith.constant 0 : i32
    return %c0_i32, %c0_i32_0 : i32, i32
  }
  func.func @transform_7(%arg0: i32) -> (i32, i32, i32, i32) {
    %c0_i32 = arith.constant 0 : i32
    %c0_i32_0 = arith.constant 0 : i32
    %c0_i32_1 = arith.constant 0 : i32
    %c0_i32_2 = arith.constant 0 : i32
    %c0_i32_3 = arith.constant 0 : i32
    return %c0_i32, %c0_i32_0, %c0_i32_1, %c0_i32_2 : i32, i32, i32, i32
  }
  func.func @transform_8(%arg0: i32) -> (i32, i32) {
    %c0_i32 = arith.constant 0 : i32
    %c0_i32_0 = arith.constant 0 : i32
    %c0_i32_1 = arith.constant 0 : i32
    return %c0_i32, %c0_i32_0 : i32, i32
  }
  func.func @transform_9(%arg0: i32) -> (i32, i32, i32, i32) {
    %c0_i32 = arith.constant 0 : i32
    %c0_i32_0 = arith.constant 0 : i32
    %c0_i32_1 = arith.constant 0 : i32
    %c0_i32_2 = arith.constant 0 : i32
    return %arg0, %c0_i32, %c0_i32_0, %c0_i32_1 : i32, i32, i32, i32
  }
  func.func @transform_10(%arg0: i32) -> (i32, i32, i32, i32) {
    %c0_i32 = arith.constant 0 : i32
    %c0_i32_0 = arith.constant 0 : i32
    %c0_i32_1 = arith.constant 0 : i32
    %c0_i32_2 = arith.constant 0 : i32
    return %arg0, %c0_i32, %c0_i32_0, %c0_i32_1 : i32, i32, i32, i32
  }
  func.func @transform_11(%arg0: i32) -> (i32, i32, i32, i32) {
    %c0_i32 = arith.constant 0 : i32
    %c0_i32_0 = arith.constant 0 : i32
    %c0_i32_1 = arith.constant 0 : i32
    %c0_i32_2 = arith.constant 0 : i32
    return %arg0, %c0_i32, %c0_i32_0, %c0_i32_1 : i32, i32, i32, i32
  }
  func.func @transform_12(%arg0: i32) -> (i32, i32, i32, i32) {
    %c0_i32 = arith.constant 0 : i32
    %c0_i32_0 = arith.constant 0 : i32
    %c0_i32_1 = arith.constant 0 : i32
    %c0_i32_2 = arith.constant 0 : i32
    return %arg0, %c0_i32, %c0_i32_0, %c0_i32_1 : i32, i32, i32, i32
  }
}

</mosaic_0001>

<llo_original>
// kernel: decoder_forward.2
$region0: #{decoder_forward.2}
  #allocation0 [shape = 'u32[]', space=smem, size = 0x4, offset = 0x4, fixed_abs, tag = 'smem constant byte address 0x4 - core index']
  #allocation1 [shape = 'u32[144,128]{1,0:T(1,128)}', space=vmem, size = 0x12000, scoped, tag = 'internal scratch']
  %s0 = inlined_call_operand.hbm [shape: f32[2,50], index: 0, kind: input, shape index: {}]
  %s1 = inlined_call_operand.hbm [shape: f32[50,39936], index: 1, kind: input, shape index: {}]
  %s2 = inlined_call_operand.hbm [shape: f32[1,39936], index: 2, kind: input, shape index: {}]
  %s3 = inlined_call_operand.vmem [shape: f32[2,39936], index: 3, kind: output, shape index: {}]
  %s4 = sld [smem:[#allocation0]]
  $region57: #{decoder_forward.2} parent=0
    _
  %s6 = ssub.s32 1, %s4
  %s7 = scalar_select 0, %s6, %s4
  $region1: #{decoder_forward.2} parent=0
    #allocation2 [shape = 'u8[1024]{0}', space=vmem, size = 0x400, scoped, tag = 'input window, operand 0, single buffered']
    #allocation3 [shape = 's32[2]{0}', space=sflag, size = 0x8, scoped, tag = 'scoped memory for decoder_forward.2']
    #allocation4 [shape = 'u8[2236416]{0}', space=vmem, size = 0x222000, scoped, tag = 'input window, operand 1']
    #allocation5 [shape = 's32[2]{0}', space=sflag, size = 0x8, scoped, tag = 'scoped memory for decoder_forward.2']
    #allocation6 [shape = 'u8[39936]{0}', space=vmem, size = 0x9c00, scoped, tag = 'input window, operand 2']
    %8 = vsyncpa [#allocation3], 0
    %9 = vsyncpa [#allocation5], 0
    %s10 = scalar_lea.sflag [#allocation5], 1
    %11 = vsyncpa %s10, 0
    loop: start=0, step=1, limit=10
    $region2: #{decoder_forward.2} parent=1 // loop_pre_header
      _
    $region3: #{decoder_forward.2} parent=1 // loop_header
      %s13 = sphi 0, %s17
      %p14 = scmp.ge.s32.totalorder %s13, 10
      %s21 = sphi 0, %s21
      %s23 = sphi 0, %s21
      %s24 = sphi 0, %s23
      %s38 = sphi 0, %s24
      %s44 = sphi 0, %s46
      %s47 = sphi 0, %s44
      %s48 = sphi 0, %s47
      %s64 = sphi 0, %s48
      %s70 = sphi 0, %s72
      %s73 = sphi 0, %s70
      %s74 = sphi 0, %s73
      %s90 = sphi 0, %s74
      %s96 = sphi 0, %s98
      %s99 = sphi 0, %s96
      %s100 = sphi 0, %s99
      %s116 = sphi 0, %s100
    $region4: #{decoder_forward.2} parent=1 // loop_header_branch
      %16 = sbr.rel (%p14) target = $region8
    $region5: #{decoder_forward.2} parent=1 // loop_body
      %s18 = ssub.s32 %s13, 1
      %s19 = ssub.s32 %s13, 2
      %s20 = sadd.s32 %s13, 1
      %s22 = sadd.s32 %s21, 1
      %p25 = scmp.eq.s32.totalorder %s13, 7
      %p26 = scmp.ne.s32.totalorder %s21, %s23
      %p27 = scmp.eq.s32.totalorder %s13, 0
      %p28 = por %p26, %p27
      %p29 = scmp.ne.s32.totalorder %s21, %s23
      %p30 = scmp.eq.s32.totalorder %s18, 7
      %p31 = por %p29, %p30
      %p32 = scmp.ne.s32.totalorder %s23, %s24
      %p33 = scmp.eq.s32.totalorder %s18, 0
      %p34 = por %p32, %p33
      %p35 = scmp.ne.s32.totalorder %s23, %s24
      %p36 = scmp.eq.s32.totalorder %s19, 7
      %p37 = por %p35, %p36
      %p39 = scmp.ne.s32.totalorder %s24, %s38
      %p40 = scmp.eq.s32.totalorder %s19, 0
      %p41 = por %p39, %p40
      %s42 = ssub.s32 %s13, %s20
      %p43 = scmp.eq.s32.totalorder %s42, 0
      %s45 = sadd.s32 %s44, 1
      %s46 = scalar_select %p43, %s44, %s45
      %p49 = pneg %p43
      %p50 = scmp.eq.s32.totalorder %s13, 7
      %p51 = por %p49, %p50
      %p52 = scmp.ne.s32.totalorder %s44, %s47
      %p53 = scmp.eq.s32.totalorder %s13, 0
      %p54 = por %p52, %p53
      %p55 = scmp.ne.s32.totalorder %s44, %s47
      %p56 = scmp.eq.s32.totalorder %s18, 7
      %p57 = por %p55, %p56
      %p58 = scmp.ne.s32.totalorder %s47, %s48
      %p59 = scmp.eq.s32.totalorder %s18, 0
      %p60 = por %p58, %p59
      %p61 = scmp.ne.s32.totalorder %s47, %s48
      %p62 = scmp.eq.s32.totalorder %s19, 7
      %p63 = por %p61, %p62
      %p65 = scmp.ne.s32.totalorder %s48, %s64
      %p66 = scmp.eq.s32.totalorder %s19, 0
      %p67 = por %p65, %p66
      %s68 = ssub.s32 %s13, %s20
      %p69 = scmp.eq.s32.totalorder %s68, 0
      %s71 = sadd.s32 %s70, 1
      %s72 = scalar_select %p69, %s70, %s71
      %p75 = pneg %p69
      %p76 = scmp.eq.s32.totalorder %s13, 7
      %p77 = por %p75, %p76
      %p78 = scmp.ne.s32.totalorder %s70, %s73
      %p79 = scmp.eq.s32.totalorder %s13, 0
      %p80 = por %p78, %p79
      %p81 = scmp.ne.s32.totalorder %s70, %s73
      %p82 = scmp.eq.s32.totalorder %s18, 7
      %p83 = por %p81, %p82
      %p84 = scmp.ne.s32.totalorder %s73, %s74
      %p85 = scmp.eq.s32.totalorder %s18, 0
      %p86 = por %p84, %p85
      %p87 = scmp.ne.s32.totalorder %s73, %s74
      %p88 = scmp.eq.s32.totalorder %s19, 7
      %p89 = por %p87, %p88
      %p91 = scmp.ne.s32.totalorder %s74, %s90
      %p92 = scmp.eq.s32.totalorder %s19, 0
      %p93 = por %p91, %p92
      %s94 = ssub.s32 %s13, %s20
      %p95 = scmp.eq.s32.totalorder %s94, 0
      %s97 = sadd.s32 %s96, 1
      %s98 = scalar_select %p95, %s96, %s97
      %p101 = pneg %p95
      %p102 = scmp.eq.s32.totalorder %s13, 7
      %p103 = por %p101, %p102
      %p104 = scmp.ne.s32.totalorder %s96, %s99
      %p105 = scmp.eq.s32.totalorder %s13, 0
      %p106 = por %p104, %p105
      %p107 = scmp.ne.s32.totalorder %s96, %s99
      %p108 = scmp.eq.s32.totalorder %s18, 7
      %p109 = por %p107, %p108
      %p110 = scmp.ne.s32.totalorder %s99, %s100
      %p111 = scmp.eq.s32.totalorder %s18, 0
      %p112 = por %p110, %p111
      %p113 = scmp.ne.s32.totalorder %s99, %s100
      %p114 = scmp.eq.s32.totalorder %s19, 7
      %p115 = por %p113, %p114
      %p117 = scmp.ne.s32.totalorder %s100, %s116
      %p118 = scmp.eq.s32.totalorder %s19, 0
      %p119 = por %p117, %p118
      %p120 = scmp.le.s32.totalorder 1, %s13
      %p121 = scmp.lt.s32.totalorder %s13, 9
      %p122 = pnand %p120, %p121
      %p123 = pneg %p122
      // Predicated region
      $region9: #{decoder_forward.2} parent=5 // pred_check
        _
      $region10: #{decoder_forward.2} parent=5 // pred_check_branch
        %125 = sbr.rel (%p122) target = $region12
      $region11: #{decoder_forward.2} parent=5 // pred_region
        %s126 = ssub.s32 %s13, 1
        // Predicated region
        $region13: #{decoder_forward.2} parent=11 // pred_check
          %p127 = pneg %p34
        $region14: #{decoder_forward.2} parent=11 // pred_check_branch
          %129 = sbr.rel (%p127) target = $region16
        $region15: #{decoder_forward.2} parent=11 // pred_region
          %s131 = ssub.s32 32, 32
          %132 = vsyncadd [#allocation3], %s131
          %s134 = sshll.u32 [#allocation2], 4
          %s135 = int_to_ptr.vmem [resolvable:$true] %s134
          %137 = dma.hbm_to_vmem [thread:$0]  %s0, 32, %s135, [#allocation3]
        $region16: #{decoder_forward.2} parent=11 // pred_fallthru
          _
      $region12: #{decoder_forward.2} parent=5 // pred_fallthru
        _
      %p138 = scmp.lt.s32.totalorder %s13, 8
      // Predicated region
      $region17: #{decoder_forward.2} parent=5 // pred_check
        %p139 = pneg %p138
      $region18: #{decoder_forward.2} parent=5 // pred_check_branch
        %141 = sbr.rel (%p139) target = $region20
      $region19: #{decoder_forward.2} parent=5 // pred_region
        // Predicated region
        $region21: #{decoder_forward.2} parent=19 // pred_check
          %p142 = pneg %p54
        $region22: #{decoder_forward.2} parent=19 // pred_check_branch
          %144 = sbr.rel (%p142) target = $region24
        $region23: #{decoder_forward.2} parent=19 // pred_region
          %s145 = sand.u32 %s13, 1
          %s146 = scalar_lea.sflag [#allocation5], %s145
          %s147 = sand.u32 %s44, 1
          %s148 = smul.addr %s147, 2184
          %s149 = scalar_lea.vmem [#allocation4], %s148
          %s150 = smul.u32 39, %s13
          %s152 = ssub.s32 34944, 34944
          %153 = vsyncadd %s146, %s152
          %s154 = smul.addr %s150, 128
          %s155 = scalar_lea.hbm %s1, %s154
          %s156 = sshll.u32 %s149, 4
          %s157 = int_to_ptr.vmem [resolvable:$true] %s156
          %162 = dma.hbm_to_vmem [thread:$0]  %s155, 34944, %s157, %s146, 39936, 4992, 312
        $region24: #{decoder_forward.2} parent=19 // pred_fallthru
          _
        // Predicated region
        $region25: #{decoder_forward.2} parent=19 // pred_check
          %p163 = pneg %p80
        $region26: #{decoder_forward.2} parent=19 // pred_check_branch
          %165 = sbr.rel (%p163) target = $region28
        $region27: #{decoder_forward.2} parent=19 // pred_region
          %s166 = sand.u32 %s13, 1
          %s167 = scalar_lea.sflag [#allocation5], %s166
          %s168 = sand.u32 %s70, 1
          %s169 = smul.addr %s168, 39
          %s170 = scalar_lea.vmem [#allocation6], %s169
          %s171 = smul.u32 39, %s13
          %s173 = ssub.s32 624, 624
          %174 = vsyncadd %s167, %s173
          %s175 = smul.addr %s171, 16
          %s176 = scalar_lea.hbm %s2, %s175
          %s178 = sshll.u32 %s170, 4
          %s179 = int_to_ptr.vmem [resolvable:$true] %s178
          %181 = dma.hbm_to_vmem [thread:$0]  %s176, 624, %s179, %s167
        $region28: #{decoder_forward.2} parent=19 // pred_fallthru
          _
      $region20: #{decoder_forward.2} parent=5 // pred_fallthru
        _
      %p182 = scmp.le.s32.totalorder 1, %s13
      %p183 = scmp.lt.s32.totalorder %s13, 9
      %p184 = pnand %p182, %p183
      %p185 = pneg %p184
      // Predicated region
      $region29: #{decoder_forward.2} parent=5 // pred_check
        _
      $region30: #{decoder_forward.2} parent=5 // pred_check_branch
        %187 = sbr.rel (%p184) target = $region32
      $region31: #{decoder_forward.2} parent=5 // pred_region
        %s188 = ssub.s32 %s13, 1
        // Predicated region
        $region33: #{decoder_forward.2} parent=31 // pred_check
          %p189 = pneg %p34
        $region34: #{decoder_forward.2} parent=31 // pred_check_branch
          %191 = sbr.rel (%p189) target = $region36
        $region35: #{decoder_forward.2} parent=31 // pred_region
          %192 = dma.done [#allocation3], 32
        $region36: #{decoder_forward.2} parent=31 // pred_fallthru
          _
        %s193 = sand.u32 %s18, 1
        %s194 = scalar_lea.sflag [#allocation5], %s193
        %s195 = sand.u32 %s47, 1
        %s196 = smul.addr %s195, 2184
        %s197 = scalar_lea.vmem [#allocation4], %s196
        // Predicated region
        $region37: #{decoder_forward.2} parent=31 // pred_check
          %p198 = pneg %p60
        $region38: #{decoder_forward.2} parent=31 // pred_check_branch
          %200 = sbr.rel (%p198) target = $region40
        $region39: #{decoder_forward.2} parent=31 // pred_region
          %201 = dma.done %s194, 34944
        $region40: #{decoder_forward.2} parent=31 // pred_fallthru
          _
        %s202 = sand.u32 %s18, 1
        %s203 = scalar_lea.sflag [#allocation5], %s202
        %s204 = sand.u32 %s73, 1
        %s205 = smul.addr %s204, 39
        %s206 = scalar_lea.vmem [#allocation6], %s205
        // Predicated region
        $region41: #{decoder_forward.2} parent=31 // pred_check
          %p207 = pneg %p86
        $region42: #{decoder_forward.2} parent=31 // pred_check_branch
          %209 = sbr.rel (%p207) target = $region44
        $region43: #{decoder_forward.2} parent=31 // pred_region
          %210 = dma.done %s203, 624
        $region44: #{decoder_forward.2} parent=31 // pred_fallthru
          _
        %p211 = pneg %p34
        %p212 = pneg %p31
        %s213 = sand.u32 %s18, 1
        %s214 = scalar_lea.sflag [#allocation5], %s213
        %s215 = sand.u32 %s47, 1
        %s216 = smul.addr %s215, 2184
        %s217 = scalar_lea.vmem [#allocation4], %s216
        %p218 = pneg %p60
        %p219 = pneg %p57
        %s220 = sand.u32 %s18, 1
        %s221 = scalar_lea.sflag [#allocation5], %s220
        %s222 = sand.u32 %s73, 1
        %s223 = smul.addr %s222, 39
        %s224 = scalar_lea.vmem [#allocation6], %s223
        %p225 = pneg %p86
        %p226 = pneg %p83
        %p227 = pneg %p112
        %p228 = pneg %p109
        %s229 = smul.u32 39, %s18
        %p230 = scmp.lt.s32.totalorder %s229, 311
        %s231 = scalar_select %p230, %s229, 311
        %s232 = smul.addr %s231, 2
        %s233 = scalar_lea.vmem %s3, %s232
        %s234 = smul.u32 39, %s18
        %s235 = smul.u32 39, %s18
        %s236 = smul.u32 39, %s18
        %p237 = scmp.lt.s32.totalorder %s236, 311
        %s238 = scalar_select %p237, %s236, 311
        %s239 = smul.addr %s238, 2
        %s240 = scalar_lea.vmem %s3, %s239
        %s241 = smul.u32 39, %s18
        %v242 = vld [vmem:[#allocation2] sm:$0x3]
        %v243 = vld [vmem:[%s197] sm:$0xff]
        %v244 = vld [vmem:[%s197 + $0x8] sm:$0xff]
        %v245 = vld [vmem:[%s197 + $0x10] sm:$0xff]
        %v246 = vld [vmem:[%s197 + $0x18] sm:$0xff]
        %v247 = vld [vmem:[%s197 + $0x20] sm:$0xff]
        %v248 = vld [vmem:[%s197 + $0x28] sm:$0xff]
        %v249 = vld [vmem:[%s197 + $0x30] sm:$0xff]
        %v250 = vld [vmem:[%s197 + $0x38] sm:$0xff]
        %v251 = vld [vmem:[%s197 + $0x40] sm:$0xff]
        %v252 = vld [vmem:[%s197 + $0x48] sm:$0xff]
        %v253 = vld [vmem:[%s197 + $0x50] sm:$0xff]
        %v254 = vld [vmem:[%s197 + $0x58] sm:$0xff]
        %v255 = vld [vmem:[%s197 + $0x60] sm:$0xff]
        %v256 = vld [vmem:[%s197 + $0x68] sm:$0xff]
        %v257 = vld [vmem:[%s197 + $0x70] sm:$0xff]
        %v258 = vld [vmem:[%s197 + $0x78] sm:$0xff]
        %v259 = vld [vmem:[%s197 + $0x80] sm:$0xff]
        %v260 = vld [vmem:[%s197 + $0x88] sm:$0xff]
        %v261 = vld [vmem:[%s197 + $0x90] sm:$0xff]
        %v262 = vld [vmem:[%s197 + $0x98] sm:$0xff]
        %v263 = vld [vmem:[%s197 + $0xa0] sm:$0xff]
        %v264 = vld [vmem:[%s197 + $0xa8] sm:$0xff]
        %v265 = vld [vmem:[%s197 + $0xb0] sm:$0xff]
        %v266 = vld [vmem:[%s197 + $0xb8] sm:$0xff]
        %v267 = vld [vmem:[%s197 + $0xc0] sm:$0xff]
        %v268 = vld [vmem:[%s197 + $0xc8] sm:$0xff]
        %v269 = vld [vmem:[%s197 + $0xd0] sm:$0xff]
        %v270 = vld [vmem:[%s197 + $0xd8] sm:$0xff]
        %v271 = vld [vmem:[%s197 + $0xe0] sm:$0xff]
        %v272 = vld [vmem:[%s197 + $0xe8] sm:$0xff]
        %v273 = vld [vmem:[%s197 + $0xf0] sm:$0xff]
        %v274 = vld [vmem:[%s197 + $0xf8] sm:$0xff]
        %v275 = vld [vmem:[%s197 + $0x100] sm:$0xff]
        %v276 = vld [vmem:[%s197 + $0x108] sm:$0xff]
        %v277 = vld [vmem:[%s197 + $0x110] sm:$0xff]
        %v278 = vld [vmem:[%s197 + $0x118] sm:$0xff]
        %v279 = vld [vmem:[%s197 + $0x120] sm:$0xff]
        %v280 = vld [vmem:[%s197 + $0x128] sm:$0xff]
        %v281 = vld [vmem:[%s197 + $0x130] sm:$0xff]
        %v282 = vld [vmem:[%s197 + $0x138] sm:$0xff]
        %v283 = vld [vmem:[%s197 + $0x140] sm:$0xff]
        %v284 = vld [vmem:[%s197 + $0x148] sm:$0xff]
        %v285 = vld [vmem:[%s197 + $0x150] sm:$0xff]
        %v286 = vld [vmem:[%s197 + $0x158] sm:$0xff]
        %v287 = vld [vmem:[%s197 + $0x160] sm:$0xff]
        %v288 = vld [vmem:[%s197 + $0x168] sm:$0xff]
        %v289 = vld [vmem:[%s197 + $0x170] sm:$0xff]
        %v290 = vld [vmem:[%s197 + $0x178] sm:$0xff]
        %v291 = vld [vmem:[%s197 + $0x180] sm:$0xff]
        %v292 = vld [vmem:[%s197 + $0x188] sm:$0xff]
        %v293 = vld [vmem:[%s197 + $0x190] sm:$0xff]
        %v294 = vld [vmem:[%s197 + $0x198] sm:$0xff]
        %v295 = vld [vmem:[%s197 + $0x1a0] sm:$0xff]
        %v296 = vld [vmem:[%s197 + $0x1a8] sm:$0xff]
        %v297 = vld [vmem:[%s197 + $0x1b0] sm:$0xff]
        %v298 = vld [vmem:[%s197 + $0x1b8] sm:$0xff]
        %v299 = vld [vmem:[%s197 + $0x1c0] sm:$0xff]
        %v300 = vld [vmem:[%s197 + $0x1c8] sm:$0xff]
        %v301 = vld [vmem:[%s197 + $0x1d0] sm:$0xff]
        %v302 = vld [vmem:[%s197 + $0x1d8] sm:$0xff]
        %v303 = vld [vmem:[%s197 + $0x1e0] sm:$0xff]
        %v304 = vld [vmem:[%s197 + $0x1e8] sm:$0xff]
        %v305 = vld [vmem:[%s197 + $0x1f0] sm:$0xff]
        %v306 = vld [vmem:[%s197 + $0x1f8] sm:$0xff]
        %v307 = vld [vmem:[%s197 + $0x200] sm:$0xff]
        %v308 = vld [vmem:[%s197 + $0x208] sm:$0xff]
        %v309 = vld [vmem:[%s197 + $0x210] sm:$0xff]
        %v310 = vld [vmem:[%s197 + $0x218] sm:$0xff]
        %v311 = vld [vmem:[%s197 + $0x220] sm:$0xff]
        %v312 = vld [vmem:[%s197 + $0x228] sm:$0xff]
        %v313 = vld [vmem:[%s197 + $0x230] sm:$0xff]
        %v314 = vld [vmem:[%s197 + $0x238] sm:$0xff]
        %v315 = vld [vmem:[%s197 + $0x240] sm:$0xff]
        %v316 = vld [vmem:[%s197 + $0x248] sm:$0xff]
        %v317 = vld [vmem:[%s197 + $0x250] sm:$0xff]
        %v318 = vld [vmem:[%s197 + $0x258] sm:$0xff]
        %v319 = vld [vmem:[%s197 + $0x260] sm:$0xff]
        %v320 = vld [vmem:[%s197 + $0x268] sm:$0xff]
        %v321 = vld [vmem:[%s197 + $0x270] sm:$0xff]
        %v322 = vld [vmem:[%s197 + $0x278] sm:$0xff]
        %v323 = vld [vmem:[%s197 + $0x280] sm:$0xff]
        %v324 = vld [vmem:[%s197 + $0x288] sm:$0xff]
        %v325 = vld [vmem:[%s197 + $0x290] sm:$0xff]
        %v326 = vld [vmem:[%s197 + $0x298] sm:$0xff]
        %v327 = vld [vmem:[%s197 + $0x2a0] sm:$0xff]
        %v328 = vld [vmem:[%s197 + $0x2a8] sm:$0xff]
        %v329 = vld [vmem:[%s197 + $0x2b0] sm:$0xff]
        %v330 = vld [vmem:[%s197 + $0x2b8] sm:$0xff]
        %v331 = vld [vmem:[%s197 + $0x2c0] sm:$0xff]
        %v332 = vld [vmem:[%s197 + $0x2c8] sm:$0xff]
        %v333 = vld [vmem:[%s197 + $0x2d0] sm:$0xff]
        %v334 = vld [vmem:[%s197 + $0x2d8] sm:$0xff]
        %v335 = vld [vmem:[%s197 + $0x2e0] sm:$0xff]
        %v336 = vld [vmem:[%s197 + $0x2e8] sm:$0xff]
        %v337 = vld [vmem:[%s197 + $0x2f0] sm:$0xff]
        %v338 = vld [vmem:[%s197 + $0x2f8] sm:$0xff]
        %v339 = vld [vmem:[%s197 + $0x300] sm:$0xff]
        %v340 = vld [vmem:[%s197 + $0x308] sm:$0xff]
        %v341 = vld [vmem:[%s197 + $0x310] sm:$0xff]
        %v342 = vld [vmem:[%s197 + $0x318] sm:$0xff]
        %v343 = vld [vmem:[%s197 + $0x320] sm:$0xff]
        %v344 = vld [vmem:[%s197 + $0x328] sm:$0xff]
        %v345 = vld [vmem:[%s197 + $0x330] sm:$0xff]
        %v346 = vld [vmem:[%s197 + $0x338] sm:$0xff]
        %v347 = vld [vmem:[%s197 + $0x340] sm:$0xff]
        %v348 = vld [vmem:[%s197 + $0x348] sm:$0xff]
        %v349 = vld [vmem:[%s197 + $0x350] sm:$0xff]
        %v350 = vld [vmem:[%s197 + $0x358] sm:$0xff]
        %v351 = vld [vmem:[%s197 + $0x360] sm:$0xff]
        %v352 = vld [vmem:[%s197 + $0x368] sm:$0xff]
        %v353 = vld [vmem:[%s197 + $0x370] sm:$0xff]
        %v354 = vld [vmem:[%s197 + $0x378] sm:$0xff]
        %v355 = vld [vmem:[%s197 + $0x380] sm:$0xff]
        %v356 = vld [vmem:[%s197 + $0x388] sm:$0xff]
        %v357 = vld [vmem:[%s197 + $0x390] sm:$0xff]
        %v358 = vld [vmem:[%s197 + $0x398] sm:$0xff]
        %v359 = vld [vmem:[%s197 + $0x3a0] sm:$0xff]
        %v360 = vld [vmem:[%s197 + $0x3a8] sm:$0xff]
        %v361 = vld [vmem:[%s197 + $0x3b0] sm:$0xff]
        %v362 = vld [vmem:[%s197 + $0x3b8] sm:$0xff]
        %v363 = vld [vmem:[%s197 + $0x3c0] sm:$0xff]
        %v364 = vld [vmem:[%s197 + $0x3c8] sm:$0xff]
        %v365 = vld [vmem:[%s197 + $0x3d0] sm:$0xff]
        %v366 = vld [vmem:[%s197 + $0x3d8] sm:$0xff]
        %v367 = vld [vmem:[%s197 + $0x3e0] sm:$0xff]
        %v368 = vld [vmem:[%s197 + $0x3e8] sm:$0xff]
        %v369 = vld [vmem:[%s197 + $0x3f0] sm:$0xff]
        %v370 = vld [vmem:[%s197 + $0x3f8] sm:$0xff]
        %v371 = vld [vmem:[%s197 + $0x400] sm:$0xff]
        %v372 = vld [vmem:[%s197 + $0x408] sm:$0xff]
        %v373 = vld [vmem:[%s197 + $0x410] sm:$0xff]
        %v374 = vld [vmem:[%s197 + $0x418] sm:$0xff]
        %v375 = vld [vmem:[%s197 + $0x420] sm:$0xff]
        %v376 = vld [vmem:[%s197 + $0x428] sm:$0xff]
        %v377 = vld [vmem:[%s197 + $0x430] sm:$0xff]
        %v378 = vld [vmem:[%s197 + $0x438] sm:$0xff]
        %v379 = vld [vmem:[%s197 + $0x440] sm:$0xff]
        %v380 = vld [vmem:[%s197 + $0x448] sm:$0xff]
        %v381 = vld [vmem:[%s197 + $0x450] sm:$0xff]
        %v382 = vld [vmem:[%s197 + $0x458] sm:$0xff]
        %v383 = vld [vmem:[%s197 + $0x460] sm:$0xff]
        %v384 = vld [vmem:[%s197 + $0x468] sm:$0xff]
        %v385 = vld [vmem:[%s197 + $0x470] sm:$0xff]
        %v386 = vld [vmem:[%s197 + $0x478] sm:$0xff]
        %v387 = vld [vmem:[%s197 + $0x480] sm:$0xff]
        %v388 = vld [vmem:[%s197 + $0x488] sm:$0xff]
        %v389 = vld [vmem:[%s197 + $0x490] sm:$0xff]
        %v390 = vld [vmem:[%s197 + $0x498] sm:$0xff]
        %v391 = vld [vmem:[%s197 + $0x4a0] sm:$0xff]
        %v392 = vld [vmem:[%s197 + $0x4a8] sm:$0xff]
        %v393 = vld [vmem:[%s197 + $0x4b0] sm:$0xff]
        %v394 = vld [vmem:[%s197 + $0x4b8] sm:$0xff]
        %v395 = vld [vmem:[%s197 + $0x4c0] sm:$0xff]
        %v396 = vld [vmem:[%s197 + $0x4c8] sm:$0xff]
        %v397 = vld [vmem:[%s197 + $0x4d0] sm:$0xff]
        %v398 = vld [vmem:[%s197 + $0x4d8] sm:$0xff]
        %v399 = vld [vmem:[%s197 + $0x4e0] sm:$0xff]
        %v400 = vld [vmem:[%s197 + $0x4e8] sm:$0xff]
        %v401 = vld [vmem:[%s197 + $0x4f0] sm:$0xff]
        %v402 = vld [vmem:[%s197 + $0x4f8] sm:$0xff]
        %v403 = vld [vmem:[%s197 + $0x500] sm:$0xff]
        %v404 = vld [vmem:[%s197 + $0x508] sm:$0xff]
        %v405 = vld [vmem:[%s197 + $0x510] sm:$0xff]
        %v406 = vld [vmem:[%s197 + $0x518] sm:$0xff]
        %v407 = vld [vmem:[%s197 + $0x520] sm:$0xff]
        %v408 = vld [vmem:[%s197 + $0x528] sm:$0xff]
        %v409 = vld [vmem:[%s197 + $0x530] sm:$0xff]
        %v410 = vld [vmem:[%s197 + $0x538] sm:$0xff]
        %v411 = vld [vmem:[%s197 + $0x540] sm:$0xff]
        %v412 = vld [vmem:[%s197 + $0x548] sm:$0xff]
        %v413 = vld [vmem:[%s197 + $0x550] sm:$0xff]
        %v414 = vld [vmem:[%s197 + $0x558] sm:$0xff]
        %v415 = vld [vmem:[%s197 + $0x560] sm:$0xff]
        %v416 = vld [vmem:[%s197 + $0x568] sm:$0xff]
        %v417 = vld [vmem:[%s197 + $0x570] sm:$0xff]
        %v418 = vld [vmem:[%s197 + $0x578] sm:$0xff]
        %v419 = vld [vmem:[%s197 + $0x580] sm:$0xff]
        %v420 = vld [vmem:[%s197 + $0x588] sm:$0xff]
        %v421 = vld [vmem:[%s197 + $0x590] sm:$0xff]
        %v422 = vld [vmem:[%s197 + $0x598] sm:$0xff]
        %v423 = vld [vmem:[%s197 + $0x5a0] sm:$0xff]
        %v424 = vld [vmem:[%s197 + $0x5a8] sm:$0xff]
        %v425 = vld [vmem:[%s197 + $0x5b0] sm:$0xff]
        %v426 = vld [vmem:[%s197 + $0x5b8] sm:$0xff]
        %v427 = vld [vmem:[%s197 + $0x5c0] sm:$0xff]
        %v428 = vld [vmem:[%s197 + $0x5c8] sm:$0xff]
        %v429 = vld [vmem:[%s197 + $0x5d0] sm:$0xff]
        %v430 = vld [vmem:[%s197 + $0x5d8] sm:$0xff]
        %v431 = vld [vmem:[%s197 + $0x5e0] sm:$0xff]
        %v432 = vld [vmem:[%s197 + $0x5e8] sm:$0xff]
        %v433 = vld [vmem:[%s197 + $0x5f0] sm:$0xff]
        %v434 = vld [vmem:[%s197 + $0x5f8] sm:$0xff]
        %v435 = vld [vmem:[%s197 + $0x600] sm:$0xff]
        %v436 = vld [vmem:[%s197 + $0x608] sm:$0xff]
        %v437 = vld [vmem:[%s197 + $0x610] sm:$0xff]
        %v438 = vld [vmem:[%s197 + $0x618] sm:$0xff]
        %v439 = vld [vmem:[%s197 + $0x620] sm:$0xff]
        %v440 = vld [vmem:[%s197 + $0x628] sm:$0xff]
        %v441 = vld [vmem:[%s197 + $0x630] sm:$0xff]
        %v442 = vld [vmem:[%s197 + $0x638] sm:$0xff]
        %v443 = vld [vmem:[%s197 + $0x640] sm:$0xff]
        %v444 = vld [vmem:[%s197 + $0x648] sm:$0xff]
        %v445 = vld [vmem:[%s197 + $0x650] sm:$0xff]
        %v446 = vld [vmem:[%s197 + $0x658] sm:$0xff]
        %v447 = vld [vmem:[%s197 + $0x660] sm:$0xff]
        %v448 = vld [vmem:[%s197 + $0x668] sm:$0xff]
        %v449 = vld [vmem:[%s197 + $0x670] sm:$0xff]
        %v450 = vld [vmem:[%s197 + $0x678] sm:$0xff]
        %v451 = vld [vmem:[%s197 + $0x680] sm:$0xff]
        %v452 = vld [vmem:[%s197 + $0x688] sm:$0xff]
        %v453 = vld [vmem:[%s197 + $0x690] sm:$0xff]
        %v454 = vld [vmem:[%s197 + $0x698] sm:$0xff]
        %v455 = vld [vmem:[%s197 + $0x6a0] sm:$0xff]
        %v456 = vld [vmem:[%s197 + $0x6a8] sm:$0xff]
        %v457 = vld [vmem:[%s197 + $0x6b0] sm:$0xff]
        %v458 = vld [vmem:[%s197 + $0x6b8] sm:$0xff]
        %v459 = vld [vmem:[%s197 + $0x6c0] sm:$0xff]
        %v460 = vld [vmem:[%s197 + $0x6c8] sm:$0xff]
        %v461 = vld [vmem:[%s197 + $0x6d0] sm:$0xff]
        %v462 = vld [vmem:[%s197 + $0x6d8] sm:$0xff]
        %v463 = vld [vmem:[%s197 + $0x6e0] sm:$0xff]
        %v464 = vld [vmem:[%s197 + $0x6e8] sm:$0xff]
        %v465 = vld [vmem:[%s197 + $0x6f0] sm:$0xff]
        %v466 = vld [vmem:[%s197 + $0x6f8] sm:$0xff]
        %v467 = vld [vmem:[%s197 + $0x700] sm:$0xff]
        %v468 = vld [vmem:[%s197 + $0x708] sm:$0xff]
        %v469 = vld [vmem:[%s197 + $0x710] sm:$0xff]
        %v470 = vld [vmem:[%s197 + $0x718] sm:$0xff]
        %v471 = vld [vmem:[%s197 + $0x720] sm:$0xff]
        %v472 = vld [vmem:[%s197 + $0x728] sm:$0xff]
        %v473 = vld [vmem:[%s197 + $0x730] sm:$0xff]
        %v474 = vld [vmem:[%s197 + $0x738] sm:$0xff]
        %v475 = vld [vmem:[%s197 + $0x740] sm:$0xff]
        %v476 = vld [vmem:[%s197 + $0x748] sm:$0xff]
        %v477 = vld [vmem:[%s197 + $0x750] sm:$0x3]
        %v478 = vld [vmem:[%s197 + $0x758] sm:$0x3]
        %v479 = vld [vmem:[%s197 + $0x760] sm:$0x3]
        %v480 = vld [vmem:[%s197 + $0x768] sm:$0x3]
        %v481 = vld [vmem:[%s197 + $0x770] sm:$0x3]
        %v482 = vld [vmem:[%s197 + $0x778] sm:$0x3]
        %v483 = vld [vmem:[%s197 + $0x780] sm:$0x3]
        %v484 = vld [vmem:[%s197 + $0x788] sm:$0x3]
        %v485 = vld [vmem:[%s197 + $0x790] sm:$0x3]
        %v486 = vld [vmem:[%s197 + $0x798] sm:$0x3]
        %v487 = vld [vmem:[%s197 + $0x7a0] sm:$0x3]
        %v488 = vld [vmem:[%s197 + $0x7a8] sm:$0x3]
        %v489 = vld [vmem:[%s197 + $0x7b0] sm:$0x3]
        %v490 = vld [vmem:[%s197 + $0x7b8] sm:$0x3]
        %v491 = vld [vmem:[%s197 + $0x7c0] sm:$0x3]
        %v492 = vld [vmem:[%s197 + $0x7c8] sm:$0x3]
        %v493 = vld [vmem:[%s197 + $0x7d0] sm:$0x3]
        %v494 = vld [vmem:[%s197 + $0x7d8] sm:$0x3]
        %v495 = vld [vmem:[%s197 + $0x7e0] sm:$0x3]
        %v496 = vld [vmem:[%s197 + $0x7e8] sm:$0x3]
        %v497 = vld [vmem:[%s197 + $0x7f0] sm:$0x3]
        %v498 = vld [vmem:[%s197 + $0x7f8] sm:$0x3]
        %v499 = vld [vmem:[%s197 + $0x800] sm:$0x3]
        %v500 = vld [vmem:[%s197 + $0x808] sm:$0x3]
        %v501 = vld [vmem:[%s197 + $0x810] sm:$0x3]
        %v502 = vld [vmem:[%s197 + $0x818] sm:$0x3]
        %v503 = vld [vmem:[%s197 + $0x820] sm:$0x3]
        %v504 = vld [vmem:[%s197 + $0x828] sm:$0x3]
        %v505 = vld [vmem:[%s197 + $0x830] sm:$0x3]
        %v506 = vld [vmem:[%s197 + $0x838] sm:$0x3]
        %v507 = vld [vmem:[%s197 + $0x840] sm:$0x3]
        %v508 = vld [vmem:[%s197 + $0x848] sm:$0x3]
        %v509 = vld [vmem:[%s197 + $0x850] sm:$0x3]
        %v510 = vld [vmem:[%s197 + $0x858] sm:$0x3]
        %v511 = vld [vmem:[%s197 + $0x860] sm:$0x3]
        %v512 = vld [vmem:[%s197 + $0x868] sm:$0x3]
        %v513 = vld [vmem:[%s197 + $0x870] sm:$0x3]
        %v514 = vld [vmem:[%s197 + $0x878] sm:$0x3]
        %v515 = vld [vmem:[%s197 + $0x880] sm:$0x3]
        %v516 = vld [vmem:[%s206] sm:$0xff]
        %v517 = vld [vmem:[%s206 + $0x8] sm:$0xff]
        %v518 = vld [vmem:[%s206 + $0x10] sm:$0xff]
        %v519 = vld [vmem:[%s206 + $0x18] sm:$0xff]
        %v520 = vld [vmem:[%s206 + $0x20] sm:$0xff]
        %v526 = vlaneseq
        %v527 = vshrl.u32 %v526, 7
        %v528 = vsub.s32 0, %v527
        %v529 = vrot.slane %v516, %v528
        %v530 = vlaneseq
        %v531 = vshrl.u32 %v530, 7
        %v532 = vsub.s32 1, %v531
        %v533 = vrot.slane %v516, %v532
        %v534 = vlaneseq
        %v535 = vshrl.u32 %v534, 7
        %v536 = vsub.s32 2, %v535
        %v537 = vrot.slane %v516, %v536
        %v538 = vlaneseq
        %v539 = vshrl.u32 %v538, 7
        %v540 = vsub.s32 3, %v539
        %v541 = vrot.slane %v516, %v540
        %v542 = vlaneseq
        %v543 = vshrl.u32 %v542, 7
        %v544 = vsub.s32 4, %v543
        %v545 = vrot.slane %v516, %v544
        %v546 = vlaneseq
        %v547 = vshrl.u32 %v546, 7
        %v548 = vsub.s32 5, %v547
        %v549 = vrot.slane %v516, %v548
        %v550 = vlaneseq
        %v551 = vshrl.u32 %v550, 7
        %v552 = vsub.s32 6, %v551
        %v553 = vrot.slane %v516, %v552
        %v554 = vlaneseq
        %v555 = vshrl.u32 %v554, 7
        %v556 = vsub.s32 7, %v555
        %v557 = vrot.slane %v516, %v556
        %v558 = vlaneseq
        %v559 = vshrl.u32 %v558, 7
        %v560 = vsub.s32 0, %v559
        %v561 = vrot.slane %v517, %v560
        %v562 = vlaneseq
        %v563 = vshrl.u32 %v562, 7
        %v564 = vsub.s32 1, %v563
        %v565 = vrot.slane %v517, %v564
        %v566 = vlaneseq
        %v567 = vshrl.u32 %v566, 7
        %v568 = vsub.s32 2, %v567
        %v569 = vrot.slane %v517, %v568
        %v570 = vlaneseq
        %v571 = vshrl.u32 %v570, 7
        %v572 = vsub.s32 3, %v571
        %v573 = vrot.slane %v517, %v572
        %v574 = vlaneseq
        %v575 = vshrl.u32 %v574, 7
        %v576 = vsub.s32 4, %v575
        %v577 = vrot.slane %v517, %v576
        %v578 = vlaneseq
        %v579 = vshrl.u32 %v578, 7
        %v580 = vsub.s32 5, %v579
        %v581 = vrot.slane %v517, %v580
        %v582 = vlaneseq
        %v583 = vshrl.u32 %v582, 7
        %v584 = vsub.s32 6, %v583
        %v585 = vrot.slane %v517, %v584
        %v586 = vlaneseq
        %v587 = vshrl.u32 %v586, 7
        %v588 = vsub.s32 7, %v587
        %v589 = vrot.slane %v517, %v588
        %v590 = vlaneseq
        %v591 = vshrl.u32 %v590, 7
        %v592 = vsub.s32 0, %v591
        %v593 = vrot.slane %v518, %v592
        %v594 = vlaneseq
        %v595 = vshrl.u32 %v594, 7
        %v596 = vsub.s32 1, %v595
        %v597 = vrot.slane %v518, %v596
        %v598 = vlaneseq
        %v599 = vshrl.u32 %v598, 7
        %v600 = vsub.s32 2, %v599
        %v601 = vrot.slane %v518, %v600
        %v602 = vlaneseq
        %v603 = vshrl.u32 %v602, 7
        %v604 = vsub.s32 3, %v603
        %v605 = vrot.slane %v518, %v604
        %v606 = vlaneseq
        %v607 = vshrl.u32 %v606, 7
        %v608 = vsub.s32 4, %v607
        %v609 = vrot.slane %v518, %v608
        %v610 = vlaneseq
        %v611 = vshrl.u32 %v610, 7
        %v612 = vsub.s32 5, %v611
        %v613 = vrot.slane %v518, %v612
        %v614 = vlaneseq
        %v615 = vshrl.u32 %v614, 7
        %v616 = vsub.s32 6, %v615
        %v617 = vrot.slane %v518, %v616
        %v618 = vlaneseq
        %v619 = vshrl.u32 %v618, 7
        %v620 = vsub.s32 7, %v619
        %v621 = vrot.slane %v518, %v620
        %v622 = vlaneseq
        %v623 = vshrl.u32 %v622, 7
        %v624 = vsub.s32 0, %v623
        %v625 = vrot.slane %v519, %v624
        %v626 = vlaneseq
        %v627 = vshrl.u32 %v626, 7
        %v628 = vsub.s32 1, %v627
        %v629 = vrot.slane %v519, %v628
        %v630 = vlaneseq
        %v631 = vshrl.u32 %v630, 7
        %v632 = vsub.s32 2, %v631
        %v633 = vrot.slane %v519, %v632
        %v634 = vlaneseq
        %v635 = vshrl.u32 %v634, 7
        %v636 = vsub.s32 3, %v635
        %v637 = vrot.slane %v519, %v636
        %v638 = vlaneseq
        %v639 = vshrl.u32 %v638, 7
        %v640 = vsub.s32 4, %v639
        %v641 = vrot.slane %v519, %v640
        %v642 = vlaneseq
        %v643 = vshrl.u32 %v642, 7
        %v644 = vsub.s32 5, %v643
        %v645 = vrot.slane %v519, %v644
        %v646 = vlaneseq
        %v647 = vshrl.u32 %v646, 7
        %v648 = vsub.s32 6, %v647
        %v649 = vrot.slane %v519, %v648
        %v650 = vlaneseq
        %v651 = vshrl.u32 %v650, 7
        %v652 = vsub.s32 7, %v651
        %v653 = vrot.slane %v519, %v652
        %v654 = vlaneseq
        %v655 = vshrl.u32 %v654, 7
        %v656 = vsub.s32 0, %v655
        %v657 = vrot.slane %v520, %v656
        %v658 = vlaneseq
        %v659 = vshrl.u32 %v658, 7
        %v660 = vsub.s32 1, %v659
        %v661 = vrot.slane %v520, %v660
        %v662 = vlaneseq
        %v663 = vshrl.u32 %v662, 7
        %v664 = vsub.s32 2, %v663
        %v665 = vrot.slane %v520, %v664
        %v666 = vlaneseq
        %v667 = vshrl.u32 %v666, 7
        %v668 = vsub.s32 3, %v667
        %v669 = vrot.slane %v520, %v668
        %v670 = vlaneseq
        %v671 = vshrl.u32 %v670, 7
        %v672 = vsub.s32 4, %v671
        %v673 = vrot.slane %v520, %v672
        %v674 = vlaneseq
        %v675 = vshrl.u32 %v674, 7
        %v676 = vsub.s32 5, %v675
        %v677 = vrot.slane %v520, %v676
        %v678 = vlaneseq
        %v679 = vshrl.u32 %v678, 7
        %v680 = vsub.s32 6, %v679
        %v681 = vrot.slane %v520, %v680
        %vm721 = vcmask 408576
        %v723 = vsel %vm721, %v242, 0
        %vm725 = vcmask 1041408
        %v727 = vsel %vm725, %v477, 0
        %v730 = vsel %vm725, %v478, 0
        %v733 = vsel %vm725, %v479, 0
        %v736 = vsel %vm725, %v480, 0
        %v739 = vsel %vm725, %v481, 0
        %v742 = vsel %vm725, %v482, 0
        %v745 = vsel %vm725, %v483, 0
        %v748 = vsel %vm725, %v484, 0
        %v751 = vsel %vm725, %v485, 0
        %v754 = vsel %vm725, %v486, 0
        %v757 = vsel %vm725, %v487, 0
        %v760 = vsel %vm725, %v488, 0
        %v763 = vsel %vm725, %v489, 0
        %v766 = vsel %vm725, %v490, 0
        %v769 = vsel %vm725, %v491, 0
        %v772 = vsel %vm725, %v492, 0
        %v775 = vsel %vm725, %v493, 0
        %v778 = vsel %vm725, %v494, 0
        %v781 = vsel %vm725, %v495, 0
        %v784 = vsel %vm725, %v496, 0
        %v787 = vsel %vm725, %v497, 0
        %v790 = vsel %vm725, %v498, 0
        %v793 = vsel %vm725, %v499, 0
        %v796 = vsel %vm725, %v500, 0
        %v799 = vsel %vm725, %v501, 0
        %v802 = vsel %vm725, %v502, 0
        %v805 = vsel %vm725, %v503, 0
        %v808 = vsel %vm725, %v504, 0
        %v811 = vsel %vm725, %v505, 0
        %v814 = vsel %vm725, %v506, 0
        %v817 = vsel %vm725, %v507, 0
        %v820 = vsel %vm725, %v508, 0
        %v823 = vsel %vm725, %v509, 0
        %v826 = vsel %vm725, %v510, 0
        %v829 = vsel %vm725, %v511, 0
        %v832 = vsel %vm725, %v512, 0
        %v835 = vsel %vm725, %v513, 0
        %v838 = vsel %vm725, %v514, 0
        %v841 = vsel %vm725, %v515, 0
        %843 = vmatprep.subr.mxu0 %v244
        %844 = vmatpush1.msra.mxu0 %v243
        %845 = vmatprep.subr.mxu0 %v283
        %846 = vmatpush1.msra.mxu0 %v282
        %847 = vmatprep.subr.mxu0 %v322
        %848 = vmatpush1.msra.mxu0 %v321
        %849 = vmatprep.subr.mxu0 %v361
        %850 = vmatpush1.msra.mxu0 %v360
        %851 = vmatprep.subr.mxu0 %v400
        %852 = vmatpush1.msra.mxu0 %v399
        %853 = vmatprep.subr.mxu0 %v439
        %854 = vmatpush1.msra.mxu0 %v438
        %855 = vmatprep.subr.mxu0 %v730
        %856 = vmatpush1.msra.mxu0 %v727
        %857 = vmatprep.subr.mxu0 0.0
        %858 = vmatpush1.msra.mxu0 0.0
        %859 = vmatprep.subr.mxu0 0.0
        %860 = vmatpush1.msra.mxu0 0.0
        %861 = vmatprep.subr.mxu0 0.0
        %862 = vmatpush1.msra.mxu0 0.0
        %863 = vmatprep.subr.mxu0 0.0
        %864 = vmatpush1.msra.mxu0 0.0
        %865 = vmatprep.subr.mxu0 0.0
        %866 = vmatpush1.msra.mxu0 0.0
        %867 = vmatprep.subr.mxu0 0.0
        %868 = vmatpush1.msra.mxu0 0.0
        %869 = vmatprep.subr.mxu0 0.0
        %870 = vmatpush1.msra.mxu0 0.0
        %871 = vmatprep.subr.mxu0 0.0
        %872 = vmatpush1.msra.mxu0 0.0
        %873 = vmatprep.subr.mxu0 0.0
        %874 = vmatpush1.msra.mxu0 0.0
        %875 = vmatprep.subr.mxu0 0.0
        %876 = vmatpush1.msra.mxu0 0.0
        %877 = vmatprep.subr.mxu0 0.0
        %878 = vmatpush1.msra.mxu0 0.0
        %879 = vmatprep.subr.mxu0 0.0
        %880 = vmatpush1.msra.mxu0 0.0
        %881 = vmatprep.subr.mxu0 0.0
        %882 = vmatpush1.msra.mxu0 0.0
        %883 = vmatprep.subr.mxu0 0.0
        %884 = vmatpush1.msra.mxu0 0.0
        %885 = vmatprep.subr.mxu0 0.0
        %886 = vmatpush1.msra.mxu0 0.0
        %887 = vmatprep.subr.mxu0 0.0
        %888 = vmatpush1.msra.mxu0 0.0
        %889 = vmatprep.subr.mxu0 0.0
        %890 = vmatpush1.msra.mxu0 0.0
        %891 = vmatprep.subr.mxu0 0.0
        %892 = vmatpush1.msra.mxu0 0.0
        %893 = vmatprep.subr.mxu0 0.0
        %894 = vmatpush1.msra.mxu0 0.0
        %895 = vmatprep.subr.mxu0 0.0
        %896 = vmatpush1.msra.mxu0 0.0
        %897 = vmatprep.subr.mxu0 0.0
        %898 = vmatpush1.msra.mxu0 0.0
        %899 = vmatprep.subr.mxu0 0.0
        %900 = vmatpush1.msra.mxu0 0.0
        %901 = vmatprep.subr.mxu0 0.0
        %902 = vmatpush1.msra.mxu0 0.0
        %903 = vmatprep.subr.mxu0 0.0
        %904 = vmatpush1.msra.mxu0 0.0
        %905 = vmatprep.subr.mxu0 0.0
        %906 = vmatpush1.msra.mxu0 0.0
        %907 = vmatprep.mubr.f32.mxu0 0.0
        %908 = vmatmul.mubr.f32.gmra.mrb[0].mxu0 %v723
        %v909 = vpop.f32.mrb[0].mxu0
        %v910 = vadd.f32 %v529, %v909
        %v911 = vpop.f32.mrb[0].mxu0
        %v912 = vadd.f32 %v533, %v911
        %913 = vdwg.mxu0
        %914 = vmatprep.subr.mxu0 %v246
        %915 = vmatpush1.msra.mxu0 %v245
        %916 = vmatprep.subr.mxu0 %v285
        %917 = vmatpush1.msra.mxu0 %v284
        %918 = vmatprep.subr.mxu0 %v324
        %919 = vmatpush1.msra.mxu0 %v323
        %920 = vmatprep.subr.mxu0 %v363
        %921 = vmatpush1.msra.mxu0 %v362
        %922 = vmatprep.subr.mxu0 %v402
        %923 = vmatpush1.msra.mxu0 %v401
        %924 = vmatprep.subr.mxu0 %v441
        %925 = vmatpush1.msra.mxu0 %v440
        %926 = vmatprep.subr.mxu0 %v736
        %927 = vmatpush1.msra.mxu0 %v733
        %928 = vmatprep.subr.mxu0 0.0
        %929 = vmatpush1.msra.mxu0 0.0
        %930 = vmatprep.subr.mxu0 0.0
        %931 = vmatpush1.msra.mxu0 0.0
        %932 = vmatprep.subr.mxu0 0.0
        %933 = vmatpush1.msra.mxu0 0.0
        %934 = vmatprep.subr.mxu0 0.0
        %935 = vmatpush1.msra.mxu0 0.0
        %936 = vmatprep.subr.mxu0 0.0
        %937 = vmatpush1.msra.mxu0 0.0
        %938 = vmatprep.subr.mxu0 0.0
        %939 = vmatpush1.msra.mxu0 0.0
        %940 = vmatprep.subr.mxu0 0.0
        %941 = vmatpush1.msra.mxu0 0.0
        %942 = vmatprep.subr.mxu0 0.0
        %943 = vmatpush1.msra.mxu0 0.0
        %944 = vmatprep.subr.mxu0 0.0
        %945 = vmatpush1.msra.mxu0 0.0
        %946 = vmatprep.subr.mxu0 0.0
        %947 = vmatpush1.msra.mxu0 0.0
        %948 = vmatprep.subr.mxu0 0.0
        %949 = vmatpush1.msra.mxu0 0.0
        %950 = vmatprep.subr.mxu0 0.0
        %951 = vmatpush1.msra.mxu0 0.0
        %952 = vmatprep.subr.mxu0 0.0
        %953 = vmatpush1.msra.mxu0 0.0
        %954 = vmatprep.subr.mxu0 0.0
        %955 = vmatpush1.msra.mxu0 0.0
        %956 = vmatprep.subr.mxu0 0.0
        %957 = vmatpush1.msra.mxu0 0.0
        %958 = vmatprep.subr.mxu0 0.0
        %959 = vmatpush1.msra.mxu0 0.0
        %960 = vmatprep.subr.mxu0 0.0
        %961 = vmatpush1.msra.mxu0 0.0
        %962 = vmatprep.subr.mxu0 0.0
        %963 = vmatpush1.msra.mxu0 0.0
        %964 = vmatprep.subr.mxu0 0.0
        %965 = vmatpush1.msra.mxu0 0.0
        %966 = vmatprep.subr.mxu0 0.0
        %967 = vmatpush1.msra.mxu0 0.0
        %968 = vmatprep.subr.mxu0 0.0
        %969 = vmatpush1.msra.mxu0 0.0
        %970 = vmatprep.subr.mxu0 0.0
        %971 = vmatpush1.msra.mxu0 0.0
        %972 = vmatprep.subr.mxu0 0.0
        %973 = vmatpush1.msra.mxu0 0.0
        %974 = vmatprep.subr.mxu0 0.0
        %975 = vmatpush1.msra.mxu0 0.0
        %976 = vmatprep.subr.mxu0 0.0
        %977 = vmatpush1.msra.mxu0 0.0
        %978 = vmatprep.mubr.f32.mxu0 0.0
        %979 = vmatmul.mubr.f32.gmra.mrb[0].mxu0 %v723
        %v980 = vpop.f32.mrb[0].mxu0
        %v981 = vadd.f32 %v537, %v980
        %v982 = vpop.f32.mrb[0].mxu0
        %v983 = vadd.f32 %v541, %v982
        %984 = vdwg.mxu0
        %985 = vmatprep.subr.mxu0 %v248
        %986 = vmatpush1.msra.mxu0 %v247
        %987 = vmatprep.subr.mxu0 %v287
        %988 = vmatpush1.msra.mxu0 %v286
        %989 = vmatprep.subr.mxu0 %v326
        %990 = vmatpush1.msra.mxu0 %v325
        %991 = vmatprep.subr.mxu0 %v365
        %992 = vmatpush1.msra.mxu0 %v364
        %993 = vmatprep.subr.mxu0 %v404
        %994 = vmatpush1.msra.mxu0 %v403
        %995 = vmatprep.subr.mxu0 %v443
        %996 = vmatpush1.msra.mxu0 %v442
        %997 = vmatprep.subr.mxu0 %v742
        %998 = vmatpush1.msra.mxu0 %v739
        %999 = vmatprep.subr.mxu0 0.0
        %1000 = vmatpush1.msra.mxu0 0.0
        %1001 = vmatprep.subr.mxu0 0.0
        %1002 = vmatpush1.msra.mxu0 0.0
        %1003 = vmatprep.subr.mxu0 0.0
        %1004 = vmatpush1.msra.mxu0 0.0
        %1005 = vmatprep.subr.mxu0 0.0
        %1006 = vmatpush1.msra.mxu0 0.0
        %1007 = vmatprep.subr.mxu0 0.0
        %1008 = vmatpush1.msra.mxu0 0.0
        %1009 = vmatprep.subr.mxu0 0.0
        %1010 = vmatpush1.msra.mxu0 0.0
        %1011 = vmatprep.subr.mxu0 0.0
        %1012 = vmatpush1.msra.mxu0 0.0
        %1013 = vmatprep.subr.mxu0 0.0
        %1014 = vmatpush1.msra.mxu0 0.0
        %1015 = vmatprep.subr.mxu0 0.0
        %1016 = vmatpush1.msra.mxu0 0.0
        %1017 = vmatprep.subr.mxu0 0.0
        %1018 = vmatpush1.msra.mxu0 0.0
        %1019 = vmatprep.subr.mxu0 0.0
        %1020 = vmatpush1.msra.mxu0 0.0
        %1021 = vmatprep.subr.mxu0 0.0
        %1022 = vmatpush1.msra.mxu0 0.0
        %1023 = vmatprep.subr.mxu0 0.0
        %1024 = vmatpush1.msra.mxu0 0.0
        %1025 = vmatprep.subr.mxu0 0.0
        %1026 = vmatpush1.msra.mxu0 0.0
        %1027 = vmatprep.subr.mxu0 0.0
        %1028 = vmatpush1.msra.mxu0 0.0
        %1029 = vmatprep.subr.mxu0 0.0
        %1030 = vmatpush1.msra.mxu0 0.0
        %1031 = vmatprep.subr.mxu0 0.0
        %1032 = vmatpush1.msra.mxu0 0.0
        %1033 = vmatprep.subr.mxu0 0.0
        %1034 = vmatpush1.msra.mxu0 0.0
        %1035 = vmatprep.subr.mxu0 0.0
        %1036 = vmatpush1.msra.mxu0 0.0
        %1037 = vmatprep.subr.mxu0 0.0
        %1038 = vmatpush1.msra.mxu0 0.0
        %1039 = vmatprep.subr.mxu0 0.0
        %1040 = vmatpush1.msra.mxu0 0.0
        %1041 = vmatprep.subr.mxu0 0.0
        %1042 = vmatpush1.msra.mxu0 0.0
        %1043 = vmatprep.subr.mxu0 0.0
        %1044 = vmatpush1.msra.mxu0 0.0
        %1045 = vmatprep.subr.mxu0 0.0
        %1046 = vmatpush1.msra.mxu0 0.0
        %1047 = vmatprep.subr.mxu0 0.0
        %1048 = vmatpush1.msra.mxu0 0.0
        %1049 = vmatprep.mubr.f32.mxu0 0.0
        %1050 = vmatmul.mubr.f32.gmra.mrb[0].mxu0 %v723
        %v1051 = vpop.f32.mrb[0].mxu0
        %v1052 = vadd.f32 %v545, %v1051
        %v1053 = vpop.f32.mrb[0].mxu0
        %v1054 = vadd.f32 %v549, %v1053
        %1055 = vdwg.mxu0
        %1056 = vmatprep.subr.mxu0 %v250
        %1057 = vmatpush1.msra.mxu0 %v249
        %1058 = vmatprep.subr.mxu0 %v289
        %1059 = vmatpush1.msra.mxu0 %v288
        %1060 = vmatprep.subr.mxu0 %v328
        %1061 = vmatpush1.msra.mxu0 %v327
        %1062 = vmatprep.subr.mxu0 %v367
        %1063 = vmatpush1.msra.mxu0 %v366
        %1064 = vmatprep.subr.mxu0 %v406
        %1065 = vmatpush1.msra.mxu0 %v405
        %1066 = vmatprep.subr.mxu0 %v445
        %1067 = vmatpush1.msra.mxu0 %v444
        %1068 = vmatprep.subr.mxu0 %v748
        %1069 = vmatpush1.msra.mxu0 %v745
        %1070 = vmatprep.subr.mxu0 0.0
        %1071 = vmatpush1.msra.mxu0 0.0
        %1072 = vmatprep.subr.mxu0 0.0
        %1073 = vmatpush1.msra.mxu0 0.0
        %1074 = vmatprep.subr.mxu0 0.0
        %1075 = vmatpush1.msra.mxu0 0.0
        %1076 = vmatprep.subr.mxu0 0.0
        %1077 = vmatpush1.msra.mxu0 0.0
        %1078 = vmatprep.subr.mxu0 0.0
        %1079 = vmatpush1.msra.mxu0 0.0
        %1080 = vmatprep.subr.mxu0 0.0
        %1081 = vmatpush1.msra.mxu0 0.0
        %1082 = vmatprep.subr.mxu0 0.0
        %1083 = vmatpush1.msra.mxu0 0.0
        %1084 = vmatprep.subr.mxu0 0.0
        %1085 = vmatpush1.msra.mxu0 0.0
        %1086 = vmatprep.subr.mxu0 0.0
        %1087 = vmatpush1.msra.mxu0 0.0
        %1088 = vmatprep.subr.mxu0 0.0
        %1089 = vmatpush1.msra.mxu0 0.0
        %1090 = vmatprep.subr.mxu0 0.0
        %1091 = vmatpush1.msra.mxu0 0.0
        %1092 = vmatprep.subr.mxu0 0.0
        %1093 = vmatpush1.msra.mxu0 0.0
        %1094 = vmatprep.subr.mxu0 0.0
        %1095 = vmatpush1.msra.mxu0 0.0
        %1096 = vmatprep.subr.mxu0 0.0
        %1097 = vmatpush1.msra.mxu0 0.0
        %1098 = vmatprep.subr.mxu0 0.0
        %1099 = vmatpush1.msra.mxu0 0.0
        %1100 = vmatprep.subr.mxu0 0.0
        %1101 = vmatpush1.msra.mxu0 0.0
        %1102 = vmatprep.subr.mxu0 0.0
        %1103 = vmatpush1.msra.mxu0 0.0
        %1104 = vmatprep.subr.mxu0 0.0
        %1105 = vmatpush1.msra.mxu0 0.0
        %1106 = vmatprep.subr.mxu0 0.0
        %1107 = vmatpush1.msra.mxu0 0.0
        %1108 = vmatprep.subr.mxu0 0.0
        %1109 = vmatpush1.msra.mxu0 0.0
        %1110 = vmatprep.subr.mxu0 0.0
        %1111 = vmatpush1.msra.mxu0 0.0
        %1112 = vmatprep.subr.mxu0 0.0
        %1113 = vmatpush1.msra.mxu0 0.0
        %1114 = vmatprep.subr.mxu0 0.0
        %1115 = vmatpush1.msra.mxu0 0.0
        %1116 = vmatprep.subr.mxu0 0.0
        %1117 = vmatpush1.msra.mxu0 0.0
        %1118 = vmatprep.subr.mxu0 0.0
        %1119 = vmatpush1.msra.mxu0 0.0
        %1120 = vmatprep.mubr.f32.mxu0 0.0
        %1121 = vmatmul.mubr.f32.gmra.mrb[0].mxu0 %v723
        %v1122 = vpop.f32.mrb[0].mxu0
        %v1123 = vadd.f32 %v553, %v1122
        %v1124 = vpop.f32.mrb[0].mxu0
        %v1125 = vadd.f32 %v557, %v1124
        %1126 = vdwg.mxu0
        %1127 = vmatprep.subr.mxu0 %v252
        %1128 = vmatpush1.msra.mxu0 %v251
        %1129 = vmatprep.subr.mxu0 %v291
        %1130 = vmatpush1.msra.mxu0 %v290
        %1131 = vmatprep.subr.mxu0 %v330
        %1132 = vmatpush1.msra.mxu0 %v329
        %1133 = vmatprep.subr.mxu0 %v369
        %1134 = vmatpush1.msra.mxu0 %v368
        %1135 = vmatprep.subr.mxu0 %v408
        %1136 = vmatpush1.msra.mxu0 %v407
        %1137 = vmatprep.subr.mxu0 %v447
        %1138 = vmatpush1.msra.mxu0 %v446
        %1139 = vmatprep.subr.mxu0 %v754
        %1140 = vmatpush1.msra.mxu0 %v751
        %1141 = vmatprep.subr.mxu0 0.0
        %1142 = vmatpush1.msra.mxu0 0.0
        %1143 = vmatprep.subr.mxu0 0.0
        %1144 = vmatpush1.msra.mxu0 0.0
        %1145 = vmatprep.subr.mxu0 0.0
        %1146 = vmatpush1.msra.mxu0 0.0
        %1147 = vmatprep.subr.mxu0 0.0
        %1148 = vmatpush1.msra.mxu0 0.0
        %1149 = vmatprep.subr.mxu0 0.0
        %1150 = vmatpush1.msra.mxu0 0.0
        %1151 = vmatprep.subr.mxu0 0.0
        %1152 = vmatpush1.msra.mxu0 0.0
        %1153 = vmatprep.subr.mxu0 0.0
        %1154 = vmatpush1.msra.mxu0 0.0
        %1155 = vmatprep.subr.mxu0 0.0
        %1156 = vmatpush1.msra.mxu0 0.0
        %1157 = vmatprep.subr.mxu0 0.0
        %1158 = vmatpush1.msra.mxu0 0.0
        %1159 = vmatprep.subr.mxu0 0.0
        %1160 = vmatpush1.msra.mxu0 0.0
        %1161 = vmatprep.subr.mxu0 0.0
        %1162 = vmatpush1.msra.mxu0 0.0
        %1163 = vmatprep.subr.mxu0 0.0
        %1164 = vmatpush1.msra.mxu0 0.0
        %1165 = vmatprep.subr.mxu0 0.0
        %1166 = vmatpush1.msra.mxu0 0.0
        %1167 = vmatprep.subr.mxu0 0.0
        %1168 = vmatpush1.msra.mxu0 0.0
        %1169 = vmatprep.subr.mxu0 0.0
        %1170 = vmatpush1.msra.mxu0 0.0
        %1171 = vmatprep.subr.mxu0 0.0
        %1172 = vmatpush1.msra.mxu0 0.0
        %1173 = vmatprep.subr.mxu0 0.0
        %1174 = vmatpush1.msra.mxu0 0.0
        %1175 = vmatprep.subr.mxu0 0.0
        %1176 = vmatpush1.msra.mxu0 0.0
        %1177 = vmatprep.subr.mxu0 0.0
        %1178 = vmatpush1.msra.mxu0 0.0
        %1179 = vmatprep.subr.mxu0 0.0
        %1180 = vmatpush1.msra.mxu0 0.0
        %1181 = vmatprep.subr.mxu0 0.0
        %1182 = vmatpush1.msra.mxu0 0.0
        %1183 = vmatprep.subr.mxu0 0.0
        %1184 = vmatpush1.msra.mxu0 0.0
        %1185 = vmatprep.subr.mxu0 0.0
        %1186 = vmatpush1.msra.mxu0 0.0
        %1187 = vmatprep.subr.mxu0 0.0
        %1188 = vmatpush1.msra.mxu0 0.0
        %1189 = vmatprep.subr.mxu0 0.0
        %1190 = vmatpush1.msra.mxu0 0.0
        %1191 = vmatprep.mubr.f32.mxu0 0.0
        %1192 = vmatmul.mubr.f32.gmra.mrb[0].mxu0 %v723
        %v1193 = vpop.f32.mrb[0].mxu0
        %v1194 = vadd.f32 %v561, %v1193
        %v1195 = vpop.f32.mrb[0].mxu0
        %v1196 = vadd.f32 %v565, %v1195
        %1197 = vdwg.mxu0
        %1198 = vmatprep.subr.mxu0 %v254
        %1199 = vmatpush1.msra.mxu0 %v253
        %1200 = vmatprep.subr.mxu0 %v293
        %1201 = vmatpush1.msra.mxu0 %v292
        %1202 = vmatprep.subr.mxu0 %v332
        %1203 = vmatpush1.msra.mxu0 %v331
        %1204 = vmatprep.subr.mxu0 %v371
        %1205 = vmatpush1.msra.mxu0 %v370
        %1206 = vmatprep.subr.mxu0 %v410
        %1207 = vmatpush1.msra.mxu0 %v409
        %1208 = vmatprep.subr.mxu0 %v449
        %1209 = vmatpush1.msra.mxu0 %v448
        %1210 = vmatprep.subr.mxu0 %v760
        %1211 = vmatpush1.msra.mxu0 %v757
        %1212 = vmatprep.subr.mxu0 0.0
        %1213 = vmatpush1.msra.mxu0 0.0
        %1214 = vmatprep.subr.mxu0 0.0
        %1215 = vmatpush1.msra.mxu0 0.0
        %1216 = vmatprep.subr.mxu0 0.0
        %1217 = vmatpush1.msra.mxu0 0.0
        %1218 = vmatprep.subr.mxu0 0.0
        %1219 = vmatpush1.msra.mxu0 0.0
        %1220 = vmatprep.subr.mxu0 0.0
        %1221 = vmatpush1.msra.mxu0 0.0
        %1222 = vmatprep.subr.mxu0 0.0
        %1223 = vmatpush1.msra.mxu0 0.0
        %1224 = vmatprep.subr.mxu0 0.0
        %1225 = vmatpush1.msra.mxu0 0.0
        %1226 = vmatprep.subr.mxu0 0.0
        %1227 = vmatpush1.msra.mxu0 0.0
        %1228 = vmatprep.subr.mxu0 0.0
        %1229 = vmatpush1.msra.mxu0 0.0
        %1230 = vmatprep.subr.mxu0 0.0
        %1231 = vmatpush1.msra.mxu0 0.0
        %1232 = vmatprep.subr.mxu0 0.0
        %1233 = vmatpush1.msra.mxu0 0.0
        %1234 = vmatprep.subr.mxu0 0.0
        %1235 = vmatpush1.msra.mxu0 0.0
        %1236 = vmatprep.subr.mxu0 0.0
        %1237 = vmatpush1.msra.mxu0 0.0
        %1238 = vmatprep.subr.mxu0 0.0
        %1239 = vmatpush1.msra.mxu0 0.0
        %1240 = vmatprep.subr.mxu0 0.0
        %1241 = vmatpush1.msra.mxu0 0.0
        %1242 = vmatprep.subr.mxu0 0.0
        %1243 = vmatpush1.msra.mxu0 0.0
        %1244 = vmatprep.subr.mxu0 0.0
        %1245 = vmatpush1.msra.mxu0 0.0
        %1246 = vmatprep.subr.mxu0 0.0
        %1247 = vmatpush1.msra.mxu0 0.0
        %1248 = vmatprep.subr.mxu0 0.0
        %1249 = vmatpush1.msra.mxu0 0.0
        %1250 = vmatprep.subr.mxu0 0.0
        %1251 = vmatpush1.msra.mxu0 0.0
        %1252 = vmatprep.subr.mxu0 0.0
        %1253 = vmatpush1.msra.mxu0 0.0
        %1254 = vmatprep.subr.mxu0 0.0
        %1255 = vmatpush1.msra.mxu0 0.0
        %1256 = vmatprep.subr.mxu0 0.0
        %1257 = vmatpush1.msra.mxu0 0.0
        %1258 = vmatprep.subr.mxu0 0.0
        %1259 = vmatpush1.msra.mxu0 0.0
        %1260 = vmatprep.subr.mxu0 0.0
        %1261 = vmatpush1.msra.mxu0 0.0
        %1262 = vmatprep.mubr.f32.mxu0 0.0
        %1263 = vmatmul.mubr.f32.gmra.mrb[0].mxu0 %v723
        %v1264 = vpop.f32.mrb[0].mxu0
        %v1265 = vadd.f32 %v569, %v1264
        %v1266 = vpop.f32.mrb[0].mxu0
        %v1267 = vadd.f32 %v573, %v1266
        %1268 = vdwg.mxu0
        %1269 = vmatprep.subr.mxu0 %v256
        %1270 = vmatpush1.msra.mxu0 %v255
        %1271 = vmatprep.subr.mxu0 %v295
        %1272 = vmatpush1.msra.mxu0 %v294
        %1273 = vmatprep.subr.mxu0 %v334
        %1274 = vmatpush1.msra.mxu0 %v333
        %1275 = vmatprep.subr.mxu0 %v373
        %1276 = vmatpush1.msra.mxu0 %v372
        %1277 = vmatprep.subr.mxu0 %v412
        %1278 = vmatpush1.msra.mxu0 %v411
        %1279 = vmatprep.subr.mxu0 %v451
        %1280 = vmatpush1.msra.mxu0 %v450
        %1281 = vmatprep.subr.mxu0 %v766
        %1282 = vmatpush1.msra.mxu0 %v763
        %1283 = vmatprep.subr.mxu0 0.0
        %1284 = vmatpush1.msra.mxu0 0.0
        %1285 = vmatprep.subr.mxu0 0.0
        %1286 = vmatpush1.msra.mxu0 0.0
        %1287 = vmatprep.subr.mxu0 0.0
        %1288 = vmatpush1.msra.mxu0 0.0
        %1289 = vmatprep.subr.mxu0 0.0
        %1290 = vmatpush1.msra.mxu0 0.0
        %1291 = vmatprep.subr.mxu0 0.0
        %1292 = vmatpush1.msra.mxu0 0.0
        %1293 = vmatprep.subr.mxu0 0.0
        %1294 = vmatpush1.msra.mxu0 0.0
        %1295 = vmatprep.subr.mxu0 0.0
        %1296 = vmatpush1.msra.mxu0 0.0
        %1297 = vmatprep.subr.mxu0 0.0
        %1298 = vmatpush1.msra.mxu0 0.0
        %1299 = vmatprep.subr.mxu0 0.0
        %1300 = vmatpush1.msra.mxu0 0.0
        %1301 = vmatprep.subr.mxu0 0.0
        %1302 = vmatpush1.msra.mxu0 0.0
        %1303 = vmatprep.subr.mxu0 0.0
        %1304 = vmatpush1.msra.mxu0 0.0
        %1305 = vmatprep.subr.mxu0 0.0
        %1306 = vmatpush1.msra.mxu0 0.0
        %1307 = vmatprep.subr.mxu0 0.0
        %1308 = vmatpush1.msra.mxu0 0.0
        %1309 = vmatprep.subr.mxu0 0.0
        %1310 = vmatpush1.msra.mxu0 0.0
        %1311 = vmatprep.subr.mxu0 0.0
        %1312 = vmatpush1.msra.mxu0 0.0
        %1313 = vmatprep.subr.mxu0 0.0
        %1314 = vmatpush1.msra.mxu0 0.0
        %1315 = vmatprep.subr.mxu0 0.0
        %1316 = vmatpush1.msra.mxu0 0.0
        %1317 = vmatprep.subr.mxu0 0.0
        %1318 = vmatpush1.msra.mxu0 0.0
        %1319 = vmatprep.subr.mxu0 0.0
        %1320 = vmatpush1.msra.mxu0 0.0
        %1321 = vmatprep.subr.mxu0 0.0
        %1322 = vmatpush1.msra.mxu0 0.0
        %1323 = vmatprep.subr.mxu0 0.0
        %1324 = vmatpush1.msra.mxu0 0.0
        %1325 = vmatprep.subr.mxu0 0.0
        %1326 = vmatpush1.msra.mxu0 0.0
        %1327 = vmatprep.subr.mxu0 0.0
        %1328 = vmatpush1.msra.mxu0 0.0
        %1329 = vmatprep.subr.mxu0 0.0
        %1330 = vmatpush1.msra.mxu0 0.0
        %1331 = vmatprep.subr.mxu0 0.0
        %1332 = vmatpush1.msra.mxu0 0.0
        %1333 = vmatprep.mubr.f32.mxu0 0.0
        %1334 = vmatmul.mubr.f32.gmra.mrb[0].mxu0 %v723
        %v1335 = vpop.f32.mrb[0].mxu0
        %v1336 = vadd.f32 %v577, %v1335
        %v1337 = vpop.f32.mrb[0].mxu0
        %v1338 = vadd.f32 %v581, %v1337
        %1339 = vdwg.mxu0
        %1340 = vmatprep.subr.mxu0 %v258
        %1341 = vmatpush1.msra.mxu0 %v257
        %1342 = vmatprep.subr.mxu0 %v297
        %1343 = vmatpush1.msra.mxu0 %v296
        %1344 = vmatprep.subr.mxu0 %v336
        %1345 = vmatpush1.msra.mxu0 %v335
        %1346 = vmatprep.subr.mxu0 %v375
        %1347 = vmatpush1.msra.mxu0 %v374
        %1348 = vmatprep.subr.mxu0 %v414
        %1349 = vmatpush1.msra.mxu0 %v413
        %1350 = vmatprep.subr.mxu0 %v453
        %1351 = vmatpush1.msra.mxu0 %v452
        %1352 = vmatprep.subr.mxu0 %v772
        %1353 = vmatpush1.msra.mxu0 %v769
        %1354 = vmatprep.subr.mxu0 0.0
        %1355 = vmatpush1.msra.mxu0 0.0
        %1356 = vmatprep.subr.mxu0 0.0
        %1357 = vmatpush1.msra.mxu0 0.0
        %1358 = vmatprep.subr.mxu0 0.0
        %1359 = vmatpush1.msra.mxu0 0.0
        %1360 = vmatprep.subr.mxu0 0.0
        %1361 = vmatpush1.msra.mxu0 0.0
        %1362 = vmatprep.subr.mxu0 0.0
        %1363 = vmatpush1.msra.mxu0 0.0
        %1364 = vmatprep.subr.mxu0 0.0
        %1365 = vmatpush1.msra.mxu0 0.0
        %1366 = vmatprep.subr.mxu0 0.0
        %1367 = vmatpush1.msra.mxu0 0.0
        %1368 = vmatprep.subr.mxu0 0.0
        %1369 = vmatpush1.msra.mxu0 0.0
        %1370 = vmatprep.subr.mxu0 0.0
        %1371 = vmatpush1.msra.mxu0 0.0
        %1372 = vmatprep.subr.mxu0 0.0
        %1373 = vmatpush1.msra.mxu0 0.0
        %1374 = vmatprep.subr.mxu0 0.0
        %1375 = vmatpush1.msra.mxu0 0.0
        %1376 = vmatprep.subr.mxu0 0.0
        %1377 = vmatpush1.msra.mxu0 0.0
        %1378 = vmatprep.subr.mxu0 0.0
        %1379 = vmatpush1.msra.mxu0 0.0
        %1380 = vmatprep.subr.mxu0 0.0
        %1381 = vmatpush1.msra.mxu0 0.0
        %1382 = vmatprep.subr.mxu0 0.0
        %1383 = vmatpush1.msra.mxu0 0.0
        %1384 = vmatprep.subr.mxu0 0.0
        %1385 = vmatpush1.msra.mxu0 0.0
        %1386 = vmatprep.subr.mxu0 0.0
        %1387 = vmatpush1.msra.mxu0 0.0
        %1388 = vmatprep.subr.mxu0 0.0
        %1389 = vmatpush1.msra.mxu0 0.0
        %1390 = vmatprep.subr.mxu0 0.0
        %1391 = vmatpush1.msra.mxu0 0.0
        %1392 = vmatprep.subr.mxu0 0.0
        %1393 = vmatpush1.msra.mxu0 0.0
        %1394 = vmatprep.subr.mxu0 0.0
        %1395 = vmatpush1.msra.mxu0 0.0
        %1396 = vmatprep.subr.mxu0 0.0
        %1397 = vmatpush1.msra.mxu0 0.0
        %1398 = vmatprep.subr.mxu0 0.0
        %1399 = vmatpush1.msra.mxu0 0.0
        %1400 = vmatprep.subr.mxu0 0.0
        %1401 = vmatpush1.msra.mxu0 0.0
        %1402 = vmatprep.subr.mxu0 0.0
        %1403 = vmatpush1.msra.mxu0 0.0
        %1404 = vmatprep.mubr.f32.mxu0 0.0
        %1405 = vmatmul.mubr.f32.gmra.mrb[0].mxu0 %v723
        %v1406 = vpop.f32.mrb[0].mxu0
        %v1407 = vadd.f32 %v585, %v1406
        %v1408 = vpop.f32.mrb[0].mxu0
        %v1409 = vadd.f32 %v589, %v1408
        %1410 = vdwg.mxu0
        %1411 = vmatprep.subr.mxu0 %v260
        %1412 = vmatpush1.msra.mxu0 %v259
        %1413 = vmatprep.subr.mxu0 %v299
        %1414 = vmatpush1.msra.mxu0 %v298
        %1415 = vmatprep.subr.mxu0 %v338
        %1416 = vmatpush1.msra.mxu0 %v337
        %1417 = vmatprep.subr.mxu0 %v377
        %1418 = vmatpush1.msra.mxu0 %v376
        %1419 = vmatprep.subr.mxu0 %v416
        %1420 = vmatpush1.msra.mxu0 %v415
        %1421 = vmatprep.subr.mxu0 %v455
        %1422 = vmatpush1.msra.mxu0 %v454
        %1423 = vmatprep.subr.mxu0 %v778
        %1424 = vmatpush1.msra.mxu0 %v775
        %1425 = vmatprep.subr.mxu0 0.0
        %1426 = vmatpush1.msra.mxu0 0.0
        %1427 = vmatprep.subr.mxu0 0.0
        %1428 = vmatpush1.msra.mxu0 0.0
        %1429 = vmatprep.subr.mxu0 0.0
        %1430 = vmatpush1.msra.mxu0 0.0
        %1431 = vmatprep.subr.mxu0 0.0
        %1432 = vmatpush1.msra.mxu0 0.0
        %1433 = vmatprep.subr.mxu0 0.0
        %1434 = vmatpush1.msra.mxu0 0.0
        %1435 = vmatprep.subr.mxu0 0.0
        %1436 = vmatpush1.msra.mxu0 0.0
        %1437 = vmatprep.subr.mxu0 0.0
        %1438 = vmatpush1.msra.mxu0 0.0
        %1439 = vmatprep.subr.mxu0 0.0
        %1440 = vmatpush1.msra.mxu0 0.0
        %1441 = vmatprep.subr.mxu0 0.0
        %1442 = vmatpush1.msra.mxu0 0.0
        %1443 = vmatprep.subr.mxu0 0.0
        %1444 = vmatpush1.msra.mxu0 0.0
        %1445 = vmatprep.subr.mxu0 0.0
        %1446 = vmatpush1.msra.mxu0 0.0
        %1447 = vmatprep.subr.mxu0 0.0
        %1448 = vmatpush1.msra.mxu0 0.0
        %1449 = vmatprep.subr.mxu0 0.0
        %1450 = vmatpush1.msra.mxu0 0.0
        %1451 = vmatprep.subr.mxu0 0.0
        %1452 = vmatpush1.msra.mxu0 0.0
        %1453 = vmatprep.subr.mxu0 0.0
        %1454 = vmatpush1.msra.mxu0 0.0
        %1455 = vmatprep.subr.mxu0 0.0
        %1456 = vmatpush1.msra.mxu0 0.0
        %1457 = vmatprep.subr.mxu0 0.0
        %1458 = vmatpush1.msra.mxu0 0.0
        %1459 = vmatprep.subr.mxu0 0.0
        %1460 = vmatpush1.msra.mxu0 0.0
        %1461 = vmatprep.subr.mxu0 0.0
        %1462 = vmatpush1.msra.mxu0 0.0
        %1463 = vmatprep.subr.mxu0 0.0
        %1464 = vmatpush1.msra.mxu0 0.0
        %1465 = vmatprep.subr.mxu0 0.0
        %1466 = vmatpush1.msra.mxu0 0.0
        %1467 = vmatprep.subr.mxu0 0.0
        %1468 = vmatpush1.msra.mxu0 0.0
        %1469 = vmatprep.subr.mxu0 0.0
        %1470 = vmatpush1.msra.mxu0 0.0
        %1471 = vmatprep.subr.mxu0 0.0
        %1472 = vmatpush1.msra.mxu0 0.0
        %1473 = vmatprep.subr.mxu0 0.0
        %1474 = vmatpush1.msra.mxu0 0.0
        %1475 = vmatprep.mubr.f32.mxu0 0.0
        %1476 = vmatmul.mubr.f32.gmra.mrb[0].mxu0 %v723
        %v1477 = vpop.f32.mrb[0].mxu0
        %v1478 = vadd.f32 %v593, %v1477
        %v1479 = vpop.f32.mrb[0].mxu0
        %v1480 = vadd.f32 %v597, %v1479
        %1481 = vdwg.mxu0
        %1482 = vmatprep.subr.mxu0 %v262
        %1483 = vmatpush1.msra.mxu0 %v261
        %1484 = vmatprep.subr.mxu0 %v301
        %1485 = vmatpush1.msra.mxu0 %v300
        %1486 = vmatprep.subr.mxu0 %v340
        %1487 = vmatpush1.msra.mxu0 %v339
        %1488 = vmatprep.subr.mxu0 %v379
        %1489 = vmatpush1.msra.mxu0 %v378
        %1490 = vmatprep.subr.mxu0 %v418
        %1491 = vmatpush1.msra.mxu0 %v417
        %1492 = vmatprep.subr.mxu0 %v457
        %1493 = vmatpush1.msra.mxu0 %v456
        %1494 = vmatprep.subr.mxu0 %v784
        %1495 = vmatpush1.msra.mxu0 %v781
        %1496 = vmatprep.subr.mxu0 0.0
        %1497 = vmatpush1.msra.mxu0 0.0
        %1498 = vmatprep.subr.mxu0 0.0
        %1499 = vmatpush1.msra.mxu0 0.0
        %1500 = vmatprep.subr.mxu0 0.0
        %1501 = vmatpush1.msra.mxu0 0.0
        %1502 = vmatprep.subr.mxu0 0.0
        %1503 = vmatpush1.msra.mxu0 0.0
        %1504 = vmatprep.subr.mxu0 0.0
        %1505 = vmatpush1.msra.mxu0 0.0
        %1506 = vmatprep.subr.mxu0 0.0
        %1507 = vmatpush1.msra.mxu0 0.0
        %1508 = vmatprep.subr.mxu0 0.0
        %1509 = vmatpush1.msra.mxu0 0.0
        %1510 = vmatprep.subr.mxu0 0.0
        %1511 = vmatpush1.msra.mxu0 0.0
        %1512 = vmatprep.subr.mxu0 0.0
        %1513 = vmatpush1.msra.mxu0 0.0
        %1514 = vmatprep.subr.mxu0 0.0
        %1515 = vmatpush1.msra.mxu0 0.0
        %1516 = vmatprep.subr.mxu0 0.0
        %1517 = vmatpush1.msra.mxu0 0.0
        %1518 = vmatprep.subr.mxu0 0.0
        %1519 = vmatpush1.msra.mxu0 0.0
        %1520 = vmatprep.subr.mxu0 0.0
        %1521 = vmatpush1.msra.mxu0 0.0
        %1522 = vmatprep.subr.mxu0 0.0
        %1523 = vmatpush1.msra.mxu0 0.0
        %1524 = vmatprep.subr.mxu0 0.0
        %1525 = vmatpush1.msra.mxu0 0.0
        %1526 = vmatprep.subr.mxu0 0.0
        %1527 = vmatpush1.msra.mxu0 0.0
        %1528 = vmatprep.subr.mxu0 0.0
        %1529 = vmatpush1.msra.mxu0 0.0
        %1530 = vmatprep.subr.mxu0 0.0
        %1531 = vmatpush1.msra.mxu0 0.0
        %1532 = vmatprep.subr.mxu0 0.0
        %1533 = vmatpush1.msra.mxu0 0.0
        %1534 = vmatprep.subr.mxu0 0.0
        %1535 = vmatpush1.msra.mxu0 0.0
        %1536 = vmatprep.subr.mxu0 0.0
        %1537 = vmatpush1.msra.mxu0 0.0
        %1538 = vmatprep.subr.mxu0 0.0
        %1539 = vmatpush1.msra.mxu0 0.0
        %1540 = vmatprep.subr.mxu0 0.0
        %1541 = vmatpush1.msra.mxu0 0.0
        %1542 = vmatprep.subr.mxu0 0.0
        %1543 = vmatpush1.msra.mxu0 0.0
        %1544 = vmatprep.subr.mxu0 0.0
        %1545 = vmatpush1.msra.mxu0 0.0
        %1546 = vmatprep.mubr.f32.mxu0 0.0
        %1547 = vmatmul.mubr.f32.gmra.mrb[0].mxu0 %v723
        %v1548 = vpop.f32.mrb[0].mxu0
        %v1549 = vadd.f32 %v601, %v1548
        %v1550 = vpop.f32.mrb[0].mxu0
        %v1551 = vadd.f32 %v605, %v1550
        %1552 = vdwg.mxu0
        %1553 = vmatprep.subr.mxu0 %v264
        %1554 = vmatpush1.msra.mxu0 %v263
        %1555 = vmatprep.subr.mxu0 %v303
        %1556 = vmatpush1.msra.mxu0 %v302
        %1557 = vmatprep.subr.mxu0 %v342
        %1558 = vmatpush1.msra.mxu0 %v341
        %1559 = vmatprep.subr.mxu0 %v381
        %1560 = vmatpush1.msra.mxu0 %v380
        %1561 = vmatprep.subr.mxu0 %v420
        %1562 = vmatpush1.msra.mxu0 %v419
        %1563 = vmatprep.subr.mxu0 %v459
        %1564 = vmatpush1.msra.mxu0 %v458
        %1565 = vmatprep.subr.mxu0 %v790
        %1566 = vmatpush1.msra.mxu0 %v787
        %1567 = vmatprep.subr.mxu0 0.0
        %1568 = vmatpush1.msra.mxu0 0.0
        %1569 = vmatprep.subr.mxu0 0.0
        %1570 = vmatpush1.msra.mxu0 0.0
        %1571 = vmatprep.subr.mxu0 0.0
        %1572 = vmatpush1.msra.mxu0 0.0
        %1573 = vmatprep.subr.mxu0 0.0
        %1574 = vmatpush1.msra.mxu0 0.0
        %1575 = vmatprep.subr.mxu0 0.0
        %1576 = vmatpush1.msra.mxu0 0.0
        %1577 = vmatprep.subr.mxu0 0.0
        %1578 = vmatpush1.msra.mxu0 0.0
        %1579 = vmatprep.subr.mxu0 0.0
        %1580 = vmatpush1.msra.mxu0 0.0
        %1581 = vmatprep.subr.mxu0 0.0
        %1582 = vmatpush1.msra.mxu0 0.0
        %1583 = vmatprep.subr.mxu0 0.0
        %1584 = vmatpush1.msra.mxu0 0.0
        %1585 = vmatprep.subr.mxu0 0.0
        %1586 = vmatpush1.msra.mxu0 0.0
        %1587 = vmatprep.subr.mxu0 0.0
        %1588 = vmatpush1.msra.mxu0 0.0
        %1589 = vmatprep.subr.mxu0 0.0
        %1590 = vmatpush1.msra.mxu0 0.0
        %1591 = vmatprep.subr.mxu0 0.0
        %1592 = vmatpush1.msra.mxu0 0.0
        %1593 = vmatprep.subr.mxu0 0.0
        %1594 = vmatpush1.msra.mxu0 0.0
        %1595 = vmatprep.subr.mxu0 0.0
        %1596 = vmatpush1.msra.mxu0 0.0
        %1597 = vmatprep.subr.mxu0 0.0
        %1598 = vmatpush1.msra.mxu0 0.0
        %1599 = vmatprep.subr.mxu0 0.0
        %1600 = vmatpush1.msra.mxu0 0.0
        %1601 = vmatprep.subr.mxu0 0.0
        %1602 = vmatpush1.msra.mxu0 0.0
        %1603 = vmatprep.subr.mxu0 0.0
        %1604 = vmatpush1.msra.mxu0 0.0
        %1605 = vmatprep.subr.mxu0 0.0
        %1606 = vmatpush1.msra.mxu0 0.0
        %1607 = vmatprep.subr.mxu0 0.0
        %1608 = vmatpush1.msra.mxu0 0.0
        %1609 = vmatprep.subr.mxu0 0.0
        %1610 = vmatpush1.msra.mxu0 0.0
        %1611 = vmatprep.subr.mxu0 0.0
        %1612 = vmatpush1.msra.mxu0 0.0
        %1613 = vmatprep.subr.mxu0 0.0
        %1614 = vmatpush1.msra.mxu0 0.0
        %1615 = vmatprep.subr.mxu0 0.0
        %1616 = vmatpush1.msra.mxu0 0.0
        %1617 = vmatprep.mubr.f32.mxu0 0.0
        %1618 = vmatmul.mubr.f32.gmra.mrb[0].mxu0 %v723
        %v1619 = vpop.f32.mrb[0].mxu0
        %v1620 = vadd.f32 %v609, %v1619
        %v1621 = vpop.f32.mrb[0].mxu0
        %v1622 = vadd.f32 %v613, %v1621
        %1623 = vdwg.mxu0
        %1624 = vmatprep.subr.mxu0 %v266
        %1625 = vmatpush1.msra.mxu0 %v265
        %1626 = vmatprep.subr.mxu0 %v305
        %1627 = vmatpush1.msra.mxu0 %v304
        %1628 = vmatprep.subr.mxu0 %v344
        %1629 = vmatpush1.msra.mxu0 %v343
        %1630 = vmatprep.subr.mxu0 %v383
        %1631 = vmatpush1.msra.mxu0 %v382
        %1632 = vmatprep.subr.mxu0 %v422
        %1633 = vmatpush1.msra.mxu0 %v421
        %1634 = vmatprep.subr.mxu0 %v461
        %1635 = vmatpush1.msra.mxu0 %v460
        %1636 = vmatprep.subr.mxu0 %v796
        %1637 = vmatpush1.msra.mxu0 %v793
        %1638 = vmatprep.subr.mxu0 0.0
        %1639 = vmatpush1.msra.mxu0 0.0
        %1640 = vmatprep.subr.mxu0 0.0
        %1641 = vmatpush1.msra.mxu0 0.0
        %1642 = vmatprep.subr.mxu0 0.0
        %1643 = vmatpush1.msra.mxu0 0.0
        %1644 = vmatprep.subr.mxu0 0.0
        %1645 = vmatpush1.msra.mxu0 0.0
        %1646 = vmatprep.subr.mxu0 0.0
        %1647 = vmatpush1.msra.mxu0 0.0
        %1648 = vmatprep.subr.mxu0 0.0
        %1649 = vmatpush1.msra.mxu0 0.0
        %1650 = vmatprep.subr.mxu0 0.0
        %1651 = vmatpush1.msra.mxu0 0.0
        %1652 = vmatprep.subr.mxu0 0.0
        %1653 = vmatpush1.msra.mxu0 0.0
        %1654 = vmatprep.subr.mxu0 0.0
        %1655 = vmatpush1.msra.mxu0 0.0
        %1656 = vmatprep.subr.mxu0 0.0
        %1657 = vmatpush1.msra.mxu0 0.0
        %1658 = vmatprep.subr.mxu0 0.0
        %1659 = vmatpush1.msra.mxu0 0.0
        %1660 = vmatprep.subr.mxu0 0.0
        %1661 = vmatpush1.msra.mxu0 0.0
        %1662 = vmatprep.subr.mxu0 0.0
        %1663 = vmatpush1.msra.mxu0 0.0
        %1664 = vmatprep.subr.mxu0 0.0
        %1665 = vmatpush1.msra.mxu0 0.0
        %1666 = vmatprep.subr.mxu0 0.0
        %1667 = vmatpush1.msra.mxu0 0.0
        %1668 = vmatprep.subr.mxu0 0.0
        %1669 = vmatpush1.msra.mxu0 0.0
        %1670 = vmatprep.subr.mxu0 0.0
        %1671 = vmatpush1.msra.mxu0 0.0
        %1672 = vmatprep.subr.mxu0 0.0
        %1673 = vmatpush1.msra.mxu0 0.0
        %1674 = vmatprep.subr.mxu0 0.0
        %1675 = vmatpush1.msra.mxu0 0.0
        %1676 = vmatprep.subr.mxu0 0.0
        %1677 = vmatpush1.msra.mxu0 0.0
        %1678 = vmatprep.subr.mxu0 0.0
        %1679 = vmatpush1.msra.mxu0 0.0
        %1680 = vmatprep.subr.mxu0 0.0
        %1681 = vmatpush1.msra.mxu0 0.0
        %1682 = vmatprep.subr.mxu0 0.0
        %1683 = vmatpush1.msra.mxu0 0.0
        %1684 = vmatprep.subr.mxu0 0.0
        %1685 = vmatpush1.msra.mxu0 0.0
        %1686 = vmatprep.subr.mxu0 0.0
        %1687 = vmatpush1.msra.mxu0 0.0
        %1688 = vmatprep.mubr.f32.mxu0 0.0
        %1689 = vmatmul.mubr.f32.gmra.mrb[0].mxu0 %v723
        %v1690 = vpop.f32.mrb[0].mxu0
        %v1691 = vadd.f32 %v617, %v1690
        %v1692 = vpop.f32.mrb[0].mxu0
        %v1693 = vadd.f32 %v621, %v1692
        %1694 = vdwg.mxu0
        %1695 = vmatprep.subr.mxu0 %v268
        %1696 = vmatpush1.msra.mxu0 %v267
        %1697 = vmatprep.subr.mxu0 %v307
        %1698 = vmatpush1.msra.mxu0 %v306
        %1699 = vmatprep.subr.mxu0 %v346
        %1700 = vmatpush1.msra.mxu0 %v345
        %1701 = vmatprep.subr.mxu0 %v385
        %1702 = vmatpush1.msra.mxu0 %v384
        %1703 = vmatprep.subr.mxu0 %v424
        %1704 = vmatpush1.msra.mxu0 %v423
        %1705 = vmatprep.subr.mxu0 %v463
        %1706 = vmatpush1.msra.mxu0 %v462
        %1707 = vmatprep.subr.mxu0 %v802
        %1708 = vmatpush1.msra.mxu0 %v799
        %1709 = vmatprep.subr.mxu0 0.0
        %1710 = vmatpush1.msra.mxu0 0.0
        %1711 = vmatprep.subr.mxu0 0.0
        %1712 = vmatpush1.msra.mxu0 0.0
        %1713 = vmatprep.subr.mxu0 0.0
        %1714 = vmatpush1.msra.mxu0 0.0
        %1715 = vmatprep.subr.mxu0 0.0
        %1716 = vmatpush1.msra.mxu0 0.0
        %1717 = vmatprep.subr.mxu0 0.0
        %1718 = vmatpush1.msra.mxu0 0.0
        %1719 = vmatprep.subr.mxu0 0.0
        %1720 = vmatpush1.msra.mxu0 0.0
        %1721 = vmatprep.subr.mxu0 0.0
        %1722 = vmatpush1.msra.mxu0 0.0
        %1723 = vmatprep.subr.mxu0 0.0
        %1724 = vmatpush1.msra.mxu0 0.0
        %1725 = vmatprep.subr.mxu0 0.0
        %1726 = vmatpush1.msra.mxu0 0.0
        %1727 = vmatprep.subr.mxu0 0.0
        %1728 = vmatpush1.msra.mxu0 0.0
        %1729 = vmatprep.subr.mxu0 0.0
        %1730 = vmatpush1.msra.mxu0 0.0
        %1731 = vmatprep.subr.mxu0 0.0
        %1732 = vmatpush1.msra.mxu0 0.0
        %1733 = vmatprep.subr.mxu0 0.0
        %1734 = vmatpush1.msra.mxu0 0.0
        %1735 = vmatprep.subr.mxu0 0.0
        %1736 = vmatpush1.msra.mxu0 0.0
        %1737 = vmatprep.subr.mxu0 0.0
        %1738 = vmatpush1.msra.mxu0 0.0
        %1739 = vmatprep.subr.mxu0 0.0
        %1740 = vmatpush1.msra.mxu0 0.0
        %1741 = vmatprep.subr.mxu0 0.0
        %1742 = vmatpush1.msra.mxu0 0.0
        %1743 = vmatprep.subr.mxu0 0.0
        %1744 = vmatpush1.msra.mxu0 0.0
        %1745 = vmatprep.subr.mxu0 0.0
        %1746 = vmatpush1.msra.mxu0 0.0
        %1747 = vmatprep.subr.mxu0 0.0
        %1748 = vmatpush1.msra.mxu0 0.0
        %1749 = vmatprep.subr.mxu0 0.0
        %1750 = vmatpush1.msra.mxu0 0.0
        %1751 = vmatprep.subr.mxu0 0.0
        %1752 = vmatpush1.msra.mxu0 0.0
        %1753 = vmatprep.subr.mxu0 0.0
        %1754 = vmatpush1.msra.mxu0 0.0
        %1755 = vmatprep.subr.mxu0 0.0
        %1756 = vmatpush1.msra.mxu0 0.0
        %1757 = vmatprep.subr.mxu0 0.0
        %1758 = vmatpush1.msra.mxu0 0.0
        %1759 = vmatprep.mubr.f32.mxu0 0.0
        %1760 = vmatmul.mubr.f32.gmra.mrb[0].mxu0 %v723
        %v1761 = vpop.f32.mrb[0].mxu0
        %v1762 = vadd.f32 %v625, %v1761
        %v1763 = vpop.f32.mrb[0].mxu0
        %v1764 = vadd.f32 %v629, %v1763
        %1765 = vdwg.mxu0
        %1766 = vmatprep.subr.mxu0 %v270
        %1767 = vmatpush1.msra.mxu0 %v269
        %1768 = vmatprep.subr.mxu0 %v309
        %1769 = vmatpush1.msra.mxu0 %v308
        %1770 = vmatprep.subr.mxu0 %v348
        %1771 = vmatpush1.msra.mxu0 %v347
        %1772 = vmatprep.subr.mxu0 %v387
        %1773 = vmatpush1.msra.mxu0 %v386
        %1774 = vmatprep.subr.mxu0 %v426
        %1775 = vmatpush1.msra.mxu0 %v425
        %1776 = vmatprep.subr.mxu0 %v465
        %1777 = vmatpush1.msra.mxu0 %v464
        %1778 = vmatprep.subr.mxu0 %v808
        %1779 = vmatpush1.msra.mxu0 %v805
        %1780 = vmatprep.subr.mxu0 0.0
        %1781 = vmatpush1.msra.mxu0 0.0
        %1782 = vmatprep.subr.mxu0 0.0
        %1783 = vmatpush1.msra.mxu0 0.0
        %1784 = vmatprep.subr.mxu0 0.0
        %1785 = vmatpush1.msra.mxu0 0.0
        %1786 = vmatprep.subr.mxu0 0.0
        %1787 = vmatpush1.msra.mxu0 0.0
        %1788 = vmatprep.subr.mxu0 0.0
        %1789 = vmatpush1.msra.mxu0 0.0
        %1790 = vmatprep.subr.mxu0 0.0
        %1791 = vmatpush1.msra.mxu0 0.0
        %1792 = vmatprep.subr.mxu0 0.0
        %1793 = vmatpush1.msra.mxu0 0.0
        %1794 = vmatprep.subr.mxu0 0.0
        %1795 = vmatpush1.msra.mxu0 0.0
        %1796 = vmatprep.subr.mxu0 0.0
        %1797 = vmatpush1.msra.mxu0 0.0
        %1798 = vmatprep.subr.mxu0 0.0
        %1799 = vmatpush1.msra.mxu0 0.0
        %1800 = vmatprep.subr.mxu0 0.0
        %1801 = vmatpush1.msra.mxu0 0.0
        %1802 = vmatprep.subr.mxu0 0.0
        %1803 = vmatpush1.msra.mxu0 0.0
        %1804 = vmatprep.subr.mxu0 0.0
        %1805 = vmatpush1.msra.mxu0 0.0
        %1806 = vmatprep.subr.mxu0 0.0
        %1807 = vmatpush1.msra.mxu0 0.0
        %1808 = vmatprep.subr.mxu0 0.0
        %1809 = vmatpush1.msra.mxu0 0.0
        %1810 = vmatprep.subr.mxu0 0.0
        %1811 = vmatpush1.msra.mxu0 0.0
        %1812 = vmatprep.subr.mxu0 0.0
        %1813 = vmatpush1.msra.mxu0 0.0
        %1814 = vmatprep.subr.mxu0 0.0
        %1815 = vmatpush1.msra.mxu0 0.0
        %1816 = vmatprep.subr.mxu0 0.0
        %1817 = vmatpush1.msra.mxu0 0.0
        %1818 = vmatprep.subr.mxu0 0.0
        %1819 = vmatpush1.msra.mxu0 0.0
        %1820 = vmatprep.subr.mxu0 0.0
        %1821 = vmatpush1.msra.mxu0 0.0
        %1822 = vmatprep.subr.mxu0 0.0
        %1823 = vmatpush1.msra.mxu0 0.0
        %1824 = vmatprep.subr.mxu0 0.0
        %1825 = vmatpush1.msra.mxu0 0.0
        %1826 = vmatprep.subr.mxu0 0.0
        %1827 = vmatpush1.msra.mxu0 0.0
        %1828 = vmatprep.subr.mxu0 0.0
        %1829 = vmatpush1.msra.mxu0 0.0
        %1830 = vmatprep.mubr.f32.mxu0 0.0
        %1831 = vmatmul.mubr.f32.gmra.mrb[0].mxu0 %v723
        %v1832 = vpop.f32.mrb[0].mxu0
        %v1833 = vadd.f32 %v633, %v1832
        %v1834 = vpop.f32.mrb[0].mxu0
        %v1835 = vadd.f32 %v637, %v1834
        %1836 = vdwg.mxu0
        %1837 = vmatprep.subr.mxu0 %v272
        %1838 = vmatpush1.msra.mxu0 %v271
        %1839 = vmatprep.subr.mxu0 %v311
        %1840 = vmatpush1.msra.mxu0 %v310
        %1841 = vmatprep.subr.mxu0 %v350
        %1842 = vmatpush1.msra.mxu0 %v349
        %1843 = vmatprep.subr.mxu0 %v389
        %1844 = vmatpush1.msra.mxu0 %v388
        %1845 = vmatprep.subr.mxu0 %v428
        %1846 = vmatpush1.msra.mxu0 %v427
        %1847 = vmatprep.subr.mxu0 %v467
        %1848 = vmatpush1.msra.mxu0 %v466
        %1849 = vmatprep.subr.mxu0 %v814
        %1850 = vmatpush1.msra.mxu0 %v811
        %1851 = vmatprep.subr.mxu0 0.0
        %1852 = vmatpush1.msra.mxu0 0.0
        %1853 = vmatprep.subr.mxu0 0.0
        %1854 = vmatpush1.msra.mxu0 0.0
        %1855 = vmatprep.subr.mxu0 0.0
        %1856 = vmatpush1.msra.mxu0 0.0
        %1857 = vmatprep.subr.mxu0 0.0
        %1858 = vmatpush1.msra.mxu0 0.0
        %1859 = vmatprep.subr.mxu0 0.0
        %1860 = vmatpush1.msra.mxu0 0.0
        %1861 = vmatprep.subr.mxu0 0.0
        %1862 = vmatpush1.msra.mxu0 0.0
        %1863 = vmatprep.subr.mxu0 0.0
        %1864 = vmatpush1.msra.mxu0 0.0
        %1865 = vmatprep.subr.mxu0 0.0
        %1866 = vmatpush1.msra.mxu0 0.0
        %1867 = vmatprep.subr.mxu0 0.0
        %1868 = vmatpush1.msra.mxu0 0.0
        %1869 = vmatprep.subr.mxu0 0.0
        %1870 = vmatpush1.msra.mxu0 0.0
        %1871 = vmatprep.subr.mxu0 0.0
        %1872 = vmatpush1.msra.mxu0 0.0
        %1873 = vmatprep.subr.mxu0 0.0
        %1874 = vmatpush1.msra.mxu0 0.0
        %1875 = vmatprep.subr.mxu0 0.0
        %1876 = vmatpush1.msra.mxu0 0.0
        %1877 = vmatprep.subr.mxu0 0.0
        %1878 = vmatpush1.msra.mxu0 0.0
        %1879 = vmatprep.subr.mxu0 0.0
        %1880 = vmatpush1.msra.mxu0 0.0
        %1881 = vmatprep.subr.mxu0 0.0
        %1882 = vmatpush1.msra.mxu0 0.0
        %1883 = vmatprep.subr.mxu0 0.0
        %1884 = vmatpush1.msra.mxu0 0.0
        %1885 = vmatprep.subr.mxu0 0.0
        %1886 = vmatpush1.msra.mxu0 0.0
        %1887 = vmatprep.subr.mxu0 0.0
        %1888 = vmatpush1.msra.mxu0 0.0
        %1889 = vmatprep.subr.mxu0 0.0
        %1890 = vmatpush1.msra.mxu0 0.0
        %1891 = vmatprep.subr.mxu0 0.0
        %1892 = vmatpush1.msra.mxu0 0.0
        %1893 = vmatprep.subr.mxu0 0.0
        %1894 = vmatpush1.msra.mxu0 0.0
        %1895 = vmatprep.subr.mxu0 0.0
        %1896 = vmatpush1.msra.mxu0 0.0
        %1897 = vmatprep.subr.mxu0 0.0
        %1898 = vmatpush1.msra.mxu0 0.0
        %1899 = vmatprep.subr.mxu0 0.0
        %1900 = vmatpush1.msra.mxu0 0.0
        %1901 = vmatprep.mubr.f32.mxu0 0.0
        %1902 = vmatmul.mubr.f32.gmra.mrb[0].mxu0 %v723
        %v1903 = vpop.f32.mrb[0].mxu0
        %v1904 = vadd.f32 %v641, %v1903
        %v1905 = vpop.f32.mrb[0].mxu0
        %v1906 = vadd.f32 %v645, %v1905
        %1907 = vdwg.mxu0
        %1908 = vmatprep.subr.mxu0 %v274
        %1909 = vmatpush1.msra.mxu0 %v273
        %1910 = vmatprep.subr.mxu0 %v313
        %1911 = vmatpush1.msra.mxu0 %v312
        %1912 = vmatprep.subr.mxu0 %v352
        %1913 = vmatpush1.msra.mxu0 %v351
        %1914 = vmatprep.subr.mxu0 %v391
        %1915 = vmatpush1.msra.mxu0 %v390
        %1916 = vmatprep.subr.mxu0 %v430
        %1917 = vmatpush1.msra.mxu0 %v429
        %1918 = vmatprep.subr.mxu0 %v469
        %1919 = vmatpush1.msra.mxu0 %v468
        %1920 = vmatprep.subr.mxu0 %v820
        %1921 = vmatpush1.msra.mxu0 %v817
        %1922 = vmatprep.subr.mxu0 0.0
        %1923 = vmatpush1.msra.mxu0 0.0
        %1924 = vmatprep.subr.mxu0 0.0
        %1925 = vmatpush1.msra.mxu0 0.0
        %1926 = vmatprep.subr.mxu0 0.0
        %1927 = vmatpush1.msra.mxu0 0.0
        %1928 = vmatprep.subr.mxu0 0.0
        %1929 = vmatpush1.msra.mxu0 0.0
        %1930 = vmatprep.subr.mxu0 0.0
        %1931 = vmatpush1.msra.mxu0 0.0
        %1932 = vmatprep.subr.mxu0 0.0
        %1933 = vmatpush1.msra.mxu0 0.0
        %1934 = vmatprep.subr.mxu0 0.0
        %1935 = vmatpush1.msra.mxu0 0.0
        %1936 = vmatprep.subr.mxu0 0.0
        %1937 = vmatpush1.msra.mxu0 0.0
        %1938 = vmatprep.subr.mxu0 0.0
        %1939 = vmatpush1.msra.mxu0 0.0
        %1940 = vmatprep.subr.mxu0 0.0
        %1941 = vmatpush1.msra.mxu0 0.0
        %1942 = vmatprep.subr.mxu0 0.0
        %1943 = vmatpush1.msra.mxu0 0.0
        %1944 = vmatprep.subr.mxu0 0.0
        %1945 = vmatpush1.msra.mxu0 0.0
        %1946 = vmatprep.subr.mxu0 0.0
        %1947 = vmatpush1.msra.mxu0 0.0
        %1948 = vmatprep.subr.mxu0 0.0
        %1949 = vmatpush1.msra.mxu0 0.0
        %1950 = vmatprep.subr.mxu0 0.0
        %1951 = vmatpush1.msra.mxu0 0.0
        %1952 = vmatprep.subr.mxu0 0.0
        %1953 = vmatpush1.msra.mxu0 0.0
        %1954 = vmatprep.subr.mxu0 0.0
        %1955 = vmatpush1.msra.mxu0 0.0
        %1956 = vmatprep.subr.mxu0 0.0
        %1957 = vmatpush1.msra.mxu0 0.0
        %1958 = vmatprep.subr.mxu0 0.0
        %1959 = vmatpush1.msra.mxu0 0.0
        %1960 = vmatprep.subr.mxu0 0.0
        %1961 = vmatpush1.msra.mxu0 0.0
        %1962 = vmatprep.subr.mxu0 0.0
        %1963 = vmatpush1.msra.mxu0 0.0
        %1964 = vmatprep.subr.mxu0 0.0
        %1965 = vmatpush1.msra.mxu0 0.0
        %1966 = vmatprep.subr.mxu0 0.0
        %1967 = vmatpush1.msra.mxu0 0.0
        %1968 = vmatprep.subr.mxu0 0.0
        %1969 = vmatpush1.msra.mxu0 0.0
        %1970 = vmatprep.subr.mxu0 0.0
        %1971 = vmatpush1.msra.mxu0 0.0
        %1972 = vmatprep.mubr.f32.mxu0 0.0
        %1973 = vmatmul.mubr.f32.gmra.mrb[0].mxu0 %v723
        %v1974 = vpop.f32.mrb[0].mxu0
        %v1975 = vadd.f32 %v649, %v1974
        %v1976 = vpop.f32.mrb[0].mxu0
        %v1977 = vadd.f32 %v653, %v1976
        %1978 = vdwg.mxu0
        %1979 = vmatprep.subr.mxu0 %v276
        %1980 = vmatpush1.msra.mxu0 %v275
        %1981 = vmatprep.subr.mxu0 %v315
        %1982 = vmatpush1.msra.mxu0 %v314
        %1983 = vmatprep.subr.mxu0 %v354
        %1984 = vmatpush1.msra.mxu0 %v353
        %1985 = vmatprep.subr.mxu0 %v393
        %1986 = vmatpush1.msra.mxu0 %v392
        %1987 = vmatprep.subr.mxu0 %v432
        %1988 = vmatpush1.msra.mxu0 %v431
        %1989 = vmatprep.subr.mxu0 %v471
        %1990 = vmatpush1.msra.mxu0 %v470
        %1991 = vmatprep.subr.mxu0 %v826
        %1992 = vmatpush1.msra.mxu0 %v823
        %1993 = vmatprep.subr.mxu0 0.0
        %1994 = vmatpush1.msra.mxu0 0.0
        %1995 = vmatprep.subr.mxu0 0.0
        %1996 = vmatpush1.msra.mxu0 0.0
        %1997 = vmatprep.subr.mxu0 0.0
        %1998 = vmatpush1.msra.mxu0 0.0
        %1999 = vmatprep.subr.mxu0 0.0
        %2000 = vmatpush1.msra.mxu0 0.0
        %2001 = vmatprep.subr.mxu0 0.0
        %2002 = vmatpush1.msra.mxu0 0.0
        %2003 = vmatprep.subr.mxu0 0.0
        %2004 = vmatpush1.msra.mxu0 0.0
        %2005 = vmatprep.subr.mxu0 0.0
        %2006 = vmatpush1.msra.mxu0 0.0
        %2007 = vmatprep.subr.mxu0 0.0
        %2008 = vmatpush1.msra.mxu0 0.0
        %2009 = vmatprep.subr.mxu0 0.0
        %2010 = vmatpush1.msra.mxu0 0.0
        %2011 = vmatprep.subr.mxu0 0.0
        %2012 = vmatpush1.msra.mxu0 0.0
        %2013 = vmatprep.subr.mxu0 0.0
        %2014 = vmatpush1.msra.mxu0 0.0
        %2015 = vmatprep.subr.mxu0 0.0
        %2016 = vmatpush1.msra.mxu0 0.0
        %2017 = vmatprep.subr.mxu0 0.0
        %2018 = vmatpush1.msra.mxu0 0.0
        %2019 = vmatprep.subr.mxu0 0.0
        %2020 = vmatpush1.msra.mxu0 0.0
        %2021 = vmatprep.subr.mxu0 0.0
        %2022 = vmatpush1.msra.mxu0 0.0
        %2023 = vmatprep.subr.mxu0 0.0
        %2024 = vmatpush1.msra.mxu0 0.0
        %2025 = vmatprep.subr.mxu0 0.0
        %2026 = vmatpush1.msra.mxu0 0.0
        %2027 = vmatprep.subr.mxu0 0.0
        %2028 = vmatpush1.msra.mxu0 0.0
        %2029 = vmatprep.subr.mxu0 0.0
        %2030 = vmatpush1.msra.mxu0 0.0
        %2031 = vmatprep.subr.mxu0 0.0
        %2032 = vmatpush1.msra.mxu0 0.0
        %2033 = vmatprep.subr.mxu0 0.0
        %2034 = vmatpush1.msra.mxu0 0.0
        %2035 = vmatprep.subr.mxu0 0.0
        %2036 = vmatpush1.msra.mxu0 0.0
        %2037 = vmatprep.subr.mxu0 0.0
        %2038 = vmatpush1.msra.mxu0 0.0
        %2039 = vmatprep.subr.mxu0 0.0
        %2040 = vmatpush1.msra.mxu0 0.0
        %2041 = vmatprep.subr.mxu0 0.0
        %2042 = vmatpush1.msra.mxu0 0.0
        %2043 = vmatprep.mubr.f32.mxu0 0.0
        %2044 = vmatmul.mubr.f32.gmra.mrb[0].mxu0 %v723
        %v2045 = vpop.f32.mrb[0].mxu0
        %v2046 = vadd.f32 %v657, %v2045
        %v2047 = vpop.f32.mrb[0].mxu0
        %v2048 = vadd.f32 %v661, %v2047
        %2049 = vdwg.mxu0
        %2050 = vmatprep.subr.mxu0 %v278
        %2051 = vmatpush1.msra.mxu0 %v277
        %2052 = vmatprep.subr.mxu0 %v317
        %2053 = vmatpush1.msra.mxu0 %v316
        %2054 = vmatprep.subr.mxu0 %v356
        %2055 = vmatpush1.msra.mxu0 %v355
        %2056 = vmatprep.subr.mxu0 %v395
        %2057 = vmatpush1.msra.mxu0 %v394
        %2058 = vmatprep.subr.mxu0 %v434
        %2059 = vmatpush1.msra.mxu0 %v433
        %2060 = vmatprep.subr.mxu0 %v473
        %2061 = vmatpush1.msra.mxu0 %v472
        %2062 = vmatprep.subr.mxu0 %v832
        %2063 = vmatpush1.msra.mxu0 %v829
        %2064 = vmatprep.subr.mxu0 0.0
        %2065 = vmatpush1.msra.mxu0 0.0
        %2066 = vmatprep.subr.mxu0 0.0
        %2067 = vmatpush1.msra.mxu0 0.0
        %2068 = vmatprep.subr.mxu0 0.0
        %2069 = vmatpush1.msra.mxu0 0.0
        %2070 = vmatprep.subr.mxu0 0.0
        %2071 = vmatpush1.msra.mxu0 0.0
        %2072 = vmatprep.subr.mxu0 0.0
        %2073 = vmatpush1.msra.mxu0 0.0
        %2074 = vmatprep.subr.mxu0 0.0
        %2075 = vmatpush1.msra.mxu0 0.0
        %2076 = vmatprep.subr.mxu0 0.0
        %2077 = vmatpush1.msra.mxu0 0.0
        %2078 = vmatprep.subr.mxu0 0.0
        %2079 = vmatpush1.msra.mxu0 0.0
        %2080 = vmatprep.subr.mxu0 0.0
        %2081 = vmatpush1.msra.mxu0 0.0
        %2082 = vmatprep.subr.mxu0 0.0
        %2083 = vmatpush1.msra.mxu0 0.0
        %2084 = vmatprep.subr.mxu0 0.0
        %2085 = vmatpush1.msra.mxu0 0.0
        %2086 = vmatprep.subr.mxu0 0.0
        %2087 = vmatpush1.msra.mxu0 0.0
        %2088 = vmatprep.subr.mxu0 0.0
        %2089 = vmatpush1.msra.mxu0 0.0
        %2090 = vmatprep.subr.mxu0 0.0
        %2091 = vmatpush1.msra.mxu0 0.0
        %2092 = vmatprep.subr.mxu0 0.0
        %2093 = vmatpush1.msra.mxu0 0.0
        %2094 = vmatprep.subr.mxu0 0.0
        %2095 = vmatpush1.msra.mxu0 0.0
        %2096 = vmatprep.subr.mxu0 0.0
        %2097 = vmatpush1.msra.mxu0 0.0
        %2098 = vmatprep.subr.mxu0 0.0
        %2099 = vmatpush1.msra.mxu0 0.0
        %2100 = vmatprep.subr.mxu0 0.0
        %2101 = vmatpush1.msra.mxu0 0.0
        %2102 = vmatprep.subr.mxu0 0.0
        %2103 = vmatpush1.msra.mxu0 0.0
        %2104 = vmatprep.subr.mxu0 0.0
        %2105 = vmatpush1.msra.mxu0 0.0
        %2106 = vmatprep.subr.mxu0 0.0
        %2107 = vmatpush1.msra.mxu0 0.0
        %2108 = vmatprep.subr.mxu0 0.0
        %2109 = vmatpush1.msra.mxu0 0.0
        %2110 = vmatprep.subr.mxu0 0.0
        %2111 = vmatpush1.msra.mxu0 0.0
        %2112 = vmatprep.subr.mxu0 0.0
        %2113 = vmatpush1.msra.mxu0 0.0
        %2114 = vmatprep.mubr.f32.mxu0 0.0
        %2115 = vmatmul.mubr.f32.gmra.mrb[0].mxu0 %v723
        %v2116 = vpop.f32.mrb[0].mxu0
        %v2117 = vadd.f32 %v665, %v2116
        %v2118 = vpop.f32.mrb[0].mxu0
        %v2119 = vadd.f32 %v669, %v2118
        %2120 = vdwg.mxu0
        %2121 = vmatprep.subr.mxu0 %v280
        %2122 = vmatpush1.msra.mxu0 %v279
        %2123 = vmatprep.subr.mxu0 %v319
        %2124 = vmatpush1.msra.mxu0 %v318
        %2125 = vmatprep.subr.mxu0 %v358
        %2126 = vmatpush1.msra.mxu0 %v357
        %2127 = vmatprep.subr.mxu0 %v397
        %2128 = vmatpush1.msra.mxu0 %v396
        %2129 = vmatprep.subr.mxu0 %v436
        %2130 = vmatpush1.msra.mxu0 %v435
        %2131 = vmatprep.subr.mxu0 %v475
        %2132 = vmatpush1.msra.mxu0 %v474
        %2133 = vmatprep.subr.mxu0 %v838
        %2134 = vmatpush1.msra.mxu0 %v835
        %2135 = vmatprep.subr.mxu0 0.0
        %2136 = vmatpush1.msra.mxu0 0.0
        %2137 = vmatprep.subr.mxu0 0.0
        %2138 = vmatpush1.msra.mxu0 0.0
        %2139 = vmatprep.subr.mxu0 0.0
        %2140 = vmatpush1.msra.mxu0 0.0
        %2141 = vmatprep.subr.mxu0 0.0
        %2142 = vmatpush1.msra.mxu0 0.0
        %2143 = vmatprep.subr.mxu0 0.0
        %2144 = vmatpush1.msra.mxu0 0.0
        %2145 = vmatprep.subr.mxu0 0.0
        %2146 = vmatpush1.msra.mxu0 0.0
        %2147 = vmatprep.subr.mxu0 0.0
        %2148 = vmatpush1.msra.mxu0 0.0
        %2149 = vmatprep.subr.mxu0 0.0
        %2150 = vmatpush1.msra.mxu0 0.0
        %2151 = vmatprep.subr.mxu0 0.0
        %2152 = vmatpush1.msra.mxu0 0.0
        %2153 = vmatprep.subr.mxu0 0.0
        %2154 = vmatpush1.msra.mxu0 0.0
        %2155 = vmatprep.subr.mxu0 0.0
        %2156 = vmatpush1.msra.mxu0 0.0
        %2157 = vmatprep.subr.mxu0 0.0
        %2158 = vmatpush1.msra.mxu0 0.0
        %2159 = vmatprep.subr.mxu0 0.0
        %2160 = vmatpush1.msra.mxu0 0.0
        %2161 = vmatprep.subr.mxu0 0.0
        %2162 = vmatpush1.msra.mxu0 0.0
        %2163 = vmatprep.subr.mxu0 0.0
        %2164 = vmatpush1.msra.mxu0 0.0
        %2165 = vmatprep.subr.mxu0 0.0
        %2166 = vmatpush1.msra.mxu0 0.0
        %2167 = vmatprep.subr.mxu0 0.0
        %2168 = vmatpush1.msra.mxu0 0.0
        %2169 = vmatprep.subr.mxu0 0.0
        %2170 = vmatpush1.msra.mxu0 0.0
        %2171 = vmatprep.subr.mxu0 0.0
        %2172 = vmatpush1.msra.mxu0 0.0
        %2173 = vmatprep.subr.mxu0 0.0
        %2174 = vmatpush1.msra.mxu0 0.0
        %2175 = vmatprep.subr.mxu0 0.0
        %2176 = vmatpush1.msra.mxu0 0.0
        %2177 = vmatprep.subr.mxu0 0.0
        %2178 = vmatpush1.msra.mxu0 0.0
        %2179 = vmatprep.subr.mxu0 0.0
        %2180 = vmatpush1.msra.mxu0 0.0
        %2181 = vmatprep.subr.mxu0 0.0
        %2182 = vmatpush1.msra.mxu0 0.0
        %2183 = vmatprep.subr.mxu0 0.0
        %2184 = vmatpush1.msra.mxu0 0.0
        %2185 = vmatprep.mubr.f32.mxu0 0.0
        %2186 = vmatmul.mubr.f32.gmra.mrb[0].mxu0 %v723
        %v2187 = vpop.f32.mrb[0].mxu0
        %v2188 = vadd.f32 %v673, %v2187
        %v2189 = vpop.f32.mrb[0].mxu0
        %v2190 = vadd.f32 %v677, %v2189
        %2191 = vdwg.mxu0
        %2192 = vmatprep.subr.mxu0 0.0
        %2193 = vmatpush1.msra.mxu0 %v281
        %2194 = vmatprep.subr.mxu0 0.0
        %2195 = vmatpush1.msra.mxu0 %v320
        %2196 = vmatprep.subr.mxu0 0.0
        %2197 = vmatpush1.msra.mxu0 %v359
        %2198 = vmatprep.subr.mxu0 0.0
        %2199 = vmatpush1.msra.mxu0 %v398
        %2200 = vmatprep.subr.mxu0 0.0
        %2201 = vmatpush1.msra.mxu0 %v437
        %2202 = vmatprep.subr.mxu0 0.0
        %2203 = vmatpush1.msra.mxu0 %v476
        %2204 = vmatprep.subr.mxu0 0.0
        %2205 = vmatpush1.msra.mxu0 %v841
        %2206 = vmatprep.subr.mxu0 0.0
        %2207 = vmatpush1.msra.mxu0 0.0
        %2208 = vmatprep.subr.mxu0 0.0
        %2209 = vmatpush1.msra.mxu0 0.0
        %2210 = vmatprep.subr.mxu0 0.0
        %2211 = vmatpush1.msra.mxu0 0.0
        %2212 = vmatprep.subr.mxu0 0.0
        %2213 = vmatpush1.msra.mxu0 0.0
        %2214 = vmatprep.subr.mxu0 0.0
        %2215 = vmatpush1.msra.mxu0 0.0
        %2216 = vmatprep.subr.mxu0 0.0
        %2217 = vmatpush1.msra.mxu0 0.0
        %2218 = vmatprep.subr.mxu0 0.0
        %2219 = vmatpush1.msra.mxu0 0.0
        %2220 = vmatprep.subr.mxu0 0.0
        %2221 = vmatpush1.msra.mxu0 0.0
        %2222 = vmatprep.subr.mxu0 0.0
        %2223 = vmatpush1.msra.mxu0 0.0
        %2224 = vmatprep.subr.mxu0 0.0
        %2225 = vmatpush1.msra.mxu0 0.0
        %2226 = vmatprep.subr.mxu0 0.0
        %2227 = vmatpush1.msra.mxu0 0.0
        %2228 = vmatprep.subr.mxu0 0.0
        %2229 = vmatpush1.msra.mxu0 0.0
        %2230 = vmatprep.subr.mxu0 0.0
        %2231 = vmatpush1.msra.mxu0 0.0
        %2232 = vmatprep.subr.mxu0 0.0
        %2233 = vmatpush1.msra.mxu0 0.0
        %2234 = vmatprep.subr.mxu0 0.0
        %2235 = vmatpush1.msra.mxu0 0.0
        %2236 = vmatprep.subr.mxu0 0.0
        %2237 = vmatpush1.msra.mxu0 0.0
        %2238 = vmatprep.subr.mxu0 0.0
        %2239 = vmatpush1.msra.mxu0 0.0
        %2240 = vmatprep.subr.mxu0 0.0
        %2241 = vmatpush1.msra.mxu0 0.0
        %2242 = vmatprep.subr.mxu0 0.0
        %2243 = vmatpush1.msra.mxu0 0.0
        %2244 = vmatprep.subr.mxu0 0.0
        %2245 = vmatpush1.msra.mxu0 0.0
        %2246 = vmatprep.subr.mxu0 0.0
        %2247 = vmatpush1.msra.mxu0 0.0
        %2248 = vmatprep.subr.mxu0 0.0
        %2249 = vmatpush1.msra.mxu0 0.0
        %2250 = vmatprep.subr.mxu0 0.0
        %2251 = vmatpush1.msra.mxu0 0.0
        %2252 = vmatprep.subr.mxu0 0.0
        %2253 = vmatpush1.msra.mxu0 0.0
        %2254 = vmatprep.subr.mxu0 0.0
        %2255 = vmatpush1.msra.mxu0 0.0
        %2256 = vmatprep.mubr.f32.mxu0 0.0
        %2257 = vmatmul.mubr.f32.gmra.mrb[0].mxu0 %v723
        %v2258 = vpop.f32.mrb[0].mxu0
        %v2259 = vadd.f32 %v681, %v2258
        %v2260 = vpop.f32.mrb[0].mxu0
        %2261 = vdwg.mxu0
        %v2262 = vmax.f32 %v910, 0.0
        %v2263 = vmax.f32 %v912, 0.0
        %v2264 = vmax.f32 %v981, 0.0
        %v2265 = vmax.f32 %v983, 0.0
        %v2266 = vmax.f32 %v1052, 0.0
        %v2267 = vmax.f32 %v1054, 0.0
        %v2268 = vmax.f32 %v1123, 0.0
        %v2269 = vmax.f32 %v1125, 0.0
        %v2270 = vmax.f32 %v1194, 0.0
        %v2271 = vmax.f32 %v1196, 0.0
        %v2272 = vmax.f32 %v1265, 0.0
        %v2273 = vmax.f32 %v1267, 0.0
        %v2274 = vmax.f32 %v1336, 0.0
        %v2275 = vmax.f32 %v1338, 0.0
        %v2276 = vmax.f32 %v1407, 0.0
        %v2277 = vmax.f32 %v1409, 0.0
        %v2278 = vmax.f32 %v1478, 0.0
        %v2279 = vmax.f32 %v1480, 0.0
        %v2280 = vmax.f32 %v1549, 0.0
        %v2281 = vmax.f32 %v1551, 0.0
        %v2282 = vmax.f32 %v1620, 0.0
        %v2283 = vmax.f32 %v1622, 0.0
        %v2284 = vmax.f32 %v1691, 0.0
        %v2285 = vmax.f32 %v1693, 0.0
        %v2286 = vmax.f32 %v1762, 0.0
        %v2287 = vmax.f32 %v1764, 0.0
        %v2288 = vmax.f32 %v1833, 0.0
        %v2289 = vmax.f32 %v1835, 0.0
        %v2290 = vmax.f32 %v1904, 0.0
        %v2291 = vmax.f32 %v1906, 0.0
        %v2292 = vmax.f32 %v1975, 0.0
        %v2293 = vmax.f32 %v1977, 0.0
        %v2294 = vmax.f32 %v2046, 0.0
        %v2295 = vmax.f32 %v2048, 0.0
        %v2296 = vmax.f32 %v2117, 0.0
        %v2297 = vmax.f32 %v2119, 0.0
        %v2298 = vmax.f32 %v2188, 0.0
        %v2299 = vmax.f32 %v2190, 0.0
        %v2300 = vmax.f32 %v2259, 0.0
        %v2340 = vcombine.low %v2262, %v2263
        %v2341 = vcombine.low %v2264, %v2265
        %v2343 = vunpack.c.l.s4 1983009808
        %v2344 = vunpack.c.0.s8 %v2343
        %v2345 = vlaneseq
        %v2346 = vshrl.u32 %v2345, 7
        %v2347 = vsub.s32 %v2344, %v2346
        %v2348 = vrot.slane %v2340, %v2347
        %v2350 = vunpack.c.l.s4 1983009808
        %v2351 = vunpack.c.0.s8 %v2350
        %v2352 = vlaneseq
        %v2353 = vshrl.u32 %v2352, 7
        %v2354 = vsub.s32 %v2351, %v2353
        %v2355 = vrot.slane %v2341, %v2354
        %v2356 = vcombine.low %v2348, %v2355
        %v2357 = vcombine.low %v2266, %v2267
        %v2358 = vcombine.low %v2268, %v2269
        %v2360 = vunpack.c.l.s4 1983009808
        %v2361 = vunpack.c.0.s8 %v2360
        %v2362 = vlaneseq
        %v2363 = vshrl.u32 %v2362, 7
        %v2364 = vsub.s32 %v2361, %v2363
        %v2365 = vrot.slane %v2357, %v2364
        %v2367 = vunpack.c.l.s4 1983009808
        %v2368 = vunpack.c.0.s8 %v2367
        %v2369 = vlaneseq
        %v2370 = vshrl.u32 %v2369, 7
        %v2371 = vsub.s32 %v2368, %v2370
        %v2372 = vrot.slane %v2358, %v2371
        %v2373 = vcombine.low %v2365, %v2372
        %v2374 = vcombine.low %v2270, %v2271
        %v2375 = vcombine.low %v2272, %v2273
        %v2377 = vunpack.c.l.s4 1983009808
        %v2378 = vunpack.c.0.s8 %v2377
        %v2379 = vlaneseq
        %v2380 = vshrl.u32 %v2379, 7
        %v2381 = vsub.s32 %v2378, %v2380
        %v2382 = vrot.slane %v2374, %v2381
        %v2384 = vunpack.c.l.s4 1983009808
        %v2385 = vunpack.c.0.s8 %v2384
        %v2386 = vlaneseq
        %v2387 = vshrl.u32 %v2386, 7
        %v2388 = vsub.s32 %v2385, %v2387
        %v2389 = vrot.slane %v2375, %v2388
        %v2390 = vcombine.low %v2382, %v2389
        %v2391 = vcombine.low %v2274, %v2275
        %v2392 = vcombine.low %v2276, %v2277
        %v2394 = vunpack.c.l.s4 1983009808
        %v2395 = vunpack.c.0.s8 %v2394
        %v2396 = vlaneseq
        %v2397 = vshrl.u32 %v2396, 7
        %v2398 = vsub.s32 %v2395, %v2397
        %v2399 = vrot.slane %v2391, %v2398
        %v2401 = vunpack.c.l.s4 1983009808
        %v2402 = vunpack.c.0.s8 %v2401
        %v2403 = vlaneseq
        %v2404 = vshrl.u32 %v2403, 7
        %v2405 = vsub.s32 %v2402, %v2404
        %v2406 = vrot.slane %v2392, %v2405
        %v2407 = vcombine.low %v2399, %v2406
        %v2408 = vcombine.low %v2278, %v2279
        %v2409 = vcombine.low %v2280, %v2281
        %v2411 = vunpack.c.l.s4 1983009808
        %v2412 = vunpack.c.0.s8 %v2411
        %v2413 = vlaneseq
        %v2414 = vshrl.u32 %v2413, 7
        %v2415 = vsub.s32 %v2412, %v2414
        %v2416 = vrot.slane %v2408, %v2415
        %v2418 = vunpack.c.l.s4 1983009808
        %v2419 = vunpack.c.0.s8 %v2418
        %v2420 = vlaneseq
        %v2421 = vshrl.u32 %v2420, 7
        %v2422 = vsub.s32 %v2419, %v2421
        %v2423 = vrot.slane %v2409, %v2422
        %v2424 = vcombine.low %v2416, %v2423
        %v2425 = vcombine.low %v2282, %v2283
        %v2426 = vcombine.low %v2284, %v2285
        %v2428 = vunpack.c.l.s4 1983009808
        %v2429 = vunpack.c.0.s8 %v2428
        %v2430 = vlaneseq
        %v2431 = vshrl.u32 %v2430, 7
        %v2432 = vsub.s32 %v2429, %v2431
        %v2433 = vrot.slane %v2425, %v2432
        %v2435 = vunpack.c.l.s4 1983009808
        %v2436 = vunpack.c.0.s8 %v2435
        %v2437 = vlaneseq
        %v2438 = vshrl.u32 %v2437, 7
        %v2439 = vsub.s32 %v2436, %v2438
        %v2440 = vrot.slane %v2426, %v2439
        %v2441 = vcombine.low %v2433, %v2440
        %v2442 = vcombine.low %v2286, %v2287
        %v2443 = vcombine.low %v2288, %v2289
        %v2445 = vunpack.c.l.s4 1983009808
        %v2446 = vunpack.c.0.s8 %v2445
        %v2447 = vlaneseq
        %v2448 = vshrl.u32 %v2447, 7
        %v2449 = vsub.s32 %v2446, %v2448
        %v2450 = vrot.slane %v2442, %v2449
        %v2452 = vunpack.c.l.s4 1983009808
        %v2453 = vunpack.c.0.s8 %v2452
        %v2454 = vlaneseq
        %v2455 = vshrl.u32 %v2454, 7
        %v2456 = vsub.s32 %v2453, %v2455
        %v2457 = vrot.slane %v2443, %v2456
        %v2458 = vcombine.low %v2450, %v2457
        %v2459 = vcombine.low %v2290, %v2291
        %v2460 = vcombine.low %v2292, %v2293
        %v2462 = vunpack.c.l.s4 1983009808
        %v2463 = vunpack.c.0.s8 %v2462
        %v2464 = vlaneseq
        %v2465 = vshrl.u32 %v2464, 7
        %v2466 = vsub.s32 %v2463, %v2465
        %v2467 = vrot.slane %v2459, %v2466
        %v2469 = vunpack.c.l.s4 1983009808
        %v2470 = vunpack.c.0.s8 %v2469
        %v2471 = vlaneseq
        %v2472 = vshrl.u32 %v2471, 7
        %v2473 = vsub.s32 %v2470, %v2472
        %v2474 = vrot.slane %v2460, %v2473
        %v2475 = vcombine.low %v2467, %v2474
        %v2476 = vcombine.low %v2294, %v2295
        %v2477 = vcombine.low %v2296, %v2297
        %v2479 = vunpack.c.l.s4 1983009808
        %v2480 = vunpack.c.0.s8 %v2479
        %v2481 = vlaneseq
        %v2482 = vshrl.u32 %v2481, 7
        %v2483 = vsub.s32 %v2480, %v2482
        %v2484 = vrot.slane %v2476, %v2483
        %v2486 = vunpack.c.l.s4 1983009808
        %v2487 = vunpack.c.0.s8 %v2486
        %v2488 = vlaneseq
        %v2489 = vshrl.u32 %v2488, 7
        %v2490 = vsub.s32 %v2487, %v2489
        %v2491 = vrot.slane %v2477, %v2490
        %v2492 = vcombine.low %v2484, %v2491
        %v2493 = vcombine.low %v2298, %v2299
        %v2495 = vunpack.c.l.s4 1983009808
        %v2496 = vunpack.c.0.s8 %v2495
        %v2497 = vlaneseq
        %v2498 = vshrl.u32 %v2497, 7
        %v2499 = vsub.s32 %v2496, %v2498
        %v2500 = vrot.slane %v2493, %v2499
        %v2502 = vunpack.c.l.s4 1983009808
        %v2503 = vunpack.c.0.s8 %v2502
        %v2504 = vlaneseq
        %v2505 = vshrl.u32 %v2504, 7
        %v2506 = vsub.s32 %v2503, %v2505
        %v2507 = vrot.slane %v2300, %v2506
        %v2508 = vcombine.low %v2500, %v2507
        %2519 = vst [vmem:[%s240] sm:$0xff] %v2356
        %2520 = vst [vmem:[%s240 + $0x8] sm:$0xff] %v2373
        %2521 = vst [vmem:[%s240 + $0x10] sm:$0xff] %v2390
        %2522 = vst [vmem:[%s240 + $0x18] sm:$0xff] %v2407
        %2523 = vst [vmem:[%s240 + $0x20] sm:$0xff] %v2424
        %2524 = vst [vmem:[%s240 + $0x28] sm:$0xff] %v2441
        %2525 = vst [vmem:[%s240 + $0x30] sm:$0xff] %v2458
        %2526 = vst [vmem:[%s240 + $0x38] sm:$0xff] %v2475
        %2527 = vst [vmem:[%s240 + $0x40] sm:$0xff] %v2492
        %2528 = vst [vmem:[%s240 + $0x48] sm:$0x3f] %v2508
        %s2529 = smul.u32 39, %s18
        %p2530 = scmp.lt.s32.totalorder %s2529, 311
        %s2531 = scalar_select %p2530, %s2529, 311
        %s2532 = smul.addr %s2531, 2
        %s2533 = scalar_lea.vmem %s3, %s2532
        // Predicated region
        $region45: #{decoder_forward.2} parent=31 // pred_check
          %p2534 = pneg %p109
        $region46: #{decoder_forward.2} parent=31 // pred_check_branch
          %2536 = sbr.rel (%p2534) target = $region48
        $region47: #{decoder_forward.2} parent=31 // pred_region
          %s2537 = smul.u32 39, %s18
        $region48: #{decoder_forward.2} parent=31 // pred_fallthru
          _
      $region32: #{decoder_forward.2} parent=5 // pred_fallthru
        _
      %p2538 = scmp.le.s32.totalorder 2, %s13
      // Predicated region
      $region49: #{decoder_forward.2} parent=5 // pred_check
        %p2539 = pneg %p2538
      $region50: #{decoder_forward.2} parent=5 // pred_check_branch
        %2541 = sbr.rel (%p2539) target = $region52
      $region51: #{decoder_forward.2} parent=5 // pred_region
        %s2542 = ssub.s32 %s13, 2
        // Predicated region
        $region53: #{decoder_forward.2} parent=51 // pred_check
          %p2543 = pneg %p115
        $region54: #{decoder_forward.2} parent=51 // pred_check_branch
          %2545 = sbr.rel (%p2543) target = $region56
        $region55: #{decoder_forward.2} parent=51 // pred_region
          %s2546 = smul.u32 39, %s19
          %p2547 = scmp.lt.s32.totalorder %s2546, 311
          %s2548 = scalar_select %p2547, %s2546, 311
          %s2549 = smul.addr %s2548, 2
          %s2550 = scalar_lea.vmem %s3, %s2549
        $region56: #{decoder_forward.2} parent=51 // pred_fallthru
          _
      $region52: #{decoder_forward.2} parent=5 // pred_fallthru
        _
    $region6: #{decoder_forward.2} parent=1 // loop_footer
      %s17 = sadd.s32 1, %s13
    $region7: #{decoder_forward.2} parent=1 // loop_footer_branch
      %12 = sbr.rel target = $region3
    $region8: #{decoder_forward.2} parent=1 // loop_exit
      _
    %2551 = vsyncpa [#allocation3], 1
    %s2552 = scalar_lea.sflag [#allocation3], 1
    %2553 = vsyncpa %s2552, 1
    %2554 = vsyncpa [#allocation5], 1
    %s2555 = scalar_lea.sflag [#allocation5], 1
    %2556 = vsyncpa %s2555, 1

// kernel: decoder_forward.3
$region0: #{decoder_forward.3}
  #allocation0 [shape = 'u32[]', space=smem, size = 0x4, offset = 0x4, fixed_abs, tag = 'smem constant byte address 0x4 - core index']
  #allocation1 [shape = 'u32[144,128]{1,0:T(1,128)}', space=vmem, size = 0x12000, scoped, tag = 'internal scratch']
  #allocation2 [shape = 'f32[39,39,32]{2,1,0:T(8,128)}', space=vmem, size = 0xc3000, scoped, tag = 'scratch operand']
  #allocation3 [shape = 'f32[41,41,32]{2,1,0:T(8,128)}', space=vmem, size = 0xf6000, scoped, tag = 'scratch operand']
  #allocation4 [shape = 'f32[43,43,32]{2,1,0:T(8,128)}', space=vmem, size = 0x102000, scoped, tag = 'scratch operand']
  #allocation5 [shape = 'f32[43,43,32]{2,1,0:T(8,128)}', space=vmem, size = 0x102000, scoped, tag = 'scratch operand']
  %s0 = inlined_call_operand.vmem [shape: f32[2,35,35,32], index: 0, kind: input, shape index: {}]
  %s1 = inlined_call_operand.vmem [shape: f32[3,3,32,32], index: 1, kind: input, shape index: {}]
  %s2 = inlined_call_operand.vmem [shape: f32[1,32], index: 2, kind: input, shape index: {}]
  %s3 = inlined_call_operand.vmem [shape: f32[3,3,32,32], index: 3, kind: input, shape index: {}]
  %s4 = inlined_call_operand.vmem [shape: f32[1,32], index: 4, kind: input, shape index: {}]
  %s5 = inlined_call_operand.vmem [shape: f32[3,3,32,32], index: 5, kind: input, shape index: {}]
  %s6 = inlined_call_operand.vmem [shape: f32[1,32], index: 6, kind: input, shape index: {}]
  %s7 = inlined_call_operand.vmem [shape: f32[3,3,32,3], index: 7, kind: input, shape index: {}]
  %s8 = inlined_call_operand.vmem [shape: f32[1,3], index: 8, kind: input, shape index: {}]
  %s9 = inlined_call_operand.vmem [shape: f32[2,42,42,3], index: 9, kind: output, shape index: {0}]
  %s10 = inlined_call_operand.vmem [shape: f32[2,42,42,3], index: 10, kind: output, shape index: {1}]
  %s11 = inlined_call_operand.vmem [shape: f32[2,42,42,3], index: 11, kind: output, shape index: {2}]
  %s12 = inlined_call_operand.vmem [shape: f32[2,42,42,3], index: 12, kind: output, shape index: {3}]
  %13 = xla_tuple %s9, %s10, %s11, %s12
  %s14 = sld [smem:[#allocation0]]
  $region128: #{decoder_forward.3} parent=0
    _
  %s16 = ssub.s32 1, %s14
  %s17 = scalar_select 0, %s16, %s14
  loop: start=0, step=1, limit=4
  $region2: #{decoder_forward.3} parent=0 // loop_pre_header
    _
  $region3: #{decoder_forward.3} parent=0 // loop_header
    %s19 = sphi 0, %s23
    %p20 = scmp.ge.s32.totalorder %s19, 4
    %s29 = sphi 0, %s31
    %s32 = sphi 0, %s29
    %s33 = sphi 0, %s32
    %s49 = sphi 0, %s33
    %s53 = sphi 0, %s53
    %s55 = sphi 0, %s53
    %s56 = sphi 0, %s55
    %s70 = sphi 0, %s56
    %s74 = sphi 0, %s74
    %s76 = sphi 0, %s74
    %s77 = sphi 0, %s76
    %s91 = sphi 0, %s77
    %s95 = sphi 0, %s95
    %s97 = sphi 0, %s95
    %s98 = sphi 0, %s97
    %s112 = sphi 0, %s98
    %s116 = sphi 0, %s116
    %s118 = sphi 0, %s116
    %s119 = sphi 0, %s118
    %s133 = sphi 0, %s119
    %s137 = sphi 0, %s137
    %s139 = sphi 0, %s137
    %s140 = sphi 0, %s139
    %s154 = sphi 0, %s140
    %s158 = sphi 0, %s158
    %s160 = sphi 0, %s158
    %s161 = sphi 0, %s160
    %s175 = sphi 0, %s161
    %s179 = sphi 0, %s179
    %s181 = sphi 0, %s179
    %s182 = sphi 0, %s181
    %s196 = sphi 0, %s182
    %s200 = sphi 0, %s200
    %s202 = sphi 0, %s200
    %s203 = sphi 0, %s202
    %s217 = sphi 0, %s203
    %s223 = sphi 0, %s225
    %s226 = sphi 0, %s223
    %s227 = sphi 0, %s226
    %s243 = sphi 0, %s227
    %s249 = sphi 0, %s251
    %s252 = sphi 0, %s249
    %s253 = sphi 0, %s252
    %s269 = sphi 0, %s253
    %s275 = sphi 0, %s277
    %s278 = sphi 0, %s275
    %s279 = sphi 0, %s278
    %s295 = sphi 0, %s279
    %s301 = sphi 0, %s303
    %s304 = sphi 0, %s301
    %s305 = sphi 0, %s304
    %s321 = sphi 0, %s305
  $region4: #{decoder_forward.3} parent=0 // loop_header_branch
    %22 = sbr.rel (%p20) target = $region8
  $region5: #{decoder_forward.3} parent=0 // loop_body
    %s24 = ssub.s32 %s19, 1
    %s25 = ssub.s32 %s19, 2
    %s26 = sadd.s32 %s19, 1
    %s27 = ssub.s32 %s19, %s26
    %p28 = scmp.eq.s32.totalorder %s27, 0
    %s30 = sadd.s32 %s29, 1
    %s31 = scalar_select %p28, %s29, %s30
    %p34 = pneg %p28
    %p35 = scmp.eq.s32.totalorder %s19, 1
    %p36 = por %p34, %p35
    %p37 = scmp.ne.s32.totalorder %s29, %s32
    %p38 = scmp.eq.s32.totalorder %s19, 0
    %p39 = por %p37, %p38
    %p40 = scmp.ne.s32.totalorder %s29, %s32
    %p41 = scmp.eq.s32.totalorder %s24, 1
    %p42 = por %p40, %p41
    %p43 = scmp.ne.s32.totalorder %s32, %s33
    %p44 = scmp.eq.s32.totalorder %s24, 0
    %p45 = por %p43, %p44
    %p46 = scmp.ne.s32.totalorder %s32, %s33
    %p47 = scmp.eq.s32.totalorder %s25, 1
    %p48 = por %p46, %p47
    %p50 = scmp.ne.s32.totalorder %s33, %s49
    %p51 = scmp.eq.s32.totalorder %s25, 0
    %p52 = por %p50, %p51
    %s54 = sadd.s32 %s53, 1
    %p57 = scmp.eq.s32.totalorder %s19, 1
    %p58 = scmp.ne.s32.totalorder %s53, %s55
    %p59 = scmp.eq.s32.totalorder %s19, 0
    %p60 = por %p58, %p59
    %p61 = scmp.ne.s32.totalorder %s53, %s55
    %p62 = scmp.eq.s32.totalorder %s24, 1
    %p63 = por %p61, %p62
    %p64 = scmp.ne.s32.totalorder %s55, %s56
    %p65 = scmp.eq.s32.totalorder %s24, 0
    %p66 = por %p64, %p65
    %p67 = scmp.ne.s32.totalorder %s55, %s56
    %p68 = scmp.eq.s32.totalorder %s25, 1
    %p69 = por %p67, %p68
    %p71 = scmp.ne.s32.totalorder %s56, %s70
    %p72 = scmp.eq.s32.totalorder %s25, 0
    %p73 = por %p71, %p72
    %s75 = sadd.s32 %s74, 1
    %p78 = scmp.eq.s32.totalorder %s19, 1
    %p79 = scmp.ne.s32.totalorder %s74, %s76
    %p80 = scmp.eq.s32.totalorder %s19, 0
    %p81 = por %p79, %p80
    %p82 = scmp.ne.s32.totalorder %s74, %s76
    %p83 = scmp.eq.s32.totalorder %s24, 1
    %p84 = por %p82, %p83
    %p85 = scmp.ne.s32.totalorder %s76, %s77
    %p86 = scmp.eq.s32.totalorder %s24, 0
    %p87 = por %p85, %p86
    %p88 = scmp.ne.s32.totalorder %s76, %s77
    %p89 = scmp.eq.s32.totalorder %s25, 1
    %p90 = por %p88, %p89
    %p92 = scmp.ne.s32.totalorder %s77, %s91
    %p93 = scmp.eq.s32.totalorder %s25, 0
    %p94 = por %p92, %p93
    %s96 = sadd.s32 %s95, 1
    %p99 = scmp.eq.s32.totalorder %s19, 1
    %p100 = scmp.ne.s32.totalorder %s95, %s97
    %p101 = scmp.eq.s32.totalorder %s19, 0
    %p102 = por %p100, %p101
    %p103 = scmp.ne.s32.totalorder %s95, %s97
    %p104 = scmp.eq.s32.totalorder %s24, 1
    %p105 = por %p103, %p104
    %p106 = scmp.ne.s32.totalorder %s97, %s98
    %p107 = scmp.eq.s32.totalorder %s24, 0
    %p108 = por %p106, %p107
    %p109 = scmp.ne.s32.totalorder %s97, %s98
    %p110 = scmp.eq.s32.totalorder %s25, 1
    %p111 = por %p109, %p110
    %p113 = scmp.ne.s32.totalorder %s98, %s112
    %p114 = scmp.eq.s32.totalorder %s25, 0
    %p115 = por %p113, %p114
    %s117 = sadd.s32 %s116, 1
    %p120 = scmp.eq.s32.totalorder %s19, 1
    %p121 = scmp.ne.s32.totalorder %s116, %s118
    %p122 = scmp.eq.s32.totalorder %s19, 0
    %p123 = por %p121, %p122
    %p124 = scmp.ne.s32.totalorder %s116, %s118
    %p125 = scmp.eq.s32.totalorder %s24, 1
    %p126 = por %p124, %p125
    %p127 = scmp.ne.s32.totalorder %s118, %s119
    %p128 = scmp.eq.s32.totalorder %s24, 0
    %p129 = por %p127, %p128
    %p130 = scmp.ne.s32.totalorder %s118, %s119
    %p131 = scmp.eq.s32.totalorder %s25, 1
    %p132 = por %p130, %p131
    %p134 = scmp.ne.s32.totalorder %s119, %s133
    %p135 = scmp.eq.s32.totalorder %s25, 0
    %p136 = por %p134, %p135
    %s138 = sadd.s32 %s137, 1
    %p141 = scmp.eq.s32.totalorder %s19, 1
    %p142 = scmp.ne.s32.totalorder %s137, %s139
    %p143 = scmp.eq.s32.totalorder %s19, 0
    %p144 = por %p142, %p143
    %p145 = scmp.ne.s32.totalorder %s137, %s139
    %p146 = scmp.eq.s32.totalorder %s24, 1
    %p147 = por %p145, %p146
    %p148 = scmp.ne.s32.totalorder %s139, %s140
    %p149 = scmp.eq.s32.totalorder %s24, 0
    %p150 = por %p148, %p149
    %p151 = scmp.ne.s32.totalorder %s139, %s140
    %p152 = scmp.eq.s32.totalorder %s25, 1
    %p153 = por %p151, %p152
    %p155 = scmp.ne.s32.totalorder %s140, %s154
    %p156 = scmp.eq.s32.totalorder %s25, 0
    %p157 = por %p155, %p156
    %s159 = sadd.s32 %s158, 1
    %p162 = scmp.eq.s32.totalorder %s19, 1
    %p163 = scmp.ne.s32.totalorder %s158, %s160
    %p164 = scmp.eq.s32.totalorder %s19, 0
    %p165 = por %p163, %p164
    %p166 = scmp.ne.s32.totalorder %s158, %s160
    %p167 = scmp.eq.s32.totalorder %s24, 1
    %p168 = por %p166, %p167
    %p169 = scmp.ne.s32.totalorder %s160, %s161
    %p170 = scmp.eq.s32.totalorder %s24, 0
    %p171 = por %p169, %p170
    %p172 = scmp.ne.s32.totalorder %s160, %s161
    %p173 = scmp.eq.s32.totalorder %s25, 1
    %p174 = por %p172, %p173
    %p176 = scmp.ne.s32.totalorder %s161, %s175
    %p177 = scmp.eq.s32.totalorder %s25, 0
    %p178 = por %p176, %p177
    %s180 = sadd.s32 %s179, 1
    %p183 = scmp.eq.s32.totalorder %s19, 1
    %p184 = scmp.ne.s32.totalorder %s179, %s181
    %p185 = scmp.eq.s32.totalorder %s19, 0
    %p186 = por %p184, %p185
    %p187 = scmp.ne.s32.totalorder %s179, %s181
    %p188 = scmp.eq.s32.totalorder %s24, 1
    %p189 = por %p187, %p188
    %p190 = scmp.ne.s32.totalorder %s181, %s182
    %p191 = scmp.eq.s32.totalorder %s24, 0
    %p192 = por %p190, %p191
    %p193 = scmp.ne.s32.totalorder %s181, %s182
    %p194 = scmp.eq.s32.totalorder %s25, 1
    %p195 = por %p193, %p194
    %p197 = scmp.ne.s32.totalorder %s182, %s196
    %p198 = scmp.eq.s32.totalorder %s25, 0
    %p199 = por %p197, %p198
    %s201 = sadd.s32 %s200, 1
    %p204 = scmp.eq.s32.totalorder %s19, 1
    %p205 = scmp.ne.s32.totalorder %s200, %s202
    %p206 = scmp.eq.s32.totalorder %s19, 0
    %p207 = por %p205, %p206
    %p208 = scmp.ne.s32.totalorder %s200, %s202
    %p209 = scmp.eq.s32.totalorder %s24, 1
    %p210 = por %p208, %p209
    %p211 = scmp.ne.s32.totalorder %s202, %s203
    %p212 = scmp.eq.s32.totalorder %s24, 0
    %p213 = por %p211, %p212
    %p214 = scmp.ne.s32.totalorder %s202, %s203
    %p215 = scmp.eq.s32.totalorder %s25, 1
    %p216 = por %p214, %p215
    %p218 = scmp.ne.s32.totalorder %s203, %s217
    %p219 = scmp.eq.s32.totalorder %s25, 0
    %p220 = por %p218, %p219
    %s221 = ssub.s32 %s19, %s26
    %p222 = scmp.eq.s32.totalorder %s221, 0
    %s224 = sadd.s32 %s223, 1
    %s225 = scalar_select %p222, %s223, %s224
    %p228 = pneg %p222
    %p229 = scmp.eq.s32.totalorder %s19, 1
    %p230 = por %p228, %p229
    %p231 = scmp.ne.s32.totalorder %s223, %s226
    %p232 = scmp.eq.s32.totalorder %s19, 0
    %p233 = por %p231, %p232
    %p234 = scmp.ne.s32.totalorder %s223, %s226
    %p235 = scmp.eq.s32.totalorder %s24, 1
    %p236 = por %p234, %p235
    %p237 = scmp.ne.s32.totalorder %s226, %s227
    %p238 = scmp.eq.s32.totalorder %s24, 0
    %p239 = por %p237, %p238
    %p240 = scmp.ne.s32.totalorder %s226, %s227
    %p241 = scmp.eq.s32.totalorder %s25, 1
    %p242 = por %p240, %p241
    %p244 = scmp.ne.s32.totalorder %s227, %s243
    %p245 = scmp.eq.s32.totalorder %s25, 0
    %p246 = por %p244, %p245
    %s247 = ssub.s32 %s19, %s26
    %p248 = scmp.eq.s32.totalorder %s247, 0
    %s250 = sadd.s32 %s249, 1
    %s251 = scalar_select %p248, %s249, %s250
    %p254 = pneg %p248
    %p255 = scmp.eq.s32.totalorder %s19, 1
    %p256 = por %p254, %p255
    %p257 = scmp.ne.s32.totalorder %s249, %s252
    %p258 = scmp.eq.s32.totalorder %s19, 0
    %p259 = por %p257, %p258
    %p260 = scmp.ne.s32.totalorder %s249, %s252
    %p261 = scmp.eq.s32.totalorder %s24, 1
    %p262 = por %p260, %p261
    %p263 = scmp.ne.s32.totalorder %s252, %s253
    %p264 = scmp.eq.s32.totalorder %s24, 0
    %p265 = por %p263, %p264
    %p266 = scmp.ne.s32.totalorder %s252, %s253
    %p267 = scmp.eq.s32.totalorder %s25, 1
    %p268 = por %p266, %p267
    %p270 = scmp.ne.s32.totalorder %s253, %s269
    %p271 = scmp.eq.s32.totalorder %s25, 0
    %p272 = por %p270, %p271
    %s273 = ssub.s32 %s19, %s26
    %p274 = scmp.eq.s32.totalorder %s273, 0
    %s276 = sadd.s32 %s275, 1
    %s277 = scalar_select %p274, %s275, %s276
    %p280 = pneg %p274
    %p281 = scmp.eq.s32.totalorder %s19, 1
    %p282 = por %p280, %p281
    %p283 = scmp.ne.s32.totalorder %s275, %s278
    %p284 = scmp.eq.s32.totalorder %s19, 0
    %p285 = por %p283, %p284
    %p286 = scmp.ne.s32.totalorder %s275, %s278
    %p287 = scmp.eq.s32.totalorder %s24, 1
    %p288 = por %p286, %p287
    %p289 = scmp.ne.s32.totalorder %s278, %s279
    %p290 = scmp.eq.s32.totalorder %s24, 0
    %p291 = por %p289, %p290
    %p292 = scmp.ne.s32.totalorder %s278, %s279
    %p293 = scmp.eq.s32.totalorder %s25, 1
    %p294 = por %p292, %p293
    %p296 = scmp.ne.s32.totalorder %s279, %s295
    %p297 = scmp.eq.s32.totalorder %s25, 0
    %p298 = por %p296, %p297
    %s299 = ssub.s32 %s19, %s26
    %p300 = scmp.eq.s32.totalorder %s299, 0
    %s302 = sadd.s32 %s301, 1
    %s303 = scalar_select %p300, %s301, %s302
    %p306 = pneg %p300
    %p307 = scmp.eq.s32.totalorder %s19, 1
    %p308 = por %p306, %p307
    %p309 = scmp.ne.s32.totalorder %s301, %s304
    %p310 = scmp.eq.s32.totalorder %s19, 0
    %p311 = por %p309, %p310
    %p312 = scmp.ne.s32.totalorder %s301, %s304
    %p313 = scmp.eq.s32.totalorder %s24, 1
    %p314 = por %p312, %p313
    %p315 = scmp.ne.s32.totalorder %s304, %s305
    %p316 = scmp.eq.s32.totalorder %s24, 0
    %p317 = por %p315, %p316
    %p318 = scmp.ne.s32.totalorder %s304, %s305
    %p319 = scmp.eq.s32.totalorder %s25, 1
    %p320 = por %p318, %p319
    %p322 = scmp.ne.s32.totalorder %s305, %s321
    %p323 = scmp.eq.s32.totalorder %s25, 0
    %p324 = por %p322, %p323
    %p325 = scmp.le.s32.totalorder 1, %s19
    %p326 = scmp.lt.s32.totalorder %s19, 3
    %p327 = pnand %p325, %p326
    %p328 = pneg %p327
    // Predicated region
    $region9: #{decoder_forward.3} parent=5 // pred_check
      _
    $region10: #{decoder_forward.3} parent=5 // pred_check_branch
      %330 = sbr.rel (%p327) target = $region12
    $region11: #{decoder_forward.3} parent=5 // pred_region
      %s331 = ssub.s32 %s19, 1
      // Predicated region
      $region13: #{decoder_forward.3} parent=11 // pred_check
        %p332 = pneg %p66
      $region14: #{decoder_forward.3} parent=11 // pred_check_branch
        %334 = sbr.rel (%p332) target = $region16
      $region15: #{decoder_forward.3} parent=11 // pred_region
        _
      $region16: #{decoder_forward.3} parent=11 // pred_fallthru
        _
      // Predicated region
      $region17: #{decoder_forward.3} parent=11 // pred_check
        %p335 = pneg %p87
      $region18: #{decoder_forward.3} parent=11 // pred_check_branch
        %337 = sbr.rel (%p335) target = $region20
      $region19: #{decoder_forward.3} parent=11 // pred_region
        _
      $region20: #{decoder_forward.3} parent=11 // pred_fallthru
        _
      // Predicated region
      $region21: #{decoder_forward.3} parent=11 // pred_check
        %p338 = pneg %p108
      $region22: #{decoder_forward.3} parent=11 // pred_check_branch
        %340 = sbr.rel (%p338) target = $region24
      $region23: #{decoder_forward.3} parent=11 // pred_region
        _
      $region24: #{decoder_forward.3} parent=11 // pred_fallthru
        _
      // Predicated region
      $region25: #{decoder_forward.3} parent=11 // pred_check
        %p341 = pneg %p129
      $region26: #{decoder_forward.3} parent=11 // pred_check_branch
        %343 = sbr.rel (%p341) target = $region28
      $region27: #{decoder_forward.3} parent=11 // pred_region
        _
      $region28: #{decoder_forward.3} parent=11 // pred_fallthru
        _
      // Predicated region
      $region29: #{decoder_forward.3} parent=11 // pred_check
        %p344 = pneg %p150
      $region30: #{decoder_forward.3} parent=11 // pred_check_branch
        %346 = sbr.rel (%p344) target = $region32
      $region31: #{decoder_forward.3} parent=11 // pred_region
        _
      $region32: #{decoder_forward.3} parent=11 // pred_fallthru
        _
      // Predicated region
      $region33: #{decoder_forward.3} parent=11 // pred_check
        %p347 = pneg %p171
      $region34: #{decoder_forward.3} parent=11 // pred_check_branch
        %349 = sbr.rel (%p347) target = $region36
      $region35: #{decoder_forward.3} parent=11 // pred_region
        _
      $region36: #{decoder_forward.3} parent=11 // pred_fallthru
        _
      // Predicated region
      $region37: #{decoder_forward.3} parent=11 // pred_check
        %p350 = pneg %p192
      $region38: #{decoder_forward.3} parent=11 // pred_check_branch
        %352 = sbr.rel (%p350) target = $region40
      $region39: #{decoder_forward.3} parent=11 // pred_region
        _
      $region40: #{decoder_forward.3} parent=11 // pred_fallthru
        _
      // Predicated region
      $region41: #{decoder_forward.3} parent=11 // pred_check
        %p353 = pneg %p213
      $region42: #{decoder_forward.3} parent=11 // pred_check_branch
        %355 = sbr.rel (%p353) target = $region44
      $region43: #{decoder_forward.3} parent=11 // pred_region
        _
      $region44: #{decoder_forward.3} parent=11 // pred_fallthru
        _
    $region12: #{decoder_forward.3} parent=5 // pred_fallthru
      _
    %p356 = scmp.lt.s32.totalorder %s19, 2
    // Predicated region
    $region45: #{decoder_forward.3} parent=5 // pred_check
      %p357 = pneg %p356
    $region46: #{decoder_forward.3} parent=5 // pred_check_branch
      %359 = sbr.rel (%p357) target = $region48
    $region47: #{decoder_forward.3} parent=5 // pred_region
      // Predicated region
      $region49: #{decoder_forward.3} parent=47 // pred_check
        %p360 = pneg %p39
      $region50: #{decoder_forward.3} parent=47 // pred_check_branch
        %362 = sbr.rel (%p360) target = $region52
      $region51: #{decoder_forward.3} parent=47 // pred_region
        %p363 = scmp.lt.s32.totalorder %s19, 1
        %s364 = scalar_select %p363, %s19, 1
        %s365 = smul.addr %s364, 175
        %s366 = smul.addr %s365, 8
        %s367 = scalar_lea.vmem %s0, %s366
      $region52: #{decoder_forward.3} parent=47 // pred_fallthru
        _
    $region48: #{decoder_forward.3} parent=5 // pred_fallthru
      _
    %p368 = scmp.le.s32.totalorder 1, %s19
    %p369 = scmp.lt.s32.totalorder %s19, 3
    %p370 = pnand %p368, %p369
    %p371 = pneg %p370
    // Predicated region
    $region53: #{decoder_forward.3} parent=5 // pred_check
      _
    $region54: #{decoder_forward.3} parent=5 // pred_check_branch
      %373 = sbr.rel (%p370) target = $region56
    $region55: #{decoder_forward.3} parent=5 // pred_region
      %s374 = ssub.s32 %s19, 1
      %p375 = scmp.lt.s32.totalorder %s24, 1
      %s376 = scalar_select %p375, %s24, 1
      %s377 = smul.addr %s376, 175
      %s378 = smul.addr %s377, 8
      %s379 = scalar_lea.vmem %s0, %s378
      %p380 = pneg %p45
      %p381 = pneg %p42
      %p382 = pneg %p66
      %p383 = pneg %p63
      %p384 = pneg %p87
      %p385 = pneg %p84
      %p386 = pneg %p108
      %p387 = pneg %p105
      %p388 = pneg %p129
      %p389 = pneg %p126
      %p390 = pneg %p150
      %p391 = pneg %p147
      %p392 = pneg %p171
      %p393 = pneg %p168
      %p394 = pneg %p192
      %p395 = pneg %p189
      %p396 = pneg %p213
      %p397 = pneg %p210
      %p398 = pneg %p239
      %p399 = pneg %p236
      %p400 = scmp.lt.s32.totalorder %s24, 1
      %s401 = scalar_select %p400, %s24, 1
      %s402 = smul.addr %s401, 252
      %s403 = smul.addr %s402, 8
      %s404 = scalar_lea.vmem %s9, %s403
      %p405 = pneg %p265
      %p406 = pneg %p262
      %p407 = scmp.lt.s32.totalorder %s24, 1
      %s408 = scalar_select %p407, %s24, 1
      %s409 = smul.addr %s408, 252
      %s410 = smul.addr %s409, 8
      %s411 = scalar_lea.vmem %s10, %s410
      %p412 = pneg %p291
      %p413 = pneg %p288
      %p414 = scmp.lt.s32.totalorder %s24, 1
      %s415 = scalar_select %p414, %s24, 1
      %s416 = smul.addr %s415, 252
      %s417 = smul.addr %s416, 8
      %s418 = scalar_lea.vmem %s11, %s417
      %p419 = pneg %p317
      %p420 = pneg %p314
      %p421 = scmp.lt.s32.totalorder %s24, 1
      %s422 = scalar_select %p421, %s24, 1
      %s423 = smul.addr %s422, 252
      %s424 = smul.addr %s423, 8
      %s425 = scalar_lea.vmem %s12, %s424
      %p426 = scmp.lt.s32.totalorder %s24, 1
      %s427 = scalar_select %p426, %s24, 1
      %s428 = smul.addr %s427, 175
      %s429 = smul.addr %s428, 8
      %s430 = scalar_lea.vmem %s0, %s429
      %p431 = scmp.lt.s32.totalorder %s24, 1
      %s432 = scalar_select %p431, %s24, 1
      %s433 = smul.addr %s432, 252
      %s434 = smul.addr %s433, 8
      %s435 = scalar_lea.vmem %s9, %s434
      %p436 = scmp.lt.s32.totalorder %s24, 1
      %s437 = scalar_select %p436, %s24, 1
      %s438 = smul.addr %s437, 252
      %s439 = smul.addr %s438, 8
      %s440 = scalar_lea.vmem %s10, %s439
      %p441 = scmp.lt.s32.totalorder %s24, 1
      %s442 = scalar_select %p441, %s24, 1
      %s443 = smul.addr %s442, 252
      %s444 = smul.addr %s443, 8
      %s445 = scalar_lea.vmem %s11, %s444
      %p446 = scmp.lt.s32.totalorder %s24, 1
      %s447 = scalar_select %p446, %s24, 1
      %s448 = smul.addr %s447, 252
      %s449 = smul.addr %s448, 8
      %s450 = scalar_lea.vmem %s12, %s449
      %vm451 = vcmask 261120
      %452 = vst.msk [vmem:[#allocation2] sm:$0xff] %vm451, 0.0
      %453 = vst.msk [vmem:[#allocation2 + $0x8] sm:$0xff] %vm451, 0.0
      %454 = vst.msk [vmem:[#allocation2 + $0x10] sm:$0xff] %vm451, 0.0
      %455 = vst.msk [vmem:[#allocation2 + $0x18] sm:$0xff] %vm451, 0.0
      %vm456 = vcmask 260096
      %457 = vst.msk [vmem:[#allocation2 + $0x20] sm:$0x7f] %vm456, 0.0
      %458 = vst.msk [vmem:[#allocation2 + $0x28] sm:$0xff] %vm451, 0.0
      %459 = vst.msk [vmem:[#allocation2 + $0x30] sm:$0xff] %vm451, 0.0
      %460 = vst.msk [vmem:[#allocation2 + $0x38] sm:$0xff] %vm451, 0.0
      %461 = vst.msk [vmem:[#allocation2 + $0x40] sm:$0xff] %vm451, 0.0
      %462 = vst.msk [vmem:[#allocation2 + $0x48] sm:$0x7f] %vm456, 0.0
      %463 = vst.msk [vmem:[#allocation2 + $0x50] sm:$0xff] %vm451, 0.0
      %464 = vst.msk [vmem:[#allocation2 + $0x58] sm:$0xff] %vm451, 0.0
      %465 = vst.msk [vmem:[#allocation2 + $0x60] sm:$0xff] %vm451, 0.0
      %466 = vst.msk [vmem:[#allocation2 + $0x68] sm:$0xff] %vm451, 0.0
      %467 = vst.msk [vmem:[#allocation2 + $0x70] sm:$0x7f] %vm456, 0.0
      %468 = vst.msk [vmem:[#allocation2 + $0x78] sm:$0xff] %vm451, 0.0
      %469 = vst.msk [vmem:[#allocation2 + $0x80] sm:$0xff] %vm451, 0.0
      %470 = vst.msk [vmem:[#allocation2 + $0x88] sm:$0xff] %vm451, 0.0
      %471 = vst.msk [vmem:[#allocation2 + $0x90] sm:$0xff] %vm451, 0.0
      %472 = vst.msk [vmem:[#allocation2 + $0x98] sm:$0x7f] %vm456, 0.0
      %473 = vst.msk [vmem:[#allocation2 + $0xa0] sm:$0xff] %vm451, 0.0
      %474 = vst.msk [vmem:[#allocation2 + $0xa8] sm:$0xff] %vm451, 0.0
      %475 = vst.msk [vmem:[#allocation2 + $0xb0] sm:$0xff] %vm451, 0.0
      %476 = vst.msk [vmem:[#allocation2 + $0xb8] sm:$0xff] %vm451, 0.0
      %477 = vst.msk [vmem:[#allocation2 + $0xc0] sm:$0x7f] %vm456, 0.0
      %478 = vst.msk [vmem:[#allocation2 + $0xc8] sm:$0xff] %vm451, 0.0
      %479 = vst.msk [vmem:[#allocation2 + $0xd0] sm:$0xff] %vm451, 0.0
      %480 = vst.msk [vmem:[#allocation2 + $0xd8] sm:$0xff] %vm451, 0.0
      %481 = vst.msk [vmem:[#allocation2 + $0xe0] sm:$0xff] %vm451, 0.0
      %482 = vst.msk [vmem:[#allocation2 + $0xe8] sm:$0x7f] %vm456, 0.0
      %483 = vst.msk [vmem:[#allocation2 + $0xf0] sm:$0xff] %vm451, 0.0
      %484 = vst.msk [vmem:[#allocation2 + $0xf8] sm:$0xff] %vm451, 0.0
      %485 = vst.msk [vmem:[#allocation2 + $0x100] sm:$0xff] %vm451, 0.0
      %486 = vst.msk [vmem:[#allocation2 + $0x108] sm:$0xff] %vm451, 0.0
      %487 = vst.msk [vmem:[#allocation2 + $0x110] sm:$0x7f] %vm456, 0.0
      %488 = vst.msk [vmem:[#allocation2 + $0x118] sm:$0xff] %vm451, 0.0
      %489 = vst.msk [vmem:[#allocation2 + $0x120] sm:$0xff] %vm451, 0.0
      %490 = vst.msk [vmem:[#allocation2 + $0x128] sm:$0xff] %vm451, 0.0
      %491 = vst.msk [vmem:[#allocation2 + $0x130] sm:$0xff] %vm451, 0.0
      %492 = vst.msk [vmem:[#allocation2 + $0x138] sm:$0x7f] %vm456, 0.0
      %493 = vst.msk [vmem:[#allocation2 + $0x140] sm:$0xff] %vm451, 0.0
      %494 = vst.msk [vmem:[#allocation2 + $0x148] sm:$0xff] %vm451, 0.0
      %495 = vst.msk [vmem:[#allocation2 + $0x150] sm:$0xff] %vm451, 0.0
      %496 = vst.msk [vmem:[#allocation2 + $0x158] sm:$0xff] %vm451, 0.0
      %497 = vst.msk [vmem:[#allocation2 + $0x160] sm:$0x7f] %vm456, 0.0
      %498 = vst.msk [vmem:[#allocation2 + $0x168] sm:$0xff] %vm451, 0.0
      %499 = vst.msk [vmem:[#allocation2 + $0x170] sm:$0xff] %vm451, 0.0
      %500 = vst.msk [vmem:[#allocation2 + $0x178] sm:$0xff] %vm451, 0.0
      %501 = vst.msk [vmem:[#allocation2 + $0x180] sm:$0xff] %vm451, 0.0
      %502 = vst.msk [vmem:[#allocation2 + $0x188] sm:$0x7f] %vm456, 0.0
      %503 = vst.msk [vmem:[#allocation2 + $0x190] sm:$0xff] %vm451, 0.0
      %504 = vst.msk [vmem:[#allocation2 + $0x198] sm:$0xff] %vm451, 0.0
      %505 = vst.msk [vmem:[#allocation2 + $0x1a0] sm:$0xff] %vm451, 0.0
      %506 = vst.msk [vmem:[#allocation2 + $0x1a8] sm:$0xff] %vm451, 0.0
      %507 = vst.msk [vmem:[#allocation2 + $0x1b0] sm:$0x7f] %vm456, 0.0
      %508 = vst.msk [vmem:[#allocation2 + $0x1b8] sm:$0xff] %vm451, 0.0
      %509 = vst.msk [vmem:[#allocation2 + $0x1c0] sm:$0xff] %vm451, 0.0
      %510 = vst.msk [vmem:[#allocation2 + $0x1c8] sm:$0xff] %vm451, 0.0
      %511 = vst.msk [vmem:[#allocation2 + $0x1d0] sm:$0xff] %vm451, 0.0
      %512 = vst.msk [vmem:[#allocation2 + $0x1d8] sm:$0x7f] %vm456, 0.0
      %513 = vst.msk [vmem:[#allocation2 + $0x1e0] sm:$0xff] %vm451, 0.0
      %514 = vst.msk [vmem:[#allocation2 + $0x1e8] sm:$0xff] %vm451, 0.0
      %515 = vst.msk [vmem:[#allocation2 + $0x1f0] sm:$0xff] %vm451, 0.0
      %516 = vst.msk [vmem:[#allocation2 + $0x1f8] sm:$0xff] %vm451, 0.0
      %517 = vst.msk [vmem:[#allocation2 + $0x200] sm:$0x7f] %vm456, 0.0
      %518 = vst.msk [vmem:[#allocation2 + $0x208] sm:$0xff] %vm451, 0.0
      %519 = vst.msk [vmem:[#allocation2 + $0x210] sm:$0xff] %vm451, 0.0
      %520 = vst.msk [vmem:[#allocation2 + $0x218] sm:$0xff] %vm451, 0.0
      %521 = vst.msk [vmem:[#allocation2 + $0x220] sm:$0xff] %vm451, 0.0
      %522 = vst.msk [vmem:[#allocation2 + $0x228] sm:$0x7f] %vm456, 0.0
      %523 = vst.msk [vmem:[#allocation2 + $0x230] sm:$0xff] %vm451, 0.0
      %524 = vst.msk [vmem:[#allocation2 + $0x238] sm:$0xff] %vm451, 0.0
      %525 = vst.msk [vmem:[#allocation2 + $0x240] sm:$0xff] %vm451, 0.0
      %526 = vst.msk [vmem:[#allocation2 + $0x248] sm:$0xff] %vm451, 0.0
      %527 = vst.msk [vmem:[#allocation2 + $0x250] sm:$0x7f] %vm456, 0.0
      %528 = vst.msk [vmem:[#allocation2 + $0x258] sm:$0xff] %vm451, 0.0
      %529 = vst.msk [vmem:[#allocation2 + $0x260] sm:$0xff] %vm451, 0.0
      %530 = vst.msk [vmem:[#allocation2 + $0x268] sm:$0xff] %vm451, 0.0
      %531 = vst.msk [vmem:[#allocation2 + $0x270] sm:$0xff] %vm451, 0.0
      %532 = vst.msk [vmem:[#allocation2 + $0x278] sm:$0x7f] %vm456, 0.0
      %533 = vst.msk [vmem:[#allocation2 + $0x280] sm:$0xff] %vm451, 0.0
      %534 = vst.msk [vmem:[#allocation2 + $0x288] sm:$0xff] %vm451, 0.0
      %535 = vst.msk [vmem:[#allocation2 + $0x290] sm:$0xff] %vm451, 0.0
      %536 = vst.msk [vmem:[#allocation2 + $0x298] sm:$0xff] %vm451, 0.0
      %537 = vst.msk [vmem:[#allocation2 + $0x2a0] sm:$0x7f] %vm456, 0.0
      %538 = vst.msk [vmem:[#allocation2 + $0x2a8] sm:$0xff] %vm451, 0.0
      %539 = vst.msk [vmem:[#allocation2 + $0x2b0] sm:$0xff] %vm451, 0.0
      %540 = vst.msk [vmem:[#allocation2 + $0x2b8] sm:$0xff] %vm451, 0.0
      %541 = vst.msk [vmem:[#allocation2 + $0x2c0] sm:$0xff] %vm451, 0.0
      %542 = vst.msk [vmem:[#allocation2 + $0x2c8] sm:$0x7f] %vm456, 0.0
      %543 = vst.msk [vmem:[#allocation2 + $0x2d0] sm:$0xff] %vm451, 0.0
      %544 = vst.msk [vmem:[#allocation2 + $0x2d8] sm:$0xff] %vm451, 0.0
      %545 = vst.msk [vmem:[#allocation2 + $0x2e0] sm:$0xff] %vm451, 0.0
      %546 = vst.msk [vmem:[#allocation2 + $0x2e8] sm:$0xff] %vm451, 0.0
      %547 = vst.msk [vmem:[#allocation2 + $0x2f0] sm:$0x7f] %vm456, 0.0
      %548 = vst.msk [vmem:[#allocation2 + $0x2f8] sm:$0xff] %vm451, 0.0
      %549 = vst.msk [vmem:[#allocation2 + $0x300] sm:$0xff] %vm451, 0.0
      %550 = vst.msk [vmem:[#allocation2 + $0x308] sm:$0xff] %vm451, 0.0
      %551 = vst.msk [vmem:[#allocation2 + $0x310] sm:$0xff] %vm451, 0.0
      %552 = vst.msk [vmem:[#allocation2 + $0x318] sm:$0x7f] %vm456, 0.0
      %553 = vst.msk [vmem:[#allocation2 + $0x320] sm:$0xff] %vm451, 0.0
      %554 = vst.msk [vmem:[#allocation2 + $0x328] sm:$0xff] %vm451, 0.0
      %555 = vst.msk [vmem:[#allocation2 + $0x330] sm:$0xff] %vm451, 0.0
      %556 = vst.msk [vmem:[#allocation2 + $0x338] sm:$0xff] %vm451, 0.0
      %557 = vst.msk [vmem:[#allocation2 + $0x340] sm:$0x7f] %vm456, 0.0
      %558 = vst.msk [vmem:[#allocation2 + $0x348] sm:$0xff] %vm451, 0.0
      %559 = vst.msk [vmem:[#allocation2 + $0x350] sm:$0xff] %vm451, 0.0
      %560 = vst.msk [vmem:[#allocation2 + $0x358] sm:$0xff] %vm451, 0.0
      %561 = vst.msk [vmem:[#allocation2 + $0x360] sm:$0xff] %vm451, 0.0
      %562 = vst.msk [vmem:[#allocation2 + $0x368] sm:$0x7f] %vm456, 0.0
      %563 = vst.msk [vmem:[#allocation2 + $0x370] sm:$0xff] %vm451, 0.0
      %564 = vst.msk [vmem:[#allocation2 + $0x378] sm:$0xff] %vm451, 0.0
      %565 = vst.msk [vmem:[#allocation2 + $0x380] sm:$0xff] %vm451, 0.0
      %566 = vst.msk [vmem:[#allocation2 + $0x388] sm:$0xff] %vm451, 0.0
      %567 = vst.msk [vmem:[#allocation2 + $0x390] sm:$0x7f] %vm456, 0.0
      %568 = vst.msk [vmem:[#allocation2 + $0x398] sm:$0xff] %vm451, 0.0
      %569 = vst.msk [vmem:[#allocation2 + $0x3a0] sm:$0xff] %vm451, 0.0
      %570 = vst.msk [vmem:[#allocation2 + $0x3a8] sm:$0xff] %vm451, 0.0
      %571 = vst.msk [vmem:[#allocation2 + $0x3b0] sm:$0xff] %vm451, 0.0
      %572 = vst.msk [vmem:[#allocation2 + $0x3b8] sm:$0x7f] %vm456, 0.0
      %573 = vst.msk [vmem:[#allocation2 + $0x3c0] sm:$0xff] %vm451, 0.0
      %574 = vst.msk [vmem:[#allocation2 + $0x3c8] sm:$0xff] %vm451, 0.0
      %575 = vst.msk [vmem:[#allocation2 + $0x3d0] sm:$0xff] %vm451, 0.0
      %576 = vst.msk [vmem:[#allocation2 + $0x3d8] sm:$0xff] %vm451, 0.0
      %577 = vst.msk [vmem:[#allocation2 + $0x3e0] sm:$0x7f] %vm456, 0.0
      %578 = vst.msk [vmem:[#allocation2 + $0x3e8] sm:$0xff] %vm451, 0.0
      %579 = vst.msk [vmem:[#allocation2 + $0x3f0] sm:$0xff] %vm451, 0.0
      %580 = vst.msk [vmem:[#allocation2 + $0x3f8] sm:$0xff] %vm451, 0.0
      %581 = vst.msk [vmem:[#allocation2 + $0x400] sm:$0xff] %vm451, 0.0
      %582 = vst.msk [vmem:[#allocation2 + $0x408] sm:$0x7f] %vm456, 0.0
      %583 = vst.msk [vmem:[#allocation2 + $0x410] sm:$0xff] %vm451, 0.0
      %584 = vst.msk [vmem:[#allocation2 + $0x418] sm:$0xff] %vm451, 0.0
      %585 = vst.msk [vmem:[#allocation2 + $0x420] sm:$0xff] %vm451, 0.0
      %586 = vst.msk [vmem:[#allocation2 + $0x428] sm:$0xff] %vm451, 0.0
      %587 = vst.msk [vmem:[#allocation2 + $0x430] sm:$0x7f] %vm456, 0.0
      %588 = vst.msk [vmem:[#allocation2 + $0x438] sm:$0xff] %vm451, 0.0
      %589 = vst.msk [vmem:[#allocation2 + $0x440] sm:$0xff] %vm451, 0.0
      %590 = vst.msk [vmem:[#allocation2 + $0x448] sm:$0xff] %vm451, 0.0
      %591 = vst.msk [vmem:[#allocation2 + $0x450] sm:$0xff] %vm451, 0.0
      %592 = vst.msk [vmem:[#allocation2 + $0x458] sm:$0x7f] %vm456, 0.0
      %593 = vst.msk [vmem:[#allocation2 + $0x460] sm:$0xff] %vm451, 0.0
      %594 = vst.msk [vmem:[#allocation2 + $0x468] sm:$0xff] %vm451, 0.0
      %595 = vst.msk [vmem:[#allocation2 + $0x470] sm:$0xff] %vm451, 0.0
      %596 = vst.msk [vmem:[#allocation2 + $0x478] sm:$0xff] %vm451, 0.0
      %597 = vst.msk [vmem:[#allocation2 + $0x480] sm:$0x7f] %vm456, 0.0
      %598 = vst.msk [vmem:[#allocation2 + $0x488] sm:$0xff] %vm451, 0.0
      %599 = vst.msk [vmem:[#allocation2 + $0x490] sm:$0xff] %vm451, 0.0
      %600 = vst.msk [vmem:[#allocation2 + $0x498] sm:$0xff] %vm451, 0.0
      %601 = vst.msk [vmem:[#allocation2 + $0x4a0] sm:$0xff] %vm451, 0.0
      %602 = vst.msk [vmem:[#allocation2 + $0x4a8] sm:$0x7f] %vm456, 0.0
      %603 = vst.msk [vmem:[#allocation2 + $0x4b0] sm:$0xff] %vm451, 0.0
      %604 = vst.msk [vmem:[#allocation2 + $0x4b8] sm:$0xff] %vm451, 0.0
      %605 = vst.msk [vmem:[#allocation2 + $0x4c0] sm:$0xff] %vm451, 0.0
      %606 = vst.msk [vmem:[#allocation2 + $0x4c8] sm:$0xff] %vm451, 0.0
      %607 = vst.msk [vmem:[#allocation2 + $0x4d0] sm:$0x7f] %vm456, 0.0
      %608 = vst.msk [vmem:[#allocation2 + $0x4d8] sm:$0xff] %vm451, 0.0
      %609 = vst.msk [vmem:[#allocation2 + $0x4e0] sm:$0xff] %vm451, 0.0
      %610 = vst.msk [vmem:[#allocation2 + $0x4e8] sm:$0xff] %vm451, 0.0
      %611 = vst.msk [vmem:[#allocation2 + $0x4f0] sm:$0xff] %vm451, 0.0
      %612 = vst.msk [vmem:[#allocation2 + $0x4f8] sm:$0x7f] %vm456, 0.0
      %613 = vst.msk [vmem:[#allocation2 + $0x500] sm:$0xff] %vm451, 0.0
      %614 = vst.msk [vmem:[#allocation2 + $0x508] sm:$0xff] %vm451, 0.0
      %615 = vst.msk [vmem:[#allocation2 + $0x510] sm:$0xff] %vm451, 0.0
      %616 = vst.msk [vmem:[#allocation2 + $0x518] sm:$0xff] %vm451, 0.0
      %617 = vst.msk [vmem:[#allocation2 + $0x520] sm:$0x7f] %vm456, 0.0
      %618 = vst.msk [vmem:[#allocation2 + $0x528] sm:$0xff] %vm451, 0.0
      %619 = vst.msk [vmem:[#allocation2 + $0x530] sm:$0xff] %vm451, 0.0
      %620 = vst.msk [vmem:[#allocation2 + $0x538] sm:$0xff] %vm451, 0.0
      %621 = vst.msk [vmem:[#allocation2 + $0x540] sm:$0xff] %vm451, 0.0
      %622 = vst.msk [vmem:[#allocation2 + $0x548] sm:$0x7f] %vm456, 0.0
      %623 = vst.msk [vmem:[#allocation2 + $0x550] sm:$0xff] %vm451, 0.0
      %624 = vst.msk [vmem:[#allocation2 + $0x558] sm:$0xff] %vm451, 0.0
      %625 = vst.msk [vmem:[#allocation2 + $0x560] sm:$0xff] %vm451, 0.0
      %626 = vst.msk [vmem:[#allocation2 + $0x568] sm:$0xff] %vm451, 0.0
      %627 = vst.msk [vmem:[#allocation2 + $0x570] sm:$0x7f] %vm456, 0.0
      %628 = vst.msk [vmem:[#allocation2 + $0x578] sm:$0xff] %vm451, 0.0
      %629 = vst.msk [vmem:[#allocation2 + $0x580] sm:$0xff] %vm451, 0.0
      %630 = vst.msk [vmem:[#allocation2 + $0x588] sm:$0xff] %vm451, 0.0
      %631 = vst.msk [vmem:[#allocation2 + $0x590] sm:$0xff] %vm451, 0.0
      %632 = vst.msk [vmem:[#allocation2 + $0x598] sm:$0x7f] %vm456, 0.0
      %633 = vst.msk [vmem:[#allocation2 + $0x5a0] sm:$0xff] %vm451, 0.0
      %634 = vst.msk [vmem:[#allocation2 + $0x5a8] sm:$0xff] %vm451, 0.0
      %635 = vst.msk [vmem:[#allocation2 + $0x5b0] sm:$0xff] %vm451, 0.0
      %636 = vst.msk [vmem:[#allocation2 + $0x5b8] sm:$0xff] %vm451, 0.0
      %637 = vst.msk [vmem:[#allocation2 + $0x5c0] sm:$0x7f] %vm456, 0.0
      %638 = vst.msk [vmem:[#allocation2 + $0x5c8] sm:$0xff] %vm451, 0.0
      %639 = vst.msk [vmem:[#allocation2 + $0x5d0] sm:$0xff] %vm451, 0.0
      %640 = vst.msk [vmem:[#allocation2 + $0x5d8] sm:$0xff] %vm451, 0.0
      %641 = vst.msk [vmem:[#allocation2 + $0x5e0] sm:$0xff] %vm451, 0.0
      %642 = vst.msk [vmem:[#allocation2 + $0x5e8] sm:$0x7f] %vm456, 0.0
      %643 = vst.msk [vmem:[#allocation2 + $0x5f0] sm:$0xff] %vm451, 0.0
      %644 = vst.msk [vmem:[#allocation2 + $0x5f8] sm:$0xff] %vm451, 0.0
      %645 = vst.msk [vmem:[#allocation2 + $0x600] sm:$0xff] %vm451, 0.0
      %646 = vst.msk [vmem:[#allocation2 + $0x608] sm:$0xff] %vm451, 0.0
      %647 = vst.msk [vmem:[#allocation2 + $0x610] sm:$0x7f] %vm456, 0.0
      %648 = vst.msk [vmem:[#allocation3] sm:$0xff] %vm451, 0.0
      %649 = vst.msk [vmem:[#allocation3 + $0x8] sm:$0xff] %vm451, 0.0
      %650 = vst.msk [vmem:[#allocation3 + $0x10] sm:$0xff] %vm451, 0.0
      %651 = vst.msk [vmem:[#allocation3 + $0x18] sm:$0xff] %vm451, 0.0
      %652 = vst.msk [vmem:[#allocation3 + $0x20] sm:$0xff] %vm451, 0.0
      %vm653 = vcmask 253952
      %654 = vst.msk [vmem:[#allocation3 + $0x28] sm:$0x1] %vm653, 0.0
      %655 = vst.msk [vmem:[#allocation3 + $0x30] sm:$0xff] %vm451, 0.0
      %656 = vst.msk [vmem:[#allocation3 + $0x38] sm:$0xff] %vm451, 0.0
      %657 = vst.msk [vmem:[#allocation3 + $0x40] sm:$0xff] %vm451, 0.0
      %658 = vst.msk [vmem:[#allocation3 + $0x48] sm:$0xff] %vm451, 0.0
      %659 = vst.msk [vmem:[#allocation3 + $0x50] sm:$0xff] %vm451, 0.0
      %660 = vst.msk [vmem:[#allocation3 + $0x58] sm:$0x1] %vm653, 0.0
      %661 = vst.msk [vmem:[#allocation3 + $0x60] sm:$0xff] %vm451, 0.0
      %662 = vst.msk [vmem:[#allocation3 + $0x68] sm:$0xff] %vm451, 0.0
      %663 = vst.msk [vmem:[#allocation3 + $0x70] sm:$0xff] %vm451, 0.0
      %664 = vst.msk [vmem:[#allocation3 + $0x78] sm:$0xff] %vm451, 0.0
      %665 = vst.msk [vmem:[#allocation3 + $0x80] sm:$0xff] %vm451, 0.0
      %666 = vst.msk [vmem:[#allocation3 + $0x88] sm:$0x1] %vm653, 0.0
      %667 = vst.msk [vmem:[#allocation3 + $0x90] sm:$0xff] %vm451, 0.0
      %668 = vst.msk [vmem:[#allocation3 + $0x98] sm:$0xff] %vm451, 0.0
      %669 = vst.msk [vmem:[#allocation3 + $0xa0] sm:$0xff] %vm451, 0.0
      %670 = vst.msk [vmem:[#allocation3 + $0xa8] sm:$0xff] %vm451, 0.0
      %671 = vst.msk [vmem:[#allocation3 + $0xb0] sm:$0xff] %vm451, 0.0
      %672 = vst.msk [vmem:[#allocation3 + $0xb8] sm:$0x1] %vm653, 0.0
      %673 = vst.msk [vmem:[#allocation3 + $0xc0] sm:$0xff] %vm451, 0.0
      %674 = vst.msk [vmem:[#allocation3 + $0xc8] sm:$0xff] %vm451, 0.0
      %675 = vst.msk [vmem:[#allocation3 + $0xd0] sm:$0xff] %vm451, 0.0
      %676 = vst.msk [vmem:[#allocation3 + $0xd8] sm:$0xff] %vm451, 0.0
      %677 = vst.msk [vmem:[#allocation3 + $0xe0] sm:$0xff] %vm451, 0.0
      %678 = vst.msk [vmem:[#allocation3 + $0xe8] sm:$0x1] %vm653, 0.0
      %679 = vst.msk [vmem:[#allocation3 + $0xf0] sm:$0xff] %vm451, 0.0
      %680 = vst.msk [vmem:[#allocation3 + $0xf8] sm:$0xff] %vm451, 0.0
      %681 = vst.msk [vmem:[#allocation3 + $0x100] sm:$0xff] %vm451, 0.0
      %682 = vst.msk [vmem:[#allocation3 + $0x108] sm:$0xff] %vm451, 0.0
      %683 = vst.msk [vmem:[#allocation3 + $0x110] sm:$0xff] %vm451, 0.0
      %684 = vst.msk [vmem:[#allocation3 + $0x118] sm:$0x1] %vm653, 0.0
      %685 = vst.msk [vmem:[#allocation3 + $0x120] sm:$0xff] %vm451, 0.0
      %686 = vst.msk [vmem:[#allocation3 + $0x128] sm:$0xff] %vm451, 0.0
      %687 = vst.msk [vmem:[#allocation3 + $0x130] sm:$0xff] %vm451, 0.0
      %688 = vst.msk [vmem:[#allocation3 + $0x138] sm:$0xff] %vm451, 0.0
      %689 = vst.msk [vmem:[#allocation3 + $0x140] sm:$0xff] %vm451, 0.0
      %690 = vst.msk [vmem:[#allocation3 + $0x148] sm:$0x1] %vm653, 0.0
      %691 = vst.msk [vmem:[#allocation3 + $0x150] sm:$0xff] %vm451, 0.0
      %692 = vst.msk [vmem:[#allocation3 + $0x158] sm:$0xff] %vm451, 0.0
      %693 = vst.msk [vmem:[#allocation3 + $0x160] sm:$0xff] %vm451, 0.0
      %694 = vst.msk [vmem:[#allocation3 + $0x168] sm:$0xff] %vm451, 0.0
      %695 = vst.msk [vmem:[#allocation3 + $0x170] sm:$0xff] %vm451, 0.0
      %696 = vst.msk [vmem:[#allocation3 + $0x178] sm:$0x1] %vm653, 0.0
      %697 = vst.msk [vmem:[#allocation3 + $0x180] sm:$0xff] %vm451, 0.0
      %698 = vst.msk [vmem:[#allocation3 + $0x188] sm:$0xff] %vm451, 0.0
      %699 = vst.msk [vmem:[#allocation3 + $0x190] sm:$0xff] %vm451, 0.0
      %700 = vst.msk [vmem:[#allocation3 + $0x198] sm:$0xff] %vm451, 0.0
      %701 = vst.msk [vmem:[#allocation3 + $0x1a0] sm:$0xff] %vm451, 0.0
      %702 = vst.msk [vmem:[#allocation3 + $0x1a8] sm:$0x1] %vm653, 0.0
      %703 = vst.msk [vmem:[#allocation3 + $0x1b0] sm:$0xff] %vm451, 0.0
      %704 = vst.msk [vmem:[#allocation3 + $0x1b8] sm:$0xff] %vm451, 0.0
      %705 = vst.msk [vmem:[#allocation3 + $0x1c0] sm:$0xff] %vm451, 0.0
      %706 = vst.msk [vmem:[#allocation3 + $0x1c8] sm:$0xff] %vm451, 0.0
      %707 = vst.msk [vmem:[#allocation3 + $0x1d0] sm:$0xff] %vm451, 0.0
      %708 = vst.msk [vmem:[#allocation3 + $0x1d8] sm:$0x1] %vm653, 0.0
      %709 = vst.msk [vmem:[#allocation3 + $0x1e0] sm:$0xff] %vm451, 0.0
      %710 = vst.msk [vmem:[#allocation3 + $0x1e8] sm:$0xff] %vm451, 0.0
      %711 = vst.msk [vmem:[#allocation3 + $0x1f0] sm:$0xff] %vm451, 0.0
      %712 = vst.msk [vmem:[#allocation3 + $0x1f8] sm:$0xff] %vm451, 0.0
      %713 = vst.msk [vmem:[#allocation3 + $0x200] sm:$0xff] %vm451, 0.0
      %714 = vst.msk [vmem:[#allocation3 + $0x208] sm:$0x1] %vm653, 0.0
      %715 = vst.msk [vmem:[#allocation3 + $0x210] sm:$0xff] %vm451, 0.0
      %716 = vst.msk [vmem:[#allocation3 + $0x218] sm:$0xff] %vm451, 0.0
      %717 = vst.msk [vmem:[#allocation3 + $0x220] sm:$0xff] %vm451, 0.0
      %718 = vst.msk [vmem:[#allocation3 + $0x228] sm:$0xff] %vm451, 0.0
      %719 = vst.msk [vmem:[#allocation3 + $0x230] sm:$0xff] %vm451, 0.0
      %720 = vst.msk [vmem:[#allocation3 + $0x238] sm:$0x1] %vm653, 0.0
      %721 = vst.msk [vmem:[#allocation3 + $0x240] sm:$0xff] %vm451, 0.0
      %722 = vst.msk [vmem:[#allocation3 + $0x248] sm:$0xff] %vm451, 0.0
      %723 = vst.msk [vmem:[#allocation3 + $0x250] sm:$0xff] %vm451, 0.0
      %724 = vst.msk [vmem:[#allocation3 + $0x258] sm:$0xff] %vm451, 0.0
      %725 = vst.msk [vmem:[#allocation3 + $0x260] sm:$0xff] %vm451, 0.0
      %726 = vst.msk [vmem:[#allocation3 + $0x268] sm:$0x1] %vm653, 0.0
      %727 = vst.msk [vmem:[#allocation3 + $0x270] sm:$0xff] %vm451, 0.0
      %728 = vst.msk [vmem:[#allocation3 + $0x278] sm:$0xff] %vm451, 0.0
      %729 = vst.msk [vmem:[#allocation3 + $0x280] sm:$0xff] %vm451, 0.0
      %730 = vst.msk [vmem:[#allocation3 + $0x288] sm:$0xff] %vm451, 0.0
      %731 = vst.msk [vmem:[#allocation3 + $0x290] sm:$0xff] %vm451, 0.0
      %732 = vst.msk [vmem:[#allocation3 + $0x298] sm:$0x1] %vm653, 0.0
      %733 = vst.msk [vmem:[#allocation3 + $0x2a0] sm:$0xff] %vm451, 0.0
      %734 = vst.msk [vmem:[#allocation3 + $0x2a8] sm:$0xff] %vm451, 0.0
      %735 = vst.msk [vmem:[#allocation3 + $0x2b0] sm:$0xff] %vm451, 0.0
      %736 = vst.msk [vmem:[#allocation3 + $0x2b8] sm:$0xff] %vm451, 0.0
      %737 = vst.msk [vmem:[#allocation3 + $0x2c0] sm:$0xff] %vm451, 0.0
      %738 = vst.msk [vmem:[#allocation3 + $0x2c8] sm:$0x1] %vm653, 0.0
      %739 = vst.msk [vmem:[#allocation3 + $0x2d0] sm:$0xff] %vm451, 0.0
      %740 = vst.msk [vmem:[#allocation3 + $0x2d8] sm:$0xff] %vm451, 0.0
      %741 = vst.msk [vmem:[#allocation3 + $0x2e0] sm:$0xff] %vm451, 0.0
      %742 = vst.msk [vmem:[#allocation3 + $0x2e8] sm:$0xff] %vm451, 0.0
      %743 = vst.msk [vmem:[#allocation3 + $0x2f0] sm:$0xff] %vm451, 0.0
      %744 = vst.msk [vmem:[#allocation3 + $0x2f8] sm:$0x1] %vm653, 0.0
      %745 = vst.msk [vmem:[#allocation3 + $0x300] sm:$0xff] %vm451, 0.0
      %746 = vst.msk [vmem:[#allocation3 + $0x308] sm:$0xff] %vm451, 0.0
      %747 = vst.msk [vmem:[#allocation3 + $0x310] sm:$0xff] %vm451, 0.0
      %748 = vst.msk [vmem:[#allocation3 + $0x318] sm:$0xff] %vm451, 0.0
      %749 = vst.msk [vmem:[#allocation3 + $0x320] sm:$0xff] %vm451, 0.0
      %750 = vst.msk [vmem:[#allocation3 + $0x328] sm:$0x1] %vm653, 0.0
      %751 = vst.msk [vmem:[#allocation3 + $0x330] sm:$0xff] %vm451, 0.0
      %752 = vst.msk [vmem:[#allocation3 + $0x338] sm:$0xff] %vm451, 0.0
      %753 = vst.msk [vmem:[#allocation3 + $0x340] sm:$0xff] %vm451, 0.0
      %754 = vst.msk [vmem:[#allocation3 + $0x348] sm:$0xff] %vm451, 0.0
      %755 = vst.msk [vmem:[#allocation3 + $0x350] sm:$0xff] %vm451, 0.0
      %756 = vst.msk [vmem:[#allocation3 + $0x358] sm:$0x1] %vm653, 0.0
      %757 = vst.msk [vmem:[#allocation3 + $0x360] sm:$0xff] %vm451, 0.0
      %758 = vst.msk [vmem:[#allocation3 + $0x368] sm:$0xff] %vm451, 0.0
      %759 = vst.msk [vmem:[#allocation3 + $0x370] sm:$0xff] %vm451, 0.0
      %760 = vst.msk [vmem:[#allocation3 + $0x378] sm:$0xff] %vm451, 0.0
      %761 = vst.msk [vmem:[#allocation3 + $0x380] sm:$0xff] %vm451, 0.0
      %762 = vst.msk [vmem:[#allocation3 + $0x388] sm:$0x1] %vm653, 0.0
      %763 = vst.msk [vmem:[#allocation3 + $0x390] sm:$0xff] %vm451, 0.0
      %764 = vst.msk [vmem:[#allocation3 + $0x398] sm:$0xff] %vm451, 0.0
      %765 = vst.msk [vmem:[#allocation3 + $0x3a0] sm:$0xff] %vm451, 0.0
      %766 = vst.msk [vmem:[#allocation3 + $0x3a8] sm:$0xff] %vm451, 0.0
      %767 = vst.msk [vmem:[#allocation3 + $0x3b0] sm:$0xff] %vm451, 0.0
      %768 = vst.msk [vmem:[#allocation3 + $0x3b8] sm:$0x1] %vm653, 0.0
      %769 = vst.msk [vmem:[#allocation3 + $0x3c0] sm:$0xff] %vm451, 0.0
      %770 = vst.msk [vmem:[#allocation3 + $0x3c8] sm:$0xff] %vm451, 0.0
      %771 = vst.msk [vmem:[#allocation3 + $0x3d0] sm:$0xff] %vm451, 0.0
      %772 = vst.msk [vmem:[#allocation3 + $0x3d8] sm:$0xff] %vm451, 0.0
      %773 = vst.msk [vmem:[#allocation3 + $0x3e0] sm:$0xff] %vm451, 0.0
      %774 = vst.msk [vmem:[#allocation3 + $0x3e8] sm:$0x1] %vm653, 0.0
      %775 = vst.msk [vmem:[#allocation3 + $0x3f0] sm:$0xff] %vm451, 0.0
      %776 = vst.msk [vmem:[#allocation3 + $0x3f8] sm:$0xff] %vm451, 0.0
      %777 = vst.msk [vmem:[#allocation3 + $0x400] sm:$0xff] %vm451, 0.0
      %778 = vst.msk [vmem:[#allocation3 + $0x408] sm:$0xff] %vm451, 0.0
      %779 = vst.msk [vmem:[#allocation3 + $0x410] sm:$0xff] %vm451, 0.0
      %780 = vst.msk [vmem:[#allocation3 + $0x418] sm:$0x1] %vm653, 0.0
      %781 = vst.msk [vmem:[#allocation3 + $0x420] sm:$0xff] %vm451, 0.0
      %782 = vst.msk [vmem:[#allocation3 + $0x428] sm:$0xff] %vm451, 0.0
      %783 = vst.msk [vmem:[#allocation3 + $0x430] sm:$0xff] %vm451, 0.0
      %784 = vst.msk [vmem:[#allocation3 + $0x438] sm:$0xff] %vm451, 0.0
      %785 = vst.msk [vmem:[#allocation3 + $0x440] sm:$0xff] %vm451, 0.0
      %786 = vst.msk [vmem:[#allocation3 + $0x448] sm:$0x1] %vm653, 0.0
      %787 = vst.msk [vmem:[#allocation3 + $0x450] sm:$0xff] %vm451, 0.0
      %788 = vst.msk [vmem:[#allocation3 + $0x458] sm:$0xff] %vm451, 0.0
      %789 = vst.msk [vmem:[#allocation3 + $0x460] sm:$0xff] %vm451, 0.0
      %790 = vst.msk [vmem:[#allocation3 + $0x468] sm:$0xff] %vm451, 0.0
      %791 = vst.msk [vmem:[#allocation3 + $0x470] sm:$0xff] %vm451, 0.0
      %792 = vst.msk [vmem:[#allocation3 + $0x478] sm:$0x1] %vm653, 0.0
      %793 = vst.msk [vmem:[#allocation3 + $0x480] sm:$0xff] %vm451, 0.0
      %794 = vst.msk [vmem:[#allocation3 + $0x488] sm:$0xff] %vm451, 0.0
      %795 = vst.msk [vmem:[#allocation3 + $0x490] sm:$0xff] %vm451, 0.0
      %796 = vst.msk [vmem:[#allocation3 + $0x498] sm:$0xff] %vm451, 0.0
      %797 = vst.msk [vmem:[#allocation3 + $0x4a0] sm:$0xff] %vm451, 0.0
      %798 = vst.msk [vmem:[#allocation3 + $0x4a8] sm:$0x1] %vm653, 0.0
      %799 = vst.msk [vmem:[#allocation3 + $0x4b0] sm:$0xff] %vm451, 0.0
      %800 = vst.msk [vmem:[#allocation3 + $0x4b8] sm:$0xff] %vm451, 0.0
      %801 = vst.msk [vmem:[#allocation3 + $0x4c0] sm:$0xff] %vm451, 0.0
      %802 = vst.msk [vmem:[#allocation3 + $0x4c8] sm:$0xff] %vm451, 0.0
      %803 = vst.msk [vmem:[#allocation3 + $0x4d0] sm:$0xff] %vm451, 0.0
      %804 = vst.msk [vmem:[#allocation3 + $0x4d8] sm:$0x1] %vm653, 0.0
      %805 = vst.msk [vmem:[#allocation3 + $0x4e0] sm:$0xff] %vm451, 0.0
      %806 = vst.msk [vmem:[#allocation3 + $0x4e8] sm:$0xff] %vm451, 0.0
      %807 = vst.msk [vmem:[#allocation3 + $0x4f0] sm:$0xff] %vm451, 0.0
      %808 = vst.msk [vmem:[#allocation3 + $0x4f8] sm:$0xff] %vm451, 0.0
      %809 = vst.msk [vmem:[#allocation3 + $0x500] sm:$0xff] %vm451, 0.0
      %810 = vst.msk [vmem:[#allocation3 + $0x508] sm:$0x1] %vm653, 0.0
      %811 = vst.msk [vmem:[#allocation3 + $0x510] sm:$0xff] %vm451, 0.0
      %812 = vst.msk [vmem:[#allocation3 + $0x518] sm:$0xff] %vm451, 0.0
      %813 = vst.msk [vmem:[#allocation3 + $0x520] sm:$0xff] %vm451, 0.0
      %814 = vst.msk [vmem:[#allocation3 + $0x528] sm:$0xff] %vm451, 0.0
      %815 = vst.msk [vmem:[#allocation3 + $0x530] sm:$0xff] %vm451, 0.0
      %816 = vst.msk [vmem:[#allocation3 + $0x538] sm:$0x1] %vm653, 0.0
      %817 = vst.msk [vmem:[#allocation3 + $0x540] sm:$0xff] %vm451, 0.0
      %818 = vst.msk [vmem:[#allocation3 + $0x548] sm:$0xff] %vm451, 0.0
      %819 = vst.msk [vmem:[#allocation3 + $0x550] sm:$0xff] %vm451, 0.0
      %820 = vst.msk [vmem:[#allocation3 + $0x558] sm:$0xff] %vm451, 0.0
      %821 = vst.msk [vmem:[#allocation3 + $0x560] sm:$0xff] %vm451, 0.0
      %822 = vst.msk [vmem:[#allocation3 + $0x568] sm:$0x1] %vm653, 0.0
      %823 = vst.msk [vmem:[#allocation3 + $0x570] sm:$0xff] %vm451, 0.0
      %824 = vst.msk [vmem:[#allocation3 + $0x578] sm:$0xff] %vm451, 0.0
      %825 = vst.msk [vmem:[#allocation3 + $0x580] sm:$0xff] %vm451, 0.0
      %826 = vst.msk [vmem:[#allocation3 + $0x588] sm:$0xff] %vm451, 0.0
      %827 = vst.msk [vmem:[#allocation3 + $0x590] sm:$0xff] %vm451, 0.0
      %828 = vst.msk [vmem:[#allocation3 + $0x598] sm:$0x1] %vm653, 0.0
      %829 = vst.msk [vmem:[#allocation3 + $0x5a0] sm:$0xff] %vm451, 0.0
      %830 = vst.msk [vmem:[#allocation3 + $0x5a8] sm:$0xff] %vm451, 0.0
      %831 = vst.msk [vmem:[#allocation3 + $0x5b0] sm:$0xff] %vm451, 0.0
      %832 = vst.msk [vmem:[#allocation3 + $0x5b8] sm:$0xff] %vm451, 0.0
      %833 = vst.msk [vmem:[#allocation3 + $0x5c0] sm:$0xff] %vm451, 0.0
      %834 = vst.msk [vmem:[#allocation3 + $0x5c8] sm:$0x1] %vm653, 0.0
      %835 = vst.msk [vmem:[#allocation3 + $0x5d0] sm:$0xff] %vm451, 0.0
      %836 = vst.msk [vmem:[#allocation3 + $0x5d8] sm:$0xff] %vm451, 0.0
      %837 = vst.msk [vmem:[#allocation3 + $0x5e0] sm:$0xff] %vm451, 0.0
      %838 = vst.msk [vmem:[#allocation3 + $0x5e8] sm:$0xff] %vm451, 0.0
      %839 = vst.msk [vmem:[#allocation3 + $0x5f0] sm:$0xff] %vm451, 0.0
      %840 = vst.msk [vmem:[#allocation3 + $0x5f8] sm:$0x1] %vm653, 0.0
      %841 = vst.msk [vmem:[#allocation3 + $0x600] sm:$0xff] %vm451, 0.0
      %842 = vst.msk [vmem:[#allocation3 + $0x608] sm:$0xff] %vm451, 0.0
      %843 = vst.msk [vmem:[#allocation3 + $0x610] sm:$0xff] %vm451, 0.0
      %844 = vst.msk [vmem:[#allocation3 + $0x618] sm:$0xff] %vm451, 0.0
      %845 = vst.msk [vmem:[#allocation3 + $0x620] sm:$0xff] %vm451, 0.0
      %846 = vst.msk [vmem:[#allocation3 + $0x628] sm:$0x1] %vm653, 0.0
      %847 = vst.msk [vmem:[#allocation3 + $0x630] sm:$0xff] %vm451, 0.0
      %848 = vst.msk [vmem:[#allocation3 + $0x638] sm:$0xff] %vm451, 0.0
      %849 = vst.msk [vmem:[#allocation3 + $0x640] sm:$0xff] %vm451, 0.0
      %850 = vst.msk [vmem:[#allocation3 + $0x648] sm:$0xff] %vm451, 0.0
      %851 = vst.msk [vmem:[#allocation3 + $0x650] sm:$0xff] %vm451, 0.0
      %852 = vst.msk [vmem:[#allocation3 + $0x658] sm:$0x1] %vm653, 0.0
      %853 = vst.msk [vmem:[#allocation3 + $0x660] sm:$0xff] %vm451, 0.0
      %854 = vst.msk [vmem:[#allocation3 + $0x668] sm:$0xff] %vm451, 0.0
      %855 = vst.msk [vmem:[#allocation3 + $0x670] sm:$0xff] %vm451, 0.0
      %856 = vst.msk [vmem:[#allocation3 + $0x678] sm:$0xff] %vm451, 0.0
      %857 = vst.msk [vmem:[#allocation3 + $0x680] sm:$0xff] %vm451, 0.0
      %858 = vst.msk [vmem:[#allocation3 + $0x688] sm:$0x1] %vm653, 0.0
      %859 = vst.msk [vmem:[#allocation3 + $0x690] sm:$0xff] %vm451, 0.0
      %860 = vst.msk [vmem:[#allocation3 + $0x698] sm:$0xff] %vm451, 0.0
      %861 = vst.msk [vmem:[#allocation3 + $0x6a0] sm:$0xff] %vm451, 0.0
      %862 = vst.msk [vmem:[#allocation3 + $0x6a8] sm:$0xff] %vm451, 0.0
      %863 = vst.msk [vmem:[#allocation3 + $0x6b0] sm:$0xff] %vm451, 0.0
      %864 = vst.msk [vmem:[#allocation3 + $0x6b8] sm:$0x1] %vm653, 0.0
      %865 = vst.msk [vmem:[#allocation3 + $0x6c0] sm:$0xff] %vm451, 0.0
      %866 = vst.msk [vmem:[#allocation3 + $0x6c8] sm:$0xff] %vm451, 0.0
      %867 = vst.msk [vmem:[#allocation3 + $0x6d0] sm:$0xff] %vm451, 0.0
      %868 = vst.msk [vmem:[#allocation3 + $0x6d8] sm:$0xff] %vm451, 0.0
      %869 = vst.msk [vmem:[#allocation3 + $0x6e0] sm:$0xff] %vm451, 0.0
      %870 = vst.msk [vmem:[#allocation3 + $0x6e8] sm:$0x1] %vm653, 0.0
      %871 = vst.msk [vmem:[#allocation3 + $0x6f0] sm:$0xff] %vm451, 0.0
      %872 = vst.msk [vmem:[#allocation3 + $0x6f8] sm:$0xff] %vm451, 0.0
      %873 = vst.msk [vmem:[#allocation3 + $0x700] sm:$0xff] %vm451, 0.0
      %874 = vst.msk [vmem:[#allocation3 + $0x708] sm:$0xff] %vm451, 0.0
      %875 = vst.msk [vmem:[#allocation3 + $0x710] sm:$0xff] %vm451, 0.0
      %876 = vst.msk [vmem:[#allocation3 + $0x718] sm:$0x1] %vm653, 0.0
      %877 = vst.msk [vmem:[#allocation3 + $0x720] sm:$0xff] %vm451, 0.0
      %878 = vst.msk [vmem:[#allocation3 + $0x728] sm:$0xff] %vm451, 0.0
      %879 = vst.msk [vmem:[#allocation3 + $0x730] sm:$0xff] %vm451, 0.0
      %880 = vst.msk [vmem:[#allocation3 + $0x738] sm:$0xff] %vm451, 0.0
      %881 = vst.msk [vmem:[#allocation3 + $0x740] sm:$0xff] %vm451, 0.0
      %882 = vst.msk [vmem:[#allocation3 + $0x748] sm:$0x1] %vm653, 0.0
      %883 = vst.msk [vmem:[#allocation3 + $0x750] sm:$0xff] %vm451, 0.0
      %884 = vst.msk [vmem:[#allocation3 + $0x758] sm:$0xff] %vm451, 0.0
      %885 = vst.msk [vmem:[#allocation3 + $0x760] sm:$0xff] %vm451, 0.0
      %886 = vst.msk [vmem:[#allocation3 + $0x768] sm:$0xff] %vm451, 0.0
      %887 = vst.msk [vmem:[#allocation3 + $0x770] sm:$0xff] %vm451, 0.0
      %888 = vst.msk [vmem:[#allocation3 + $0x778] sm:$0x1] %vm653, 0.0
      %889 = vst.msk [vmem:[#allocation3 + $0x780] sm:$0xff] %vm451, 0.0
      %890 = vst.msk [vmem:[#allocation3 + $0x788] sm:$0xff] %vm451, 0.0
      %891 = vst.msk [vmem:[#allocation3 + $0x790] sm:$0xff] %vm451, 0.0
      %892 = vst.msk [vmem:[#allocation3 + $0x798] sm:$0xff] %vm451, 0.0
      %893 = vst.msk [vmem:[#allocation3 + $0x7a0] sm:$0xff] %vm451, 0.0
      %894 = vst.msk [vmem:[#allocation3 + $0x7a8] sm:$0x1] %vm653, 0.0
      %895 = vst.msk [vmem:[#allocation4] sm:$0xff] %vm451, 0.0
      %896 = vst.msk [vmem:[#allocation4 + $0x8] sm:$0xff] %vm451, 0.0
      %897 = vst.msk [vmem:[#allocation4 + $0x10] sm:$0xff] %vm451, 0.0
      %898 = vst.msk [vmem:[#allocation4 + $0x18] sm:$0xff] %vm451, 0.0
      %899 = vst.msk [vmem:[#allocation4 + $0x20] sm:$0xff] %vm451, 0.0
      %vm900 = vcmask 256000
      %901 = vst.msk [vmem:[#allocation4 + $0x28] sm:$0x7] %vm900, 0.0
      %902 = vst.msk [vmem:[#allocation4 + $0x30] sm:$0xff] %vm451, 0.0
      %903 = vst.msk [vmem:[#allocation4 + $0x38] sm:$0xff] %vm451, 0.0
      %904 = vst.msk [vmem:[#allocation4 + $0x40] sm:$0xff] %vm451, 0.0
      %905 = vst.msk [vmem:[#allocation4 + $0x48] sm:$0xff] %vm451, 0.0
      %906 = vst.msk [vmem:[#allocation4 + $0x50] sm:$0xff] %vm451, 0.0
      %907 = vst.msk [vmem:[#allocation4 + $0x58] sm:$0x7] %vm900, 0.0
      %908 = vst.msk [vmem:[#allocation4 + $0x60] sm:$0xff] %vm451, 0.0
      %909 = vst.msk [vmem:[#allocation4 + $0x68] sm:$0xff] %vm451, 0.0
      %910 = vst.msk [vmem:[#allocation4 + $0x70] sm:$0xff] %vm451, 0.0
      %911 = vst.msk [vmem:[#allocation4 + $0x78] sm:$0xff] %vm451, 0.0
      %912 = vst.msk [vmem:[#allocation4 + $0x80] sm:$0xff] %vm451, 0.0
      %913 = vst.msk [vmem:[#allocation4 + $0x88] sm:$0x7] %vm900, 0.0
      %914 = vst.msk [vmem:[#allocation4 + $0x90] sm:$0xff] %vm451, 0.0
      %915 = vst.msk [vmem:[#allocation4 + $0x98] sm:$0xff] %vm451, 0.0
      %916 = vst.msk [vmem:[#allocation4 + $0xa0] sm:$0xff] %vm451, 0.0
      %917 = vst.msk [vmem:[#allocation4 + $0xa8] sm:$0xff] %vm451, 0.0
      %918 = vst.msk [vmem:[#allocation4 + $0xb0] sm:$0xff] %vm451, 0.0
      %919 = vst.msk [vmem:[#allocation4 + $0xb8] sm:$0x7] %vm900, 0.0
      %920 = vst.msk [vmem:[#allocation4 + $0xc0] sm:$0xff] %vm451, 0.0
      %921 = vst.msk [vmem:[#allocation4 + $0xc8] sm:$0xff] %vm451, 0.0
      %922 = vst.msk [vmem:[#allocation4 + $0xd0] sm:$0xff] %vm451, 0.0
      %923 = vst.msk [vmem:[#allocation4 + $0xd8] sm:$0xff] %vm451, 0.0
      %924 = vst.msk [vmem:[#allocation4 + $0xe0] sm:$0xff] %vm451, 0.0
      %925 = vst.msk [vmem:[#allocation4 + $0xe8] sm:$0x7] %vm900, 0.0
      %926 = vst.msk [vmem:[#allocation4 + $0xf0] sm:$0xff] %vm451, 0.0
      %927 = vst.msk [vmem:[#allocation4 + $0xf8] sm:$0xff] %vm451, 0.0
      %928 = vst.msk [vmem:[#allocation4 + $0x100] sm:$0xff] %vm451, 0.0
      %929 = vst.msk [vmem:[#allocation4 + $0x108] sm:$0xff] %vm451, 0.0
      %930 = vst.msk [vmem:[#allocation4 + $0x110] sm:$0xff] %vm451, 0.0
      %931 = vst.msk [vmem:[#allocation4 + $0x118] sm:$0x7] %vm900, 0.0
      %932 = vst.msk [vmem:[#allocation4 + $0x120] sm:$0xff] %vm451, 0.0
      %933 = vst.msk [vmem:[#allocation4 + $0x128] sm:$0xff] %vm451, 0.0
      %934 = vst.msk [vmem:[#allocation4 + $0x130] sm:$0xff] %vm451, 0.0
      %935 = vst.msk [vmem:[#allocation4 + $0x138] sm:$0xff] %vm451, 0.0
      %936 = vst.msk [vmem:[#allocation4 + $0x140] sm:$0xff] %vm451, 0.0
      %937 = vst.msk [vmem:[#allocation4 + $0x148] sm:$0x7] %vm900, 0.0
      %938 = vst.msk [vmem:[#allocation4 + $0x150] sm:$0xff] %vm451, 0.0
      %939 = vst.msk [vmem:[#allocation4 + $0x158] sm:$0xff] %vm451, 0.0
      %940 = vst.msk [vmem:[#allocation4 + $0x160] sm:$0xff] %vm451, 0.0
      %941 = vst.msk [vmem:[#allocation4 + $0x168] sm:$0xff] %vm451, 0.0
      %942 = vst.msk [vmem:[#allocation4 + $0x170] sm:$0xff] %vm451, 0.0
      %943 = vst.msk [vmem:[#allocation4 + $0x178] sm:$0x7] %vm900, 0.0
      %944 = vst.msk [vmem:[#allocation4 + $0x180] sm:$0xff] %vm451, 0.0
      %945 = vst.msk [vmem:[#allocation4 + $0x188] sm:$0xff] %vm451, 0.0
      %946 = vst.msk [vmem:[#allocation4 + $0x190] sm:$0xff] %vm451, 0.0
      %947 = vst.msk [vmem:[#allocation4 + $0x198] sm:$0xff] %vm451, 0.0
      %948 = vst.msk [vmem:[#allocation4 + $0x1a0] sm:$0xff] %vm451, 0.0
      %949 = vst.msk [vmem:[#allocation4 + $0x1a8] sm:$0x7] %vm900, 0.0
      %950 = vst.msk [vmem:[#allocation4 + $0x1b0] sm:$0xff] %vm451, 0.0
      %951 = vst.msk [vmem:[#allocation4 + $0x1b8] sm:$0xff] %vm451, 0.0
      %952 = vst.msk [vmem:[#allocation4 + $0x1c0] sm:$0xff] %vm451, 0.0
      %953 = vst.msk [vmem:[#allocation4 + $0x1c8] sm:$0xff] %vm451, 0.0
      %954 = vst.msk [vmem:[#allocation4 + $0x1d0] sm:$0xff] %vm451, 0.0
      %955 = vst.msk [vmem:[#allocation4 + $0x1d8] sm:$0x7] %vm900, 0.0
      %956 = vst.msk [vmem:[#allocation4 + $0x1e0] sm:$0xff] %vm451, 0.0
      %957 = vst.msk [vmem:[#allocation4 + $0x1e8] sm:$0xff] %vm451, 0.0
      %958 = vst.msk [vmem:[#allocation4 + $0x1f0] sm:$0xff] %vm451, 0.0
      %959 = vst.msk [vmem:[#allocation4 + $0x1f8] sm:$0xff] %vm451, 0.0
      %960 = vst.msk [vmem:[#allocation4 + $0x200] sm:$0xff] %vm451, 0.0
      %961 = vst.msk [vmem:[#allocation4 + $0x208] sm:$0x7] %vm900, 0.0
      %962 = vst.msk [vmem:[#allocation4 + $0x210] sm:$0xff] %vm451, 0.0
      %963 = vst.msk [vmem:[#allocation4 + $0x218] sm:$0xff] %vm451, 0.0
      %964 = vst.msk [vmem:[#allocation4 + $0x220] sm:$0xff] %vm451, 0.0
      %965 = vst.msk [vmem:[#allocation4 + $0x228] sm:$0xff] %vm451, 0.0
      %966 = vst.msk [vmem:[#allocation4 + $0x230] sm:$0xff] %vm451, 0.0
      %967 = vst.msk [vmem:[#allocation4 + $0x238] sm:$0x7] %vm900, 0.0
      %968 = vst.msk [vmem:[#allocation4 + $0x240] sm:$0xff] %vm451, 0.0
      %969 = vst.msk [vmem:[#allocation4 + $0x248] sm:$0xff] %vm451, 0.0
      %970 = vst.msk [vmem:[#allocation4 + $0x250] sm:$0xff] %vm451, 0.0
      %971 = vst.msk [vmem:[#allocation4 + $0x258] sm:$0xff] %vm451, 0.0
      %972 = vst.msk [vmem:[#allocation4 + $0x260] sm:$0xff] %vm451, 0.0
      %973 = vst.msk [vmem:[#allocation4 + $0x268] sm:$0x7] %vm900, 0.0
      %974 = vst.msk [vmem:[#allocation4 + $0x270] sm:$0xff] %vm451, 0.0
      %975 = vst.msk [vmem:[#allocation4 + $0x278] sm:$0xff] %vm451, 0.0
      %976 = vst.msk [vmem:[#allocation4 + $0x280] sm:$0xff] %vm451, 0.0
      %977 = vst.msk [vmem:[#allocation4 + $0x288] sm:$0xff] %vm451, 0.0
      %978 = vst.msk [vmem:[#allocation4 + $0x290] sm:$0xff] %vm451, 0.0
      %979 = vst.msk [vmem:[#allocation4 + $0x298] sm:$0x7] %vm900, 0.0
      %980 = vst.msk [vmem:[#allocation4 + $0x2a0] sm:$0xff] %vm451, 0.0
      %981 = vst.msk [vmem:[#allocation4 + $0x2a8] sm:$0xff] %vm451, 0.0
      %982 = vst.msk [vmem:[#allocation4 + $0x2b0] sm:$0xff] %vm451, 0.0
      %983 = vst.msk [vmem:[#allocation4 + $0x2b8] sm:$0xff] %vm451, 0.0
      %984 = vst.msk [vmem:[#allocation4 + $0x2c0] sm:$0xff] %vm451, 0.0
      %985 = vst.msk [vmem:[#allocation4 + $0x2c8] sm:$0x7] %vm900, 0.0
      %986 = vst.msk [vmem:[#allocation4 + $0x2d0] sm:$0xff] %vm451, 0.0
      %987 = vst.msk [vmem:[#allocation4 + $0x2d8] sm:$0xff] %vm451, 0.0
      %988 = vst.msk [vmem:[#allocation4 + $0x2e0] sm:$0xff] %vm451, 0.0
      %989 = vst.msk [vmem:[#allocation4 + $0x2e8] sm:$0xff] %vm451, 0.0
      %990 = vst.msk [vmem:[#allocation4 + $0x2f0] sm:$0xff] %vm451, 0.0
      %991 = vst.msk [vmem:[#allocation4 + $0x2f8] sm:$0x7] %vm900, 0.0
      %992 = vst.msk [vmem:[#allocation4 + $0x300] sm:$0xff] %vm451, 0.0
      %993 = vst.msk [vmem:[#allocation4 + $0x308] sm:$0xff] %vm451, 0.0
      %994 = vst.msk [vmem:[#allocation4 + $0x310] sm:$0xff] %vm451, 0.0
      %995 = vst.msk [vmem:[#allocation4 + $0x318] sm:$0xff] %vm451, 0.0
      %996 = vst.msk [vmem:[#allocation4 + $0x320] sm:$0xff] %vm451, 0.0
      %997 = vst.msk [vmem:[#allocation4 + $0x328] sm:$0x7] %vm900, 0.0
      %998 = vst.msk [vmem:[#allocation4 + $0x330] sm:$0xff] %vm451, 0.0
      %999 = vst.msk [vmem:[#allocation4 + $0x338] sm:$0xff] %vm451, 0.0
      %1000 = vst.msk [vmem:[#allocation4 + $0x340] sm:$0xff] %vm451, 0.0
      %1001 = vst.msk [vmem:[#allocation4 + $0x348] sm:$0xff] %vm451, 0.0
      %1002 = vst.msk [vmem:[#allocation4 + $0x350] sm:$0xff] %vm451, 0.0
      %1003 = vst.msk [vmem:[#allocation4 + $0x358] sm:$0x7] %vm900, 0.0
      %1004 = vst.msk [vmem:[#allocation4 + $0x360] sm:$0xff] %vm451, 0.0
      %1005 = vst.msk [vmem:[#allocation4 + $0x368] sm:$0xff] %vm451, 0.0
      %1006 = vst.msk [vmem:[#allocation4 + $0x370] sm:$0xff] %vm451, 0.0
      %1007 = vst.msk [vmem:[#allocation4 + $0x378] sm:$0xff] %vm451, 0.0
      %1008 = vst.msk [vmem:[#allocation4 + $0x380] sm:$0xff] %vm451, 0.0
      %1009 = vst.msk [vmem:[#allocation4 + $0x388] sm:$0x7] %vm900, 0.0
      %1010 = vst.msk [vmem:[#allocation4 + $0x390] sm:$0xff] %vm451, 0.0
      %1011 = vst.msk [vmem:[#allocation4 + $0x398] sm:$0xff] %vm451, 0.0
      %1012 = vst.msk [vmem:[#allocation4 + $0x3a0] sm:$0xff] %vm451, 0.0
      %1013 = vst.msk [vmem:[#allocation4 + $0x3a8] sm:$0xff] %vm451, 0.0
      %1014 = vst.msk [vmem:[#allocation4 + $0x3b0] sm:$0xff] %vm451, 0.0
      %1015 = vst.msk [vmem:[#allocation4 + $0x3b8] sm:$0x7] %vm900, 0.0
      %1016 = vst.msk [vmem:[#allocation4 + $0x3c0] sm:$0xff] %vm451, 0.0
      %1017 = vst.msk [vmem:[#allocation4 + $0x3c8] sm:$0xff] %vm451, 0.0
      %1018 = vst.msk [vmem:[#allocation4 + $0x3d0] sm:$0xff] %vm451, 0.0
      %1019 = vst.msk [vmem:[#allocation4 + $0x3d8] sm:$0xff] %vm451, 0.0
      %1020 = vst.msk [vmem:[#allocation4 + $0x3e0] sm:$0xff] %vm451, 0.0
      %1021 = vst.msk [vmem:[#allocation4 + $0x3e8] sm:$0x7] %vm900, 0.0
      %1022 = vst.msk [vmem:[#allocation4 + $0x3f0] sm:$0xff] %vm451, 0.0
      %1023 = vst.msk [vmem:[#allocation4 + $0x3f8] sm:$0xff] %vm451, 0.0
      %1024 = vst.msk [vmem:[#allocation4 + $0x400] sm:$0xff] %vm451, 0.0
      %1025 = vst.msk [vmem:[#allocation4 + $0x408] sm:$0xff] %vm451, 0.0
      %1026 = vst.msk [vmem:[#allocation4 + $0x410] sm:$0xff] %vm451, 0.0
      %1027 = vst.msk [vmem:[#allocation4 + $0x418] sm:$0x7] %vm900, 0.0
      %1028 = vst.msk [vmem:[#allocation4 + $0x420] sm:$0xff] %vm451, 0.0
      %1029 = vst.msk [vmem:[#allocation4 + $0x428] sm:$0xff] %vm451, 0.0
      %1030 = vst.msk [vmem:[#allocation4 + $0x430] sm:$0xff] %vm451, 0.0
      %1031 = vst.msk [vmem:[#allocation4 + $0x438] sm:$0xff] %vm451, 0.0
      %1032 = vst.msk [vmem:[#allocation4 + $0x440] sm:$0xff] %vm451, 0.0
      %1033 = vst.msk [vmem:[#allocation4 + $0x448] sm:$0x7] %vm900, 0.0
      %1034 = vst.msk [vmem:[#allocation4 + $0x450] sm:$0xff] %vm451, 0.0
      %1035 = vst.msk [vmem:[#allocation4 + $0x458] sm:$0xff] %vm451, 0.0
      %1036 = vst.msk [vmem:[#allocation4 + $0x460] sm:$0xff] %vm451, 0.0
      %1037 = vst.msk [vmem:[#allocation4 + $0x468] sm:$0xff] %vm451, 0.0
      %1038 = vst.msk [vmem:[#allocation4 + $0x470] sm:$0xff] %vm451, 0.0
      %1039 = vst.msk [vmem:[#allocation4 + $0x478] sm:$0x7] %vm900, 0.0
      %1040 = vst.msk [vmem:[#allocation4 + $0x480] sm:$0xff] %vm451, 0.0
      %1041 = vst.msk [vmem:[#allocation4 + $0x488] sm:$0xff] %vm451, 0.0
      %1042 = vst.msk [vmem:[#allocation4 + $0x490] sm:$0xff] %vm451, 0.0
      %1043 = vst.msk [vmem:[#allocation4 + $0x498] sm:$0xff] %vm451, 0.0
      %1044 = vst.msk [vmem:[#allocation4 + $0x4a0] sm:$0xff] %vm451, 0.0
      %1045 = vst.msk [vmem:[#allocation4 + $0x4a8] sm:$0x7] %vm900, 0.0
      %1046 = vst.msk [vmem:[#allocation4 + $0x4b0] sm:$0xff] %vm451, 0.0
      %1047 = vst.msk [vmem:[#allocation4 + $0x4b8] sm:$0xff] %vm451, 0.0
      %1048 = vst.msk [vmem:[#allocation4 + $0x4c0] sm:$0xff] %vm451, 0.0
      %1049 = vst.msk [vmem:[#allocation4 + $0x4c8] sm:$0xff] %vm451, 0.0
      %1050 = vst.msk [vmem:[#allocation4 + $0x4d0] sm:$0xff] %vm451, 0.0
      %1051 = vst.msk [vmem:[#allocation4 + $0x4d8] sm:$0x7] %vm900, 0.0
      %1052 = vst.msk [vmem:[#allocation4 + $0x4e0] sm:$0xff] %vm451, 0.0
      %1053 = vst.msk [vmem:[#allocation4 + $0x4e8] sm:$0xff] %vm451, 0.0
      %1054 = vst.msk [vmem:[#allocation4 + $0x4f0] sm:$0xff] %vm451, 0.0
      %1055 = vst.msk [vmem:[#allocation4 + $0x4f8] sm:$0xff] %vm451, 0.0
      %1056 = vst.msk [vmem:[#allocation4 + $0x500] sm:$0xff] %vm451, 0.0
      %1057 = vst.msk [vmem:[#allocation4 + $0x508] sm:$0x7] %vm900, 0.0
      %1058 = vst.msk [vmem:[#allocation4 + $0x510] sm:$0xff] %vm451, 0.0
      %1059 = vst.msk [vmem:[#allocation4 + $0x518] sm:$0xff] %vm451, 0.0
      %1060 = vst.msk [vmem:[#allocation4 + $0x520] sm:$0xff] %vm451, 0.0
      %1061 = vst.msk [vmem:[#allocation4 + $0x528] sm:$0xff] %vm451, 0.0
      %1062 = vst.msk [vmem:[#allocation4 + $0x530] sm:$0xff] %vm451, 0.0
      %1063 = vst.msk [vmem:[#allocation4 + $0x538] sm:$0x7] %vm900, 0.0
      %1064 = vst.msk [vmem:[#allocation4 + $0x540] sm:$0xff] %vm451, 0.0
      %1065 = vst.msk [vmem:[#allocation4 + $0x548] sm:$0xff] %vm451, 0.0
      %1066 = vst.msk [vmem:[#allocation4 + $0x550] sm:$0xff] %vm451, 0.0
      %1067 = vst.msk [vmem:[#allocation4 + $0x558] sm:$0xff] %vm451, 0.0
      %1068 = vst.msk [vmem:[#allocation4 + $0x560] sm:$0xff] %vm451, 0.0
      %1069 = vst.msk [vmem:[#allocation4 + $0x568] sm:$0x7] %vm900, 0.0
      %1070 = vst.msk [vmem:[#allocation4 + $0x570] sm:$0xff] %vm451, 0.0
      %1071 = vst.msk [vmem:[#allocation4 + $0x578] sm:$0xff] %vm451, 0.0
      %1072 = vst.msk [vmem:[#allocation4 + $0x580] sm:$0xff] %vm451, 0.0
      %1073 = vst.msk [vmem:[#allocation4 + $0x588] sm:$0xff] %vm451, 0.0
      %1074 = vst.msk [vmem:[#allocation4 + $0x590] sm:$0xff] %vm451, 0.0
      %1075 = vst.msk [vmem:[#allocation4 + $0x598] sm:$0x7] %vm900, 0.0
      %1076 = vst.msk [vmem:[#allocation4 + $0x5a0] sm:$0xff] %vm451, 0.0
      %1077 = vst.msk [vmem:[#allocation4 + $0x5a8] sm:$0xff] %vm451, 0.0
      %1078 = vst.msk [vmem:[#allocation4 + $0x5b0] sm:$0xff] %vm451, 0.0
      %1079 = vst.msk [vmem:[#allocation4 + $0x5b8] sm:$0xff] %vm451, 0.0
      %1080 = vst.msk [vmem:[#allocation4 + $0x5c0] sm:$0xff] %vm451, 0.0
      %1081 = vst.msk [vmem:[#allocation4 + $0x5c8] sm:$0x7] %vm900, 0.0
      %1082 = vst.msk [vmem:[#allocation4 + $0x5d0] sm:$0xff] %vm451, 0.0
      %1083 = vst.msk [vmem:[#allocation4 + $0x5d8] sm:$0xff] %vm451, 0.0
      %1084 = vst.msk [vmem:[#allocation4 + $0x5e0] sm:$0xff] %vm451, 0.0
      %1085 = vst.msk [vmem:[#allocation4 + $0x5e8] sm:$0xff] %vm451, 0.0
      %1086 = vst.msk [vmem:[#allocation4 + $0x5f0] sm:$0xff] %vm451, 0.0
      %1087 = vst.msk [vmem:[#allocation4 + $0x5f8] sm:$0x7] %vm900, 0.0
      %1088 = vst.msk [vmem:[#allocation4 + $0x600] sm:$0xff] %vm451, 0.0
      %1089 = vst.msk [vmem:[#allocation4 + $0x608] sm:$0xff] %vm451, 0.0
      %1090 = vst.msk [vmem:[#allocation4 + $0x610] sm:$0xff] %vm451, 0.0
      %1091 = vst.msk [vmem:[#allocation4 + $0x618] sm:$0xff] %vm451, 0.0
      %1092 = vst.msk [vmem:[#allocation4 + $0x620] sm:$0xff] %vm451, 0.0
      %1093 = vst.msk [vmem:[#allocation4 + $0x628] sm:$0x7] %vm900, 0.0
      %1094 = vst.msk [vmem:[#allocation4 + $0x630] sm:$0xff] %vm451, 0.0
      %1095 = vst.msk [vmem:[#allocation4 + $0x638] sm:$0xff] %vm451, 0.0
      %1096 = vst.msk [vmem:[#allocation4 + $0x640] sm:$0xff] %vm451, 0.0
      %1097 = vst.msk [vmem:[#allocation4 + $0x648] sm:$0xff] %vm451, 0.0
      %1098 = vst.msk [vmem:[#allocation4 + $0x650] sm:$0xff] %vm451, 0.0
      %1099 = vst.msk [vmem:[#allocation4 + $0x658] sm:$0x7] %vm900, 0.0
      %1100 = vst.msk [vmem:[#allocation4 + $0x660] sm:$0xff] %vm451, 0.0
      %1101 = vst.msk [vmem:[#allocation4 + $0x668] sm:$0xff] %vm451, 0.0
      %1102 = vst.msk [vmem:[#allocation4 + $0x670] sm:$0xff] %vm451, 0.0
      %1103 = vst.msk [vmem:[#allocation4 + $0x678] sm:$0xff] %vm451, 0.0
      %1104 = vst.msk [vmem:[#allocation4 + $0x680] sm:$0xff] %vm451, 0.0
      %1105 = vst.msk [vmem:[#allocation4 + $0x688] sm:$0x7] %vm900, 0.0
      %1106 = vst.msk [vmem:[#allocation4 + $0x690] sm:$0xff] %vm451, 0.0
      %1107 = vst.msk [vmem:[#allocation4 + $0x698] sm:$0xff] %vm451, 0.0
      %1108 = vst.msk [vmem:[#allocation4 + $0x6a0] sm:$0xff] %vm451, 0.0
      %1109 = vst.msk [vmem:[#allocation4 + $0x6a8] sm:$0xff] %vm451, 0.0
      %1110 = vst.msk [vmem:[#allocation4 + $0x6b0] sm:$0xff] %vm451, 0.0
      %1111 = vst.msk [vmem:[#allocation4 + $0x6b8] sm:$0x7] %vm900, 0.0
      %1112 = vst.msk [vmem:[#allocation4 + $0x6c0] sm:$0xff] %vm451, 0.0
      %1113 = vst.msk [vmem:[#allocation4 + $0x6c8] sm:$0xff] %vm451, 0.0
      %1114 = vst.msk [vmem:[#allocation4 + $0x6d0] sm:$0xff] %vm451, 0.0
      %1115 = vst.msk [vmem:[#allocation4 + $0x6d8] sm:$0xff] %vm451, 0.0
      %1116 = vst.msk [vmem:[#allocation4 + $0x6e0] sm:$0xff] %vm451, 0.0
      %1117 = vst.msk [vmem:[#allocation4 + $0x6e8] sm:$0x7] %vm900, 0.0
      %1118 = vst.msk [vmem:[#allocation4 + $0x6f0] sm:$0xff] %vm451, 0.0
      %1119 = vst.msk [vmem:[#allocation4 + $0x6f8] sm:$0xff] %vm451, 0.0
      %1120 = vst.msk [vmem:[#allocation4 + $0x700] sm:$0xff] %vm451, 0.0
      %1121 = vst.msk [vmem:[#allocation4 + $0x708] sm:$0xff] %vm451, 0.0
      %1122 = vst.msk [vmem:[#allocation4 + $0x710] sm:$0xff] %vm451, 0.0
      %1123 = vst.msk [vmem:[#allocation4 + $0x718] sm:$0x7] %vm900, 0.0
      %1124 = vst.msk [vmem:[#allocation4 + $0x720] sm:$0xff] %vm451, 0.0
      %1125 = vst.msk [vmem:[#allocation4 + $0x728] sm:$0xff] %vm451, 0.0
      %1126 = vst.msk [vmem:[#allocation4 + $0x730] sm:$0xff] %vm451, 0.0
      %1127 = vst.msk [vmem:[#allocation4 + $0x738] sm:$0xff] %vm451, 0.0
      %1128 = vst.msk [vmem:[#allocation4 + $0x740] sm:$0xff] %vm451, 0.0
      %1129 = vst.msk [vmem:[#allocation4 + $0x748] sm:$0x7] %vm900, 0.0
      %1130 = vst.msk [vmem:[#allocation4 + $0x750] sm:$0xff] %vm451, 0.0
      %1131 = vst.msk [vmem:[#allocation4 + $0x758] sm:$0xff] %vm451, 0.0
      %1132 = vst.msk [vmem:[#allocation4 + $0x760] sm:$0xff] %vm451, 0.0
      %1133 = vst.msk [vmem:[#allocation4 + $0x768] sm:$0xff] %vm451, 0.0
      %1134 = vst.msk [vmem:[#allocation4 + $0x770] sm:$0xff] %vm451, 0.0
      %1135 = vst.msk [vmem:[#allocation4 + $0x778] sm:$0x7] %vm900, 0.0
      %1136 = vst.msk [vmem:[#allocation4 + $0x780] sm:$0xff] %vm451, 0.0
      %1137 = vst.msk [vmem:[#allocation4 + $0x788] sm:$0xff] %vm451, 0.0
      %1138 = vst.msk [vmem:[#allocation4 + $0x790] sm:$0xff] %vm451, 0.0
      %1139 = vst.msk [vmem:[#allocation4 + $0x798] sm:$0xff] %vm451, 0.0
      %1140 = vst.msk [vmem:[#allocation4 + $0x7a0] sm:$0xff] %vm451, 0.0
      %1141 = vst.msk [vmem:[#allocation4 + $0x7a8] sm:$0x7] %vm900, 0.0
      %1142 = vst.msk [vmem:[#allocation4 + $0x7b0] sm:$0xff] %vm451, 0.0
      %1143 = vst.msk [vmem:[#allocation4 + $0x7b8] sm:$0xff] %vm451, 0.0
      %1144 = vst.msk [vmem:[#allocation4 + $0x7c0] sm:$0xff] %vm451, 0.0
      %1145 = vst.msk [vmem:[#allocation4 + $0x7c8] sm:$0xff] %vm451, 0.0
      %1146 = vst.msk [vmem:[#allocation4 + $0x7d0] sm:$0xff] %vm451, 0.0
      %1147 = vst.msk [vmem:[#allocation4 + $0x7d8] sm:$0x7] %vm900, 0.0
      %1148 = vst.msk [vmem:[#allocation4 + $0x7e0] sm:$0xff] %vm451, 0.0
      %1149 = vst.msk [vmem:[#allocation4 + $0x7e8] sm:$0xff] %vm451, 0.0
      %1150 = vst.msk [vmem:[#allocation4 + $0x7f0] sm:$0xff] %vm451, 0.0
      %1151 = vst.msk [vmem:[#allocation4 + $0x7f8] sm:$0xff] %vm451, 0.0
      %1152 = vst.msk [vmem:[#allocation4 + $0x800] sm:$0xff] %vm451, 0.0
      %1153 = vst.msk [vmem:[#allocation4 + $0x808] sm:$0x7] %vm900, 0.0
      %1154 = vst.msk [vmem:[#allocation5] sm:$0xff] %vm451, 0.0
      %1155 = vst.msk [vmem:[#allocation5 + $0x8] sm:$0xff] %vm451, 0.0
      %1156 = vst.msk [vmem:[#allocation5 + $0x10] sm:$0xff] %vm451, 0.0
      %1157 = vst.msk [vmem:[#allocation5 + $0x18] sm:$0xff] %vm451, 0.0
      %1158 = vst.msk [vmem:[#allocation5 + $0x20] sm:$0xff] %vm451, 0.0
      %1159 = vst.msk [vmem:[#allocation5 + $0x28] sm:$0x7] %vm900, 0.0
      %1160 = vst.msk [vmem:[#allocation5 + $0x30] sm:$0xff] %vm451, 0.0
      %1161 = vst.msk [vmem:[#allocation5 + $0x38] sm:$0xff] %vm451, 0.0
      %1162 = vst.msk [vmem:[#allocation5 + $0x40] sm:$0xff] %vm451, 0.0
      %1163 = vst.msk [vmem:[#allocation5 + $0x48] sm:$0xff] %vm451, 0.0
      %1164 = vst.msk [vmem:[#allocation5 + $0x50] sm:$0xff] %vm451, 0.0
      %1165 = vst.msk [vmem:[#allocation5 + $0x58] sm:$0x7] %vm900, 0.0
      %1166 = vst.msk [vmem:[#allocation5 + $0x60] sm:$0xff] %vm451, 0.0
      %1167 = vst.msk [vmem:[#allocation5 + $0x68] sm:$0xff] %vm451, 0.0
      %1168 = vst.msk [vmem:[#allocation5 + $0x70] sm:$0xff] %vm451, 0.0
      %1169 = vst.msk [vmem:[#allocation5 + $0x78] sm:$0xff] %vm451, 0.0
      %1170 = vst.msk [vmem:[#allocation5 + $0x80] sm:$0xff] %vm451, 0.0
      %1171 = vst.msk [vmem:[#allocation5 + $0x88] sm:$0x7] %vm900, 0.0
      %1172 = vst.msk [vmem:[#allocation5 + $0x90] sm:$0xff] %vm451, 0.0
      %1173 = vst.msk [vmem:[#allocation5 + $0x98] sm:$0xff] %vm451, 0.0
      %1174 = vst.msk [vmem:[#allocation5 + $0xa0] sm:$0xff] %vm451, 0.0
      %1175 = vst.msk [vmem:[#allocation5 + $0xa8] sm:$0xff] %vm451, 0.0
      %1176 = vst.msk [vmem:[#allocation5 + $0xb0] sm:$0xff] %vm451, 0.0
      %1177 = vst.msk [vmem:[#allocation5 + $0xb8] sm:$0x7] %vm900, 0.0
      %1178 = vst.msk [vmem:[#allocation5 + $0xc0] sm:$0xff] %vm451, 0.0
      %1179 = vst.msk [vmem:[#allocation5 + $0xc8] sm:$0xff] %vm451, 0.0
      %1180 = vst.msk [vmem:[#allocation5 + $0xd0] sm:$0xff] %vm451, 0.0
      %1181 = vst.msk [vmem:[#allocation5 + $0xd8] sm:$0xff] %vm451, 0.0
      %1182 = vst.msk [vmem:[#allocation5 + $0xe0] sm:$0xff] %vm451, 0.0
      %1183 = vst.msk [vmem:[#allocation5 + $0xe8] sm:$0x7] %vm900, 0.0
      %1184 = vst.msk [vmem:[#allocation5 + $0xf0] sm:$0xff] %vm451, 0.0
      %1185 = vst.msk [vmem:[#allocation5 + $0xf8] sm:$0xff] %vm451, 0.0
      %1186 = vst.msk [vmem:[#allocation5 + $0x100] sm:$0xff] %vm451, 0.0
      %1187 = vst.msk [vmem:[#allocation5 + $0x108] sm:$0xff] %vm451, 0.0
      %1188 = vst.msk [vmem:[#allocation5 + $0x110] sm:$0xff] %vm451, 0.0
      %1189 = vst.msk [vmem:[#allocation5 + $0x118] sm:$0x7] %vm900, 0.0
      %1190 = vst.msk [vmem:[#allocation5 + $0x120] sm:$0xff] %vm451, 0.0
      %1191 = vst.msk [vmem:[#allocation5 + $0x128] sm:$0xff] %vm451, 0.0
      %1192 = vst.msk [vmem:[#allocation5 + $0x130] sm:$0xff] %vm451, 0.0
      %1193 = vst.msk [vmem:[#allocation5 + $0x138] sm:$0xff] %vm451, 0.0
      %1194 = vst.msk [vmem:[#allocation5 + $0x140] sm:$0xff] %vm451, 0.0
      %1195 = vst.msk [vmem:[#allocation5 + $0x148] sm:$0x7] %vm900, 0.0
      %1196 = vst.msk [vmem:[#allocation5 + $0x150] sm:$0xff] %vm451, 0.0
      %1197 = vst.msk [vmem:[#allocation5 + $0x158] sm:$0xff] %vm451, 0.0
      %1198 = vst.msk [vmem:[#allocation5 + $0x160] sm:$0xff] %vm451, 0.0
      %1199 = vst.msk [vmem:[#allocation5 + $0x168] sm:$0xff] %vm451, 0.0
      %1200 = vst.msk [vmem:[#allocation5 + $0x170] sm:$0xff] %vm451, 0.0
      %1201 = vst.msk [vmem:[#allocation5 + $0x178] sm:$0x7] %vm900, 0.0
      %1202 = vst.msk [vmem:[#allocation5 + $0x180] sm:$0xff] %vm451, 0.0
      %1203 = vst.msk [vmem:[#allocation5 + $0x188] sm:$0xff] %vm451, 0.0
      %1204 = vst.msk [vmem:[#allocation5 + $0x190] sm:$0xff] %vm451, 0.0
      %1205 = vst.msk [vmem:[#allocation5 + $0x198] sm:$0xff] %vm451, 0.0
      %1206 = vst.msk [vmem:[#allocation5 + $0x1a0] sm:$0xff] %vm451, 0.0
      %1207 = vst.msk [vmem:[#allocation5 + $0x1a8] sm:$0x7] %vm900, 0.0
      %1208 = vst.msk [vmem:[#allocation5 + $0x1b0] sm:$0xff] %vm451, 0.0
      %1209 = vst.msk [vmem:[#allocation5 + $0x1b8] sm:$0xff] %vm451, 0.0
      %1210 = vst.msk [vmem:[#allocation5 + $0x1c0] sm:$0xff] %vm451, 0.0
      %1211 = vst.msk [vmem:[#allocation5 + $0x1c8] sm:$0xff] %vm451, 0.0
      %1212 = vst.msk [vmem:[#allocation5 + $0x1d0] sm:$0xff] %vm451, 0.0
      %1213 = vst.msk [vmem:[#allocation5 + $0x1d8] sm:$0x7] %vm900, 0.0
      %1214 = vst.msk [vmem:[#allocation5 + $0x1e0] sm:$0xff] %vm451, 0.0
      %1215 = vst.msk [vmem:[#allocation5 + $0x1e8] sm:$0xff] %vm451, 0.0
      %1216 = vst.msk [vmem:[#allocation5 + $0x1f0] sm:$0xff] %vm451, 0.0
      %1217 = vst.msk [vmem:[#allocation5 + $0x1f8] sm:$0xff] %vm451, 0.0
      %1218 = vst.msk [vmem:[#allocation5 + $0x200] sm:$0xff] %vm451, 0.0
      %1219 = vst.msk [vmem:[#allocation5 + $0x208] sm:$0x7] %vm900, 0.0
      %1220 = vst.msk [vmem:[#allocation5 + $0x210] sm:$0xff] %vm451, 0.0
      %1221 = vst.msk [vmem:[#allocation5 + $0x218] sm:$0xff] %vm451, 0.0
      %1222 = vst.msk [vmem:[#allocation5 + $0x220] sm:$0xff] %vm451, 0.0
      %1223 = vst.msk [vmem:[#allocation5 + $0x228] sm:$0xff] %vm451, 0.0
      %1224 = vst.msk [vmem:[#allocation5 + $0x230] sm:$0xff] %vm451, 0.0
      %1225 = vst.msk [vmem:[#allocation5 + $0x238] sm:$0x7] %vm900, 0.0
      %1226 = vst.msk [vmem:[#allocation5 + $0x240] sm:$0xff] %vm451, 0.0
      %1227 = vst.msk [vmem:[#allocation5 + $0x248] sm:$0xff] %vm451, 0.0
      %1228 = vst.msk [vmem:[#allocation5 + $0x250] sm:$0xff] %vm451, 0.0
      %1229 = vst.msk [vmem:[#allocation5 + $0x258] sm:$0xff] %vm451, 0.0
      %1230 = vst.msk [vmem:[#allocation5 + $0x260] sm:$0xff] %vm451, 0.0
      %1231 = vst.msk [vmem:[#allocation5 + $0x268] sm:$0x7] %vm900, 0.0
      %1232 = vst.msk [vmem:[#allocation5 + $0x270] sm:$0xff] %vm451, 0.0
      %1233 = vst.msk [vmem:[#allocation5 + $0x278] sm:$0xff] %vm451, 0.0
      %1234 = vst.msk [vmem:[#allocation5 + $0x280] sm:$0xff] %vm451, 0.0
      %1235 = vst.msk [vmem:[#allocation5 + $0x288] sm:$0xff] %vm451, 0.0
      %1236 = vst.msk [vmem:[#allocation5 + $0x290] sm:$0xff] %vm451, 0.0
      %1237 = vst.msk [vmem:[#allocation5 + $0x298] sm:$0x7] %vm900, 0.0
      %1238 = vst.msk [vmem:[#allocation5 + $0x2a0] sm:$0xff] %vm451, 0.0
      %1239 = vst.msk [vmem:[#allocation5 + $0x2a8] sm:$0xff] %vm451, 0.0
      %1240 = vst.msk [vmem:[#allocation5 + $0x2b0] sm:$0xff] %vm451, 0.0
      %1241 = vst.msk [vmem:[#allocation5 + $0x2b8] sm:$0xff] %vm451, 0.0
      %1242 = vst.msk [vmem:[#allocation5 + $0x2c0] sm:$0xff] %vm451, 0.0
      %1243 = vst.msk [vmem:[#allocation5 + $0x2c8] sm:$0x7] %vm900, 0.0
      %1244 = vst.msk [vmem:[#allocation5 + $0x2d0] sm:$0xff] %vm451, 0.0
      %1245 = vst.msk [vmem:[#allocation5 + $0x2d8] sm:$0xff] %vm451, 0.0
      %1246 = vst.msk [vmem:[#allocation5 + $0x2e0] sm:$0xff] %vm451, 0.0
      %1247 = vst.msk [vmem:[#allocation5 + $0x2e8] sm:$0xff] %vm451, 0.0
      %1248 = vst.msk [vmem:[#allocation5 + $0x2f0] sm:$0xff] %vm451, 0.0
      %1249 = vst.msk [vmem:[#allocation5 + $0x2f8] sm:$0x7] %vm900, 0.0
      %1250 = vst.msk [vmem:[#allocation5 + $0x300] sm:$0xff] %vm451, 0.0
      %1251 = vst.msk [vmem:[#allocation5 + $0x308] sm:$0xff] %vm451, 0.0
      %1252 = vst.msk [vmem:[#allocation5 + $0x310] sm:$0xff] %vm451, 0.0
      %1253 = vst.msk [vmem:[#allocation5 + $0x318] sm:$0xff] %vm451, 0.0
      %1254 = vst.msk [vmem:[#allocation5 + $0x320] sm:$0xff] %vm451, 0.0
      %1255 = vst.msk [vmem:[#allocation5 + $0x328] sm:$0x7] %vm900, 0.0
      %1256 = vst.msk [vmem:[#allocation5 + $0x330] sm:$0xff] %vm451, 0.0
      %1257 = vst.msk [vmem:[#allocation5 + $0x338] sm:$0xff] %vm451, 0.0
      %1258 = vst.msk [vmem:[#allocation5 + $0x340] sm:$0xff] %vm451, 0.0
      %1259 = vst.msk [vmem:[#allocation5 + $0x348] sm:$0xff] %vm451, 0.0
      %1260 = vst.msk [vmem:[#allocation5 + $0x350] sm:$0xff] %vm451, 0.0
      %1261 = vst.msk [vmem:[#allocation5 + $0x358] sm:$0x7] %vm900, 0.0
      %1262 = vst.msk [vmem:[#allocation5 + $0x360] sm:$0xff] %vm451, 0.0
      %1263 = vst.msk [vmem:[#allocation5 + $0x368] sm:$0xff] %vm451, 0.0
      %1264 = vst.msk [vmem:[#allocation5 + $0x370] sm:$0xff] %vm451, 0.0
      %1265 = vst.msk [vmem:[#allocation5 + $0x378] sm:$0xff] %vm451, 0.0
      %1266 = vst.msk [vmem:[#allocation5 + $0x380] sm:$0xff] %vm451, 0.0
      %1267 = vst.msk [vmem:[#allocation5 + $0x388] sm:$0x7] %vm900, 0.0
      %1268 = vst.msk [vmem:[#allocation5 + $0x390] sm:$0xff] %vm451, 0.0
      %1269 = vst.msk [vmem:[#allocation5 + $0x398] sm:$0xff] %vm451, 0.0
      %1270 = vst.msk [vmem:[#allocation5 + $0x3a0] sm:$0xff] %vm451, 0.0
      %1271 = vst.msk [vmem:[#allocation5 + $0x3a8] sm:$0xff] %vm451, 0.0
      %1272 = vst.msk [vmem:[#allocation5 + $0x3b0] sm:$0xff] %vm451, 0.0
      %1273 = vst.msk [vmem:[#allocation5 + $0x3b8] sm:$0x7] %vm900, 0.0
      %1274 = vst.msk [vmem:[#allocation5 + $0x3c0] sm:$0xff] %vm451, 0.0
      %1275 = vst.msk [vmem:[#allocation5 + $0x3c8] sm:$0xff] %vm451, 0.0
      %1276 = vst.msk [vmem:[#allocation5 + $0x3d0] sm:$0xff] %vm451, 0.0
      %1277 = vst.msk [vmem:[#allocation5 + $0x3d8] sm:$0xff] %vm451, 0.0
      %1278 = vst.msk [vmem:[#allocation5 + $0x3e0] sm:$0xff] %vm451, 0.0
      %1279 = vst.msk [vmem:[#allocation5 + $0x3e8] sm:$0x7] %vm900, 0.0
      %1280 = vst.msk [vmem:[#allocation5 + $0x3f0] sm:$0xff] %vm451, 0.0
      %1281 = vst.msk [vmem:[#allocation5 + $0x3f8] sm:$0xff] %vm451, 0.0
      %1282 = vst.msk [vmem:[#allocation5 + $0x400] sm:$0xff] %vm451, 0.0
      %1283 = vst.msk [vmem:[#allocation5 + $0x408] sm:$0xff] %vm451, 0.0
      %1284 = vst.msk [vmem:[#allocation5 + $0x410] sm:$0xff] %vm451, 0.0
      %1285 = vst.msk [vmem:[#allocation5 + $0x418] sm:$0x7] %vm900, 0.0
      %1286 = vst.msk [vmem:[#allocation5 + $0x420] sm:$0xff] %vm451, 0.0
      %1287 = vst.msk [vmem:[#allocation5 + $0x428] sm:$0xff] %vm451, 0.0
      %1288 = vst.msk [vmem:[#allocation5 + $0x430] sm:$0xff] %vm451, 0.0
      %1289 = vst.msk [vmem:[#allocation5 + $0x438] sm:$0xff] %vm451, 0.0
      %1290 = vst.msk [vmem:[#allocation5 + $0x440] sm:$0xff] %vm451, 0.0
      %1291 = vst.msk [vmem:[#allocation5 + $0x448] sm:$0x7] %vm900, 0.0
      %1292 = vst.msk [vmem:[#allocation5 + $0x450] sm:$0xff] %vm451, 0.0
      %1293 = vst.msk [vmem:[#allocation5 + $0x458] sm:$0xff] %vm451, 0.0
      %1294 = vst.msk [vmem:[#allocation5 + $0x460] sm:$0xff] %vm451, 0.0
      %1295 = vst.msk [vmem:[#allocation5 + $0x468] sm:$0xff] %vm451, 0.0
      %1296 = vst.msk [vmem:[#allocation5 + $0x470] sm:$0xff] %vm451, 0.0
      %1297 = vst.msk [vmem:[#allocation5 + $0x478] sm:$0x7] %vm900, 0.0
      %1298 = vst.msk [vmem:[#allocation5 + $0x480] sm:$0xff] %vm451, 0.0
      %1299 = vst.msk [vmem:[#allocation5 + $0x488] sm:$0xff] %vm451, 0.0
      %1300 = vst.msk [vmem:[#allocation5 + $0x490] sm:$0xff] %vm451, 0.0
      %1301 = vst.msk [vmem:[#allocation5 + $0x498] sm:$0xff] %vm451, 0.0
      %1302 = vst.msk [vmem:[#allocation5 + $0x4a0] sm:$0xff] %vm451, 0.0
      %1303 = vst.msk [vmem:[#allocation5 + $0x4a8] sm:$0x7] %vm900, 0.0
      %1304 = vst.msk [vmem:[#allocation5 + $0x4b0] sm:$0xff] %vm451, 0.0
      %1305 = vst.msk [vmem:[#allocation5 + $0x4b8] sm:$0xff] %vm451, 0.0
      %1306 = vst.msk [vmem:[#allocation5 + $0x4c0] sm:$0xff] %vm451, 0.0
      %1307 = vst.msk [vmem:[#allocation5 + $0x4c8] sm:$0xff] %vm451, 0.0
      %1308 = vst.msk [vmem:[#allocation5 + $0x4d0] sm:$0xff] %vm451, 0.0
      %1309 = vst.msk [vmem:[#allocation5 + $0x4d8] sm:$0x7] %vm900, 0.0
      %1310 = vst.msk [vmem:[#allocation5 + $0x4e0] sm:$0xff] %vm451, 0.0
      %1311 = vst.msk [vmem:[#allocation5 + $0x4e8] sm:$0xff] %vm451, 0.0
      %1312 = vst.msk [vmem:[#allocation5 + $0x4f0] sm:$0xff] %vm451, 0.0
      %1313 = vst.msk [vmem:[#allocation5 + $0x4f8] sm:$0xff] %vm451, 0.0
      %1314 = vst.msk [vmem:[#allocation5 + $0x500] sm:$0xff] %vm451, 0.0
      %1315 = vst.msk [vmem:[#allocation5 + $0x508] sm:$0x7] %vm900, 0.0
      %1316 = vst.msk [vmem:[#allocation5 + $0x510] sm:$0xff] %vm451, 0.0
      %1317 = vst.msk [vmem:[#allocation5 + $0x518] sm:$0xff] %vm451, 0.0
      %1318 = vst.msk [vmem:[#allocation5 + $0x520] sm:$0xff] %vm451, 0.0
      %1319 = vst.msk [vmem:[#allocation5 + $0x528] sm:$0xff] %vm451, 0.0
      %1320 = vst.msk [vmem:[#allocation5 + $0x530] sm:$0xff] %vm451, 0.0
      %1321 = vst.msk [vmem:[#allocation5 + $0x538] sm:$0x7] %vm900, 0.0
      %1322 = vst.msk [vmem:[#allocation5 + $0x540] sm:$0xff] %vm451, 0.0
      %1323 = vst.msk [vmem:[#allocation5 + $0x548] sm:$0xff] %vm451, 0.0
      %1324 = vst.msk [vmem:[#allocation5 + $0x550] sm:$0xff] %vm451, 0.0
      %1325 = vst.msk [vmem:[#allocation5 + $0x558] sm:$0xff] %vm451, 0.0
      %1326 = vst.msk [vmem:[#allocation5 + $0x560] sm:$0xff] %vm451, 0.0
      %1327 = vst.msk [vmem:[#allocation5 + $0x568] sm:$0x7] %vm900, 0.0
      %1328 = vst.msk [vmem:[#allocation5 + $0x570] sm:$0xff] %vm451, 0.0
      %1329 = vst.msk [vmem:[#allocation5 + $0x578] sm:$0xff] %vm451, 0.0
      %1330 = vst.msk [vmem:[#allocation5 + $0x580] sm:$0xff] %vm451, 0.0
      %1331 = vst.msk [vmem:[#allocation5 + $0x588] sm:$0xff] %vm451, 0.0
      %1332 = vst.msk [vmem:[#allocation5 + $0x590] sm:$0xff] %vm451, 0.0
      %1333 = vst.msk [vmem:[#allocation5 + $0x598] sm:$0x7] %vm900, 0.0
      %1334 = vst.msk [vmem:[#allocation5 + $0x5a0] sm:$0xff] %vm451, 0.0
      %1335 = vst.msk [vmem:[#allocation5 + $0x5a8] sm:$0xff] %vm451, 0.0
      %1336 = vst.msk [vmem:[#allocation5 + $0x5b0] sm:$0xff] %vm451, 0.0
      %1337 = vst.msk [vmem:[#allocation5 + $0x5b8] sm:$0xff] %vm451, 0.0
      %1338 = vst.msk [vmem:[#allocation5 + $0x5c0] sm:$0xff] %vm451, 0.0
      %1339 = vst.msk [vmem:[#allocation5 + $0x5c8] sm:$0x7] %vm900, 0.0
      %1340 = vst.msk [vmem:[#allocation5 + $0x5d0] sm:$0xff] %vm451, 0.0
      %1341 = vst.msk [vmem:[#allocation5 + $0x5d8] sm:$0xff] %vm451, 0.0
      %1342 = vst.msk [vmem:[#allocation5 + $0x5e0] sm:$0xff] %vm451, 0.0
      %1343 = vst.msk [vmem:[#allocation5 + $0x5e8] sm:$0xff] %vm451, 0.0
      %1344 = vst.msk [vmem:[#allocation5 + $0x5f0] sm:$0xff] %vm451, 0.0
      %1345 = vst.msk [vmem:[#allocation5 + $0x5f8] sm:$0x7] %vm900, 0.0
      %1346 = vst.msk [vmem:[#allocation5 + $0x600] sm:$0xff] %vm451, 0.0
      %1347 = vst.msk [vmem:[#allocation5 + $0x608] sm:$0xff] %vm451, 0.0
      %1348 = vst.msk [vmem:[#allocation5 + $0x610] sm:$0xff] %vm451, 0.0
      %1349 = vst.msk [vmem:[#allocation5 + $0x618] sm:$0xff] %vm451, 0.0
      %1350 = vst.msk [vmem:[#allocation5 + $0x620] sm:$0xff] %vm451, 0.0
      %1351 = vst.msk [vmem:[#allocation5 + $0x628] sm:$0x7] %vm900, 0.0
      %1352 = vst.msk [vmem:[#allocation5 + $0x630] sm:$0xff] %vm451, 0.0
      %1353 = vst.msk [vmem:[#allocation5 + $0x638] sm:$0xff] %vm451, 0.0
      %1354 = vst.msk [vmem:[#allocation5 + $0x640] sm:$0xff] %vm451, 0.0
      %1355 = vst.msk [vmem:[#allocation5 + $0x648] sm:$0xff] %vm451, 0.0
      %1356 = vst.msk [vmem:[#allocation5 + $0x650] sm:$0xff] %vm451, 0.0
      %1357 = vst.msk [vmem:[#allocation5 + $0x658] sm:$0x7] %vm900, 0.0
      %1358 = vst.msk [vmem:[#allocation5 + $0x660] sm:$0xff] %vm451, 0.0
      %1359 = vst.msk [vmem:[#allocation5 + $0x668] sm:$0xff] %vm451, 0.0
      %1360 = vst.msk [vmem:[#allocation5 + $0x670] sm:$0xff] %vm451, 0.0
      %1361 = vst.msk [vmem:[#allocation5 + $0x678] sm:$0xff] %vm451, 0.0
      %1362 = vst.msk [vmem:[#allocation5 + $0x680] sm:$0xff] %vm451, 0.0
      %1363 = vst.msk [vmem:[#allocation5 + $0x688] sm:$0x7] %vm900, 0.0
      %1364 = vst.msk [vmem:[#allocation5 + $0x690] sm:$0xff] %vm451, 0.0
      %1365 = vst.msk [vmem:[#allocation5 + $0x698] sm:$0xff] %vm451, 0.0
      %1366 = vst.msk [vmem:[#allocation5 + $0x6a0] sm:$0xff] %vm451, 0.0
      %1367 = vst.msk [vmem:[#allocation5 + $0x6a8] sm:$0xff] %vm451, 0.0
      %1368 = vst.msk [vmem:[#allocation5 + $0x6b0] sm:$0xff] %vm451, 0.0
      %1369 = vst.msk [vmem:[#allocation5 + $0x6b8] sm:$0x7] %vm900, 0.0
      %1370 = vst.msk [vmem:[#allocation5 + $0x6c0] sm:$0xff] %vm451, 0.0
      %1371 = vst.msk [vmem:[#allocation5 + $0x6c8] sm:$0xff] %vm451, 0.0
      %1372 = vst.msk [vmem:[#allocation5 + $0x6d0] sm:$0xff] %vm451, 0.0
      %1373 = vst.msk [vmem:[#allocation5 + $0x6d8] sm:$0xff] %vm451, 0.0
      %1374 = vst.msk [vmem:[#allocation5 + $0x6e0] sm:$0xff] %vm451, 0.0
      %1375 = vst.msk [vmem:[#allocation5 + $0x6e8] sm:$0x7] %vm900, 0.0
      %1376 = vst.msk [vmem:[#allocation5 + $0x6f0] sm:$0xff] %vm451, 0.0
      %1377 = vst.msk [vmem:[#allocation5 + $0x6f8] sm:$0xff] %vm451, 0.0
      %1378 = vst.msk [vmem:[#allocation5 + $0x700] sm:$0xff] %vm451, 0.0
      %1379 = vst.msk [vmem:[#allocation5 + $0x708] sm:$0xff] %vm451, 0.0
      %1380 = vst.msk [vmem:[#allocation5 + $0x710] sm:$0xff] %vm451, 0.0
      %1381 = vst.msk [vmem:[#allocation5 + $0x718] sm:$0x7] %vm900, 0.0
      %1382 = vst.msk [vmem:[#allocation5 + $0x720] sm:$0xff] %vm451, 0.0
      %1383 = vst.msk [vmem:[#allocation5 + $0x728] sm:$0xff] %vm451, 0.0
      %1384 = vst.msk [vmem:[#allocation5 + $0x730] sm:$0xff] %vm451, 0.0
      %1385 = vst.msk [vmem:[#allocation5 + $0x738] sm:$0xff] %vm451, 0.0
      %1386 = vst.msk [vmem:[#allocation5 + $0x740] sm:$0xff] %vm451, 0.0
      %1387 = vst.msk [vmem:[#allocation5 + $0x748] sm:$0x7] %vm900, 0.0
      %1388 = vst.msk [vmem:[#allocation5 + $0x750] sm:$0xff] %vm451, 0.0
      %1389 = vst.msk [vmem:[#allocation5 + $0x758] sm:$0xff] %vm451, 0.0
      %1390 = vst.msk [vmem:[#allocation5 + $0x760] sm:$0xff] %vm451, 0.0
      %1391 = vst.msk [vmem:[#allocation5 + $0x768] sm:$0xff] %vm451, 0.0
      %1392 = vst.msk [vmem:[#allocation5 + $0x770] sm:$0xff] %vm451, 0.0
      %1393 = vst.msk [vmem:[#allocation5 + $0x778] sm:$0x7] %vm900, 0.0
      %1394 = vst.msk [vmem:[#allocation5 + $0x780] sm:$0xff] %vm451, 0.0
      %1395 = vst.msk [vmem:[#allocation5 + $0x788] sm:$0xff] %vm451, 0.0
      %1396 = vst.msk [vmem:[#allocation5 + $0x790] sm:$0xff] %vm451, 0.0
      %1397 = vst.msk [vmem:[#allocation5 + $0x798] sm:$0xff] %vm451, 0.0
      %1398 = vst.msk [vmem:[#allocation5 + $0x7a0] sm:$0xff] %vm451, 0.0
      %1399 = vst.msk [vmem:[#allocation5 + $0x7a8] sm:$0x7] %vm900, 0.0
      %1400 = vst.msk [vmem:[#allocation5 + $0x7b0] sm:$0xff] %vm451, 0.0
      %1401 = vst.msk [vmem:[#allocation5 + $0x7b8] sm:$0xff] %vm451, 0.0
      %1402 = vst.msk [vmem:[#allocation5 + $0x7c0] sm:$0xff] %vm451, 0.0
      %1403 = vst.msk [vmem:[#allocation5 + $0x7c8] sm:$0xff] %vm451, 0.0
      %1404 = vst.msk [vmem:[#allocation5 + $0x7d0] sm:$0xff] %vm451, 0.0
      %1405 = vst.msk [vmem:[#allocation5 + $0x7d8] sm:$0x7] %vm900, 0.0
      %1406 = vst.msk [vmem:[#allocation5 + $0x7e0] sm:$0xff] %vm451, 0.0
      %1407 = vst.msk [vmem:[#allocation5 + $0x7e8] sm:$0xff] %vm451, 0.0
      %1408 = vst.msk [vmem:[#allocation5 + $0x7f0] sm:$0xff] %vm451, 0.0
      %1409 = vst.msk [vmem:[#allocation5 + $0x7f8] sm:$0xff] %vm451, 0.0
      %1410 = vst.msk [vmem:[#allocation5 + $0x800] sm:$0xff] %vm451, 0.0
      %1411 = vst.msk [vmem:[#allocation5 + $0x808] sm:$0x7] %vm900, 0.0
      loop: start=0, step=1, limit=35
      $region57: #{decoder_forward.3} parent=55 // loop_pre_header
        _
      $region58: #{decoder_forward.3} parent=55 // loop_header
        %s1413 = sphi 0, %s1417
        %p1414 = scmp.ge.s32.totalorder %s1413, 35
      $region59: #{decoder_forward.3} parent=55 // loop_header_branch
        %1416 = sbr.rel (%p1414) target = $region63
      $region60: #{decoder_forward.3} parent=55 // loop_body
        %s1418 = smul.u32 %s1413, 40
        %s1419 = scalar_lea.vmem %s430, %s1418
        %v1420 = vld [vmem:[%s1419] sm:$0xff]
        %v1421 = vld [vmem:[%s1419 + $0x8] sm:$0xff]
        %v1422 = vld [vmem:[%s1419 + $0x10] sm:$0xff]
        %v1423 = vld [vmem:[%s1419 + $0x18] sm:$0xff]
        %v1424 = vld [vmem:[%s1419 + $0x20] sm:$0x7]
        %s1425 = sadd.s32 %s1413, 2
        %s1426 = smul.u32 %s1425, 40
        %s1427 = scalar_lea.vmem [#allocation2], %s1426
        %1428 = vst.msk [vmem:[%s1427 + $0x2] sm:$0xff] %vm451, %v1420
        %1429 = vst.msk [vmem:[%s1427 + $0xa] sm:$0xff] %vm451, %v1421
        %1430 = vst.msk [vmem:[%s1427 + $0x12] sm:$0xff] %vm451, %v1422
        %1431 = vst.msk [vmem:[%s1427 + $0x1a] sm:$0xff] %vm451, %v1423
        %1432 = vst.msk [vmem:[%s1427 + $0x22] sm:$0x7] %vm900, %v1424
      $region61: #{decoder_forward.3} parent=55 // loop_footer
        %s1417 = sadd.s32 1, %s1413
      $region62: #{decoder_forward.3} parent=55 // loop_footer_branch
        %1412 = sbr.rel target = $region58
      $region63: #{decoder_forward.3} parent=55 // loop_exit
        _
      %v1433 = vld [vmem:[%s2] sm:$0x1]
      loop: start=0, step=1, limit=37
      $region64: #{decoder_forward.3} parent=55 // loop_pre_header
        _
      $region65: #{decoder_forward.3} parent=55 // loop_header
        %s1435 = sphi 0, %s1439
        %p1436 = scmp.ge.s32.totalorder %s1435, 37
      $region66: #{decoder_forward.3} parent=55 // loop_header_branch
        %1438 = sbr.rel (%p1436) target = $region70
      $region67: #{decoder_forward.3} parent=55 // loop_body
        %s1440 = smul.u32 %s1435, 40
        %s1441 = scalar_lea.vmem [#allocation2], %s1440
        %v1442 = vld [vmem:[%s1441] sm:$0xff]
        %v1443 = vld [vmem:[%s1441 + $0x8] sm:$0xff]
        %v1444 = vld [vmem:[%s1441 + $0x10] sm:$0xff]
        %v1445 = vld [vmem:[%s1441 + $0x18] sm:$0xff]
        %v1446 = vld [vmem:[%s1441 + $0x20] sm:$0x1f]
        %v1447 = vld [vmem:[%s1] sm:$0xff]
        %v1448 = vld [vmem:[%s1 + $0x8] sm:$0xff]
        %v1449 = vld [vmem:[%s1 + $0x10] sm:$0xff]
        %v1450 = vld [vmem:[%s1 + $0x18] sm:$0xff]
        %v1451 = vld [vmem:[%s1441 + $0x1] sm:$0xff]
        %v1452 = vld [vmem:[%s1441 + $0x9] sm:$0xff]
        %v1453 = vld [vmem:[%s1441 + $0x11] sm:$0xff]
        %v1454 = vld [vmem:[%s1441 + $0x19] sm:$0xff]
        %v1455 = vld [vmem:[%s1441 + $0x21] sm:$0x1f]
        %s1456 = scalar_lea.vmem %s1, 32
        %v1457 = vld [vmem:[%s1456] sm:$0xff]
        %v1458 = vld [vmem:[%s1456 + $0x8] sm:$0xff]
        %v1459 = vld [vmem:[%s1456 + $0x10] sm:$0xff]
        %v1460 = vld [vmem:[%s1456 + $0x18] sm:$0xff]
        %v1462 = vsel %vm451, %v1451, 0
        %v1465 = vsel %vm451, %v1452, 0
        %v1468 = vsel %vm451, %v1453, 0
        %v1471 = vsel %vm451, %v1454, 0
        %v1474 = vsel %vm451, %v1455, 0
        %1476 = vmatprep.subr.mxu0 0.0
        %1477 = vmatpush1.msra.mxu0 %v1457
        %1478 = vmatprep.subr.mxu0 0.0
        %1479 = vmatpush1.msra.mxu0 %v1458
        %1480 = vmatprep.subr.mxu0 0.0
        %1481 = vmatpush1.msra.mxu0 %v1459
        %1482 = vmatprep.subr.mxu0 0.0
        %1483 = vmatpush1.msra.mxu0 %v1460
        %1484 = vmatprep.subr.mxu0 0.0
        %1485 = vmatpush1.msra.mxu0 0.0
        %1486 = vmatprep.subr.mxu0 0.0
        %1487 = vmatpush1.msra.mxu0 0.0
        %1488 = vmatprep.subr.mxu0 0.0
        %1489 = vmatpush1.msra.mxu0 0.0
        %1490 = vmatprep.subr.mxu0 0.0
        %1491 = vmatpush1.msra.mxu0 0.0
        %1492 = vmatprep.subr.mxu0 0.0
        %1493 = vmatpush1.msra.mxu0 0.0
        %1494 = vmatprep.subr.mxu0 0.0
        %1495 = vmatpush1.msra.mxu0 0.0
        %1496 = vmatprep.subr.mxu0 0.0
        %1497 = vmatpush1.msra.mxu0 0.0
        %1498 = vmatprep.subr.mxu0 0.0
        %1499 = vmatpush1.msra.mxu0 0.0
        %1500 = vmatprep.subr.mxu0 0.0
        %1501 = vmatpush1.msra.mxu0 0.0
        %1502 = vmatprep.subr.mxu0 0.0
        %1503 = vmatpush1.msra.mxu0 0.0
        %1504 = vmatprep.subr.mxu0 0.0
        %1505 = vmatpush1.msra.mxu0 0.0
        %1506 = vmatprep.subr.mxu0 0.0
        %1507 = vmatpush1.msra.mxu0 0.0
        %1508 = vmatprep.subr.mxu0 0.0
        %1509 = vmatpush1.msra.mxu0 0.0
        %1510 = vmatprep.subr.mxu0 0.0
        %1511 = vmatpush1.msra.mxu0 0.0
        %1512 = vmatprep.subr.mxu0 0.0
        %1513 = vmatpush1.msra.mxu0 0.0
        %1514 = vmatprep.subr.mxu0 0.0
        %1515 = vmatpush1.msra.mxu0 0.0
        %1516 = vmatprep.subr.mxu0 0.0
        %1517 = vmatpush1.msra.mxu0 0.0
        %1518 = vmatprep.subr.mxu0 0.0
        %1519 = vmatpush1.msra.mxu0 0.0
        %1520 = vmatprep.subr.mxu0 0.0
        %1521 = vmatpush1.msra.mxu0 0.0
        %1522 = vmatprep.subr.mxu0 0.0
        %1523 = vmatpush1.msra.mxu0 0.0
        %1524 = vmatprep.subr.mxu0 0.0
        %1525 = vmatpush1.msra.mxu0 0.0
        %1526 = vmatprep.subr.mxu0 0.0
        %1527 = vmatpush1.msra.mxu0 0.0
        %1528 = vmatprep.subr.mxu0 0.0
        %1529 = vmatpush1.msra.mxu0 0.0
        %1530 = vmatprep.subr.mxu0 0.0
        %1531 = vmatpush1.msra.mxu0 0.0
        %1532 = vmatprep.subr.mxu0 0.0
        %1533 = vmatpush1.msra.mxu0 0.0
        %1534 = vmatprep.subr.mxu0 0.0
        %1535 = vmatpush1.msra.mxu0 0.0
        %1536 = vmatprep.subr.mxu0 0.0
        %1537 = vmatpush1.msra.mxu0 0.0
        %1538 = vmatprep.subr.mxu0 0.0
        %1539 = vmatpush1.msra.mxu0 0.0
        %1540 = vmatprep.mubr.f32.mxu0 0.0
        %1541 = vmatmul.mubr.f32.gmra.mrb[0].mxu0 %v1462
        %v1542 = vpop.f32.mrb[0].mxu0
        %v1543 = vadd.f32 0.0, %v1542
        %v1544 = vpop.f32.mrb[0].mxu0
        %1545 = vmatprep.mubr.f32.mxu0 0.0
        %1546 = vmatmul.mubr.f32.gmra.mrb[0].mxu0 %v1465
        %v1547 = vpop.f32.mrb[0].mxu0
        %v1548 = vadd.f32 0.0, %v1547
        %v1549 = vpop.f32.mrb[0].mxu0
        %1550 = vmatprep.mubr.f32.mxu0 0.0
        %1551 = vmatmul.mubr.f32.gmra.mrb[0].mxu0 %v1468
        %v1552 = vpop.f32.mrb[0].mxu0
        %v1553 = vadd.f32 0.0, %v1552
        %v1554 = vpop.f32.mrb[0].mxu0
        %1555 = vmatprep.mubr.f32.mxu0 0.0
        %1556 = vmatmul.mubr.f32.gmra.mrb[0].mxu0 %v1471
        %v1557 = vpop.f32.mrb[0].mxu0
        %v1558 = vadd.f32 0.0, %v1557
        %v1559 = vpop.f32.mrb[0].mxu0
        %1560 = vmatprep.mubr.f32.mxu0 0.0
        %1561 = vmatmul.mubr.f32.gmra.mrb[0].mxu0 %v1474
        %v1562 = vpop.f32.mrb[0].mxu0
        %v1563 = vadd.f32 0.0, %v1562
        %v1564 = vpop.f32.mrb[0].mxu0
        %1565 = vdwg.mxu0
        %v1567 = vsel %vm451, %v1442, 0
        %v1570 = vsel %vm451, %v1443, 0
        %v1573 = vsel %vm451, %v1444, 0
        %v1576 = vsel %vm451, %v1445, 0
        %v1579 = vsel %vm451, %v1446, 0
        %1581 = vmatprep.subr.mxu0 0.0
        %1582 = vmatpush1.msra.mxu0 %v1447
        %1583 = vmatprep.subr.mxu0 0.0
        %1584 = vmatpush1.msra.mxu0 %v1448
        %1585 = vmatprep.subr.mxu0 0.0
        %1586 = vmatpush1.msra.mxu0 %v1449
        %1587 = vmatprep.subr.mxu0 0.0
        %1588 = vmatpush1.msra.mxu0 %v1450
        %1589 = vmatprep.subr.mxu0 0.0
        %1590 = vmatpush1.msra.mxu0 0.0
        %1591 = vmatprep.subr.mxu0 0.0
        %1592 = vmatpush1.msra.mxu0 0.0
        %1593 = vmatprep.subr.mxu0 0.0
        %1594 = vmatpush1.msra.mxu0 0.0
        %1595 = vmatprep.subr.mxu0 0.0
        %1596 = vmatpush1.msra.mxu0 0.0
        %1597 = vmatprep.subr.mxu0 0.0
        %1598 = vmatpush1.msra.mxu0 0.0
        %1599 = vmatprep.subr.mxu0 0.0
        %1600 = vmatpush1.msra.mxu0 0.0
        %1601 = vmatprep.subr.mxu0 0.0
        %1602 = vmatpush1.msra.mxu0 0.0
        %1603 = vmatprep.subr.mxu0 0.0
        %1604 = vmatpush1.msra.mxu0 0.0
        %1605 = vmatprep.subr.mxu0 0.0
        %1606 = vmatpush1.msra.mxu0 0.0
        %1607 = vmatprep.subr.mxu0 0.0
        %1608 = vmatpush1.msra.mxu0 0.0
        %1609 = vmatprep.subr.mxu0 0.0
        %1610 = vmatpush1.msra.mxu0 0.0
        %1611 = vmatprep.subr.mxu0 0.0
        %1612 = vmatpush1.msra.mxu0 0.0
        %1613 = vmatprep.subr.mxu0 0.0
        %1614 = vmatpush1.msra.mxu0 0.0
        %1615 = vmatprep.subr.mxu0 0.0
        %1616 = vmatpush1.msra.mxu0 0.0
        %1617 = vmatprep.subr.mxu0 0.0
        %1618 = vmatpush1.msra.mxu0 0.0
        %1619 = vmatprep.subr.mxu0 0.0
        %1620 = vmatpush1.msra.mxu0 0.0
        %1621 = vmatprep.subr.mxu0 0.0
        %1622 = vmatpush1.msra.mxu0 0.0
        %1623 = vmatprep.subr.mxu0 0.0
        %1624 = vmatpush1.msra.mxu0 0.0
        %1625 = vmatprep.subr.mxu0 0.0
        %1626 = vmatpush1.msra.mxu0 0.0
        %1627 = vmatprep.subr.mxu0 0.0
        %1628 = vmatpush1.msra.mxu0 0.0
        %1629 = vmatprep.subr.mxu0 0.0
        %1630 = vmatpush1.msra.mxu0 0.0
        %1631 = vmatprep.subr.mxu0 0.0
        %1632 = vmatpush1.msra.mxu0 0.0
        %1633 = vmatprep.subr.mxu0 0.0
        %1634 = vmatpush1.msra.mxu0 0.0
        %1635 = vmatprep.subr.mxu0 0.0
        %1636 = vmatpush1.msra.mxu0 0.0
        %1637 = vmatprep.subr.mxu0 0.0
        %1638 = vmatpush1.msra.mxu0 0.0
        %1639 = vmatprep.subr.mxu0 0.0
        %1640 = vmatpush1.msra.mxu0 0.0
        %1641 = vmatprep.subr.mxu0 0.0
        %1642 = vmatpush1.msra.mxu0 0.0
        %1643 = vmatprep.subr.mxu0 0.0
        %1644 = vmatpush1.msra.mxu0 0.0
        %1645 = vmatprep.mubr.f32.mxu0 0.0
        %1646 = vmatmul.mubr.f32.gmra.mrb[0].mxu0 %v1567
        %v1647 = vpop.f32.mrb[0].mxu0
        %v1648 = vadd.f32 %v1543, %v1647
        %v1649 = vpop.f32.mrb[0].mxu0
        %1650 = vmatprep.mubr.f32.mxu0 0.0
        %1651 = vmatmul.mubr.f32.gmra.mrb[0].mxu0 %v1570
        %v1652 = vpop.f32.mrb[0].mxu0
        %v1653 = vadd.f32 %v1548, %v1652
        %v1654 = vpop.f32.mrb[0].mxu0
        %1655 = vmatprep.mubr.f32.mxu0 0.0
        %1656 = vmatmul.mubr.f32.gmra.mrb[0].mxu0 %v1573
        %v1657 = vpop.f32.mrb[0].mxu0
        %v1658 = vadd.f32 %v1553, %v1657
        %v1659 = vpop.f32.mrb[0].mxu0
        %1660 = vmatprep.mubr.f32.mxu0 0.0
        %1661 = vmatmul.mubr.f32.gmra.mrb[0].mxu0 %v1576
        %v1662 = vpop.f32.mrb[0].mxu0
        %v1663 = vadd.f32 %v1558, %v1662
        %v1664 = vpop.f32.mrb[0].mxu0
        %1665 = vmatprep.mubr.f32.mxu0 0.0
        %1666 = vmatmul.mubr.f32.gmra.mrb[0].mxu0 %v1579
        %v1667 = vpop.f32.mrb[0].mxu0
        %v1668 = vadd.f32 %v1563, %v1667
        %v1669 = vpop.f32.mrb[0].mxu0
        %1670 = vdwg.mxu0
        %v1671 = vld [vmem:[%s1441 + $0x2] sm:$0xff]
        %v1672 = vld [vmem:[%s1441 + $0xa] sm:$0xff]
        %v1673 = vld [vmem:[%s1441 + $0x12] sm:$0xff]
        %v1674 = vld [vmem:[%s1441 + $0x1a] sm:$0xff]
        %v1675 = vld [vmem:[%s1441 + $0x22] sm:$0x1f]
        %s1676 = scalar_lea.vmem %s1, 64
        %v1677 = vld [vmem:[%s1676] sm:$0xff]
        %v1678 = vld [vmem:[%s1676 + $0x8] sm:$0xff]
        %v1679 = vld [vmem:[%s1676 + $0x10] sm:$0xff]
        %v1680 = vld [vmem:[%s1676 + $0x18] sm:$0xff]
        %v1682 = vsel %vm451, %v1671, 0
        %v1685 = vsel %vm451, %v1672, 0
        %v1688 = vsel %vm451, %v1673, 0
        %v1691 = vsel %vm451, %v1674, 0
        %v1694 = vsel %vm451, %v1675, 0
        %1696 = vmatprep.subr.mxu0 0.0
        %1697 = vmatpush1.msra.mxu0 %v1677
        %1698 = vmatprep.subr.mxu0 0.0
        %1699 = vmatpush1.msra.mxu0 %v1678
        %1700 = vmatprep.subr.mxu0 0.0
        %1701 = vmatpush1.msra.mxu0 %v1679
        %1702 = vmatprep.subr.mxu0 0.0
        %1703 = vmatpush1.msra.mxu0 %v1680
        %1704 = vmatprep.subr.mxu0 0.0
        %1705 = vmatpush1.msra.mxu0 0.0
        %1706 = vmatprep.subr.mxu0 0.0
        %1707 = vmatpush1.msra.mxu0 0.0
        %1708 = vmatprep.subr.mxu0 0.0
        %1709 = vmatpush1.msra.mxu0 0.0
        %1710 = vmatprep.subr.mxu0 0.0
        %1711 = vmatpush1.msra.mxu0 0.0
        %1712 = vmatprep.subr.mxu0 0.0
        %1713 = vmatpush1.msra.mxu0 0.0
        %1714 = vmatprep.subr.mxu0 0.0
        %1715 = vmatpush1.msra.mxu0 0.0
        %1716 = vmatprep.subr.mxu0 0.0
        %1717 = vmatpush1.msra.mxu0 0.0
        %1718 = vmatprep.subr.mxu0 0.0
        %1719 = vmatpush1.msra.mxu0 0.0
        %1720 = vmatprep.subr.mxu0 0.0
        %1721 = vmatpush1.msra.mxu0 0.0
        %1722 = vmatprep.subr.mxu0 0.0
        %1723 = vmatpush1.msra.mxu0 0.0
        %1724 = vmatprep.subr.mxu0 0.0
        %1725 = vmatpush1.msra.mxu0 0.0
        %1726 = vmatprep.subr.mxu0 0.0
        %1727 = vmatpush1.msra.mxu0 0.0
        %1728 = vmatprep.subr.mxu0 0.0
        %1729 = vmatpush1.msra.mxu0 0.0
        %1730 = vmatprep.subr.mxu0 0.0
        %1731 = vmatpush1.msra.mxu0 0.0
        %1732 = vmatprep.subr.mxu0 0.0
        %1733 = vmatpush1.msra.mxu0 0.0
        %1734 = vmatprep.subr.mxu0 0.0
        %1735 = vmatpush1.msra.mxu0 0.0
        %1736 = vmatprep.subr.mxu0 0.0
        %1737 = vmatpush1.msra.mxu0 0.0
        %1738 = vmatprep.subr.mxu0 0.0
        %1739 = vmatpush1.msra.mxu0 0.0
        %1740 = vmatprep.subr.mxu0 0.0
        %1741 = vmatpush1.msra.mxu0 0.0
        %1742 = vmatprep.subr.mxu0 0.0
        %1743 = vmatpush1.msra.mxu0 0.0
        %1744 = vmatprep.subr.mxu0 0.0
        %1745 = vmatpush1.msra.mxu0 0.0
        %1746 = vmatprep.subr.mxu0 0.0
        %1747 = vmatpush1.msra.mxu0 0.0
        %1748 = vmatprep.subr.mxu0 0.0
        %1749 = vmatpush1.msra.mxu0 0.0
        %1750 = vmatprep.subr.mxu0 0.0
        %1751 = vmatpush1.msra.mxu0 0.0
        %1752 = vmatprep.subr.mxu0 0.0
        %1753 = vmatpush1.msra.mxu0 0.0
        %1754 = vmatprep.subr.mxu0 0.0
        %1755 = vmatpush1.msra.mxu0 0.0
        %1756 = vmatprep.subr.mxu0 0.0
        %1757 = vmatpush1.msra.mxu0 0.0
        %1758 = vmatprep.subr.mxu0 0.0
        %1759 = vmatpush1.msra.mxu0 0.0
        %1760 = vmatprep.mubr.f32.mxu0 0.0
        %1761 = vmatmul.mubr.f32.gmra.mrb[0].mxu0 %v1682
        %v1762 = vpop.f32.mrb[0].mxu0
        %v1763 = vadd.f32 0.0, %v1762
        %v1764 = vpop.f32.mrb[0].mxu0
        %1765 = vmatprep.mubr.f32.mxu0 0.0
        %1766 = vmatmul.mubr.f32.gmra.mrb[0].mxu0 %v1685
        %v1767 = vpop.f32.mrb[0].mxu0
        %v1768 = vadd.f32 0.0, %v1767
        %v1769 = vpop.f32.mrb[0].mxu0
        %1770 = vmatprep.mubr.f32.mxu0 0.0
        %1771 = vmatmul.mubr.f32.gmra.mrb[0].mxu0 %v1688
        %v1772 = vpop.f32.mrb[0].mxu0
        %v1773 = vadd.f32 0.0, %v1772
        %v1774 = vpop.f32.mrb[0].mxu0
        %1775 = vmatprep.mubr.f32.mxu0 0.0
        %1776 = vmatmul.mubr.f32.gmra.mrb[0].mxu0 %v1691
        %v1777 = vpop.f32.mrb[0].mxu0
        %v1778 = vadd.f32 0.0, %v1777
        %v1779 = vpop.f32.mrb[0].mxu0
        %1780 = vmatprep.mubr.f32.mxu0 0.0
        %1781 = vmatmul.mubr.f32.gmra.mrb[0].mxu0 %v1694
        %v1782 = vpop.f32.mrb[0].mxu0
        %v1783 = vadd.f32 0.0, %v1782
        %v1784 = vpop.f32.mrb[0].mxu0
        %1785 = vdwg.mxu0
        %v1786 = vadd.f32 %v1648, %v1763
        %v1787 = vadd.f32 %v1653, %v1768
        %v1788 = vadd.f32 %v1658, %v1773
        %v1789 = vadd.f32 %v1663, %v1778
        %v1790 = vadd.f32 %v1668, %v1783
        %s1791 = sadd.s32 %s1435, 1
        %s1792 = smul.u32 %s1791, 40
        %s1793 = scalar_lea.vmem [#allocation2], %s1792
        %v1794 = vld [vmem:[%s1793] sm:$0xff]
        %v1795 = vld [vmem:[%s1793 + $0x8] sm:$0xff]
        %v1796 = vld [vmem:[%s1793 + $0x10] sm:$0xff]
        %v1797 = vld [vmem:[%s1793 + $0x18] sm:$0xff]
        %v1798 = vld [vmem:[%s1793 + $0x20] sm:$0x1f]
        %s1799 = scalar_lea.vmem %s1, 96
        %v1800 = vld [vmem:[%s1799] sm:$0xff]
        %v1801 = vld [vmem:[%s1799 + $0x8] sm:$0xff]
        %v1802 = vld [vmem:[%s1799 + $0x10] sm:$0xff]
        %v1803 = vld [vmem:[%s1799 + $0x18] sm:$0xff]
        %v1805 = vsel %vm451, %v1794, 0
        %v1808 = vsel %vm451, %v1795, 0
        %v1811 = vsel %vm451, %v1796, 0
        %v1814 = vsel %vm451, %v1797, 0
        %v1817 = vsel %vm451, %v1798, 0
        %1819 = vmatprep.subr.mxu0 0.0
        %1820 = vmatpush1.msra.mxu0 %v1800
        %1821 = vmatprep.subr.mxu0 0.0
        %1822 = vmatpush1.msra.mxu0 %v1801
        %1823 = vmatprep.subr.mxu0 0.0
        %1824 = vmatpush1.msra.mxu0 %v1802
        %1825 = vmatprep.subr.mxu0 0.0
        %1826 = vmatpush1.msra.mxu0 %v1803
        %1827 = vmatprep.subr.mxu0 0.0
        %1828 = vmatpush1.msra.mxu0 0.0
        %1829 = vmatprep.subr.mxu0 0.0
        %1830 = vmatpush1.msra.mxu0 0.0
        %1831 = vmatprep.subr.mxu0 0.0
        %1832 = vmatpush1.msra.mxu0 0.0
        %1833 = vmatprep.subr.mxu0 0.0
        %1834 = vmatpush1.msra.mxu0 0.0
        %1835 = vmatprep.subr.mxu0 0.0
        %1836 = vmatpush1.msra.mxu0 0.0
        %1837 = vmatprep.subr.mxu0 0.0
        %1838 = vmatpush1.msra.mxu0 0.0
        %1839 = vmatprep.subr.mxu0 0.0
        %1840 = vmatpush1.msra.mxu0 0.0
        %1841 = vmatprep.subr.mxu0 0.0
        %1842 = vmatpush1.msra.mxu0 0.0
        %1843 = vmatprep.subr.mxu0 0.0
        %1844 = vmatpush1.msra.mxu0 0.0
        %1845 = vmatprep.subr.mxu0 0.0
        %1846 = vmatpush1.msra.mxu0 0.0
        %1847 = vmatprep.subr.mxu0 0.0
        %1848 = vmatpush1.msra.mxu0 0.0
        %1849 = vmatprep.subr.mxu0 0.0
        %1850 = vmatpush1.msra.mxu0 0.0
        %1851 = vmatprep.subr.mxu0 0.0
        %1852 = vmatpush1.msra.mxu0 0.0
        %1853 = vmatprep.subr.mxu0 0.0
        %1854 = vmatpush1.msra.mxu0 0.0
        %1855 = vmatprep.subr.mxu0 0.0
        %1856 = vmatpush1.msra.mxu0 0.0
        %1857 = vmatprep.subr.mxu0 0.0
        %1858 = vmatpush1.msra.mxu0 0.0
        %1859 = vmatprep.subr.mxu0 0.0
        %1860 = vmatpush1.msra.mxu0 0.0
        %1861 = vmatprep.subr.mxu0 0.0
        %1862 = vmatpush1.msra.mxu0 0.0
        %1863 = vmatprep.subr.mxu0 0.0
        %1864 = vmatpush1.msra.mxu0 0.0
        %1865 = vmatprep.subr.mxu0 0.0
        %1866 = vmatpush1.msra.mxu0 0.0
        %1867 = vmatprep.subr.mxu0 0.0
        %1868 = vmatpush1.msra.mxu0 0.0
        %1869 = vmatprep.subr.mxu0 0.0
        %1870 = vmatpush1.msra.mxu0 0.0
        %1871 = vmatprep.subr.mxu0 0.0
        %1872 = vmatpush1.msra.mxu0 0.0
        %1873 = vmatprep.subr.mxu0 0.0
        %1874 = vmatpush1.msra.mxu0 0.0
        %1875 = vmatprep.subr.mxu0 0.0
        %1876 = vmatpush1.msra.mxu0 0.0
        %1877 = vmatprep.subr.mxu0 0.0
        %1878 = vmatpush1.msra.mxu0 0.0
        %1879 = vmatprep.subr.mxu0 0.0
        %1880 = vmatpush1.msra.mxu0 0.0
        %1881 = vmatprep.subr.mxu0 0.0
        %1882 = vmatpush1.msra.mxu0 0.0
        %1883 = vmatprep.mubr.f32.mxu0 0.0
        %1884 = vmatmul.mubr.f32.gmra.mrb[0].mxu0 %v1805
        %v1885 = vpop.f32.mrb[0].mxu0
        %v1886 = vadd.f32 0.0, %v1885
        %v1887 = vpop.f32.mrb[0].mxu0
        %1888 = vmatprep.mubr.f32.mxu0 0.0
        %1889 = vmatmul.mubr.f32.gmra.mrb[0].mxu0 %v1808
        %v1890 = vpop.f32.mrb[0].mxu0
        %v1891 = vadd.f32 0.0, %v1890
        %v1892 = vpop.f32.mrb[0].mxu0
        %1893 = vmatprep.mubr.f32.mxu0 0.0
        %1894 = vmatmul.mubr.f32.gmra.mrb[0].mxu0 %v1811
        %v1895 = vpop.f32.mrb[0].mxu0
        %v1896 = vadd.f32 0.0, %v1895
        %v1897 = vpop.f32.mrb[0].mxu0
        %1898 = vmatprep.mubr.f32.mxu0 0.0
        %1899 = vmatmul.mubr.f32.gmra.mrb[0].mxu0 %v1814
        %v1900 = vpop.f32.mrb[0].mxu0
        %v1901 = vadd.f32 0.0, %v1900
        %v1902 = vpop.f32.mrb[0].mxu0
        %1903 = vmatprep.mubr.f32.mxu0 0.0
        %1904 = vmatmul.mubr.f32.gmra.mrb[0].mxu0 %v1817
        %v1905 = vpop.f32.mrb[0].mxu0
        %v1906 = vadd.f32 0.0, %v1905
        %v1907 = vpop.f32.mrb[0].mxu0
        %1908 = vdwg.mxu0
        %v1909 = vadd.f32 %v1786, %v1886
        %v1910 = vadd.f32 %v1787, %v1891
        %v1911 = vadd.f32 %v1788, %v1896
        %v1912 = vadd.f32 %v1789, %v1901
        %v1913 = vadd.f32 %v1790, %v1906
        %v1914 = vld [vmem:[%s1793 + $0x1] sm:$0xff]
        %v1915 = vld [vmem:[%s1793 + $0x9] sm:$0xff]
        %v1916 = vld [vmem:[%s1793 + $0x11] sm:$0xff]
        %v1917 = vld [vmem:[%s1793 + $0x19] sm:$0xff]
        %v1918 = vld [vmem:[%s1793 + $0x21] sm:$0x1f]
        %s1919 = scalar_lea.vmem %s1, 128
        %v1920 = vld [vmem:[%s1919] sm:$0xff]
        %v1921 = vld [vmem:[%s1919 + $0x8] sm:$0xff]
        %v1922 = vld [vmem:[%s1919 + $0x10] sm:$0xff]
        %v1923 = vld [vmem:[%s1919 + $0x18] sm:$0xff]
        %v1925 = vsel %vm451, %v1914, 0
        %v1928 = vsel %vm451, %v1915, 0
        %v1931 = vsel %vm451, %v1916, 0
        %v1934 = vsel %vm451, %v1917, 0
        %v1937 = vsel %vm451, %v1918, 0
        %1939 = vmatprep.subr.mxu0 0.0
        %1940 = vmatpush1.msra.mxu0 %v1920
        %1941 = vmatprep.subr.mxu0 0.0
        %1942 = vmatpush1.msra.mxu0 %v1921
        %1943 = vmatprep.subr.mxu0 0.0
        %1944 = vmatpush1.msra.mxu0 %v1922
        %1945 = vmatprep.subr.mxu0 0.0
        %1946 = vmatpush1.msra.mxu0 %v1923
        %1947 = vmatprep.subr.mxu0 0.0
        %1948 = vmatpush1.msra.mxu0 0.0
        %1949 = vmatprep.subr.mxu0 0.0
        %1950 = vmatpush1.msra.mxu0 0.0
        %1951 = vmatprep.subr.mxu0 0.0
        %1952 = vmatpush1.msra.mxu0 0.0
        %1953 = vmatprep.subr.mxu0 0.0
        %1954 = vmatpush1.msra.mxu0 0.0
        %1955 = vmatprep.subr.mxu0 0.0
        %1956 = vmatpush1.msra.mxu0 0.0
        %1957 = vmatprep.subr.mxu0 0.0
        %1958 = vmatpush1.msra.mxu0 0.0
        %1959 = vmatprep.subr.mxu0 0.0
        %1960 = vmatpush1.msra.mxu0 0.0
        %1961 = vmatprep.subr.mxu0 0.0
        %1962 = vmatpush1.msra.mxu0 0.0
        %1963 = vmatprep.subr.mxu0 0.0
        %1964 = vmatpush1.msra.mxu0 0.0
        %1965 = vmatprep.subr.mxu0 0.0
        %1966 = vmatpush1.msra.mxu0 0.0
        %1967 = vmatprep.subr.mxu0 0.0
        %1968 = vmatpush1.msra.mxu0 0.0
        %1969 = vmatprep.subr.mxu0 0.0
        %1970 = vmatpush1.msra.mxu0 0.0
        %1971 = vmatprep.subr.mxu0 0.0
        %1972 = vmatpush1.msra.mxu0 0.0
        %1973 = vmatprep.subr.mxu0 0.0
        %1974 = vmatpush1.msra.mxu0 0.0
        %1975 = vmatprep.subr.mxu0 0.0
        %1976 = vmatpush1.msra.mxu0 0.0
        %1977 = vmatprep.subr.mxu0 0.0
        %1978 = vmatpush1.msra.mxu0 0.0
        %1979 = vmatprep.subr.mxu0 0.0
        %1980 = vmatpush1.msra.mxu0 0.0
        %1981 = vmatprep.subr.mxu0 0.0
        %1982 = vmatpush1.msra.mxu0 0.0
        %1983 = vmatprep.subr.mxu0 0.0
        %1984 = vmatpush1.msra.mxu0 0.0
        %1985 = vmatprep.subr.mxu0 0.0
        %1986 = vmatpush1.msra.mxu0 0.0
        %1987 = vmatprep.subr.mxu0 0.0
        %1988 = vmatpush1.msra.mxu0 0.0
        %1989 = vmatprep.subr.mxu0 0.0
        %1990 = vmatpush1.msra.mxu0 0.0
        %1991 = vmatprep.subr.mxu0 0.0
        %1992 = vmatpush1.msra.mxu0 0.0
        %1993 = vmatprep.subr.mxu0 0.0
        %1994 = vmatpush1.msra.mxu0 0.0
        %1995 = vmatprep.subr.mxu0 0.0
        %1996 = vmatpush1.msra.mxu0 0.0
        %1997 = vmatprep.subr.mxu0 0.0
        %1998 = vmatpush1.msra.mxu0 0.0
        %1999 = vmatprep.subr.mxu0 0.0
        %2000 = vmatpush1.msra.mxu0 0.0
        %2001 = vmatprep.subr.mxu0 0.0
        %2002 = vmatpush1.msra.mxu0 0.0
        %2003 = vmatprep.mubr.f32.mxu0 0.0
        %2004 = vmatmul.mubr.f32.gmra.mrb[0].mxu0 %v1925
        %v2005 = vpop.f32.mrb[0].mxu0
        %v2006 = vadd.f32 0.0, %v2005
        %v2007 = vpop.f32.mrb[0].mxu0
        %2008 = vmatprep.mubr.f32.mxu0 0.0
        %2009 = vmatmul.mubr.f32.gmra.mrb[0].mxu0 %v1928
        %v2010 = vpop.f32.mrb[0].mxu0
        %v2011 = vadd.f32 0.0, %v2010
        %v2012 = vpop.f32.mrb[0].mxu0
        %2013 = vmatprep.mubr.f32.mxu0 0.0
        %2014 = vmatmul.mubr.f32.gmra.mrb[0].mxu0 %v1931
        %v2015 = vpop.f32.mrb[0].mxu0
        %v2016 = vadd.f32 0.0, %v2015
        %v2017 = vpop.f32.mrb[0].mxu0
        %2018 = vmatprep.mubr.f32.mxu0 0.0
        %2019 = vmatmul.mubr.f32.gmra.mrb[0].mxu0 %v1934
        %v2020 = vpop.f32.mrb[0].mxu0
        %v2021 = vadd.f32 0.0, %v2020
        %v2022 = vpop.f32.mrb[0].mxu0
        %2023 = vmatprep.mubr.f32.mxu0 0.0
        %2024 = vmatmul.mubr.f32.gmra.mrb[0].mxu0 %v1937
        %v2025 = vpop.f32.mrb[0].mxu0
        %v2026 = vadd.f32 0.0, %v2025
        %v2027 = vpop.f32.mrb[0].mxu0
        %2028 = vdwg.mxu0
        %v2029 = vadd.f32 %v1909, %v2006
        %v2030 = vadd.f32 %v1910, %v2011
        %v2031 = vadd.f32 %v1911, %v2016
        %v2032 = vadd.f32 %v1912, %v2021
        %v2033 = vadd.f32 %v1913, %v2026
        %v2034 = vld [vmem:[%s1793 + $0x2] sm:$0xff]
        %v2035 = vld [vmem:[%s1793 + $0xa] sm:$0xff]
        %v2036 = vld [vmem:[%s1793 + $0x12] sm:$0xff]
        %v2037 = vld [vmem:[%s1793 + $0x1a] sm:$0xff]
        %v2038 = vld [vmem:[%s1793 + $0x22] sm:$0x1f]
        %s2039 = scalar_lea.vmem %s1, 160
        %v2040 = vld [vmem:[%s2039] sm:$0xff]
        %v2041 = vld [vmem:[%s2039 + $0x8] sm:$0xff]
        %v2042 = vld [vmem:[%s2039 + $0x10] sm:$0xff]
        %v2043 = vld [vmem:[%s2039 + $0x18] sm:$0xff]
        %v2045 = vsel %vm451, %v2034, 0
        %v2048 = vsel %vm451, %v2035, 0
        %v2051 = vsel %vm451, %v2036, 0
        %v2054 = vsel %vm451, %v2037, 0
        %v2057 = vsel %vm451, %v2038, 0
        %2059 = vmatprep.subr.mxu0 0.0
        %2060 = vmatpush1.msra.mxu0 %v2040
        %2061 = vmatprep.subr.mxu0 0.0
        %2062 = vmatpush1.msra.mxu0 %v2041
        %2063 = vmatprep.subr.mxu0 0.0
        %2064 = vmatpush1.msra.mxu0 %v2042
        %2065 = vmatprep.subr.mxu0 0.0
        %2066 = vmatpush1.msra.mxu0 %v2043
        %2067 = vmatprep.subr.mxu0 0.0
        %2068 = vmatpush1.msra.mxu0 0.0
        %2069 = vmatprep.subr.mxu0 0.0
        %2070 = vmatpush1.msra.mxu0 0.0
        %2071 = vmatprep.subr.mxu0 0.0
        %2072 = vmatpush1.msra.mxu0 0.0
        %2073 = vmatprep.subr.mxu0 0.0
        %2074 = vmatpush1.msra.mxu0 0.0
        %2075 = vmatprep.subr.mxu0 0.0
        %2076 = vmatpush1.msra.mxu0 0.0
        %2077 = vmatprep.subr.mxu0 0.0
        %2078 = vmatpush1.msra.mxu0 0.0
        %2079 = vmatprep.subr.mxu0 0.0
        %2080 = vmatpush1.msra.mxu0 0.0
        %2081 = vmatprep.subr.mxu0 0.0
        %2082 = vmatpush1.msra.mxu0 0.0
        %2083 = vmatprep.subr.mxu0 0.0
        %2084 = vmatpush1.msra.mxu0 0.0
        %2085 = vmatprep.subr.mxu0 0.0
        %2086 = vmatpush1.msra.mxu0 0.0
        %2087 = vmatprep.subr.mxu0 0.0
        %2088 = vmatpush1.msra.mxu0 0.0
        %2089 = vmatprep.subr.mxu0 0.0
        %2090 = vmatpush1.msra.mxu0 0.0
        %2091 = vmatprep.subr.mxu0 0.0
        %2092 = vmatpush1.msra.mxu0 0.0
        %2093 = vmatprep.subr.mxu0 0.0
        %2094 = vmatpush1.msra.mxu0 0.0
        %2095 = vmatprep.subr.mxu0 0.0
        %2096 = vmatpush1.msra.mxu0 0.0
        %2097 = vmatprep.subr.mxu0 0.0
        %2098 = vmatpush1.msra.mxu0 0.0
        %2099 = vmatprep.subr.mxu0 0.0
        %2100 = vmatpush1.msra.mxu0 0.0
        %2101 = vmatprep.subr.mxu0 0.0
        %2102 = vmatpush1.msra.mxu0 0.0
        %2103 = vmatprep.subr.mxu0 0.0
        %2104 = vmatpush1.msra.mxu0 0.0
        %2105 = vmatprep.subr.mxu0 0.0
        %2106 = vmatpush1.msra.mxu0 0.0
        %2107 = vmatprep.subr.mxu0 0.0
        %2108 = vmatpush1.msra.mxu0 0.0
        %2109 = vmatprep.subr.mxu0 0.0
        %2110 = vmatpush1.msra.mxu0 0.0
        %2111 = vmatprep.subr.mxu0 0.0
        %2112 = vmatpush1.msra.mxu0 0.0
        %2113 = vmatprep.subr.mxu0 0.0
        %2114 = vmatpush1.msra.mxu0 0.0
        %2115 = vmatprep.subr.mxu0 0.0
        %2116 = vmatpush1.msra.mxu0 0.0
        %2117 = vmatprep.subr.mxu0 0.0
        %2118 = vmatpush1.msra.mxu0 0.0
        %2119 = vmatprep.subr.mxu0 0.0
        %2120 = vmatpush1.msra.mxu0 0.0
        %2121 = vmatprep.subr.mxu0 0.0
        %2122 = vmatpush1.msra.mxu0 0.0
        %2123 = vmatprep.mubr.f32.mxu0 0.0
        %2124 = vmatmul.mubr.f32.gmra.mrb[0].mxu0 %v2045
        %v2125 = vpop.f32.mrb[0].mxu0
        %v2126 = vadd.f32 0.0, %v2125
        %v2127 = vpop.f32.mrb[0].mxu0
        %2128 = vmatprep.mubr.f32.mxu0 0.0
        %2129 = vmatmul.mubr.f32.gmra.mrb[0].mxu0 %v2048
        %v2130 = vpop.f32.mrb[0].mxu0
        %v2131 = vadd.f32 0.0, %v2130
        %v2132 = vpop.f32.mrb[0].mxu0
        %2133 = vmatprep.mubr.f32.mxu0 0.0
        %2134 = vmatmul.mubr.f32.gmra.mrb[0].mxu0 %v2051
        %v2135 = vpop.f32.mrb[0].mxu0
        %v2136 = vadd.f32 0.0, %v2135
        %v2137 = vpop.f32.mrb[0].mxu0
        %2138 = vmatprep.mubr.f32.mxu0 0.0
        %2139 = vmatmul.mubr.f32.gmra.mrb[0].mxu0 %v2054
        %v2140 = vpop.f32.mrb[0].mxu0
        %v2141 = vadd.f32 0.0, %v2140
        %v2142 = vpop.f32.mrb[0].mxu0
        %2143 = vmatprep.mubr.f32.mxu0 0.0
        %2144 = vmatmul.mubr.f32.gmra.mrb[0].mxu0 %v2057
        %v2145 = vpop.f32.mrb[0].mxu0
        %v2146 = vadd.f32 0.0, %v2145
        %v2147 = vpop.f32.mrb[0].mxu0
        %2148 = vdwg.mxu0
        %v2149 = vadd.f32 %v2029, %v2126
        %v2150 = vadd.f32 %v2030, %v2131
        %v2151 = vadd.f32 %v2031, %v2136
        %v2152 = vadd.f32 %v2032, %v2141
        %v2153 = vadd.f32 %v2033, %v2146
        %s2154 = sadd.s32 %s1435, 2
        %s2155 = smul.u32 %s2154, 40
        %s2156 = scalar_lea.vmem [#allocation2], %s2155
        %v2157 = vld [vmem:[%s2156] sm:$0xff]
        %v2158 = vld [vmem:[%s2156 + $0x8] sm:$0xff]
        %v2159 = vld [vmem:[%s2156 + $0x10] sm:$0xff]
        %v2160 = vld [vmem:[%s2156 + $0x18] sm:$0xff]
        %v2161 = vld [vmem:[%s2156 + $0x20] sm:$0x1f]
        %s2162 = scalar_lea.vmem %s1, 192
        %v2163 = vld [vmem:[%s2162] sm:$0xff]
        %v2164 = vld [vmem:[%s2162 + $0x8] sm:$0xff]
        %v2165 = vld [vmem:[%s2162 + $0x10] sm:$0xff]
        %v2166 = vld [vmem:[%s2162 + $0x18] sm:$0xff]
        %v2168 = vsel %vm451, %v2157, 0
        %v2171 = vsel %vm451, %v2158, 0
        %v2174 = vsel %vm451, %v2159, 0
        %v2177 = vsel %vm451, %v2160, 0
        %v2180 = vsel %vm451, %v2161, 0
        %2182 = vmatprep.subr.mxu0 0.0
        %2183 = vmatpush1.msra.mxu0 %v2163
        %2184 = vmatprep.subr.mxu0 0.0
        %2185 = vmatpush1.msra.mxu0 %v2164
        %2186 = vmatprep.subr.mxu0 0.0
        %2187 = vmatpush1.msra.mxu0 %v2165
        %2188 = vmatprep.subr.mxu0 0.0
        %2189 = vmatpush1.msra.mxu0 %v2166
        %2190 = vmatprep.subr.mxu0 0.0
        %2191 = vmatpush1.msra.mxu0 0.0
        %2192 = vmatprep.subr.mxu0 0.0
        %2193 = vmatpush1.msra.mxu0 0.0
        %2194 = vmatprep.subr.mxu0 0.0
        %2195 = vmatpush1.msra.mxu0 0.0
        %2196 = vmatprep.subr.mxu0 0.0
        %2197 = vmatpush1.msra.mxu0 0.0
        %2198 = vmatprep.subr.mxu0 0.0
        %2199 = vmatpush1.msra.mxu0 0.0
        %2200 = vmatprep.subr.mxu0 0.0
        %2201 = vmatpush1.msra.mxu0 0.0
        %2202 = vmatprep.subr.mxu0 0.0
        %2203 = vmatpush1.msra.mxu0 0.0
        %2204 = vmatprep.subr.mxu0 0.0
        %2205 = vmatpush1.msra.mxu0 0.0
        %2206 = vmatprep.subr.mxu0 0.0
        %2207 = vmatpush1.msra.mxu0 0.0
        %2208 = vmatprep.subr.mxu0 0.0
        %2209 = vmatpush1.msra.mxu0 0.0
        %2210 = vmatprep.subr.mxu0 0.0
        %2211 = vmatpush1.msra.mxu0 0.0
        %2212 = vmatprep.subr.mxu0 0.0
        %2213 = vmatpush1.msra.mxu0 0.0
        %2214 = vmatprep.subr.mxu0 0.0
        %2215 = vmatpush1.msra.mxu0 0.0
        %2216 = vmatprep.subr.mxu0 0.0
        %2217 = vmatpush1.msra.mxu0 0.0
        %2218 = vmatprep.subr.mxu0 0.0
        %2219 = vmatpush1.msra.mxu0 0.0
        %2220 = vmatprep.subr.mxu0 0.0
        %2221 = vmatpush1.msra.mxu0 0.0
        %2222 = vmatprep.subr.mxu0 0.0
        %2223 = vmatpush1.msra.mxu0 0.0
        %2224 = vmatprep.subr.mxu0 0.0
        %2225 = vmatpush1.msra.mxu0 0.0
        %2226 = vmatprep.subr.mxu0 0.0
        %2227 = vmatpush1.msra.mxu0 0.0
        %2228 = vmatprep.subr.mxu0 0.0
        %2229 = vmatpush1.msra.mxu0 0.0
        %2230 = vmatprep.subr.mxu0 0.0
        %2231 = vmatpush1.msra.mxu0 0.0
        %2232 = vmatprep.subr.mxu0 0.0
        %2233 = vmatpush1.msra.mxu0 0.0
        %2234 = vmatprep.subr.mxu0 0.0
        %2235 = vmatpush1.msra.mxu0 0.0
        %2236 = vmatprep.subr.mxu0 0.0
        %2237 = vmatpush1.msra.mxu0 0.0
        %2238 = vmatprep.subr.mxu0 0.0
        %2239 = vmatpush1.msra.mxu0 0.0
        %2240 = vmatprep.subr.mxu0 0.0
        %2241 = vmatpush1.msra.mxu0 0.0
        %2242 = vmatprep.subr.mxu0 0.0
        %2243 = vmatpush1.msra.mxu0 0.0
        %2244 = vmatprep.subr.mxu0 0.0
        %2245 = vmatpush1.msra.mxu0 0.0
        %2246 = vmatprep.mubr.f32.mxu0 0.0
        %2247 = vmatmul.mubr.f32.gmra.mrb[0].mxu0 %v2168
        %v2248 = vpop.f32.mrb[0].mxu0
        %v2249 = vadd.f32 0.0, %v2248
        %v2250 = vpop.f32.mrb[0].mxu0
        %2251 = vmatprep.mubr.f32.mxu0 0.0
        %2252 = vmatmul.mubr.f32.gmra.mrb[0].mxu0 %v2171
        %v2253 = vpop.f32.mrb[0].mxu0
        %v2254 = vadd.f32 0.0, %v2253
        %v2255 = vpop.f32.mrb[0].mxu0
        %2256 = vmatprep.mubr.f32.mxu0 0.0
        %2257 = vmatmul.mubr.f32.gmra.mrb[0].mxu0 %v2174
        %v2258 = vpop.f32.mrb[0].mxu0
        %v2259 = vadd.f32 0.0, %v2258
        %v2260 = vpop.f32.mrb[0].mxu0
        %2261 = vmatprep.mubr.f32.mxu0 0.0
        %2262 = vmatmul.mubr.f32.gmra.mrb[0].mxu0 %v2177
        %v2263 = vpop.f32.mrb[0].mxu0
        %v2264 = vadd.f32 0.0, %v2263
        %v2265 = vpop.f32.mrb[0].mxu0
        %2266 = vmatprep.mubr.f32.mxu0 0.0
        %2267 = vmatmul.mubr.f32.gmra.mrb[0].mxu0 %v2180
        %v2268 = vpop.f32.mrb[0].mxu0
        %v2269 = vadd.f32 0.0, %v2268
        %v2270 = vpop.f32.mrb[0].mxu0
        %2271 = vdwg.mxu0
        %v2272 = vadd.f32 %v2149, %v2249
        %v2273 = vadd.f32 %v2150, %v2254
        %v2274 = vadd.f32 %v2151, %v2259
        %v2275 = vadd.f32 %v2152, %v2264
        %v2276 = vadd.f32 %v2153, %v2269
        %v2277 = vld [vmem:[%s2156 + $0x1] sm:$0xff]
        %v2278 = vld [vmem:[%s2156 + $0x9] sm:$0xff]
        %v2279 = vld [vmem:[%s2156 + $0x11] sm:$0xff]
        %v2280 = vld [vmem:[%s2156 + $0x19] sm:$0xff]
        %v2281 = vld [vmem:[%s2156 + $0x21] sm:$0x1f]
        %s2282 = scalar_lea.vmem %s1, 224
        %v2283 = vld [vmem:[%s2282] sm:$0xff]
        %v2284 = vld [vmem:[%s2282 + $0x8] sm:$0xff]
        %v2285 = vld [vmem:[%s2282 + $0x10] sm:$0xff]
        %v2286 = vld [vmem:[%s2282 + $0x18] sm:$0xff]
        %v2288 = vsel %vm451, %v2277, 0
        %v2291 = vsel %vm451, %v2278, 0
        %v2294 = vsel %vm451, %v2279, 0
        %v2297 = vsel %vm451, %v2280, 0
        %v2300 = vsel %vm451, %v2281, 0
        %2302 = vmatprep.subr.mxu0 0.0
        %2303 = vmatpush1.msra.mxu0 %v2283
        %2304 = vmatprep.subr.mxu0 0.0
        %2305 = vmatpush1.msra.mxu0 %v2284
        %2306 = vmatprep.subr.mxu0 0.0
        %2307 = vmatpush1.msra.mxu0 %v2285
        %2308 = vmatprep.subr.mxu0 0.0
        %2309 = vmatpush1.msra.mxu0 %v2286
        %2310 = vmatprep.subr.mxu0 0.0
        %2311 = vmatpush1.msra.mxu0 0.0
        %2312 = vmatprep.subr.mxu0 0.0
        %2313 = vmatpush1.msra.mxu0 0.0
        %2314 = vmatprep.subr.mxu0 0.0
        %2315 = vmatpush1.msra.mxu0 0.0
        %2316 = vmatprep.subr.mxu0 0.0
        %2317 = vmatpush1.msra.mxu0 0.0
        %2318 = vmatprep.subr.mxu0 0.0
        %2319 = vmatpush1.msra.mxu0 0.0
        %2320 = vmatprep.subr.mxu0 0.0
        %2321 = vmatpush1.msra.mxu0 0.0
        %2322 = vmatprep.subr.mxu0 0.0
        %2323 = vmatpush1.msra.mxu0 0.0
        %2324 = vmatprep.subr.mxu0 0.0
        %2325 = vmatpush1.msra.mxu0 0.0
        %2326 = vmatprep.subr.mxu0 0.0
        %2327 = vmatpush1.msra.mxu0 0.0
        %2328 = vmatprep.subr.mxu0 0.0
        %2329 = vmatpush1.msra.mxu0 0.0
        %2330 = vmatprep.subr.mxu0 0.0
        %2331 = vmatpush1.msra.mxu0 0.0
        %2332 = vmatprep.subr.mxu0 0.0
        %2333 = vmatpush1.msra.mxu0 0.0
        %2334 = vmatprep.subr.mxu0 0.0
        %2335 = vmatpush1.msra.mxu0 0.0
        %2336 = vmatprep.subr.mxu0 0.0
        %2337 = vmatpush1.msra.mxu0 0.0
        %2338 = vmatprep.subr.mxu0 0.0
        %2339 = vmatpush1.msra.mxu0 0.0
        %2340 = vmatprep.subr.mxu0 0.0
        %2341 = vmatpush1.msra.mxu0 0.0
        %2342 = vmatprep.subr.mxu0 0.0
        %2343 = vmatpush1.msra.mxu0 0.0
        %2344 = vmatprep.subr.mxu0 0.0
        %2345 = vmatpush1.msra.mxu0 0.0
        %2346 = vmatprep.subr.mxu0 0.0
        %2347 = vmatpush1.msra.mxu0 0.0
        %2348 = vmatprep.subr.mxu0 0.0
        %2349 = vmatpush1.msra.mxu0 0.0
        %2350 = vmatprep.subr.mxu0 0.0
        %2351 = vmatpush1.msra.mxu0 0.0
        %2352 = vmatprep.subr.mxu0 0.0
        %2353 = vmatpush1.msra.mxu0 0.0
        %2354 = vmatprep.subr.mxu0 0.0
        %2355 = vmatpush1.msra.mxu0 0.0
        %2356 = vmatprep.subr.mxu0 0.0
        %2357 = vmatpush1.msra.mxu0 0.0
        %2358 = vmatprep.subr.mxu0 0.0
        %2359 = vmatpush1.msra.mxu0 0.0
        %2360 = vmatprep.subr.mxu0 0.0
        %2361 = vmatpush1.msra.mxu0 0.0
        %2362 = vmatprep.subr.mxu0 0.0
        %2363 = vmatpush1.msra.mxu0 0.0
        %2364 = vmatprep.subr.mxu0 0.0
        %2365 = vmatpush1.msra.mxu0 0.0
        %2366 = vmatprep.mubr.f32.mxu0 0.0
        %2367 = vmatmul.mubr.f32.gmra.mrb[0].mxu0 %v2288
        %v2368 = vpop.f32.mrb[0].mxu0
        %v2369 = vadd.f32 0.0, %v2368
        %v2370 = vpop.f32.mrb[0].mxu0
        %2371 = vmatprep.mubr.f32.mxu0 0.0
        %2372 = vmatmul.mubr.f32.gmra.mrb[0].mxu0 %v2291
        %v2373 = vpop.f32.mrb[0].mxu0
        %v2374 = vadd.f32 0.0, %v2373
        %v2375 = vpop.f32.mrb[0].mxu0
        %2376 = vmatprep.mubr.f32.mxu0 0.0
        %2377 = vmatmul.mubr.f32.gmra.mrb[0].mxu0 %v2294
        %v2378 = vpop.f32.mrb[0].mxu0
        %v2379 = vadd.f32 0.0, %v2378
        %v2380 = vpop.f32.mrb[0].mxu0
        %2381 = vmatprep.mubr.f32.mxu0 0.0
        %2382 = vmatmul.mubr.f32.gmra.mrb[0].mxu0 %v2297
        %v2383 = vpop.f32.mrb[0].mxu0
        %v2384 = vadd.f32 0.0, %v2383
        %v2385 = vpop.f32.mrb[0].mxu0
        %2386 = vmatprep.mubr.f32.mxu0 0.0
        %2387 = vmatmul.mubr.f32.gmra.mrb[0].mxu0 %v2300
        %v2388 = vpop.f32.mrb[0].mxu0
        %v2389 = vadd.f32 0.0, %v2388
        %v2390 = vpop.f32.mrb[0].mxu0
        %2391 = vdwg.mxu0
        %v2392 = vadd.f32 %v2272, %v2369
        %v2393 = vadd.f32 %v2273, %v2374
        %v2394 = vadd.f32 %v2274, %v2379
        %v2395 = vadd.f32 %v2275, %v2384
        %v2396 = vadd.f32 %v2276, %v2389
        %v2397 = vld [vmem:[%s2156 + $0x2] sm:$0xff]
        %v2398 = vld [vmem:[%s2156 + $0xa] sm:$0xff]
        %v2399 = vld [vmem:[%s2156 + $0x12] sm:$0xff]
        %v2400 = vld [vmem:[%s2156 + $0x1a] sm:$0xff]
        %v2401 = vld [vmem:[%s2156 + $0x22] sm:$0x1f]
        %s2402 = scalar_lea.vmem %s1, 256
        %v2403 = vld [vmem:[%s2402] sm:$0xff]
        %v2404 = vld [vmem:[%s2402 + $0x8] sm:$0xff]
        %v2405 = vld [vmem:[%s2402 + $0x10] sm:$0xff]
        %v2406 = vld [vmem:[%s2402 + $0x18] sm:$0xff]
        %v2408 = vsel %vm451, %v2397, 0
        %v2411 = vsel %vm451, %v2398, 0
        %v2414 = vsel %vm451, %v2399, 0
        %v2417 = vsel %vm451, %v2400, 0
        %v2420 = vsel %vm451, %v2401, 0
        %2422 = vmatprep.subr.mxu0 0.0
        %2423 = vmatpush1.msra.mxu0 %v2403
        %2424 = vmatprep.subr.mxu0 0.0
        %2425 = vmatpush1.msra.mxu0 %v2404
        %2426 = vmatprep.subr.mxu0 0.0
        %2427 = vmatpush1.msra.mxu0 %v2405
        %2428 = vmatprep.subr.mxu0 0.0
        %2429 = vmatpush1.msra.mxu0 %v2406
        %2430 = vmatprep.subr.mxu0 0.0
        %2431 = vmatpush1.msra.mxu0 0.0
        %2432 = vmatprep.subr.mxu0 0.0
        %2433 = vmatpush1.msra.mxu0 0.0
        %2434 = vmatprep.subr.mxu0 0.0
        %2435 = vmatpush1.msra.mxu0 0.0
        %2436 = vmatprep.subr.mxu0 0.0
        %2437 = vmatpush1.msra.mxu0 0.0
        %2438 = vmatprep.subr.mxu0 0.0
        %2439 = vmatpush1.msra.mxu0 0.0
        %2440 = vmatprep.subr.mxu0 0.0
        %2441 = vmatpush1.msra.mxu0 0.0
        %2442 = vmatprep.subr.mxu0 0.0
        %2443 = vmatpush1.msra.mxu0 0.0
        %2444 = vmatprep.subr.mxu0 0.0
        %2445 = vmatpush1.msra.mxu0 0.0
        %2446 = vmatprep.subr.mxu0 0.0
        %2447 = vmatpush1.msra.mxu0 0.0
        %2448 = vmatprep.subr.mxu0 0.0
        %2449 = vmatpush1.msra.mxu0 0.0
        %2450 = vmatprep.subr.mxu0 0.0
        %2451 = vmatpush1.msra.mxu0 0.0
        %2452 = vmatprep.subr.mxu0 0.0
        %2453 = vmatpush1.msra.mxu0 0.0
        %2454 = vmatprep.subr.mxu0 0.0
        %2455 = vmatpush1.msra.mxu0 0.0
        %2456 = vmatprep.subr.mxu0 0.0
        %2457 = vmatpush1.msra.mxu0 0.0
        %2458 = vmatprep.subr.mxu0 0.0
        %2459 = vmatpush1.msra.mxu0 0.0
        %2460 = vmatprep.subr.mxu0 0.0
        %2461 = vmatpush1.msra.mxu0 0.0
        %2462 = vmatprep.subr.mxu0 0.0
        %2463 = vmatpush1.msra.mxu0 0.0
        %2464 = vmatprep.subr.mxu0 0.0
        %2465 = vmatpush1.msra.mxu0 0.0
        %2466 = vmatprep.subr.mxu0 0.0
        %2467 = vmatpush1.msra.mxu0 0.0
        %2468 = vmatprep.subr.mxu0 0.0
        %2469 = vmatpush1.msra.mxu0 0.0
        %2470 = vmatprep.subr.mxu0 0.0
        %2471 = vmatpush1.msra.mxu0 0.0
        %2472 = vmatprep.subr.mxu0 0.0
        %2473 = vmatpush1.msra.mxu0 0.0
        %2474 = vmatprep.subr.mxu0 0.0
        %2475 = vmatpush1.msra.mxu0 0.0
        %2476 = vmatprep.subr.mxu0 0.0
        %2477 = vmatpush1.msra.mxu0 0.0
        %2478 = vmatprep.subr.mxu0 0.0
        %2479 = vmatpush1.msra.mxu0 0.0
        %2480 = vmatprep.subr.mxu0 0.0
        %2481 = vmatpush1.msra.mxu0 0.0
        %2482 = vmatprep.subr.mxu0 0.0
        %2483 = vmatpush1.msra.mxu0 0.0
        %2484 = vmatprep.subr.mxu0 0.0
        %2485 = vmatpush1.msra.mxu0 0.0
        %2486 = vmatprep.mubr.f32.mxu0 0.0
        %2487 = vmatmul.mubr.f32.gmra.mrb[0].mxu0 %v2408
        %v2488 = vpop.f32.mrb[0].mxu0
        %v2489 = vadd.f32 0.0, %v2488
        %v2490 = vpop.f32.mrb[0].mxu0
        %2491 = vmatprep.mubr.f32.mxu0 0.0
        %2492 = vmatmul.mubr.f32.gmra.mrb[0].mxu0 %v2411
        %v2493 = vpop.f32.mrb[0].mxu0
        %v2494 = vadd.f32 0.0, %v2493
        %v2495 = vpop.f32.mrb[0].mxu0
        %2496 = vmatprep.mubr.f32.mxu0 0.0
        %2497 = vmatmul.mubr.f32.gmra.mrb[0].mxu0 %v2414
        %v2498 = vpop.f32.mrb[0].mxu0
        %v2499 = vadd.f32 0.0, %v2498
        %v2500 = vpop.f32.mrb[0].mxu0
        %2501 = vmatprep.mubr.f32.mxu0 0.0
        %2502 = vmatmul.mubr.f32.gmra.mrb[0].mxu0 %v2417
        %v2503 = vpop.f32.mrb[0].mxu0
        %v2504 = vadd.f32 0.0, %v2503
        %v2505 = vpop.f32.mrb[0].mxu0
        %2506 = vmatprep.mubr.f32.mxu0 0.0
        %2507 = vmatmul.mubr.f32.gmra.mrb[0].mxu0 %v2420
        %v2508 = vpop.f32.mrb[0].mxu0
        %v2509 = vadd.f32 0.0, %v2508
        %v2510 = vpop.f32.mrb[0].mxu0
        %2511 = vdwg.mxu0
        %v2512 = vadd.f32 %v2392, %v2489
        %v2513 = vadd.f32 %v2393, %v2494
        %v2514 = vadd.f32 %v2394, %v2499
        %v2515 = vadd.f32 %v2395, %v2504
        %v2516 = vadd.f32 %v2396, %v2509
        %v2518 = vlaneseq
        %v2519 = vshrl.u32 %v2518, 7
        %v2520 = vsub.s32 0, %v2519
        %v2521 = vrot.slane %v1433, %v2520
        %v2523 = vadd.f32 %v2512, %v2521
        %v2524 = vadd.f32 %v2513, %v2521
        %v2525 = vadd.f32 %v2514, %v2521
        %v2526 = vadd.f32 %v2515, %v2521
        %v2527 = vadd.f32 %v2516, %v2521
        %v2528 = vmax.f32 %v2523, 0.0
        %v2529 = vmax.f32 %v2524, 0.0
        %v2530 = vmax.f32 %v2525, 0.0
        %v2531 = vmax.f32 %v2526, 0.0
        %v2532 = vmax.f32 %v2527, 0.0
        %s2533 = smul.u32 %s2154, 48
        %s2534 = scalar_lea.vmem [#allocation3], %s2533
        %2535 = vst.msk [vmem:[%s2534 + $0x2] sm:$0xff] %vm451, %v2528
        %2536 = vst.msk [vmem:[%s2534 + $0xa] sm:$0xff] %vm451, %v2529
        %2537 = vst.msk [vmem:[%s2534 + $0x12] sm:$0xff] %vm451, %v2530
        %2538 = vst.msk [vmem:[%s2534 + $0x1a] sm:$0xff] %vm451, %v2531
        %vm2539 = vcmask 258048
        %2540 = vst.msk [vmem:[%s2534 + $0x22] sm:$0x1f] %vm2539, %v2532
      $region68: #{decoder_forward.3} parent=55 // loop_footer
        %s1439 = sadd.s32 1, %s1435
      $region69: #{decoder_forward.3} parent=55 // loop_footer_branch
        %1434 = sbr.rel target = $region65
      $region70: #{decoder_forward.3} parent=55 // loop_exit
        _
      %v2541 = vld [vmem:[%s4] sm:$0x1]
      loop: start=0, step=1, limit=39
      $region71: #{decoder_forward.3} parent=55 // loop_pre_header
        _
      $region72: #{decoder_forward.3} parent=55 // loop_header
        %s2543 = sphi 0, %s2547
        %p2544 = scmp.ge.s32.totalorder %s2543, 39
      $region73: #{decoder_forward.3} parent=55 // loop_header_branch
        %2546 = sbr.rel (%p2544) target = $region77
      $region74: #{decoder_forward.3} parent=55 // loop_body
        %s2548 = smul.u32 %s2543, 48
        %s2549 = scalar_lea.vmem [#allocation3], %s2548
        %v2550 = vld [vmem:[%s2549] sm:$0xff]
        %v2551 = vld [vmem:[%s2549 + $0x8] sm:$0xff]
        %v2552 = vld [vmem:[%s2549 + $0x10] sm:$0xff]
        %v2553 = vld [vmem:[%s2549 + $0x18] sm:$0xff]
        %v2554 = vld [vmem:[%s2549 + $0x20] sm:$0x7f]
        %v2555 = vld [vmem:[%s3] sm:$0xff]
        %v2556 = vld [vmem:[%s3 + $0x8] sm:$0xff]
        %v2557 = vld [vmem:[%s3 + $0x10] sm:$0xff]
        %v2558 = vld [vmem:[%s3 + $0x18] sm:$0xff]
        %v2559 = vld [vmem:[%s2549 + $0x1] sm:$0xff]
        %v2560 = vld [vmem:[%s2549 + $0x9] sm:$0xff]
        %v2561 = vld [vmem:[%s2549 + $0x11] sm:$0xff]
        %v2562 = vld [vmem:[%s2549 + $0x19] sm:$0xff]
        %v2563 = vld [vmem:[%s2549 + $0x21] sm:$0x7f]
        %s2564 = scalar_lea.vmem %s3, 32
        %v2565 = vld [vmem:[%s2564] sm:$0xff]
        %v2566 = vld [vmem:[%s2564 + $0x8] sm:$0xff]
        %v2567 = vld [vmem:[%s2564 + $0x10] sm:$0xff]
        %v2568 = vld [vmem:[%s2564 + $0x18] sm:$0xff]
        %v2570 = vsel %vm451, %v2559, 0
        %v2573 = vsel %vm451, %v2560, 0
        %v2576 = vsel %vm451, %v2561, 0
        %v2579 = vsel %vm451, %v2562, 0
        %v2582 = vsel %vm451, %v2563, 0
        %2584 = vmatprep.subr.mxu0 0.0
        %2585 = vmatpush1.msra.mxu0 %v2565
        %2586 = vmatprep.subr.mxu0 0.0
        %2587 = vmatpush1.msra.mxu0 %v2566
        %2588 = vmatprep.subr.mxu0 0.0
        %2589 = vmatpush1.msra.mxu0 %v2567
        %2590 = vmatprep.subr.mxu0 0.0
        %2591 = vmatpush1.msra.mxu0 %v2568
        %2592 = vmatprep.subr.mxu0 0.0
        %2593 = vmatpush1.msra.mxu0 0.0
        %2594 = vmatprep.subr.mxu0 0.0
        %2595 = vmatpush1.msra.mxu0 0.0
        %2596 = vmatprep.subr.mxu0 0.0
        %2597 = vmatpush1.msra.mxu0 0.0
        %2598 = vmatprep.subr.mxu0 0.0
        %2599 = vmatpush1.msra.mxu0 0.0
        %2600 = vmatprep.subr.mxu0 0.0
        %2601 = vmatpush1.msra.mxu0 0.0
        %2602 = vmatprep.subr.mxu0 0.0
        %2603 = vmatpush1.msra.mxu0 0.0
        %2604 = vmatprep.subr.mxu0 0.0
        %2605 = vmatpush1.msra.mxu0 0.0
        %2606 = vmatprep.subr.mxu0 0.0
        %2607 = vmatpush1.msra.mxu0 0.0
        %2608 = vmatprep.subr.mxu0 0.0
        %2609 = vmatpush1.msra.mxu0 0.0
        %2610 = vmatprep.subr.mxu0 0.0
        %2611 = vmatpush1.msra.mxu0 0.0
        %2612 = vmatprep.subr.mxu0 0.0
        %2613 = vmatpush1.msra.mxu0 0.0
        %2614 = vmatprep.subr.mxu0 0.0
        %2615 = vmatpush1.msra.mxu0 0.0
        %2616 = vmatprep.subr.mxu0 0.0
        %2617 = vmatpush1.msra.mxu0 0.0
        %2618 = vmatprep.subr.mxu0 0.0
        %2619 = vmatpush1.msra.mxu0 0.0
        %2620 = vmatprep.subr.mxu0 0.0
        %2621 = vmatpush1.msra.mxu0 0.0
        %2622 = vmatprep.subr.mxu0 0.0
        %2623 = vmatpush1.msra.mxu0 0.0
        %2624 = vmatprep.subr.mxu0 0.0
        %2625 = vmatpush1.msra.mxu0 0.0
        %2626 = vmatprep.subr.mxu0 0.0
        %2627 = vmatpush1.msra.mxu0 0.0
        %2628 = vmatprep.subr.mxu0 0.0
        %2629 = vmatpush1.msra.mxu0 0.0
        %2630 = vmatprep.subr.mxu0 0.0
        %2631 = vmatpush1.msra.mxu0 0.0
        %2632 = vmatprep.subr.mxu0 0.0
        %2633 = vmatpush1.msra.mxu0 0.0
        %2634 = vmatprep.subr.mxu0 0.0
        %2635 = vmatpush1.msra.mxu0 0.0
        %2636 = vmatprep.subr.mxu0 0.0
        %2637 = vmatpush1.msra.mxu0 0.0
        %2638 = vmatprep.subr.mxu0 0.0
        %2639 = vmatpush1.msra.mxu0 0.0
        %2640 = vmatprep.subr.mxu0 0.0
        %2641 = vmatpush1.msra.mxu0 0.0
        %2642 = vmatprep.subr.mxu0 0.0
        %2643 = vmatpush1.msra.mxu0 0.0
        %2644 = vmatprep.subr.mxu0 0.0
        %2645 = vmatpush1.msra.mxu0 0.0
        %2646 = vmatprep.subr.mxu0 0.0
        %2647 = vmatpush1.msra.mxu0 0.0
        %2648 = vmatprep.mubr.f32.mxu0 0.0
        %2649 = vmatmul.mubr.f32.gmra.mrb[0].mxu0 %v2570
        %v2650 = vpop.f32.mrb[0].mxu0
        %v2651 = vadd.f32 0.0, %v2650
        %v2652 = vpop.f32.mrb[0].mxu0
        %2653 = vmatprep.mubr.f32.mxu0 0.0
        %2654 = vmatmul.mubr.f32.gmra.mrb[0].mxu0 %v2573
        %v2655 = vpop.f32.mrb[0].mxu0
        %v2656 = vadd.f32 0.0, %v2655
        %v2657 = vpop.f32.mrb[0].mxu0
        %2658 = vmatprep.mubr.f32.mxu0 0.0
        %2659 = vmatmul.mubr.f32.gmra.mrb[0].mxu0 %v2576
        %v2660 = vpop.f32.mrb[0].mxu0
        %v2661 = vadd.f32 0.0, %v2660
        %v2662 = vpop.f32.mrb[0].mxu0
        %2663 = vmatprep.mubr.f32.mxu0 0.0
        %2664 = vmatmul.mubr.f32.gmra.mrb[0].mxu0 %v2579
        %v2665 = vpop.f32.mrb[0].mxu0
        %v2666 = vadd.f32 0.0, %v2665
        %v2667 = vpop.f32.mrb[0].mxu0
        %2668 = vmatprep.mubr.f32.mxu0 0.0
        %2669 = vmatmul.mubr.f32.gmra.mrb[0].mxu0 %v2582
        %v2670 = vpop.f32.mrb[0].mxu0
        %v2671 = vadd.f32 0.0, %v2670
        %v2672 = vpop.f32.mrb[0].mxu0
        %2673 = vdwg.mxu0
        %v2675 = vsel %vm451, %v2550, 0
        %v2678 = vsel %vm451, %v2551, 0
        %v2681 = vsel %vm451, %v2552, 0
        %v2684 = vsel %vm451, %v2553, 0
        %v2687 = vsel %vm451, %v2554, 0
        %2689 = vmatprep.subr.mxu0 0.0
        %2690 = vmatpush1.msra.mxu0 %v2555
        %2691 = vmatprep.subr.mxu0 0.0
        %2692 = vmatpush1.msra.mxu0 %v2556
        %2693 = vmatprep.subr.mxu0 0.0
        %2694 = vmatpush1.msra.mxu0 %v2557
        %2695 = vmatprep.subr.mxu0 0.0
        %2696 = vmatpush1.msra.mxu0 %v2558
        %2697 = vmatprep.subr.mxu0 0.0
        %2698 = vmatpush1.msra.mxu0 0.0
        %2699 = vmatprep.subr.mxu0 0.0
        %2700 = vmatpush1.msra.mxu0 0.0
        %2701 = vmatprep.subr.mxu0 0.0
        %2702 = vmatpush1.msra.mxu0 0.0
        %2703 = vmatprep.subr.mxu0 0.0
        %2704 = vmatpush1.msra.mxu0 0.0
        %2705 = vmatprep.subr.mxu0 0.0
        %2706 = vmatpush1.msra.mxu0 0.0
        %2707 = vmatprep.subr.mxu0 0.0
        %2708 = vmatpush1.msra.mxu0 0.0
        %2709 = vmatprep.subr.mxu0 0.0
        %2710 = vmatpush1.msra.mxu0 0.0
        %2711 = vmatprep.subr.mxu0 0.0
        %2712 = vmatpush1.msra.mxu0 0.0
        %2713 = vmatprep.subr.mxu0 0.0
        %2714 = vmatpush1.msra.mxu0 0.0
        %2715 = vmatprep.subr.mxu0 0.0
        %2716 = vmatpush1.msra.mxu0 0.0
        %2717 = vmatprep.subr.mxu0 0.0
        %2718 = vmatpush1.msra.mxu0 0.0
        %2719 = vmatprep.subr.mxu0 0.0
        %2720 = vmatpush1.msra.mxu0 0.0
        %2721 = vmatprep.subr.mxu0 0.0
        %2722 = vmatpush1.msra.mxu0 0.0
        %2723 = vmatprep.subr.mxu0 0.0
        %2724 = vmatpush1.msra.mxu0 0.0
        %2725 = vmatprep.subr.mxu0 0.0
        %2726 = vmatpush1.msra.mxu0 0.0
        %2727 = vmatprep.subr.mxu0 0.0
        %2728 = vmatpush1.msra.mxu0 0.0
        %2729 = vmatprep.subr.mxu0 0.0
        %2730 = vmatpush1.msra.mxu0 0.0
        %2731 = vmatprep.subr.mxu0 0.0
        %2732 = vmatpush1.msra.mxu0 0.0
        %2733 = vmatprep.subr.mxu0 0.0
        %2734 = vmatpush1.msra.mxu0 0.0
        %2735 = vmatprep.subr.mxu0 0.0
        %2736 = vmatpush1.msra.mxu0 0.0
        %2737 = vmatprep.subr.mxu0 0.0
        %2738 = vmatpush1.msra.mxu0 0.0
        %2739 = vmatprep.subr.mxu0 0.0
        %2740 = vmatpush1.msra.mxu0 0.0
        %2741 = vmatprep.subr.mxu0 0.0
        %2742 = vmatpush1.msra.mxu0 0.0
        %2743 = vmatprep.subr.mxu0 0.0
        %2744 = vmatpush1.msra.mxu0 0.0
        %2745 = vmatprep.subr.mxu0 0.0
        %2746 = vmatpush1.msra.mxu0 0.0
        %2747 = vmatprep.subr.mxu0 0.0
        %2748 = vmatpush1.msra.mxu0 0.0
        %2749 = vmatprep.subr.mxu0 0.0
        %2750 = vmatpush1.msra.mxu0 0.0
        %2751 = vmatprep.subr.mxu0 0.0
        %2752 = vmatpush1.msra.mxu0 0.0
        %2753 = vmatprep.mubr.f32.mxu0 0.0
        %2754 = vmatmul.mubr.f32.gmra.mrb[0].mxu0 %v2675
        %v2755 = vpop.f32.mrb[0].mxu0
        %v2756 = vadd.f32 %v2651, %v2755
        %v2757 = vpop.f32.mrb[0].mxu0
        %2758 = vmatprep.mubr.f32.mxu0 0.0
        %2759 = vmatmul.mubr.f32.gmra.mrb[0].mxu0 %v2678
        %v2760 = vpop.f32.mrb[0].mxu0
        %v2761 = vadd.f32 %v2656, %v2760
        %v2762 = vpop.f32.mrb[0].mxu0
        %2763 = vmatprep.mubr.f32.mxu0 0.0
        %2764 = vmatmul.mubr.f32.gmra.mrb[0].mxu0 %v2681
        %v2765 = vpop.f32.mrb[0].mxu0
        %v2766 = vadd.f32 %v2661, %v2765
        %v2767 = vpop.f32.mrb[0].mxu0
        %2768 = vmatprep.mubr.f32.mxu0 0.0
        %2769 = vmatmul.mubr.f32.gmra.mrb[0].mxu0 %v2684
        %v2770 = vpop.f32.mrb[0].mxu0
        %v2771 = vadd.f32 %v2666, %v2770
        %v2772 = vpop.f32.mrb[0].mxu0
        %2773 = vmatprep.mubr.f32.mxu0 0.0
        %2774 = vmatmul.mubr.f32.gmra.mrb[0].mxu0 %v2687
        %v2775 = vpop.f32.mrb[0].mxu0
        %v2776 = vadd.f32 %v2671, %v2775
        %v2777 = vpop.f32.mrb[0].mxu0
        %2778 = vdwg.mxu0
        %v2779 = vld [vmem:[%s2549 + $0x2] sm:$0xff]
        %v2780 = vld [vmem:[%s2549 + $0xa] sm:$0xff]
        %v2781 = vld [vmem:[%s2549 + $0x12] sm:$0xff]
        %v2782 = vld [vmem:[%s2549 + $0x1a] sm:$0xff]
        %v2783 = vld [vmem:[%s2549 + $0x22] sm:$0x7f]
        %s2784 = scalar_lea.vmem %s3, 64
        %v2785 = vld [vmem:[%s2784] sm:$0xff]
        %v2786 = vld [vmem:[%s2784 + $0x8] sm:$0xff]
        %v2787 = vld [vmem:[%s2784 + $0x10] sm:$0xff]
        %v2788 = vld [vmem:[%s2784 + $0x18] sm:$0xff]
        %v2790 = vsel %vm451, %v2779, 0
        %v2793 = vsel %vm451, %v2780, 0
        %v2796 = vsel %vm451, %v2781, 0
        %v2799 = vsel %vm451, %v2782, 0
        %v2802 = vsel %vm451, %v2783, 0
        %2804 = vmatprep.subr.mxu0 0.0
        %2805 = vmatpush1.msra.mxu0 %v2785
        %2806 = vmatprep.subr.mxu0 0.0
        %2807 = vmatpush1.msra.mxu0 %v2786
        %2808 = vmatprep.subr.mxu0 0.0
        %2809 = vmatpush1.msra.mxu0 %v2787
        %2810 = vmatprep.subr.mxu0 0.0
        %2811 = vmatpush1.msra.mxu0 %v2788
        %2812 = vmatprep.subr.mxu0 0.0
        %2813 = vmatpush1.msra.mxu0 0.0
        %2814 = vmatprep.subr.mxu0 0.0
        %2815 = vmatpush1.msra.mxu0 0.0
        %2816 = vmatprep.subr.mxu0 0.0
        %2817 = vmatpush1.msra.mxu0 0.0
        %2818 = vmatprep.subr.mxu0 0.0
        %2819 = vmatpush1.msra.mxu0 0.0
        %2820 = vmatprep.subr.mxu0 0.0
        %2821 = vmatpush1.msra.mxu0 0.0
        %2822 = vmatprep.subr.mxu0 0.0
        %2823 = vmatpush1.msra.mxu0 0.0
        %2824 = vmatprep.subr.mxu0 0.0
        %2825 = vmatpush1.msra.mxu0 0.0
        %2826 = vmatprep.subr.mxu0 0.0
        %2827 = vmatpush1.msra.mxu0 0.0
        %2828 = vmatprep.subr.mxu0 0.0
        %2829 = vmatpush1.msra.mxu0 0.0
        %2830 = vmatprep.subr.mxu0 0.0
        %2831 = vmatpush1.msra.mxu0 0.0
        %2832 = vmatprep.subr.mxu0 0.0
        %2833 = vmatpush1.msra.mxu0 0.0
        %2834 = vmatprep.subr.mxu0 0.0
        %2835 = vmatpush1.msra.mxu0 0.0
        %2836 = vmatprep.subr.mxu0 0.0
        %2837 = vmatpush1.msra.mxu0 0.0
        %2838 = vmatprep.subr.mxu0 0.0
        %2839 = vmatpush1.msra.mxu0 0.0
        %2840 = vmatprep.subr.mxu0 0.0
        %2841 = vmatpush1.msra.mxu0 0.0
        %2842 = vmatprep.subr.mxu0 0.0
        %2843 = vmatpush1.msra.mxu0 0.0
        %2844 = vmatprep.subr.mxu0 0.0
        %2845 = vmatpush1.msra.mxu0 0.0
        %2846 = vmatprep.subr.mxu0 0.0
        %2847 = vmatpush1.msra.mxu0 0.0
        %2848 = vmatprep.subr.mxu0 0.0
        %2849 = vmatpush1.msra.mxu0 0.0
        %2850 = vmatprep.subr.mxu0 0.0
        %2851 = vmatpush1.msra.mxu0 0.0
        %2852 = vmatprep.subr.mxu0 0.0
        %2853 = vmatpush1.msra.mxu0 0.0
        %2854 = vmatprep.subr.mxu0 0.0
        %2855 = vmatpush1.msra.mxu0 0.0
        %2856 = vmatprep.subr.mxu0 0.0
        %2857 = vmatpush1.msra.mxu0 0.0
        %2858 = vmatprep.subr.mxu0 0.0
        %2859 = vmatpush1.msra.mxu0 0.0
        %2860 = vmatprep.subr.mxu0 0.0
        %2861 = vmatpush1.msra.mxu0 0.0
        %2862 = vmatprep.subr.mxu0 0.0
        %2863 = vmatpush1.msra.mxu0 0.0
        %2864 = vmatprep.subr.mxu0 0.0
        %2865 = vmatpush1.msra.mxu0 0.0
        %2866 = vmatprep.subr.mxu0 0.0
        %2867 = vmatpush1.msra.mxu0 0.0
        %2868 = vmatprep.mubr.f32.mxu0 0.0
        %2869 = vmatmul.mubr.f32.gmra.mrb[0].mxu0 %v2790
        %v2870 = vpop.f32.mrb[0].mxu0
        %v2871 = vadd.f32 0.0, %v2870
        %v2872 = vpop.f32.mrb[0].mxu0
        %2873 = vmatprep.mubr.f32.mxu0 0.0
        %2874 = vmatmul.mubr.f32.gmra.mrb[0].mxu0 %v2793
        %v2875 = vpop.f32.mrb[0].mxu0
        %v2876 = vadd.f32 0.0, %v2875
        %v2877 = vpop.f32.mrb[0].mxu0
        %2878 = vmatprep.mubr.f32.mxu0 0.0
        %2879 = vmatmul.mubr.f32.gmra.mrb[0].mxu0 %v2796
        %v2880 = vpop.f32.mrb[0].mxu0
        %v2881 = vadd.f32 0.0, %v2880
        %v2882 = vpop.f32.mrb[0].mxu0
        %2883 = vmatprep.mubr.f32.mxu0 0.0
        %2884 = vmatmul.mubr.f32.gmra.mrb[0].mxu0 %v2799
        %v2885 = vpop.f32.mrb[0].mxu0
        %v2886 = vadd.f32 0.0, %v2885
        %v2887 = vpop.f32.mrb[0].mxu0
        %2888 = vmatprep.mubr.f32.mxu0 0.0
        %2889 = vmatmul.mubr.f32.gmra.mrb[0].mxu0 %v2802
        %v2890 = vpop.f32.mrb[0].mxu0
        %v2891 = vadd.f32 0.0, %v2890
        %v2892 = vpop.f32.mrb[0].mxu0
        %2893 = vdwg.mxu0
        %v2894 = vadd.f32 %v2756, %v2871
        %v2895 = vadd.f32 %v2761, %v2876
        %v2896 = vadd.f32 %v2766, %v2881
        %v2897 = vadd.f32 %v2771, %v2886
        %v2898 = vadd.f32 %v2776, %v2891
        %s2899 = sadd.s32 %s2543, 1
        %s2900 = smul.u32 %s2899, 48
        %s2901 = scalar_lea.vmem [#allocation3], %s2900
        %v2902 = vld [vmem:[%s2901] sm:$0xff]
        %v2903 = vld [vmem:[%s2901 + $0x8] sm:$0xff]
        %v2904 = vld [vmem:[%s2901 + $0x10] sm:$0xff]
        %v2905 = vld [vmem:[%s2901 + $0x18] sm:$0xff]
        %v2906 = vld [vmem:[%s2901 + $0x20] sm:$0x7f]
        %s2907 = scalar_lea.vmem %s3, 96
        %v2908 = vld [vmem:[%s2907] sm:$0xff]
        %v2909 = vld [vmem:[%s2907 + $0x8] sm:$0xff]
        %v2910 = vld [vmem:[%s2907 + $0x10] sm:$0xff]
        %v2911 = vld [vmem:[%s2907 + $0x18] sm:$0xff]
        %v2913 = vsel %vm451, %v2902, 0
        %v2916 = vsel %vm451, %v2903, 0
        %v2919 = vsel %vm451, %v2904, 0
        %v2922 = vsel %vm451, %v2905, 0
        %v2925 = vsel %vm451, %v2906, 0
        %2927 = vmatprep.subr.mxu0 0.0
        %2928 = vmatpush1.msra.mxu0 %v2908
        %2929 = vmatprep.subr.mxu0 0.0
        %2930 = vmatpush1.msra.mxu0 %v2909
        %2931 = vmatprep.subr.mxu0 0.0
        %2932 = vmatpush1.msra.mxu0 %v2910
        %2933 = vmatprep.subr.mxu0 0.0
        %2934 = vmatpush1.msra.mxu0 %v2911
        %2935 = vmatprep.subr.mxu0 0.0
        %2936 = vmatpush1.msra.mxu0 0.0
        %2937 = vmatprep.subr.mxu0 0.0
        %2938 = vmatpush1.msra.mxu0 0.0
        %2939 = vmatprep.subr.mxu0 0.0
        %2940 = vmatpush1.msra.mxu0 0.0
        %2941 = vmatprep.subr.mxu0 0.0
        %2942 = vmatpush1.msra.mxu0 0.0
        %2943 = vmatprep.subr.mxu0 0.0
        %2944 = vmatpush1.msra.mxu0 0.0
        %2945 = vmatprep.subr.mxu0 0.0
        %2946 = vmatpush1.msra.mxu0 0.0
        %2947 = vmatprep.subr.mxu0 0.0
        %2948 = vmatpush1.msra.mxu0 0.0
        %2949 = vmatprep.subr.mxu0 0.0
        %2950 = vmatpush1.msra.mxu0 0.0
        %2951 = vmatprep.subr.mxu0 0.0
        %2952 = vmatpush1.msra.mxu0 0.0
        %2953 = vmatprep.subr.mxu0 0.0
        %2954 = vmatpush1.msra.mxu0 0.0
        %2955 = vmatprep.subr.mxu0 0.0
        %2956 = vmatpush1.msra.mxu0 0.0
        %2957 = vmatprep.subr.mxu0 0.0
        %2958 = vmatpush1.msra.mxu0 0.0
        %2959 = vmatprep.subr.mxu0 0.0
        %2960 = vmatpush1.msra.mxu0 0.0
        %2961 = vmatprep.subr.mxu0 0.0
        %2962 = vmatpush1.msra.mxu0 0.0
        %2963 = vmatprep.subr.mxu0 0.0
        %2964 = vmatpush1.msra.mxu0 0.0
        %2965 = vmatprep.subr.mxu0 0.0
        %2966 = vmatpush1.msra.mxu0 0.0
        %2967 = vmatprep.subr.mxu0 0.0
        %2968 = vmatpush1.msra.mxu0 0.0
        %2969 = vmatprep.subr.mxu0 0.0
        %2970 = vmatpush1.msra.mxu0 0.0
        %2971 = vmatprep.subr.mxu0 0.0
        %2972 = vmatpush1.msra.mxu0 0.0
        %2973 = vmatprep.subr.mxu0 0.0
        %2974 = vmatpush1.msra.mxu0 0.0
        %2975 = vmatprep.subr.mxu0 0.0
        %2976 = vmatpush1.msra.mxu0 0.0
        %2977 = vmatprep.subr.mxu0 0.0
        %2978 = vmatpush1.msra.mxu0 0.0
        %2979 = vmatprep.subr.mxu0 0.0
        %2980 = vmatpush1.msra.mxu0 0.0
        %2981 = vmatprep.subr.mxu0 0.0
        %2982 = vmatpush1.msra.mxu0 0.0
        %2983 = vmatprep.subr.mxu0 0.0
        %2984 = vmatpush1.msra.mxu0 0.0
        %2985 = vmatprep.subr.mxu0 0.0
        %2986 = vmatpush1.msra.mxu0 0.0
        %2987 = vmatprep.subr.mxu0 0.0
        %2988 = vmatpush1.msra.mxu0 0.0
        %2989 = vmatprep.subr.mxu0 0.0
        %2990 = vmatpush1.msra.mxu0 0.0
        %2991 = vmatprep.mubr.f32.mxu0 0.0
        %2992 = vmatmul.mubr.f32.gmra.mrb[0].mxu0 %v2913
        %v2993 = vpop.f32.mrb[0].mxu0
        %v2994 = vadd.f32 0.0, %v2993
        %v2995 = vpop.f32.mrb[0].mxu0
        %2996 = vmatprep.mubr.f32.mxu0 0.0
        %2997 = vmatmul.mubr.f32.gmra.mrb[0].mxu0 %v2916
        %v2998 = vpop.f32.mrb[0].mxu0
        %v2999 = vadd.f32 0.0, %v2998
        %v3000 = vpop.f32.mrb[0].mxu0
        %3001 = vmatprep.mubr.f32.mxu0 0.0
        %3002 = vmatmul.mubr.f32.gmra.mrb[0].mxu0 %v2919
        %v3003 = vpop.f32.mrb[0].mxu0
        %v3004 = vadd.f32 0.0, %v3003
        %v3005 = vpop.f32.mrb[0].mxu0
        %3006 = vmatprep.mubr.f32.mxu0 0.0
        %3007 = vmatmul.mubr.f32.gmra.mrb[0].mxu0 %v2922
        %v3008 = vpop.f32.mrb[0].mxu0
        %v3009 = vadd.f32 0.0, %v3008
        %v3010 = vpop.f32.mrb[0].mxu0
        %3011 = vmatprep.mubr.f32.mxu0 0.0
        %3012 = vmatmul.mubr.f32.gmra.mrb[0].mxu0 %v2925
        %v3013 = vpop.f32.mrb[0].mxu0
        %v3014 = vadd.f32 0.0, %v3013
        %v3015 = vpop.f32.mrb[0].mxu0
        %3016 = vdwg.mxu0
        %v3017 = vadd.f32 %v2894, %v2994
        %v3018 = vadd.f32 %v2895, %v2999
        %v3019 = vadd.f32 %v2896, %v3004
        %v3020 = vadd.f32 %v2897, %v3009
        %v3021 = vadd.f32 %v2898, %v3014
        %v3022 = vld [vmem:[%s2901 + $0x1] sm:$0xff]
        %v3023 = vld [vmem:[%s2901 + $0x9] sm:$0xff]
        %v3024 = vld [vmem:[%s2901 + $0x11] sm:$0xff]
        %v3025 = vld [vmem:[%s2901 + $0x19] sm:$0xff]
        %v3026 = vld [vmem:[%s2901 + $0x21] sm:$0x7f]
        %s3027 = scalar_lea.vmem %s3, 128
        %v3028 = vld [vmem:[%s3027] sm:$0xff]
        %v3029 = vld [vmem:[%s3027 + $0x8] sm:$0xff]
        %v3030 = vld [vmem:[%s3027 + $0x10] sm:$0xff]
        %v3031 = vld [vmem:[%s3027 + $0x18] sm:$0xff]
        %v3033 = vsel %vm451, %v3022, 0
        %v3036 = vsel %vm451, %v3023, 0
        %v3039 = vsel %vm451, %v3024, 0
        %v3042 = vsel %vm451, %v3025, 0
        %v3045 = vsel %vm451, %v3026, 0
        %3047 = vmatprep.subr.mxu0 0.0
        %3048 = vmatpush1.msra.mxu0 %v3028
        %3049 = vmatprep.subr.mxu0 0.0
        %3050 = vmatpush1.msra.mxu0 %v3029
        %3051 = vmatprep.subr.mxu0 0.0
        %3052 = vmatpush1.msra.mxu0 %v3030
        %3053 = vmatprep.subr.mxu0 0.0
        %3054 = vmatpush1.msra.mxu0 %v3031
        %3055 = vmatprep.subr.mxu0 0.0
        %3056 = vmatpush1.msra.mxu0 0.0
        %3057 = vmatprep.subr.mxu0 0.0
        %3058 = vmatpush1.msra.mxu0 0.0
        %3059 = vmatprep.subr.mxu0 0.0
        %3060 = vmatpush1.msra.mxu0 0.0
        %3061 = vmatprep.subr.mxu0 0.0
        %3062 = vmatpush1.msra.mxu0 0.0
        %3063 = vmatprep.subr.mxu0 0.0
        %3064 = vmatpush1.msra.mxu0 0.0
        %3065 = vmatprep.subr.mxu0 0.0
        %3066 = vmatpush1.msra.mxu0 0.0
        %3067 = vmatprep.subr.mxu0 0.0
        %3068 = vmatpush1.msra.mxu0 0.0
        %3069 = vmatprep.subr.mxu0 0.0
        %3070 = vmatpush1.msra.mxu0 0.0
        %3071 = vmatprep.subr.mxu0 0.0
        %3072 = vmatpush1.msra.mxu0 0.0
        %3073 = vmatprep.subr.mxu0 0.0
        %3074 = vmatpush1.msra.mxu0 0.0
        %3075 = vmatprep.subr.mxu0 0.0
        %3076 = vmatpush1.msra.mxu0 0.0
        %3077 = vmatprep.subr.mxu0 0.0
        %3078 = vmatpush1.msra.mxu0 0.0
        %3079 = vmatprep.subr.mxu0 0.0
        %3080 = vmatpush1.msra.mxu0 0.0
        %3081 = vmatprep.subr.mxu0 0.0
        %3082 = vmatpush1.msra.mxu0 0.0
        %3083 = vmatprep.subr.mxu0 0.0
        %3084 = vmatpush1.msra.mxu0 0.0
        %3085 = vmatprep.subr.mxu0 0.0
        %3086 = vmatpush1.msra.mxu0 0.0
        %3087 = vmatprep.subr.mxu0 0.0
        %3088 = vmatpush1.msra.mxu0 0.0
        %3089 = vmatprep.subr.mxu0 0.0
        %3090 = vmatpush1.msra.mxu0 0.0
        %3091 = vmatprep.subr.mxu0 0.0
        %3092 = vmatpush1.msra.mxu0 0.0
        %3093 = vmatprep.subr.mxu0 0.0
        %3094 = vmatpush1.msra.mxu0 0.0
        %3095 = vmatprep.subr.mxu0 0.0
        %3096 = vmatpush1.msra.mxu0 0.0
        %3097 = vmatprep.subr.mxu0 0.0
        %3098 = vmatpush1.msra.mxu0 0.0
        %3099 = vmatprep.subr.mxu0 0.0
        %3100 = vmatpush1.msra.mxu0 0.0
        %3101 = vmatprep.subr.mxu0 0.0
        %3102 = vmatpush1.msra.mxu0 0.0
        %3103 = vmatprep.subr.mxu0 0.0
        %3104 = vmatpush1.msra.mxu0 0.0
        %3105 = vmatprep.subr.mxu0 0.0
        %3106 = vmatpush1.msra.mxu0 0.0
        %3107 = vmatprep.subr.mxu0 0.0
        %3108 = vmatpush1.msra.mxu0 0.0
        %3109 = vmatprep.subr.mxu0 0.0
        %3110 = vmatpush1.msra.mxu0 0.0
        %3111 = vmatprep.mubr.f32.mxu0 0.0
        %3112 = vmatmul.mubr.f32.gmra.mrb[0].mxu0 %v3033
        %v3113 = vpop.f32.mrb[0].mxu0
        %v3114 = vadd.f32 0.0, %v3113
        %v3115 = vpop.f32.mrb[0].mxu0
        %3116 = vmatprep.mubr.f32.mxu0 0.0
        %3117 = vmatmul.mubr.f32.gmra.mrb[0].mxu0 %v3036
        %v3118 = vpop.f32.mrb[0].mxu0
        %v3119 = vadd.f32 0.0, %v3118
        %v3120 = vpop.f32.mrb[0].mxu0
        %3121 = vmatprep.mubr.f32.mxu0 0.0
        %3122 = vmatmul.mubr.f32.gmra.mrb[0].mxu0 %v3039
        %v3123 = vpop.f32.mrb[0].mxu0
        %v3124 = vadd.f32 0.0, %v3123
        %v3125 = vpop.f32.mrb[0].mxu0
        %3126 = vmatprep.mubr.f32.mxu0 0.0
        %3127 = vmatmul.mubr.f32.gmra.mrb[0].mxu0 %v3042
        %v3128 = vpop.f32.mrb[0].mxu0
        %v3129 = vadd.f32 0.0, %v3128
        %v3130 = vpop.f32.mrb[0].mxu0
        %3131 = vmatprep.mubr.f32.mxu0 0.0
        %3132 = vmatmul.mubr.f32.gmra.mrb[0].mxu0 %v3045
        %v3133 = vpop.f32.mrb[0].mxu0
        %v3134 = vadd.f32 0.0, %v3133
        %v3135 = vpop.f32.mrb[0].mxu0
        %3136 = vdwg.mxu0
        %v3137 = vadd.f32 %v3017, %v3114
        %v3138 = vadd.f32 %v3018, %v3119
        %v3139 = vadd.f32 %v3019, %v3124
        %v3140 = vadd.f32 %v3020, %v3129
        %v3141 = vadd.f32 %v3021, %v3134
        %v3142 = vld [vmem:[%s2901 + $0x2] sm:$0xff]
        %v3143 = vld [vmem:[%s2901 + $0xa] sm:$0xff]
        %v3144 = vld [vmem:[%s2901 + $0x12] sm:$0xff]
        %v3145 = vld [vmem:[%s2901 + $0x1a] sm:$0xff]
        %v3146 = vld [vmem:[%s2901 + $0x22] sm:$0x7f]
        %s3147 = scalar_lea.vmem %s3, 160
        %v3148 = vld [vmem:[%s3147] sm:$0xff]
        %v3149 = vld [vmem:[%s3147 + $0x8] sm:$0xff]
        %v3150 = vld [vmem:[%s3147 + $0x10] sm:$0xff]
        %v3151 = vld [vmem:[%s3147 + $0x18] sm:$0xff]
        %v3153 = vsel %vm451, %v3142, 0
        %v3156 = vsel %vm451, %v3143, 0
        %v3159 = vsel %vm451, %v3144, 0
        %v3162 = vsel %vm451, %v3145, 0
        %v3165 = vsel %vm451, %v3146, 0
        %3167 = vmatprep.subr.mxu0 0.0
        %3168 = vmatpush1.msra.mxu0 %v3148
        %3169 = vmatprep.subr.mxu0 0.0
        %3170 = vmatpush1.msra.mxu0 %v3149
        %3171 = vmatprep.subr.mxu0 0.0
        %3172 = vmatpush1.msra.mxu0 %v3150
        %3173 = vmatprep.subr.mxu0 0.0
        %3174 = vmatpush1.msra.mxu0 %v3151
        %3175 = vmatprep.subr.mxu0 0.0
        %3176 = vmatpush1.msra.mxu0 0.0
        %3177 = vmatprep.subr.mxu0 0.0
        %3178 = vmatpush1.msra.mxu0 0.0
        %3179 = vmatprep.subr.mxu0 0.0
        %3180 = vmatpush1.msra.mxu0 0.0
        %3181 = vmatprep.subr.mxu0 0.0
        %3182 = vmatpush1.msra.mxu0 0.0
        %3183 = vmatprep.subr.mxu0 0.0
        %3184 = vmatpush1.msra.mxu0 0.0
        %3185 = vmatprep.subr.mxu0 0.0
        %3186 = vmatpush1.msra.mxu0 0.0
        %3187 = vmatprep.subr.mxu0 0.0
        %3188 = vmatpush1.msra.mxu0 0.0
        %3189 = vmatprep.subr.mxu0 0.0
        %3190 = vmatpush1.msra.mxu0 0.0
        %3191 = vmatprep.subr.mxu0 0.0
        %3192 = vmatpush1.msra.mxu0 0.0
        %3193 = vmatprep.subr.mxu0 0.0
        %3194 = vmatpush1.msra.mxu0 0.0
        %3195 = vmatprep.subr.mxu0 0.0
        %3196 = vmatpush1.msra.mxu0 0.0
        %3197 = vmatprep.subr.mxu0 0.0
        %3198 = vmatpush1.msra.mxu0 0.0
        %3199 = vmatprep.subr.mxu0 0.0
        %3200 = vmatpush1.msra.mxu0 0.0
        %3201 = vmatprep.subr.mxu0 0.0
        %3202 = vmatpush1.msra.mxu0 0.0
        %3203 = vmatprep.subr.mxu0 0.0
        %3204 = vmatpush1.msra.mxu0 0.0
        %3205 = vmatprep.subr.mxu0 0.0
        %3206 = vmatpush1.msra.mxu0 0.0
        %3207 = vmatprep.subr.mxu0 0.0
        %3208 = vmatpush1.msra.mxu0 0.0
        %3209 = vmatprep.subr.mxu0 0.0
        %3210 = vmatpush1.msra.mxu0 0.0
        %3211 = vmatprep.subr.mxu0 0.0
        %3212 = vmatpush1.msra.mxu0 0.0
        %3213 = vmatprep.subr.mxu0 0.0
        %3214 = vmatpush1.msra.mxu0 0.0
        %3215 = vmatprep.subr.mxu0 0.0
        %3216 = vmatpush1.msra.mxu0 0.0
        %3217 = vmatprep.subr.mxu0 0.0
        %3218 = vmatpush1.msra.mxu0 0.0
        %3219 = vmatprep.subr.mxu0 0.0
        %3220 = vmatpush1.msra.mxu0 0.0
        %3221 = vmatprep.subr.mxu0 0.0
        %3222 = vmatpush1.msra.mxu0 0.0
        %3223 = vmatprep.subr.mxu0 0.0
        %3224 = vmatpush1.msra.mxu0 0.0
        %3225 = vmatprep.subr.mxu0 0.0
        %3226 = vmatpush1.msra.mxu0 0.0
        %3227 = vmatprep.subr.mxu0 0.0
        %3228 = vmatpush1.msra.mxu0 0.0
        %3229 = vmatprep.subr.mxu0 0.0
        %3230 = vmatpush1.msra.mxu0 0.0
        %3231 = vmatprep.mubr.f32.mxu0 0.0
        %3232 = vmatmul.mubr.f32.gmra.mrb[0].mxu0 %v3153
        %v3233 = vpop.f32.mrb[0].mxu0
        %v3234 = vadd.f32 0.0, %v3233
        %v3235 = vpop.f32.mrb[0].mxu0
        %3236 = vmatprep.mubr.f32.mxu0 0.0
        %3237 = vmatmul.mubr.f32.gmra.mrb[0].mxu0 %v3156
        %v3238 = vpop.f32.mrb[0].mxu0
        %v3239 = vadd.f32 0.0, %v3238
        %v3240 = vpop.f32.mrb[0].mxu0
        %3241 = vmatprep.mubr.f32.mxu0 0.0
        %3242 = vmatmul.mubr.f32.gmra.mrb[0].mxu0 %v3159
        %v3243 = vpop.f32.mrb[0].mxu0
        %v3244 = vadd.f32 0.0, %v3243
        %v3245 = vpop.f32.mrb[0].mxu0
        %3246 = vmatprep.mubr.f32.mxu0 0.0
        %3247 = vmatmul.mubr.f32.gmra.mrb[0].mxu0 %v3162
        %v3248 = vpop.f32.mrb[0].mxu0
        %v3249 = vadd.f32 0.0, %v3248
        %v3250 = vpop.f32.mrb[0].mxu0
        %3251 = vmatprep.mubr.f32.mxu0 0.0
        %3252 = vmatmul.mubr.f32.gmra.mrb[0].mxu0 %v3165
        %v3253 = vpop.f32.mrb[0].mxu0
        %v3254 = vadd.f32 0.0, %v3253
        %v3255 = vpop.f32.mrb[0].mxu0
        %3256 = vdwg.mxu0
        %v3257 = vadd.f32 %v3137, %v3234
        %v3258 = vadd.f32 %v3138, %v3239
        %v3259 = vadd.f32 %v3139, %v3244
        %v3260 = vadd.f32 %v3140, %v3249
        %v3261 = vadd.f32 %v3141, %v3254
        %s3262 = sadd.s32 %s2543, 2
        %s3263 = smul.u32 %s3262, 48
        %s3264 = scalar_lea.vmem [#allocation3], %s3263
        %v3265 = vld [vmem:[%s3264] sm:$0xff]
        %v3266 = vld [vmem:[%s3264 + $0x8] sm:$0xff]
        %v3267 = vld [vmem:[%s3264 + $0x10] sm:$0xff]
        %v3268 = vld [vmem:[%s3264 + $0x18] sm:$0xff]
        %v3269 = vld [vmem:[%s3264 + $0x20] sm:$0x7f]
        %s3270 = scalar_lea.vmem %s3, 192
        %v3271 = vld [vmem:[%s3270] sm:$0xff]
        %v3272 = vld [vmem:[%s3270 + $0x8] sm:$0xff]
        %v3273 = vld [vmem:[%s3270 + $0x10] sm:$0xff]
        %v3274 = vld [vmem:[%s3270 + $0x18] sm:$0xff]
        %v3276 = vsel %vm451, %v3265, 0
        %v3279 = vsel %vm451, %v3266, 0
        %v3282 = vsel %vm451, %v3267, 0
        %v3285 = vsel %vm451, %v3268, 0
        %v3288 = vsel %vm451, %v3269, 0
        %3290 = vmatprep.subr.mxu0 0.0
        %3291 = vmatpush1.msra.mxu0 %v3271
        %3292 = vmatprep.subr.mxu0 0.0
        %3293 = vmatpush1.msra.mxu0 %v3272
        %3294 = vmatprep.subr.mxu0 0.0
        %3295 = vmatpush1.msra.mxu0 %v3273
        %3296 = vmatprep.subr.mxu0 0.0
        %3297 = vmatpush1.msra.mxu0 %v3274
        %3298 = vmatprep.subr.mxu0 0.0
        %3299 = vmatpush1.msra.mxu0 0.0
        %3300 = vmatprep.subr.mxu0 0.0
        %3301 = vmatpush1.msra.mxu0 0.0
        %3302 = vmatprep.subr.mxu0 0.0
        %3303 = vmatpush1.msra.mxu0 0.0
        %3304 = vmatprep.subr.mxu0 0.0
        %3305 = vmatpush1.msra.mxu0 0.0
        %3306 = vmatprep.subr.mxu0 0.0
        %3307 = vmatpush1.msra.mxu0 0.0
        %3308 = vmatprep.subr.mxu0 0.0
        %3309 = vmatpush1.msra.mxu0 0.0
        %3310 = vmatprep.subr.mxu0 0.0
        %3311 = vmatpush1.msra.mxu0 0.0
        %3312 = vmatprep.subr.mxu0 0.0
        %3313 = vmatpush1.msra.mxu0 0.0
        %3314 = vmatprep.subr.mxu0 0.0
        %3315 = vmatpush1.msra.mxu0 0.0
        %3316 = vmatprep.subr.mxu0 0.0
        %3317 = vmatpush1.msra.mxu0 0.0
        %3318 = vmatprep.subr.mxu0 0.0
        %3319 = vmatpush1.msra.mxu0 0.0
        %3320 = vmatprep.subr.mxu0 0.0
        %3321 = vmatpush1.msra.mxu0 0.0
        %3322 = vmatprep.subr.mxu0 0.0
        %3323 = vmatpush1.msra.mxu0 0.0
        %3324 = vmatprep.subr.mxu0 0.0
        %3325 = vmatpush1.msra.mxu0 0.0
        %3326 = vmatprep.subr.mxu0 0.0
        %3327 = vmatpush1.msra.mxu0 0.0
        %3328 = vmatprep.subr.mxu0 0.0
        %3329 = vmatpush1.msra.mxu0 0.0
        %3330 = vmatprep.subr.mxu0 0.0
        %3331 = vmatpush1.msra.mxu0 0.0
        %3332 = vmatprep.subr.mxu0 0.0
        %3333 = vmatpush1.msra.mxu0 0.0
        %3334 = vmatprep.subr.mxu0 0.0
        %3335 = vmatpush1.msra.mxu0 0.0
        %3336 = vmatprep.subr.mxu0 0.0
        %3337 = vmatpush1.msra.mxu0 0.0
        %3338 = vmatprep.subr.mxu0 0.0
        %3339 = vmatpush1.msra.mxu0 0.0
        %3340 = vmatprep.subr.mxu0 0.0
        %3341 = vmatpush1.msra.mxu0 0.0
        %3342 = vmatprep.subr.mxu0 0.0
        %3343 = vmatpush1.msra.mxu0 0.0
        %3344 = vmatprep.subr.mxu0 0.0
        %3345 = vmatpush1.msra.mxu0 0.0
        %3346 = vmatprep.subr.mxu0 0.0
        %3347 = vmatpush1.msra.mxu0 0.0
        %3348 = vmatprep.subr.mxu0 0.0
        %3349 = vmatpush1.msra.mxu0 0.0
        %3350 = vmatprep.subr.mxu0 0.0
        %3351 = vmatpush1.msra.mxu0 0.0
        %3352 = vmatprep.subr.mxu0 0.0
        %3353 = vmatpush1.msra.mxu0 0.0
        %3354 = vmatprep.mubr.f32.mxu0 0.0
        %3355 = vmatmul.mubr.f32.gmra.mrb[0].mxu0 %v3276
        %v3356 = vpop.f32.mrb[0].mxu0
        %v3357 = vadd.f32 0.0, %v3356
        %v3358 = vpop.f32.mrb[0].mxu0
        %3359 = vmatprep.mubr.f32.mxu0 0.0
        %3360 = vmatmul.mubr.f32.gmra.mrb[0].mxu0 %v3279
        %v3361 = vpop.f32.mrb[0].mxu0
        %v3362 = vadd.f32 0.0, %v3361
        %v3363 = vpop.f32.mrb[0].mxu0
        %3364 = vmatprep.mubr.f32.mxu0 0.0
        %3365 = vmatmul.mubr.f32.gmra.mrb[0].mxu0 %v3282
        %v3366 = vpop.f32.mrb[0].mxu0
        %v3367 = vadd.f32 0.0, %v3366
        %v3368 = vpop.f32.mrb[0].mxu0
        %3369 = vmatprep.mubr.f32.mxu0 0.0
        %3370 = vmatmul.mubr.f32.gmra.mrb[0].mxu0 %v3285
        %v3371 = vpop.f32.mrb[0].mxu0
        %v3372 = vadd.f32 0.0, %v3371
        %v3373 = vpop.f32.mrb[0].mxu0
        %3374 = vmatprep.mubr.f32.mxu0 0.0
        %3375 = vmatmul.mubr.f32.gmra.mrb[0].mxu0 %v3288
        %v3376 = vpop.f32.mrb[0].mxu0
        %v3377 = vadd.f32 0.0, %v3376
        %v3378 = vpop.f32.mrb[0].mxu0
        %3379 = vdwg.mxu0
        %v3380 = vadd.f32 %v3257, %v3357
        %v3381 = vadd.f32 %v3258, %v3362
        %v3382 = vadd.f32 %v3259, %v3367
        %v3383 = vadd.f32 %v3260, %v3372
        %v3384 = vadd.f32 %v3261, %v3377
        %v3385 = vld [vmem:[%s3264 + $0x1] sm:$0xff]
        %v3386 = vld [vmem:[%s3264 + $0x9] sm:$0xff]
        %v3387 = vld [vmem:[%s3264 + $0x11] sm:$0xff]
        %v3388 = vld [vmem:[%s3264 + $0x19] sm:$0xff]
        %v3389 = vld [vmem:[%s3264 + $0x21] sm:$0x7f]
        %s3390 = scalar_lea.vmem %s3, 224
        %v3391 = vld [vmem:[%s3390] sm:$0xff]
        %v3392 = vld [vmem:[%s3390 + $0x8] sm:$0xff]
        %v3393 = vld [vmem:[%s3390 + $0x10] sm:$0xff]
        %v3394 = vld [vmem:[%s3390 + $0x18] sm:$0xff]
        %v3396 = vsel %vm451, %v3385, 0
        %v3399 = vsel %vm451, %v3386, 0
        %v3402 = vsel %vm451, %v3387, 0
        %v3405 = vsel %vm451, %v3388, 0
        %v3408 = vsel %vm451, %v3389, 0
        %3410 = vmatprep.subr.mxu0 0.0
        %3411 = vmatpush1.msra.mxu0 %v3391
        %3412 = vmatprep.subr.mxu0 0.0
        %3413 = vmatpush1.msra.mxu0 %v3392
        %3414 = vmatprep.subr.mxu0 0.0
        %3415 = vmatpush1.msra.mxu0 %v3393
        %3416 = vmatprep.subr.mxu0 0.0
        %3417 = vmatpush1.msra.mxu0 %v3394
        %3418 = vmatprep.subr.mxu0 0.0
        %3419 = vmatpush1.msra.mxu0 0.0
        %3420 = vmatprep.subr.mxu0 0.0
        %3421 = vmatpush1.msra.mxu0 0.0
        %3422 = vmatprep.subr.mxu0 0.0
        %3423 = vmatpush1.msra.mxu0 0.0
        %3424 = vmatprep.subr.mxu0 0.0
        %3425 = vmatpush1.msra.mxu0 0.0
        %3426 = vmatprep.subr.mxu0 0.0
        %3427 = vmatpush1.msra.mxu0 0.0
        %3428 = vmatprep.subr.mxu0 0.0
        %3429 = vmatpush1.msra.mxu0 0.0
        %3430 = vmatprep.subr.mxu0 0.0
        %3431 = vmatpush1.msra.mxu0 0.0
        %3432 = vmatprep.subr.mxu0 0.0
        %3433 = vmatpush1.msra.mxu0 0.0
        %3434 = vmatprep.subr.mxu0 0.0
        %3435 = vmatpush1.msra.mxu0 0.0
        %3436 = vmatprep.subr.mxu0 0.0
        %3437 = vmatpush1.msra.mxu0 0.0
        %3438 = vmatprep.subr.mxu0 0.0
        %3439 = vmatpush1.msra.mxu0 0.0
        %3440 = vmatprep.subr.mxu0 0.0
        %3441 = vmatpush1.msra.mxu0 0.0
        %3442 = vmatprep.subr.mxu0 0.0
        %3443 = vmatpush1.msra.mxu0 0.0
        %3444 = vmatprep.subr.mxu0 0.0
        %3445 = vmatpush1.msra.mxu0 0.0
        %3446 = vmatprep.subr.mxu0 0.0
        %3447 = vmatpush1.msra.mxu0 0.0
        %3448 = vmatprep.subr.mxu0 0.0
        %3449 = vmatpush1.msra.mxu0 0.0
        %3450 = vmatprep.subr.mxu0 0.0
        %3451 = vmatpush1.msra.mxu0 0.0
        %3452 = vmatprep.subr.mxu0 0.0
        %3453 = vmatpush1.msra.mxu0 0.0
        %3454 = vmatprep.subr.mxu0 0.0
        %3455 = vmatpush1.msra.mxu0 0.0
        %3456 = vmatprep.subr.mxu0 0.0
        %3457 = vmatpush1.msra.mxu0 0.0
        %3458 = vmatprep.subr.mxu0 0.0
        %3459 = vmatpush1.msra.mxu0 0.0
        %3460 = vmatprep.subr.mxu0 0.0
        %3461 = vmatpush1.msra.mxu0 0.0
        %3462 = vmatprep.subr.mxu0 0.0
        %3463 = vmatpush1.msra.mxu0 0.0
        %3464 = vmatprep.subr.mxu0 0.0
        %3465 = vmatpush1.msra.mxu0 0.0
        %3466 = vmatprep.subr.mxu0 0.0
        %3467 = vmatpush1.msra.mxu0 0.0
        %3468 = vmatprep.subr.mxu0 0.0
        %3469 = vmatpush1.msra.mxu0 0.0
        %3470 = vmatprep.subr.mxu0 0.0
        %3471 = vmatpush1.msra.mxu0 0.0
        %3472 = vmatprep.subr.mxu0 0.0
        %3473 = vmatpush1.msra.mxu0 0.0
        %3474 = vmatprep.mubr.f32.mxu0 0.0
        %3475 = vmatmul.mubr.f32.gmra.mrb[0].mxu0 %v3396
        %v3476 = vpop.f32.mrb[0].mxu0
        %v3477 = vadd.f32 0.0, %v3476
        %v3478 = vpop.f32.mrb[0].mxu0
        %3479 = vmatprep.mubr.f32.mxu0 0.0
        %3480 = vmatmul.mubr.f32.gmra.mrb[0].mxu0 %v3399
        %v3481 = vpop.f32.mrb[0].mxu0
        %v3482 = vadd.f32 0.0, %v3481
        %v3483 = vpop.f32.mrb[0].mxu0
        %3484 = vmatprep.mubr.f32.mxu0 0.0
        %3485 = vmatmul.mubr.f32.gmra.mrb[0].mxu0 %v3402
        %v3486 = vpop.f32.mrb[0].mxu0
        %v3487 = vadd.f32 0.0, %v3486
        %v3488 = vpop.f32.mrb[0].mxu0
        %3489 = vmatprep.mubr.f32.mxu0 0.0
        %3490 = vmatmul.mubr.f32.gmra.mrb[0].mxu0 %v3405
        %v3491 = vpop.f32.mrb[0].mxu0
        %v3492 = vadd.f32 0.0, %v3491
        %v3493 = vpop.f32.mrb[0].mxu0
        %3494 = vmatprep.mubr.f32.mxu0 0.0
        %3495 = vmatmul.mubr.f32.gmra.mrb[0].mxu0 %v3408
        %v3496 = vpop.f32.mrb[0].mxu0
        %v3497 = vadd.f32 0.0, %v3496
        %v3498 = vpop.f32.mrb[0].mxu0
        %3499 = vdwg.mxu0
        %v3500 = vadd.f32 %v3380, %v3477
        %v3501 = vadd.f32 %v3381, %v3482
        %v3502 = vadd.f32 %v3382, %v3487
        %v3503 = vadd.f32 %v3383, %v3492
        %v3504 = vadd.f32 %v3384, %v3497
        %v3505 = vld [vmem:[%s3264 + $0x2] sm:$0xff]
        %v3506 = vld [vmem:[%s3264 + $0xa] sm:$0xff]
        %v3507 = vld [vmem:[%s3264 + $0x12] sm:$0xff]
        %v3508 = vld [vmem:[%s3264 + $0x1a] sm:$0xff]
        %v3509 = vld [vmem:[%s3264 + $0x22] sm:$0x7f]
        %s3510 = scalar_lea.vmem %s3, 256
        %v3511 = vld [vmem:[%s3510] sm:$0xff]
        %v3512 = vld [vmem:[%s3510 + $0x8] sm:$0xff]
        %v3513 = vld [vmem:[%s3510 + $0x10] sm:$0xff]
        %v3514 = vld [vmem:[%s3510 + $0x18] sm:$0xff]
        %v3516 = vsel %vm451, %v3505, 0
        %v3519 = vsel %vm451, %v3506, 0
        %v3522 = vsel %vm451, %v3507, 0
        %v3525 = vsel %vm451, %v3508, 0
        %v3528 = vsel %vm451, %v3509, 0
        %3530 = vmatprep.subr.mxu0 0.0
        %3531 = vmatpush1.msra.mxu0 %v3511
        %3532 = vmatprep.subr.mxu0 0.0
        %3533 = vmatpush1.msra.mxu0 %v3512
        %3534 = vmatprep.subr.mxu0 0.0
        %3535 = vmatpush1.msra.mxu0 %v3513
        %3536 = vmatprep.subr.mxu0 0.0
        %3537 = vmatpush1.msra.mxu0 %v3514
        %3538 = vmatprep.subr.mxu0 0.0
        %3539 = vmatpush1.msra.mxu0 0.0
        %3540 = vmatprep.subr.mxu0 0.0
        %3541 = vmatpush1.msra.mxu0 0.0
        %3542 = vmatprep.subr.mxu0 0.0
        %3543 = vmatpush1.msra.mxu0 0.0
        %3544 = vmatprep.subr.mxu0 0.0
        %3545 = vmatpush1.msra.mxu0 0.0
        %3546 = vmatprep.subr.mxu0 0.0
        %3547 = vmatpush1.msra.mxu0 0.0
        %3548 = vmatprep.subr.mxu0 0.0
        %3549 = vmatpush1.msra.mxu0 0.0
        %3550 = vmatprep.subr.mxu0 0.0
        %3551 = vmatpush1.msra.mxu0 0.0
        %3552 = vmatprep.subr.mxu0 0.0
        %3553 = vmatpush1.msra.mxu0 0.0
        %3554 = vmatprep.subr.mxu0 0.0
        %3555 = vmatpush1.msra.mxu0 0.0
        %3556 = vmatprep.subr.mxu0 0.0
        %3557 = vmatpush1.msra.mxu0 0.0
        %3558 = vmatprep.subr.mxu0 0.0
        %3559 = vmatpush1.msra.mxu0 0.0
        %3560 = vmatprep.subr.mxu0 0.0
        %3561 = vmatpush1.msra.mxu0 0.0
        %3562 = vmatprep.subr.mxu0 0.0
        %3563 = vmatpush1.msra.mxu0 0.0
        %3564 = vmatprep.subr.mxu0 0.0
        %3565 = vmatpush1.msra.mxu0 0.0
        %3566 = vmatprep.subr.mxu0 0.0
        %3567 = vmatpush1.msra.mxu0 0.0
        %3568 = vmatprep.subr.mxu0 0.0
        %3569 = vmatpush1.msra.mxu0 0.0
        %3570 = vmatprep.subr.mxu0 0.0
        %3571 = vmatpush1.msra.mxu0 0.0
        %3572 = vmatprep.subr.mxu0 0.0
        %3573 = vmatpush1.msra.mxu0 0.0
        %3574 = vmatprep.subr.mxu0 0.0
        %3575 = vmatpush1.msra.mxu0 0.0
        %3576 = vmatprep.subr.mxu0 0.0
        %3577 = vmatpush1.msra.mxu0 0.0
        %3578 = vmatprep.subr.mxu0 0.0
        %3579 = vmatpush1.msra.mxu0 0.0
        %3580 = vmatprep.subr.mxu0 0.0
        %3581 = vmatpush1.msra.mxu0 0.0
        %3582 = vmatprep.subr.mxu0 0.0
        %3583 = vmatpush1.msra.mxu0 0.0
        %3584 = vmatprep.subr.mxu0 0.0
        %3585 = vmatpush1.msra.mxu0 0.0
        %3586 = vmatprep.subr.mxu0 0.0
        %3587 = vmatpush1.msra.mxu0 0.0
        %3588 = vmatprep.subr.mxu0 0.0
        %3589 = vmatpush1.msra.mxu0 0.0
        %3590 = vmatprep.subr.mxu0 0.0
        %3591 = vmatpush1.msra.mxu0 0.0
        %3592 = vmatprep.subr.mxu0 0.0
        %3593 = vmatpush1.msra.mxu0 0.0
        %3594 = vmatprep.mubr.f32.mxu0 0.0
        %3595 = vmatmul.mubr.f32.gmra.mrb[0].mxu0 %v3516
        %v3596 = vpop.f32.mrb[0].mxu0
        %v3597 = vadd.f32 0.0, %v3596
        %v3598 = vpop.f32.mrb[0].mxu0
        %3599 = vmatprep.mubr.f32.mxu0 0.0
        %3600 = vmatmul.mubr.f32.gmra.mrb[0].mxu0 %v3519
        %v3601 = vpop.f32.mrb[0].mxu0
        %v3602 = vadd.f32 0.0, %v3601
        %v3603 = vpop.f32.mrb[0].mxu0
        %3604 = vmatprep.mubr.f32.mxu0 0.0
        %3605 = vmatmul.mubr.f32.gmra.mrb[0].mxu0 %v3522
        %v3606 = vpop.f32.mrb[0].mxu0
        %v3607 = vadd.f32 0.0, %v3606
        %v3608 = vpop.f32.mrb[0].mxu0
        %3609 = vmatprep.mubr.f32.mxu0 0.0
        %3610 = vmatmul.mubr.f32.gmra.mrb[0].mxu0 %v3525
        %v3611 = vpop.f32.mrb[0].mxu0
        %v3612 = vadd.f32 0.0, %v3611
        %v3613 = vpop.f32.mrb[0].mxu0
        %3614 = vmatprep.mubr.f32.mxu0 0.0
        %3615 = vmatmul.mubr.f32.gmra.mrb[0].mxu0 %v3528
        %v3616 = vpop.f32.mrb[0].mxu0
        %v3617 = vadd.f32 0.0, %v3616
        %v3618 = vpop.f32.mrb[0].mxu0
        %3619 = vdwg.mxu0
        %v3620 = vadd.f32 %v3500, %v3597
        %v3621 = vadd.f32 %v3501, %v3602
        %v3622 = vadd.f32 %v3502, %v3607
        %v3623 = vadd.f32 %v3503, %v3612
        %v3624 = vadd.f32 %v3504, %v3617
        %v3626 = vlaneseq
        %v3627 = vshrl.u32 %v3626, 7
        %v3628 = vsub.s32 0, %v3627
        %v3629 = vrot.slane %v2541, %v3628
        %v3631 = vadd.f32 %v3620, %v3629
        %v3632 = vadd.f32 %v3621, %v3629
        %v3633 = vadd.f32 %v3622, %v3629
        %v3634 = vadd.f32 %v3623, %v3629
        %v3635 = vadd.f32 %v3624, %v3629
        %v3636 = vmax.f32 %v3631, 0.0
        %v3637 = vmax.f32 %v3632, 0.0
        %v3638 = vmax.f32 %v3633, 0.0
        %v3639 = vmax.f32 %v3634, 0.0
        %v3640 = vmax.f32 %v3635, 0.0
        %s3641 = scalar_lea.vmem [#allocation4], %s3263
        %3642 = vst.msk [vmem:[%s3641 + $0x2] sm:$0xff] %vm451, %v3636
        %3643 = vst.msk [vmem:[%s3641 + $0xa] sm:$0xff] %vm451, %v3637
        %3644 = vst.msk [vmem:[%s3641 + $0x12] sm:$0xff] %vm451, %v3638
        %3645 = vst.msk [vmem:[%s3641 + $0x1a] sm:$0xff] %vm451, %v3639
        %3646 = vst.msk [vmem:[%s3641 + $0x22] sm:$0x7f] %vm456, %v3640
      $region75: #{decoder_forward.3} parent=55 // loop_footer
        %s2547 = sadd.s32 1, %s2543
      $region76: #{decoder_forward.3} parent=55 // loop_footer_branch
        %2542 = sbr.rel target = $region72
      $region77: #{decoder_forward.3} parent=55 // loop_exit
        _
      %v3647 = vld [vmem:[%s6] sm:$0x1]
      loop: start=0, step=1, limit=41
      $region78: #{decoder_forward.3} parent=55 // loop_pre_header
        _
      $region79: #{decoder_forward.3} parent=55 // loop_header
        %s3649 = sphi 0, %s3653
        %p3650 = scmp.ge.s32.totalorder %s3649, 41
      $region80: #{decoder_forward.3} parent=55 // loop_header_branch
        %3652 = sbr.rel (%p3650) target = $region84
      $region81: #{decoder_forward.3} parent=55 // loop_body
        %s3654 = smul.u32 %s3649, 48
        %s3655 = scalar_lea.vmem [#allocation4], %s3654
        %v3656 = vld [vmem:[%s3655] sm:$0xff]
        %v3657 = vld [vmem:[%s3655 + $0x8] sm:$0xff]
        %v3658 = vld [vmem:[%s3655 + $0x10] sm:$0xff]
        %v3659 = vld [vmem:[%s3655 + $0x18] sm:$0xff]
        %v3660 = vld [vmem:[%s3655 + $0x20] sm:$0xff]
        %v3661 = vld [vmem:[%s3655 + $0x28] sm:$0x1]
        %v3662 = vld [vmem:[%s5] sm:$0xff]
        %v3663 = vld [vmem:[%s5 + $0x8] sm:$0xff]
        %v3664 = vld [vmem:[%s5 + $0x10] sm:$0xff]
        %v3665 = vld [vmem:[%s5 + $0x18] sm:$0xff]
        %v3666 = vld [vmem:[%s3655 + $0x1] sm:$0xff]
        %v3667 = vld [vmem:[%s3655 + $0x9] sm:$0xff]
        %v3668 = vld [vmem:[%s3655 + $0x11] sm:$0xff]
        %v3669 = vld [vmem:[%s3655 + $0x19] sm:$0xff]
        %v3670 = vld [vmem:[%s3655 + $0x21] sm:$0xff]
        %v3671 = vld [vmem:[%s3655 + $0x29] sm:$0x1]
        %s3672 = scalar_lea.vmem %s5, 32
        %v3673 = vld [vmem:[%s3672] sm:$0xff]
        %v3674 = vld [vmem:[%s3672 + $0x8] sm:$0xff]
        %v3675 = vld [vmem:[%s3672 + $0x10] sm:$0xff]
        %v3676 = vld [vmem:[%s3672 + $0x18] sm:$0xff]
        %v3678 = vsel %vm451, %v3666, 0
        %v3681 = vsel %vm451, %v3667, 0
        %v3684 = vsel %vm451, %v3668, 0
        %v3687 = vsel %vm451, %v3669, 0
        %v3690 = vsel %vm451, %v3670, 0
        %v3693 = vsel %vm451, %v3671, 0
        %3695 = vmatprep.subr.mxu0 0.0
        %3696 = vmatpush1.msra.mxu0 %v3673
        %3697 = vmatprep.subr.mxu0 0.0
        %3698 = vmatpush1.msra.mxu0 %v3674
        %3699 = vmatprep.subr.mxu0 0.0
        %3700 = vmatpush1.msra.mxu0 %v3675
        %3701 = vmatprep.subr.mxu0 0.0
        %3702 = vmatpush1.msra.mxu0 %v3676
        %3703 = vmatprep.subr.mxu0 0.0
        %3704 = vmatpush1.msra.mxu0 0.0
        %3705 = vmatprep.subr.mxu0 0.0
        %3706 = vmatpush1.msra.mxu0 0.0
        %3707 = vmatprep.subr.mxu0 0.0
        %3708 = vmatpush1.msra.mxu0 0.0
        %3709 = vmatprep.subr.mxu0 0.0
        %3710 = vmatpush1.msra.mxu0 0.0
        %3711 = vmatprep.subr.mxu0 0.0
        %3712 = vmatpush1.msra.mxu0 0.0
        %3713 = vmatprep.subr.mxu0 0.0
        %3714 = vmatpush1.msra.mxu0 0.0
        %3715 = vmatprep.subr.mxu0 0.0
        %3716 = vmatpush1.msra.mxu0 0.0
        %3717 = vmatprep.subr.mxu0 0.0
        %3718 = vmatpush1.msra.mxu0 0.0
        %3719 = vmatprep.subr.mxu0 0.0
        %3720 = vmatpush1.msra.mxu0 0.0
        %3721 = vmatprep.subr.mxu0 0.0
        %3722 = vmatpush1.msra.mxu0 0.0
        %3723 = vmatprep.subr.mxu0 0.0
        %3724 = vmatpush1.msra.mxu0 0.0
        %3725 = vmatprep.subr.mxu0 0.0
        %3726 = vmatpush1.msra.mxu0 0.0
        %3727 = vmatprep.subr.mxu0 0.0
        %3728 = vmatpush1.msra.mxu0 0.0
        %3729 = vmatprep.subr.mxu0 0.0
        %3730 = vmatpush1.msra.mxu0 0.0
        %3731 = vmatprep.subr.mxu0 0.0
        %3732 = vmatpush1.msra.mxu0 0.0
        %3733 = vmatprep.subr.mxu0 0.0
        %3734 = vmatpush1.msra.mxu0 0.0
        %3735 = vmatprep.subr.mxu0 0.0
        %3736 = vmatpush1.msra.mxu0 0.0
        %3737 = vmatprep.subr.mxu0 0.0
        %3738 = vmatpush1.msra.mxu0 0.0
        %3739 = vmatprep.subr.mxu0 0.0
        %3740 = vmatpush1.msra.mxu0 0.0
        %3741 = vmatprep.subr.mxu0 0.0
        %3742 = vmatpush1.msra.mxu0 0.0
        %3743 = vmatprep.subr.mxu0 0.0
        %3744 = vmatpush1.msra.mxu0 0.0
        %3745 = vmatprep.subr.mxu0 0.0
        %3746 = vmatpush1.msra.mxu0 0.0
        %3747 = vmatprep.subr.mxu0 0.0
        %3748 = vmatpush1.msra.mxu0 0.0
        %3749 = vmatprep.subr.mxu0 0.0
        %3750 = vmatpush1.msra.mxu0 0.0
        %3751 = vmatprep.subr.mxu0 0.0
        %3752 = vmatpush1.msra.mxu0 0.0
        %3753 = vmatprep.subr.mxu0 0.0
        %3754 = vmatpush1.msra.mxu0 0.0
        %3755 = vmatprep.subr.mxu0 0.0
        %3756 = vmatpush1.msra.mxu0 0.0
        %3757 = vmatprep.subr.mxu0 0.0
        %3758 = vmatpush1.msra.mxu0 0.0
        %3759 = vmatprep.mubr.f32.mxu0 0.0
        %3760 = vmatmul.mubr.f32.gmra.mrb[0].mxu0 %v3678
        %v3761 = vpop.f32.mrb[0].mxu0
        %v3762 = vadd.f32 0.0, %v3761
        %v3763 = vpop.f32.mrb[0].mxu0
        %3764 = vmatprep.mubr.f32.mxu0 0.0
        %3765 = vmatmul.mubr.f32.gmra.mrb[0].mxu0 %v3681
        %v3766 = vpop.f32.mrb[0].mxu0
        %v3767 = vadd.f32 0.0, %v3766
        %v3768 = vpop.f32.mrb[0].mxu0
        %3769 = vmatprep.mubr.f32.mxu0 0.0
        %3770 = vmatmul.mubr.f32.gmra.mrb[0].mxu0 %v3684
        %v3771 = vpop.f32.mrb[0].mxu0
        %v3772 = vadd.f32 0.0, %v3771
        %v3773 = vpop.f32.mrb[0].mxu0
        %3774 = vmatprep.mubr.f32.mxu0 0.0
        %3775 = vmatmul.mubr.f32.gmra.mrb[0].mxu0 %v3687
        %v3776 = vpop.f32.mrb[0].mxu0
        %v3777 = vadd.f32 0.0, %v3776
        %v3778 = vpop.f32.mrb[0].mxu0
        %3779 = vmatprep.mubr.f32.mxu0 0.0
        %3780 = vmatmul.mubr.f32.gmra.mrb[0].mxu0 %v3690
        %v3781 = vpop.f32.mrb[0].mxu0
        %v3782 = vadd.f32 0.0, %v3781
        %v3783 = vpop.f32.mrb[0].mxu0
        %3784 = vmatprep.mubr.f32.mxu0 0.0
        %3785 = vmatmul.mubr.f32.gmra.mrb[0].mxu0 %v3693
        %v3786 = vpop.f32.mrb[0].mxu0
        %v3787 = vadd.f32 0.0, %v3786
        %v3788 = vpop.f32.mrb[0].mxu0
        %3789 = vdwg.mxu0
        %v3791 = vsel %vm451, %v3656, 0
        %v3794 = vsel %vm451, %v3657, 0
        %v3797 = vsel %vm451, %v3658, 0
        %v3800 = vsel %vm451, %v3659, 0
        %v3803 = vsel %vm451, %v3660, 0
        %v3806 = vsel %vm451, %v3661, 0
        %3808 = vmatprep.subr.mxu0 0.0
        %3809 = vmatpush1.msra.mxu0 %v3662
        %3810 = vmatprep.subr.mxu0 0.0
        %3811 = vmatpush1.msra.mxu0 %v3663
        %3812 = vmatprep.subr.mxu0 0.0
        %3813 = vmatpush1.msra.mxu0 %v3664
        %3814 = vmatprep.subr.mxu0 0.0
        %3815 = vmatpush1.msra.mxu0 %v3665
        %3816 = vmatprep.subr.mxu0 0.0
        %3817 = vmatpush1.msra.mxu0 0.0
        %3818 = vmatprep.subr.mxu0 0.0
        %3819 = vmatpush1.msra.mxu0 0.0
        %3820 = vmatprep.subr.mxu0 0.0
        %3821 = vmatpush1.msra.mxu0 0.0
        %3822 = vmatprep.subr.mxu0 0.0
        %3823 = vmatpush1.msra.mxu0 0.0
        %3824 = vmatprep.subr.mxu0 0.0
        %3825 = vmatpush1.msra.mxu0 0.0
        %3826 = vmatprep.subr.mxu0 0.0
        %3827 = vmatpush1.msra.mxu0 0.0
        %3828 = vmatprep.subr.mxu0 0.0
        %3829 = vmatpush1.msra.mxu0 0.0
        %3830 = vmatprep.subr.mxu0 0.0
        %3831 = vmatpush1.msra.mxu0 0.0
        %3832 = vmatprep.subr.mxu0 0.0
        %3833 = vmatpush1.msra.mxu0 0.0
        %3834 = vmatprep.subr.mxu0 0.0
        %3835 = vmatpush1.msra.mxu0 0.0
        %3836 = vmatprep.subr.mxu0 0.0
        %3837 = vmatpush1.msra.mxu0 0.0
        %3838 = vmatprep.subr.mxu0 0.0
        %3839 = vmatpush1.msra.mxu0 0.0
        %3840 = vmatprep.subr.mxu0 0.0
        %3841 = vmatpush1.msra.mxu0 0.0
        %3842 = vmatprep.subr.mxu0 0.0
        %3843 = vmatpush1.msra.mxu0 0.0
        %3844 = vmatprep.subr.mxu0 0.0
        %3845 = vmatpush1.msra.mxu0 0.0
        %3846 = vmatprep.subr.mxu0 0.0
        %3847 = vmatpush1.msra.mxu0 0.0
        %3848 = vmatprep.subr.mxu0 0.0
        %3849 = vmatpush1.msra.mxu0 0.0
        %3850 = vmatprep.subr.mxu0 0.0
        %3851 = vmatpush1.msra.mxu0 0.0
        %3852 = vmatprep.subr.mxu0 0.0
        %3853 = vmatpush1.msra.mxu0 0.0
        %3854 = vmatprep.subr.mxu0 0.0
        %3855 = vmatpush1.msra.mxu0 0.0
        %3856 = vmatprep.subr.mxu0 0.0
        %3857 = vmatpush1.msra.mxu0 0.0
        %3858 = vmatprep.subr.mxu0 0.0
        %3859 = vmatpush1.msra.mxu0 0.0
        %3860 = vmatprep.subr.mxu0 0.0
        %3861 = vmatpush1.msra.mxu0 0.0
        %3862 = vmatprep.subr.mxu0 0.0
        %3863 = vmatpush1.msra.mxu0 0.0
        %3864 = vmatprep.subr.mxu0 0.0
        %3865 = vmatpush1.msra.mxu0 0.0
        %3866 = vmatprep.subr.mxu0 0.0
        %3867 = vmatpush1.msra.mxu0 0.0
        %3868 = vmatprep.subr.mxu0 0.0
        %3869 = vmatpush1.msra.mxu0 0.0
        %3870 = vmatprep.subr.mxu0 0.0
        %3871 = vmatpush1.msra.mxu0 0.0
        %3872 = vmatprep.mubr.f32.mxu0 0.0
        %3873 = vmatmul.mubr.f32.gmra.mrb[0].mxu0 %v3791
        %v3874 = vpop.f32.mrb[0].mxu0
        %v3875 = vadd.f32 %v3762, %v3874
        %v3876 = vpop.f32.mrb[0].mxu0
        %3877 = vmatprep.mubr.f32.mxu0 0.0
        %3878 = vmatmul.mubr.f32.gmra.mrb[0].mxu0 %v3794
        %v3879 = vpop.f32.mrb[0].mxu0
        %v3880 = vadd.f32 %v3767, %v3879
        %v3881 = vpop.f32.mrb[0].mxu0
        %3882 = vmatprep.mubr.f32.mxu0 0.0
        %3883 = vmatmul.mubr.f32.gmra.mrb[0].mxu0 %v3797
        %v3884 = vpop.f32.mrb[0].mxu0
        %v3885 = vadd.f32 %v3772, %v3884
        %v3886 = vpop.f32.mrb[0].mxu0
        %3887 = vmatprep.mubr.f32.mxu0 0.0
        %3888 = vmatmul.mubr.f32.gmra.mrb[0].mxu0 %v3800
        %v3889 = vpop.f32.mrb[0].mxu0
        %v3890 = vadd.f32 %v3777, %v3889
        %v3891 = vpop.f32.mrb[0].mxu0
        %3892 = vmatprep.mubr.f32.mxu0 0.0
        %3893 = vmatmul.mubr.f32.gmra.mrb[0].mxu0 %v3803
        %v3894 = vpop.f32.mrb[0].mxu0
        %v3895 = vadd.f32 %v3782, %v3894
        %v3896 = vpop.f32.mrb[0].mxu0
        %3897 = vmatprep.mubr.f32.mxu0 0.0
        %3898 = vmatmul.mubr.f32.gmra.mrb[0].mxu0 %v3806
        %v3899 = vpop.f32.mrb[0].mxu0
        %v3900 = vadd.f32 %v3787, %v3899
        %v3901 = vpop.f32.mrb[0].mxu0
        %3902 = vdwg.mxu0
        %v3903 = vld [vmem:[%s3655 + $0x2] sm:$0xff]
        %v3904 = vld [vmem:[%s3655 + $0xa] sm:$0xff]
        %v3905 = vld [vmem:[%s3655 + $0x12] sm:$0xff]
        %v3906 = vld [vmem:[%s3655 + $0x1a] sm:$0xff]
        %v3907 = vld [vmem:[%s3655 + $0x22] sm:$0xff]
        %v3908 = vld [vmem:[%s3655 + $0x2a] sm:$0x1]
        %s3909 = scalar_lea.vmem %s5, 64
        %v3910 = vld [vmem:[%s3909] sm:$0xff]
        %v3911 = vld [vmem:[%s3909 + $0x8] sm:$0xff]
        %v3912 = vld [vmem:[%s3909 + $0x10] sm:$0xff]
        %v3913 = vld [vmem:[%s3909 + $0x18] sm:$0xff]
        %v3915 = vsel %vm451, %v3903, 0
        %v3918 = vsel %vm451, %v3904, 0
        %v3921 = vsel %vm451, %v3905, 0
        %v3924 = vsel %vm451, %v3906, 0
        %v3927 = vsel %vm451, %v3907, 0
        %v3930 = vsel %vm451, %v3908, 0
        %3932 = vmatprep.subr.mxu0 0.0
        %3933 = vmatpush1.msra.mxu0 %v3910
        %3934 = vmatprep.subr.mxu0 0.0
        %3935 = vmatpush1.msra.mxu0 %v3911
        %3936 = vmatprep.subr.mxu0 0.0
        %3937 = vmatpush1.msra.mxu0 %v3912
        %3938 = vmatprep.subr.mxu0 0.0
        %3939 = vmatpush1.msra.mxu0 %v3913
        %3940 = vmatprep.subr.mxu0 0.0
        %3941 = vmatpush1.msra.mxu0 0.0
        %3942 = vmatprep.subr.mxu0 0.0
        %3943 = vmatpush1.msra.mxu0 0.0
        %3944 = vmatprep.subr.mxu0 0.0
        %3945 = vmatpush1.msra.mxu0 0.0
        %3946 = vmatprep.subr.mxu0 0.0
        %3947 = vmatpush1.msra.mxu0 0.0
        %3948 = vmatprep.subr.mxu0 0.0
        %3949 = vmatpush1.msra.mxu0 0.0
        %3950 = vmatprep.subr.mxu0 0.0
        %3951 = vmatpush1.msra.mxu0 0.0
        %3952 = vmatprep.subr.mxu0 0.0
        %3953 = vmatpush1.msra.mxu0 0.0
        %3954 = vmatprep.subr.mxu0 0.0
        %3955 = vmatpush1.msra.mxu0 0.0
        %3956 = vmatprep.subr.mxu0 0.0
        %3957 = vmatpush1.msra.mxu0 0.0
        %3958 = vmatprep.subr.mxu0 0.0
        %3959 = vmatpush1.msra.mxu0 0.0
        %3960 = vmatprep.subr.mxu0 0.0
        %3961 = vmatpush1.msra.mxu0 0.0
        %3962 = vmatprep.subr.mxu0 0.0
        %3963 = vmatpush1.msra.mxu0 0.0
        %3964 = vmatprep.subr.mxu0 0.0
        %3965 = vmatpush1.msra.mxu0 0.0
        %3966 = vmatprep.subr.mxu0 0.0
        %3967 = vmatpush1.msra.mxu0 0.0
        %3968 = vmatprep.subr.mxu0 0.0
        %3969 = vmatpush1.msra.mxu0 0.0
        %3970 = vmatprep.subr.mxu0 0.0
        %3971 = vmatpush1.msra.mxu0 0.0
        %3972 = vmatprep.subr.mxu0 0.0
        %3973 = vmatpush1.msra.mxu0 0.0
        %3974 = vmatprep.subr.mxu0 0.0
        %3975 = vmatpush1.msra.mxu0 0.0
        %3976 = vmatprep.subr.mxu0 0.0
        %3977 = vmatpush1.msra.mxu0 0.0
        %3978 = vmatprep.subr.mxu0 0.0
        %3979 = vmatpush1.msra.mxu0 0.0
        %3980 = vmatprep.subr.mxu0 0.0
        %3981 = vmatpush1.msra.mxu0 0.0
        %3982 = vmatprep.subr.mxu0 0.0
        %3983 = vmatpush1.msra.mxu0 0.0
        %3984 = vmatprep.subr.mxu0 0.0
        %3985 = vmatpush1.msra.mxu0 0.0
        %3986 = vmatprep.subr.mxu0 0.0
        %3987 = vmatpush1.msra.mxu0 0.0
        %3988 = vmatprep.subr.mxu0 0.0
        %3989 = vmatpush1.msra.mxu0 0.0
        %3990 = vmatprep.subr.mxu0 0.0
        %3991 = vmatpush1.msra.mxu0 0.0
        %3992 = vmatprep.subr.mxu0 0.0
        %3993 = vmatpush1.msra.mxu0 0.0
        %3994 = vmatprep.subr.mxu0 0.0
        %3995 = vmatpush1.msra.mxu0 0.0
        %3996 = vmatprep.mubr.f32.mxu0 0.0
        %3997 = vmatmul.mubr.f32.gmra.mrb[0].mxu0 %v3915
        %v3998 = vpop.f32.mrb[0].mxu0
        %v3999 = vadd.f32 0.0, %v3998
        %v4000 = vpop.f32.mrb[0].mxu0
        %4001 = vmatprep.mubr.f32.mxu0 0.0
        %4002 = vmatmul.mubr.f32.gmra.mrb[0].mxu0 %v3918
        %v4003 = vpop.f32.mrb[0].mxu0
        %v4004 = vadd.f32 0.0, %v4003
        %v4005 = vpop.f32.mrb[0].mxu0
        %4006 = vmatprep.mubr.f32.mxu0 0.0
        %4007 = vmatmul.mubr.f32.gmra.mrb[0].mxu0 %v3921
        %v4008 = vpop.f32.mrb[0].mxu0
        %v4009 = vadd.f32 0.0, %v4008
        %v4010 = vpop.f32.mrb[0].mxu0
        %4011 = vmatprep.mubr.f32.mxu0 0.0
        %4012 = vmatmul.mubr.f32.gmra.mrb[0].mxu0 %v3924
        %v4013 = vpop.f32.mrb[0].mxu0
        %v4014 = vadd.f32 0.0, %v4013
        %v4015 = vpop.f32.mrb[0].mxu0
        %4016 = vmatprep.mubr.f32.mxu0 0.0
        %4017 = vmatmul.mubr.f32.gmra.mrb[0].mxu0 %v3927
        %v4018 = vpop.f32.mrb[0].mxu0
        %v4019 = vadd.f32 0.0, %v4018
        %v4020 = vpop.f32.mrb[0].mxu0
        %4021 = vmatprep.mubr.f32.mxu0 0.0
        %4022 = vmatmul.mubr.f32.gmra.mrb[0].mxu0 %v3930
        %v4023 = vpop.f32.mrb[0].mxu0
        %v4024 = vadd.f32 0.0, %v4023
        %v4025 = vpop.f32.mrb[0].mxu0
        %4026 = vdwg.mxu0
        %v4027 = vadd.f32 %v3875, %v3999
        %v4028 = vadd.f32 %v3880, %v4004
        %v4029 = vadd.f32 %v3885, %v4009
        %v4030 = vadd.f32 %v3890, %v4014
        %v4031 = vadd.f32 %v3895, %v4019
        %v4032 = vadd.f32 %v3900, %v4024
        %s4033 = sadd.s32 %s3649, 1
        %s4034 = smul.u32 %s4033, 48
        %s4035 = scalar_lea.vmem [#allocation4], %s4034
        %v4036 = vld [vmem:[%s4035] sm:$0xff]
        %v4037 = vld [vmem:[%s4035 + $0x8] sm:$0xff]
        %v4038 = vld [vmem:[%s4035 + $0x10] sm:$0xff]
        %v4039 = vld [vmem:[%s4035 + $0x18] sm:$0xff]
        %v4040 = vld [vmem:[%s4035 + $0x20] sm:$0xff]
        %v4041 = vld [vmem:[%s4035 + $0x28] sm:$0x1]
        %s4042 = scalar_lea.vmem %s5, 96
        %v4043 = vld [vmem:[%s4042] sm:$0xff]
        %v4044 = vld [vmem:[%s4042 + $0x8] sm:$0xff]
        %v4045 = vld [vmem:[%s4042 + $0x10] sm:$0xff]
        %v4046 = vld [vmem:[%s4042 + $0x18] sm:$0xff]
        %v4048 = vsel %vm451, %v4036, 0
        %v4051 = vsel %vm451, %v4037, 0
        %v4054 = vsel %vm451, %v4038, 0
        %v4057 = vsel %vm451, %v4039, 0
        %v4060 = vsel %vm451, %v4040, 0
        %v4063 = vsel %vm451, %v4041, 0
        %4065 = vmatprep.subr.mxu0 0.0
        %4066 = vmatpush1.msra.mxu0 %v4043
        %4067 = vmatprep.subr.mxu0 0.0
        %4068 = vmatpush1.msra.mxu0 %v4044
        %4069 = vmatprep.subr.mxu0 0.0
        %4070 = vmatpush1.msra.mxu0 %v4045
        %4071 = vmatprep.subr.mxu0 0.0
        %4072 = vmatpush1.msra.mxu0 %v4046
        %4073 = vmatprep.subr.mxu0 0.0
        %4074 = vmatpush1.msra.mxu0 0.0
        %4075 = vmatprep.subr.mxu0 0.0
        %4076 = vmatpush1.msra.mxu0 0.0
        %4077 = vmatprep.subr.mxu0 0.0
        %4078 = vmatpush1.msra.mxu0 0.0
        %4079 = vmatprep.subr.mxu0 0.0
        %4080 = vmatpush1.msra.mxu0 0.0
        %4081 = vmatprep.subr.mxu0 0.0
        %4082 = vmatpush1.msra.mxu0 0.0
        %4083 = vmatprep.subr.mxu0 0.0
        %4084 = vmatpush1.msra.mxu0 0.0
        %4085 = vmatprep.subr.mxu0 0.0
        %4086 = vmatpush1.msra.mxu0 0.0
        %4087 = vmatprep.subr.mxu0 0.0
        %4088 = vmatpush1.msra.mxu0 0.0
        %4089 = vmatprep.subr.mxu0 0.0
        %4090 = vmatpush1.msra.mxu0 0.0
        %4091 = vmatprep.subr.mxu0 0.0
        %4092 = vmatpush1.msra.mxu0 0.0
        %4093 = vmatprep.subr.mxu0 0.0
        %4094 = vmatpush1.msra.mxu0 0.0
        %4095 = vmatprep.subr.mxu0 0.0
        %4096 = vmatpush1.msra.mxu0 0.0
        %4097 = vmatprep.subr.mxu0 0.0
        %4098 = vmatpush1.msra.mxu0 0.0
        %4099 = vmatprep.subr.mxu0 0.0
        %4100 = vmatpush1.msra.mxu0 0.0
        %4101 = vmatprep.subr.mxu0 0.0
        %4102 = vmatpush1.msra.mxu0 0.0
        %4103 = vmatprep.subr.mxu0 0.0
        %4104 = vmatpush1.msra.mxu0 0.0
        %4105 = vmatprep.subr.mxu0 0.0
        %4106 = vmatpush1.msra.mxu0 0.0
        %4107 = vmatprep.subr.mxu0 0.0
        %4108 = vmatpush1.msra.mxu0 0.0
        %4109 = vmatprep.subr.mxu0 0.0
        %4110 = vmatpush1.msra.mxu0 0.0
        %4111 = vmatprep.subr.mxu0 0.0
        %4112 = vmatpush1.msra.mxu0 0.0
        %4113 = vmatprep.subr.mxu0 0.0
        %4114 = vmatpush1.msra.mxu0 0.0
        %4115 = vmatprep.subr.mxu0 0.0
        %4116 = vmatpush1.msra.mxu0 0.0
        %4117 = vmatprep.subr.mxu0 0.0
        %4118 = vmatpush1.msra.mxu0 0.0
        %4119 = vmatprep.subr.mxu0 0.0
        %4120 = vmatpush1.msra.mxu0 0.0
        %4121 = vmatprep.subr.mxu0 0.0
        %4122 = vmatpush1.msra.mxu0 0.0
        %4123 = vmatprep.subr.mxu0 0.0
        %4124 = vmatpush1.msra.mxu0 0.0
        %4125 = vmatprep.subr.mxu0 0.0
        %4126 = vmatpush1.msra.mxu0 0.0
        %4127 = vmatprep.subr.mxu0 0.0
        %4128 = vmatpush1.msra.mxu0 0.0
        %4129 = vmatprep.mubr.f32.mxu0 0.0
        %4130 = vmatmul.mubr.f32.gmra.mrb[0].mxu0 %v4048
        %v4131 = vpop.f32.mrb[0].mxu0
        %v4132 = vadd.f32 0.0, %v4131
        %v4133 = vpop.f32.mrb[0].mxu0
        %4134 = vmatprep.mubr.f32.mxu0 0.0
        %4135 = vmatmul.mubr.f32.gmra.mrb[0].mxu0 %v4051
        %v4136 = vpop.f32.mrb[0].mxu0
        %v4137 = vadd.f32 0.0, %v4136
        %v4138 = vpop.f32.mrb[0].mxu0
        %4139 = vmatprep.mubr.f32.mxu0 0.0
        %4140 = vmatmul.mubr.f32.gmra.mrb[0].mxu0 %v4054
        %v4141 = vpop.f32.mrb[0].mxu0
        %v4142 = vadd.f32 0.0, %v4141
        %v4143 = vpop.f32.mrb[0].mxu0
        %4144 = vmatprep.mubr.f32.mxu0 0.0
        %4145 = vmatmul.mubr.f32.gmra.mrb[0].mxu0 %v4057
        %v4146 = vpop.f32.mrb[0].mxu0
        %v4147 = vadd.f32 0.0, %v4146
        %v4148 = vpop.f32.mrb[0].mxu0
        %4149 = vmatprep.mubr.f32.mxu0 0.0
        %4150 = vmatmul.mubr.f32.gmra.mrb[0].mxu0 %v4060
        %v4151 = vpop.f32.mrb[0].mxu0
        %v4152 = vadd.f32 0.0, %v4151
        %v4153 = vpop.f32.mrb[0].mxu0
        %4154 = vmatprep.mubr.f32.mxu0 0.0
        %4155 = vmatmul.mubr.f32.gmra.mrb[0].mxu0 %v4063
        %v4156 = vpop.f32.mrb[0].mxu0
        %v4157 = vadd.f32 0.0, %v4156
        %v4158 = vpop.f32.mrb[0].mxu0
        %4159 = vdwg.mxu0
        %v4160 = vadd.f32 %v4027, %v4132
        %v4161 = vadd.f32 %v4028, %v4137
        %v4162 = vadd.f32 %v4029, %v4142
        %v4163 = vadd.f32 %v4030, %v4147
        %v4164 = vadd.f32 %v4031, %v4152
        %v4165 = vadd.f32 %v4032, %v4157
        %v4166 = vld [vmem:[%s4035 + $0x1] sm:$0xff]
        %v4167 = vld [vmem:[%s4035 + $0x9] sm:$0xff]
        %v4168 = vld [vmem:[%s4035 + $0x11] sm:$0xff]
        %v4169 = vld [vmem:[%s4035 + $0x19] sm:$0xff]
        %v4170 = vld [vmem:[%s4035 + $0x21] sm:$0xff]
        %v4171 = vld [vmem:[%s4035 + $0x29] sm:$0x1]
        %s4172 = scalar_lea.vmem %s5, 128
        %v4173 = vld [vmem:[%s4172] sm:$0xff]
        %v4174 = vld [vmem:[%s4172 + $0x8] sm:$0xff]
        %v4175 = vld [vmem:[%s4172 + $0x10] sm:$0xff]
        %v4176 = vld [vmem:[%s4172 + $0x18] sm:$0xff]
        %v4178 = vsel %vm451, %v4166, 0
        %v4181 = vsel %vm451, %v4167, 0
        %v4184 = vsel %vm451, %v4168, 0
        %v4187 = vsel %vm451, %v4169, 0
        %v4190 = vsel %vm451, %v4170, 0
        %v4193 = vsel %vm451, %v4171, 0
        %4195 = vmatprep.subr.mxu0 0.0
        %4196 = vmatpush1.msra.mxu0 %v4173
        %4197 = vmatprep.subr.mxu0 0.0
        %4198 = vmatpush1.msra.mxu0 %v4174
        %4199 = vmatprep.subr.mxu0 0.0
        %4200 = vmatpush1.msra.mxu0 %v4175
        %4201 = vmatprep.subr.mxu0 0.0
        %4202 = vmatpush1.msra.mxu0 %v4176
        %4203 = vmatprep.subr.mxu0 0.0
        %4204 = vmatpush1.msra.mxu0 0.0
        %4205 = vmatprep.subr.mxu0 0.0
        %4206 = vmatpush1.msra.mxu0 0.0
        %4207 = vmatprep.subr.mxu0 0.0
        %4208 = vmatpush1.msra.mxu0 0.0
        %4209 = vmatprep.subr.mxu0 0.0
        %4210 = vmatpush1.msra.mxu0 0.0
        %4211 = vmatprep.subr.mxu0 0.0
        %4212 = vmatpush1.msra.mxu0 0.0
        %4213 = vmatprep.subr.mxu0 0.0
        %4214 = vmatpush1.msra.mxu0 0.0
        %4215 = vmatprep.subr.mxu0 0.0
        %4216 = vmatpush1.msra.mxu0 0.0
        %4217 = vmatprep.subr.mxu0 0.0
        %4218 = vmatpush1.msra.mxu0 0.0
        %4219 = vmatprep.subr.mxu0 0.0
        %4220 = vmatpush1.msra.mxu0 0.0
        %4221 = vmatprep.subr.mxu0 0.0
        %4222 = vmatpush1.msra.mxu0 0.0
        %4223 = vmatprep.subr.mxu0 0.0
        %4224 = vmatpush1.msra.mxu0 0.0
        %4225 = vmatprep.subr.mxu0 0.0
        %4226 = vmatpush1.msra.mxu0 0.0
        %4227 = vmatprep.subr.mxu0 0.0
        %4228 = vmatpush1.msra.mxu0 0.0
        %4229 = vmatprep.subr.mxu0 0.0
        %4230 = vmatpush1.msra.mxu0 0.0
        %4231 = vmatprep.subr.mxu0 0.0
        %4232 = vmatpush1.msra.mxu0 0.0
        %4233 = vmatprep.subr.mxu0 0.0
        %4234 = vmatpush1.msra.mxu0 0.0
        %4235 = vmatprep.subr.mxu0 0.0
        %4236 = vmatpush1.msra.mxu0 0.0
        %4237 = vmatprep.subr.mxu0 0.0
        %4238 = vmatpush1.msra.mxu0 0.0
        %4239 = vmatprep.subr.mxu0 0.0
        %4240 = vmatpush1.msra.mxu0 0.0
        %4241 = vmatprep.subr.mxu0 0.0
        %4242 = vmatpush1.msra.mxu0 0.0
        %4243 = vmatprep.subr.mxu0 0.0
        %4244 = vmatpush1.msra.mxu0 0.0
        %4245 = vmatprep.subr.mxu0 0.0
        %4246 = vmatpush1.msra.mxu0 0.0
        %4247 = vmatprep.subr.mxu0 0.0
        %4248 = vmatpush1.msra.mxu0 0.0
        %4249 = vmatprep.subr.mxu0 0.0
        %4250 = vmatpush1.msra.mxu0 0.0
        %4251 = vmatprep.subr.mxu0 0.0
        %4252 = vmatpush1.msra.mxu0 0.0
        %4253 = vmatprep.subr.mxu0 0.0
        %4254 = vmatpush1.msra.mxu0 0.0
        %4255 = vmatprep.subr.mxu0 0.0
        %4256 = vmatpush1.msra.mxu0 0.0
        %4257 = vmatprep.subr.mxu0 0.0
        %4258 = vmatpush1.msra.mxu0 0.0
        %4259 = vmatprep.mubr.f32.mxu0 0.0
        %4260 = vmatmul.mubr.f32.gmra.mrb[0].mxu0 %v4178
        %v4261 = vpop.f32.mrb[0].mxu0
        %v4262 = vadd.f32 0.0, %v4261
        %v4263 = vpop.f32.mrb[0].mxu0
        %4264 = vmatprep.mubr.f32.mxu0 0.0
        %4265 = vmatmul.mubr.f32.gmra.mrb[0].mxu0 %v4181
        %v4266 = vpop.f32.mrb[0].mxu0
        %v4267 = vadd.f32 0.0, %v4266
        %v4268 = vpop.f32.mrb[0].mxu0
        %4269 = vmatprep.mubr.f32.mxu0 0.0
        %4270 = vmatmul.mubr.f32.gmra.mrb[0].mxu0 %v4184
        %v4271 = vpop.f32.mrb[0].mxu0
        %v4272 = vadd.f32 0.0, %v4271
        %v4273 = vpop.f32.mrb[0].mxu0
        %4274 = vmatprep.mubr.f32.mxu0 0.0
        %4275 = vmatmul.mubr.f32.gmra.mrb[0].mxu0 %v4187
        %v4276 = vpop.f32.mrb[0].mxu0
        %v4277 = vadd.f32 0.0, %v4276
        %v4278 = vpop.f32.mrb[0].mxu0
        %4279 = vmatprep.mubr.f32.mxu0 0.0
        %4280 = vmatmul.mubr.f32.gmra.mrb[0].mxu0 %v4190
        %v4281 = vpop.f32.mrb[0].mxu0
        %v4282 = vadd.f32 0.0, %v4281
        %v4283 = vpop.f32.mrb[0].mxu0
        %4284 = vmatprep.mubr.f32.mxu0 0.0
        %4285 = vmatmul.mubr.f32.gmra.mrb[0].mxu0 %v4193
        %v4286 = vpop.f32.mrb[0].mxu0
        %v4287 = vadd.f32 0.0, %v4286
        %v4288 = vpop.f32.mrb[0].mxu0
        %4289 = vdwg.mxu0
        %v4290 = vadd.f32 %v4160, %v4262
        %v4291 = vadd.f32 %v4161, %v4267
        %v4292 = vadd.f32 %v4162, %v4272
        %v4293 = vadd.f32 %v4163, %v4277
        %v4294 = vadd.f32 %v4164, %v4282
        %v4295 = vadd.f32 %v4165, %v4287
        %v4296 = vld [vmem:[%s4035 + $0x2] sm:$0xff]
        %v4297 = vld [vmem:[%s4035 + $0xa] sm:$0xff]
        %v4298 = vld [vmem:[%s4035 + $0x12] sm:$0xff]
        %v4299 = vld [vmem:[%s4035 + $0x1a] sm:$0xff]
        %v4300 = vld [vmem:[%s4035 + $0x22] sm:$0xff]
        %v4301 = vld [vmem:[%s4035 + $0x2a] sm:$0x1]
        %s4302 = scalar_lea.vmem %s5, 160
        %v4303 = vld [vmem:[%s4302] sm:$0xff]
        %v4304 = vld [vmem:[%s4302 + $0x8] sm:$0xff]
        %v4305 = vld [vmem:[%s4302 + $0x10] sm:$0xff]
        %v4306 = vld [vmem:[%s4302 + $0x18] sm:$0xff]
        %v4308 = vsel %vm451, %v4296, 0
        %v4311 = vsel %vm451, %v4297, 0
        %v4314 = vsel %vm451, %v4298, 0
        %v4317 = vsel %vm451, %v4299, 0
        %v4320 = vsel %vm451, %v4300, 0
        %v4323 = vsel %vm451, %v4301, 0
        %4325 = vmatprep.subr.mxu0 0.0
        %4326 = vmatpush1.msra.mxu0 %v4303
        %4327 = vmatprep.subr.mxu0 0.0
        %4328 = vmatpush1.msra.mxu0 %v4304
        %4329 = vmatprep.subr.mxu0 0.0
        %4330 = vmatpush1.msra.mxu0 %v4305
        %4331 = vmatprep.subr.mxu0 0.0
        %4332 = vmatpush1.msra.mxu0 %v4306
        %4333 = vmatprep.subr.mxu0 0.0
        %4334 = vmatpush1.msra.mxu0 0.0
        %4335 = vmatprep.subr.mxu0 0.0
        %4336 = vmatpush1.msra.mxu0 0.0
        %4337 = vmatprep.subr.mxu0 0.0
        %4338 = vmatpush1.msra.mxu0 0.0
        %4339 = vmatprep.subr.mxu0 0.0
        %4340 = vmatpush1.msra.mxu0 0.0
        %4341 = vmatprep.subr.mxu0 0.0
        %4342 = vmatpush1.msra.mxu0 0.0
        %4343 = vmatprep.subr.mxu0 0.0
        %4344 = vmatpush1.msra.mxu0 0.0
        %4345 = vmatprep.subr.mxu0 0.0
        %4346 = vmatpush1.msra.mxu0 0.0
        %4347 = vmatprep.subr.mxu0 0.0
        %4348 = vmatpush1.msra.mxu0 0.0
        %4349 = vmatprep.subr.mxu0 0.0
        %4350 = vmatpush1.msra.mxu0 0.0
        %4351 = vmatprep.subr.mxu0 0.0
        %4352 = vmatpush1.msra.mxu0 0.0
        %4353 = vmatprep.subr.mxu0 0.0
        %4354 = vmatpush1.msra.mxu0 0.0
        %4355 = vmatprep.subr.mxu0 0.0
        %4356 = vmatpush1.msra.mxu0 0.0
        %4357 = vmatprep.subr.mxu0 0.0
        %4358 = vmatpush1.msra.mxu0 0.0
        %4359 = vmatprep.subr.mxu0 0.0
        %4360 = vmatpush1.msra.mxu0 0.0
        %4361 = vmatprep.subr.mxu0 0.0
        %4362 = vmatpush1.msra.mxu0 0.0
        %4363 = vmatprep.subr.mxu0 0.0
        %4364 = vmatpush1.msra.mxu0 0.0
        %4365 = vmatprep.subr.mxu0 0.0
        %4366 = vmatpush1.msra.mxu0 0.0
        %4367 = vmatprep.subr.mxu0 0.0
        %4368 = vmatpush1.msra.mxu0 0.0
        %4369 = vmatprep.subr.mxu0 0.0
        %4370 = vmatpush1.msra.mxu0 0.0
        %4371 = vmatprep.subr.mxu0 0.0
        %4372 = vmatpush1.msra.mxu0 0.0
        %4373 = vmatprep.subr.mxu0 0.0
        %4374 = vmatpush1.msra.mxu0 0.0
        %4375 = vmatprep.subr.mxu0 0.0
        %4376 = vmatpush1.msra.mxu0 0.0
        %4377 = vmatprep.subr.mxu0 0.0
        %4378 = vmatpush1.msra.mxu0 0.0
        %4379 = vmatprep.subr.mxu0 0.0
        %4380 = vmatpush1.msra.mxu0 0.0
        %4381 = vmatprep.subr.mxu0 0.0
        %4382 = vmatpush1.msra.mxu0 0.0
        %4383 = vmatprep.subr.mxu0 0.0
        %4384 = vmatpush1.msra.mxu0 0.0
        %4385 = vmatprep.subr.mxu0 0.0
        %4386 = vmatpush1.msra.mxu0 0.0
        %4387 = vmatprep.subr.mxu0 0.0
        %4388 = vmatpush1.msra.mxu0 0.0
        %4389 = vmatprep.mubr.f32.mxu0 0.0
        %4390 = vmatmul.mubr.f32.gmra.mrb[0].mxu0 %v4308
        %v4391 = vpop.f32.mrb[0].mxu0
        %v4392 = vadd.f32 0.0, %v4391
        %v4393 = vpop.f32.mrb[0].mxu0
        %4394 = vmatprep.mubr.f32.mxu0 0.0
        %4395 = vmatmul.mubr.f32.gmra.mrb[0].mxu0 %v4311
        %v4396 = vpop.f32.mrb[0].mxu0
        %v4397 = vadd.f32 0.0, %v4396
        %v4398 = vpop.f32.mrb[0].mxu0
        %4399 = vmatprep.mubr.f32.mxu0 0.0
        %4400 = vmatmul.mubr.f32.gmra.mrb[0].mxu0 %v4314
        %v4401 = vpop.f32.mrb[0].mxu0
        %v4402 = vadd.f32 0.0, %v4401
        %v4403 = vpop.f32.mrb[0].mxu0
        %4404 = vmatprep.mubr.f32.mxu0 0.0
        %4405 = vmatmul.mubr.f32.gmra.mrb[0].mxu0 %v4317
        %v4406 = vpop.f32.mrb[0].mxu0
        %v4407 = vadd.f32 0.0, %v4406
        %v4408 = vpop.f32.mrb[0].mxu0
        %4409 = vmatprep.mubr.f32.mxu0 0.0
        %4410 = vmatmul.mubr.f32.gmra.mrb[0].mxu0 %v4320
        %v4411 = vpop.f32.mrb[0].mxu0
        %v4412 = vadd.f32 0.0, %v4411
        %v4413 = vpop.f32.mrb[0].mxu0
        %4414 = vmatprep.mubr.f32.mxu0 0.0
        %4415 = vmatmul.mubr.f32.gmra.mrb[0].mxu0 %v4323
        %v4416 = vpop.f32.mrb[0].mxu0
        %v4417 = vadd.f32 0.0, %v4416
        %v4418 = vpop.f32.mrb[0].mxu0
        %4419 = vdwg.mxu0
        %v4420 = vadd.f32 %v4290, %v4392
        %v4421 = vadd.f32 %v4291, %v4397
        %v4422 = vadd.f32 %v4292, %v4402
        %v4423 = vadd.f32 %v4293, %v4407
        %v4424 = vadd.f32 %v4294, %v4412
        %v4425 = vadd.f32 %v4295, %v4417
        %s4426 = sadd.s32 %s3649, 2
        %s4427 = smul.u32 %s4426, 48
        %s4428 = scalar_lea.vmem [#allocation4], %s4427
        %v4429 = vld [vmem:[%s4428] sm:$0xff]
        %v4430 = vld [vmem:[%s4428 + $0x8] sm:$0xff]
        %v4431 = vld [vmem:[%s4428 + $0x10] sm:$0xff]
        %v4432 = vld [vmem:[%s4428 + $0x18] sm:$0xff]
        %v4433 = vld [vmem:[%s4428 + $0x20] sm:$0xff]
        %v4434 = vld [vmem:[%s4428 + $0x28] sm:$0x1]
        %s4435 = scalar_lea.vmem %s5, 192
        %v4436 = vld [vmem:[%s4435] sm:$0xff]
        %v4437 = vld [vmem:[%s4435 + $0x8] sm:$0xff]
        %v4438 = vld [vmem:[%s4435 + $0x10] sm:$0xff]
        %v4439 = vld [vmem:[%s4435 + $0x18] sm:$0xff]
        %v4441 = vsel %vm451, %v4429, 0
        %v4444 = vsel %vm451, %v4430, 0
        %v4447 = vsel %vm451, %v4431, 0
        %v4450 = vsel %vm451, %v4432, 0
        %v4453 = vsel %vm451, %v4433, 0
        %v4456 = vsel %vm451, %v4434, 0
        %4458 = vmatprep.subr.mxu0 0.0
        %4459 = vmatpush1.msra.mxu0 %v4436
        %4460 = vmatprep.subr.mxu0 0.0
        %4461 = vmatpush1.msra.mxu0 %v4437
        %4462 = vmatprep.subr.mxu0 0.0
        %4463 = vmatpush1.msra.mxu0 %v4438
        %4464 = vmatprep.subr.mxu0 0.0
        %4465 = vmatpush1.msra.mxu0 %v4439
        %4466 = vmatprep.subr.mxu0 0.0
        %4467 = vmatpush1.msra.mxu0 0.0
        %4468 = vmatprep.subr.mxu0 0.0
        %4469 = vmatpush1.msra.mxu0 0.0
        %4470 = vmatprep.subr.mxu0 0.0
        %4471 = vmatpush1.msra.mxu0 0.0
        %4472 = vmatprep.subr.mxu0 0.0
        %4473 = vmatpush1.msra.mxu0 0.0
        %4474 = vmatprep.subr.mxu0 0.0
        %4475 = vmatpush1.msra.mxu0 0.0
        %4476 = vmatprep.subr.mxu0 0.0
        %4477 = vmatpush1.msra.mxu0 0.0
        %4478 = vmatprep.subr.mxu0 0.0
        %4479 = vmatpush1.msra.mxu0 0.0
        %4480 = vmatprep.subr.mxu0 0.0
        %4481 = vmatpush1.msra.mxu0 0.0
        %4482 = vmatprep.subr.mxu0 0.0
        %4483 = vmatpush1.msra.mxu0 0.0
        %4484 = vmatprep.subr.mxu0 0.0
        %4485 = vmatpush1.msra.mxu0 0.0
        %4486 = vmatprep.subr.mxu0 0.0
        %4487 = vmatpush1.msra.mxu0 0.0
        %4488 = vmatprep.subr.mxu0 0.0
        %4489 = vmatpush1.msra.mxu0 0.0
        %4490 = vmatprep.subr.mxu0 0.0
        %4491 = vmatpush1.msra.mxu0 0.0
        %4492 = vmatprep.subr.mxu0 0.0
        %4493 = vmatpush1.msra.mxu0 0.0
        %4494 = vmatprep.subr.mxu0 0.0
        %4495 = vmatpush1.msra.mxu0 0.0
        %4496 = vmatprep.subr.mxu0 0.0
        %4497 = vmatpush1.msra.mxu0 0.0
        %4498 = vmatprep.subr.mxu0 0.0
        %4499 = vmatpush1.msra.mxu0 0.0
        %4500 = vmatprep.subr.mxu0 0.0
        %4501 = vmatpush1.msra.mxu0 0.0
        %4502 = vmatprep.subr.mxu0 0.0
        %4503 = vmatpush1.msra.mxu0 0.0
        %4504 = vmatprep.subr.mxu0 0.0
        %4505 = vmatpush1.msra.mxu0 0.0
        %4506 = vmatprep.subr.mxu0 0.0
        %4507 = vmatpush1.msra.mxu0 0.0
        %4508 = vmatprep.subr.mxu0 0.0
        %4509 = vmatpush1.msra.mxu0 0.0
        %4510 = vmatprep.subr.mxu0 0.0
        %4511 = vmatpush1.msra.mxu0 0.0
        %4512 = vmatprep.subr.mxu0 0.0
        %4513 = vmatpush1.msra.mxu0 0.0
        %4514 = vmatprep.subr.mxu0 0.0
        %4515 = vmatpush1.msra.mxu0 0.0
        %4516 = vmatprep.subr.mxu0 0.0
        %4517 = vmatpush1.msra.mxu0 0.0
        %4518 = vmatprep.subr.mxu0 0.0
        %4519 = vmatpush1.msra.mxu0 0.0
        %4520 = vmatprep.subr.mxu0 0.0
        %4521 = vmatpush1.msra.mxu0 0.0
        %4522 = vmatprep.mubr.f32.mxu0 0.0
        %4523 = vmatmul.mubr.f32.gmra.mrb[0].mxu0 %v4441
        %v4524 = vpop.f32.mrb[0].mxu0
        %v4525 = vadd.f32 0.0, %v4524
        %v4526 = vpop.f32.mrb[0].mxu0
        %4527 = vmatprep.mubr.f32.mxu0 0.0
        %4528 = vmatmul.mubr.f32.gmra.mrb[0].mxu0 %v4444
        %v4529 = vpop.f32.mrb[0].mxu0
        %v4530 = vadd.f32 0.0, %v4529
        %v4531 = vpop.f32.mrb[0].mxu0
        %4532 = vmatprep.mubr.f32.mxu0 0.0
        %4533 = vmatmul.mubr.f32.gmra.mrb[0].mxu0 %v4447
        %v4534 = vpop.f32.mrb[0].mxu0
        %v4535 = vadd.f32 0.0, %v4534
        %v4536 = vpop.f32.mrb[0].mxu0
        %4537 = vmatprep.mubr.f32.mxu0 0.0
        %4538 = vmatmul.mubr.f32.gmra.mrb[0].mxu0 %v4450
        %v4539 = vpop.f32.mrb[0].mxu0
        %v4540 = vadd.f32 0.0, %v4539
        %v4541 = vpop.f32.mrb[0].mxu0
        %4542 = vmatprep.mubr.f32.mxu0 0.0
        %4543 = vmatmul.mubr.f32.gmra.mrb[0].mxu0 %v4453
        %v4544 = vpop.f32.mrb[0].mxu0
        %v4545 = vadd.f32 0.0, %v4544
        %v4546 = vpop.f32.mrb[0].mxu0
        %4547 = vmatprep.mubr.f32.mxu0 0.0
        %4548 = vmatmul.mubr.f32.gmra.mrb[0].mxu0 %v4456
        %v4549 = vpop.f32.mrb[0].mxu0
        %v4550 = vadd.f32 0.0, %v4549
        %v4551 = vpop.f32.mrb[0].mxu0
        %4552 = vdwg.mxu0
        %v4553 = vadd.f32 %v4420, %v4525
        %v4554 = vadd.f32 %v4421, %v4530
        %v4555 = vadd.f32 %v4422, %v4535
        %v4556 = vadd.f32 %v4423, %v4540
        %v4557 = vadd.f32 %v4424, %v4545
        %v4558 = vadd.f32 %v4425, %v4550
        %v4559 = vld [vmem:[%s4428 + $0x1] sm:$0xff]
        %v4560 = vld [vmem:[%s4428 + $0x9] sm:$0xff]
        %v4561 = vld [vmem:[%s4428 + $0x11] sm:$0xff]
        %v4562 = vld [vmem:[%s4428 + $0x19] sm:$0xff]
        %v4563 = vld [vmem:[%s4428 + $0x21] sm:$0xff]
        %v4564 = vld [vmem:[%s4428 + $0x29] sm:$0x1]
        %s4565 = scalar_lea.vmem %s5, 224
        %v4566 = vld [vmem:[%s4565] sm:$0xff]
        %v4567 = vld [vmem:[%s4565 + $0x8] sm:$0xff]
        %v4568 = vld [vmem:[%s4565 + $0x10] sm:$0xff]
        %v4569 = vld [vmem:[%s4565 + $0x18] sm:$0xff]
        %v4571 = vsel %vm451, %v4559, 0
        %v4574 = vsel %vm451, %v4560, 0
        %v4577 = vsel %vm451, %v4561, 0
        %v4580 = vsel %vm451, %v4562, 0
        %v4583 = vsel %vm451, %v4563, 0
        %v4586 = vsel %vm451, %v4564, 0
        %4588 = vmatprep.subr.mxu0 0.0
        %4589 = vmatpush1.msra.mxu0 %v4566
        %4590 = vmatprep.subr.mxu0 0.0
        %4591 = vmatpush1.msra.mxu0 %v4567
        %4592 = vmatprep.subr.mxu0 0.0
        %4593 = vmatpush1.msra.mxu0 %v4568
        %4594 = vmatprep.subr.mxu0 0.0
        %4595 = vmatpush1.msra.mxu0 %v4569
        %4596 = vmatprep.subr.mxu0 0.0
        %4597 = vmatpush1.msra.mxu0 0.0
        %4598 = vmatprep.subr.mxu0 0.0
        %4599 = vmatpush1.msra.mxu0 0.0
        %4600 = vmatprep.subr.mxu0 0.0
        %4601 = vmatpush1.msra.mxu0 0.0
        %4602 = vmatprep.subr.mxu0 0.0
        %4603 = vmatpush1.msra.mxu0 0.0
        %4604 = vmatprep.subr.mxu0 0.0
        %4605 = vmatpush1.msra.mxu0 0.0
        %4606 = vmatprep.subr.mxu0 0.0
        %4607 = vmatpush1.msra.mxu0 0.0
        %4608 = vmatprep.subr.mxu0 0.0
        %4609 = vmatpush1.msra.mxu0 0.0
        %4610 = vmatprep.subr.mxu0 0.0
        %4611 = vmatpush1.msra.mxu0 0.0
        %4612 = vmatprep.subr.mxu0 0.0
        %4613 = vmatpush1.msra.mxu0 0.0
        %4614 = vmatprep.subr.mxu0 0.0
        %4615 = vmatpush1.msra.mxu0 0.0
        %4616 = vmatprep.subr.mxu0 0.0
        %4617 = vmatpush1.msra.mxu0 0.0
        %4618 = vmatprep.subr.mxu0 0.0
        %4619 = vmatpush1.msra.mxu0 0.0
        %4620 = vmatprep.subr.mxu0 0.0
        %4621 = vmatpush1.msra.mxu0 0.0
        %4622 = vmatprep.subr.mxu0 0.0
        %4623 = vmatpush1.msra.mxu0 0.0
        %4624 = vmatprep.subr.mxu0 0.0
        %4625 = vmatpush1.msra.mxu0 0.0
        %4626 = vmatprep.subr.mxu0 0.0
        %4627 = vmatpush1.msra.mxu0 0.0
        %4628 = vmatprep.subr.mxu0 0.0
        %4629 = vmatpush1.msra.mxu0 0.0
        %4630 = vmatprep.subr.mxu0 0.0
        %4631 = vmatpush1.msra.mxu0 0.0
        %4632 = vmatprep.subr.mxu0 0.0
        %4633 = vmatpush1.msra.mxu0 0.0
        %4634 = vmatprep.subr.mxu0 0.0
        %4635 = vmatpush1.msra.mxu0 0.0
        %4636 = vmatprep.subr.mxu0 0.0
        %4637 = vmatpush1.msra.mxu0 0.0
        %4638 = vmatprep.subr.mxu0 0.0
        %4639 = vmatpush1.msra.mxu0 0.0
        %4640 = vmatprep.subr.mxu0 0.0
        %4641 = vmatpush1.msra.mxu0 0.0
        %4642 = vmatprep.subr.mxu0 0.0
        %4643 = vmatpush1.msra.mxu0 0.0
        %4644 = vmatprep.subr.mxu0 0.0
        %4645 = vmatpush1.msra.mxu0 0.0
        %4646 = vmatprep.subr.mxu0 0.0
        %4647 = vmatpush1.msra.mxu0 0.0
        %4648 = vmatprep.subr.mxu0 0.0
        %4649 = vmatpush1.msra.mxu0 0.0
        %4650 = vmatprep.subr.mxu0 0.0
        %4651 = vmatpush1.msra.mxu0 0.0
        %4652 = vmatprep.mubr.f32.mxu0 0.0
        %4653 = vmatmul.mubr.f32.gmra.mrb[0].mxu0 %v4571
        %v4654 = vpop.f32.mrb[0].mxu0
        %v4655 = vadd.f32 0.0, %v4654
        %v4656 = vpop.f32.mrb[0].mxu0
        %4657 = vmatprep.mubr.f32.mxu0 0.0
        %4658 = vmatmul.mubr.f32.gmra.mrb[0].mxu0 %v4574
        %v4659 = vpop.f32.mrb[0].mxu0
        %v4660 = vadd.f32 0.0, %v4659
        %v4661 = vpop.f32.mrb[0].mxu0
        %4662 = vmatprep.mubr.f32.mxu0 0.0
        %4663 = vmatmul.mubr.f32.gmra.mrb[0].mxu0 %v4577
        %v4664 = vpop.f32.mrb[0].mxu0
        %v4665 = vadd.f32 0.0, %v4664
        %v4666 = vpop.f32.mrb[0].mxu0
        %4667 = vmatprep.mubr.f32.mxu0 0.0
        %4668 = vmatmul.mubr.f32.gmra.mrb[0].mxu0 %v4580
        %v4669 = vpop.f32.mrb[0].mxu0
        %v4670 = vadd.f32 0.0, %v4669
        %v4671 = vpop.f32.mrb[0].mxu0
        %4672 = vmatprep.mubr.f32.mxu0 0.0
        %4673 = vmatmul.mubr.f32.gmra.mrb[0].mxu0 %v4583
        %v4674 = vpop.f32.mrb[0].mxu0
        %v4675 = vadd.f32 0.0, %v4674
        %v4676 = vpop.f32.mrb[0].mxu0
        %4677 = vmatprep.mubr.f32.mxu0 0.0
        %4678 = vmatmul.mubr.f32.gmra.mrb[0].mxu0 %v4586
        %v4679 = vpop.f32.mrb[0].mxu0
        %v4680 = vadd.f32 0.0, %v4679
        %v4681 = vpop.f32.mrb[0].mxu0
        %4682 = vdwg.mxu0
        %v4683 = vadd.f32 %v4553, %v4655
        %v4684 = vadd.f32 %v4554, %v4660
        %v4685 = vadd.f32 %v4555, %v4665
        %v4686 = vadd.f32 %v4556, %v4670
        %v4687 = vadd.f32 %v4557, %v4675
        %v4688 = vadd.f32 %v4558, %v4680
        %v4689 = vld [vmem:[%s4428 + $0x2] sm:$0xff]
        %v4690 = vld [vmem:[%s4428 + $0xa] sm:$0xff]
        %v4691 = vld [vmem:[%s4428 + $0x12] sm:$0xff]
        %v4692 = vld [vmem:[%s4428 + $0x1a] sm:$0xff]
        %v4693 = vld [vmem:[%s4428 + $0x22] sm:$0xff]
        %v4694 = vld [vmem:[%s4428 + $0x2a] sm:$0x1]
        %s4695 = scalar_lea.vmem %s5, 256
        %v4696 = vld [vmem:[%s4695] sm:$0xff]
        %v4697 = vld [vmem:[%s4695 + $0x8] sm:$0xff]
        %v4698 = vld [vmem:[%s4695 + $0x10] sm:$0xff]
        %v4699 = vld [vmem:[%s4695 + $0x18] sm:$0xff]
        %v4701 = vsel %vm451, %v4689, 0
        %v4704 = vsel %vm451, %v4690, 0
        %v4707 = vsel %vm451, %v4691, 0
        %v4710 = vsel %vm451, %v4692, 0
        %v4713 = vsel %vm451, %v4693, 0
        %v4716 = vsel %vm451, %v4694, 0
        %4718 = vmatprep.subr.mxu0 0.0
        %4719 = vmatpush1.msra.mxu0 %v4696
        %4720 = vmatprep.subr.mxu0 0.0
        %4721 = vmatpush1.msra.mxu0 %v4697
        %4722 = vmatprep.subr.mxu0 0.0
        %4723 = vmatpush1.msra.mxu0 %v4698
        %4724 = vmatprep.subr.mxu0 0.0
        %4725 = vmatpush1.msra.mxu0 %v4699
        %4726 = vmatprep.subr.mxu0 0.0
        %4727 = vmatpush1.msra.mxu0 0.0
        %4728 = vmatprep.subr.mxu0 0.0
        %4729 = vmatpush1.msra.mxu0 0.0
        %4730 = vmatprep.subr.mxu0 0.0
        %4731 = vmatpush1.msra.mxu0 0.0
        %4732 = vmatprep.subr.mxu0 0.0
        %4733 = vmatpush1.msra.mxu0 0.0
        %4734 = vmatprep.subr.mxu0 0.0
        %4735 = vmatpush1.msra.mxu0 0.0
        %4736 = vmatprep.subr.mxu0 0.0
        %4737 = vmatpush1.msra.mxu0 0.0
        %4738 = vmatprep.subr.mxu0 0.0
        %4739 = vmatpush1.msra.mxu0 0.0
        %4740 = vmatprep.subr.mxu0 0.0
        %4741 = vmatpush1.msra.mxu0 0.0
        %4742 = vmatprep.subr.mxu0 0.0
        %4743 = vmatpush1.msra.mxu0 0.0
        %4744 = vmatprep.subr.mxu0 0.0
        %4745 = vmatpush1.msra.mxu0 0.0
        %4746 = vmatprep.subr.mxu0 0.0
        %4747 = vmatpush1.msra.mxu0 0.0
        %4748 = vmatprep.subr.mxu0 0.0
        %4749 = vmatpush1.msra.mxu0 0.0
        %4750 = vmatprep.subr.mxu0 0.0
        %4751 = vmatpush1.msra.mxu0 0.0
        %4752 = vmatprep.subr.mxu0 0.0
        %4753 = vmatpush1.msra.mxu0 0.0
        %4754 = vmatprep.subr.mxu0 0.0
        %4755 = vmatpush1.msra.mxu0 0.0
        %4756 = vmatprep.subr.mxu0 0.0
        %4757 = vmatpush1.msra.mxu0 0.0
        %4758 = vmatprep.subr.mxu0 0.0
        %4759 = vmatpush1.msra.mxu0 0.0
        %4760 = vmatprep.subr.mxu0 0.0
        %4761 = vmatpush1.msra.mxu0 0.0
        %4762 = vmatprep.subr.mxu0 0.0
        %4763 = vmatpush1.msra.mxu0 0.0
        %4764 = vmatprep.subr.mxu0 0.0
        %4765 = vmatpush1.msra.mxu0 0.0
        %4766 = vmatprep.subr.mxu0 0.0
        %4767 = vmatpush1.msra.mxu0 0.0
        %4768 = vmatprep.subr.mxu0 0.0
        %4769 = vmatpush1.msra.mxu0 0.0
        %4770 = vmatprep.subr.mxu0 0.0
        %4771 = vmatpush1.msra.mxu0 0.0
        %4772 = vmatprep.subr.mxu0 0.0
        %4773 = vmatpush1.msra.mxu0 0.0
        %4774 = vmatprep.subr.mxu0 0.0
        %4775 = vmatpush1.msra.mxu0 0.0
        %4776 = vmatprep.subr.mxu0 0.0
        %4777 = vmatpush1.msra.mxu0 0.0
        %4778 = vmatprep.subr.mxu0 0.0
        %4779 = vmatpush1.msra.mxu0 0.0
        %4780 = vmatprep.subr.mxu0 0.0
        %4781 = vmatpush1.msra.mxu0 0.0
        %4782 = vmatprep.mubr.f32.mxu0 0.0
        %4783 = vmatmul.mubr.f32.gmra.mrb[0].mxu0 %v4701
        %v4784 = vpop.f32.mrb[0].mxu0
        %v4785 = vadd.f32 0.0, %v4784
        %v4786 = vpop.f32.mrb[0].mxu0
        %4787 = vmatprep.mubr.f32.mxu0 0.0
        %4788 = vmatmul.mubr.f32.gmra.mrb[0].mxu0 %v4704
        %v4789 = vpop.f32.mrb[0].mxu0
        %v4790 = vadd.f32 0.0, %v4789
        %v4791 = vpop.f32.mrb[0].mxu0
        %4792 = vmatprep.mubr.f32.mxu0 0.0
        %4793 = vmatmul.mubr.f32.gmra.mrb[0].mxu0 %v4707
        %v4794 = vpop.f32.mrb[0].mxu0
        %v4795 = vadd.f32 0.0, %v4794
        %v4796 = vpop.f32.mrb[0].mxu0
        %4797 = vmatprep.mubr.f32.mxu0 0.0
        %4798 = vmatmul.mubr.f32.gmra.mrb[0].mxu0 %v4710
        %v4799 = vpop.f32.mrb[0].mxu0
        %v4800 = vadd.f32 0.0, %v4799
        %v4801 = vpop.f32.mrb[0].mxu0
        %4802 = vmatprep.mubr.f32.mxu0 0.0
        %4803 = vmatmul.mubr.f32.gmra.mrb[0].mxu0 %v4713
        %v4804 = vpop.f32.mrb[0].mxu0
        %v4805 = vadd.f32 0.0, %v4804
        %v4806 = vpop.f32.mrb[0].mxu0
        %4807 = vmatprep.mubr.f32.mxu0 0.0
        %4808 = vmatmul.mubr.f32.gmra.mrb[0].mxu0 %v4716
        %v4809 = vpop.f32.mrb[0].mxu0
        %v4810 = vadd.f32 0.0, %v4809
        %v4811 = vpop.f32.mrb[0].mxu0
        %4812 = vdwg.mxu0
        %v4813 = vadd.f32 %v4683, %v4785
        %v4814 = vadd.f32 %v4684, %v4790
        %v4815 = vadd.f32 %v4685, %v4795
        %v4816 = vadd.f32 %v4686, %v4800
        %v4817 = vadd.f32 %v4687, %v4805
        %v4818 = vadd.f32 %v4688, %v4810
        %v4820 = vlaneseq
        %v4821 = vshrl.u32 %v4820, 7
        %v4822 = vsub.s32 0, %v4821
        %v4823 = vrot.slane %v3647, %v4822
        %v4825 = vadd.f32 %v4813, %v4823
        %v4826 = vadd.f32 %v4814, %v4823
        %v4827 = vadd.f32 %v4815, %v4823
        %v4828 = vadd.f32 %v4816, %v4823
        %v4829 = vadd.f32 %v4817, %v4823
        %v4830 = vadd.f32 %v4818, %v4823
        %v4831 = vmax.f32 %v4825, 0.0
        %v4832 = vmax.f32 %v4826, 0.0
        %v4833 = vmax.f32 %v4827, 0.0
        %v4834 = vmax.f32 %v4828, 0.0
        %v4835 = vmax.f32 %v4829, 0.0
        %v4836 = vmax.f32 %v4830, 0.0
        %s4837 = scalar_lea.vmem [#allocation5], %s4034
        %4838 = vst.msk [vmem:[%s4837 + $0x1] sm:$0xff] %vm451, %v4831
        %4839 = vst.msk [vmem:[%s4837 + $0x9] sm:$0xff] %vm451, %v4832
        %4840 = vst.msk [vmem:[%s4837 + $0x11] sm:$0xff] %vm451, %v4833
        %4841 = vst.msk [vmem:[%s4837 + $0x19] sm:$0xff] %vm451, %v4834
        %4842 = vst.msk [vmem:[%s4837 + $0x21] sm:$0xff] %vm451, %v4835
        %4843 = vst.msk [vmem:[%s4837 + $0x29] sm:$0x1] %vm653, %v4836
      $region82: #{decoder_forward.3} parent=55 // loop_footer
        %s3653 = sadd.s32 1, %s3649
      $region83: #{decoder_forward.3} parent=55 // loop_footer_branch
        %3648 = sbr.rel target = $region79
      $region84: #{decoder_forward.3} parent=55 // loop_exit
        _
      %v4844 = vld [vmem:[%s8] sm:$0x1]
      loop: start=0, step=1, limit=42
      $region85: #{decoder_forward.3} parent=55 // loop_pre_header
        _
      $region86: #{decoder_forward.3} parent=55 // loop_header
        %s4846 = sphi 0, %s4850
        %p4847 = scmp.ge.s32.totalorder %s4846, 42
      $region87: #{decoder_forward.3} parent=55 // loop_header_branch
        %4849 = sbr.rel (%p4847) target = $region91
      $region88: #{decoder_forward.3} parent=55 // loop_body
        %s4851 = smul.u32 %s4846, 48
        %s4852 = scalar_lea.vmem [#allocation5], %s4851
        %v4853 = vld [vmem:[%s4852] sm:$0xff]
        %v4854 = vld [vmem:[%s4852 + $0x8] sm:$0xff]
        %v4855 = vld [vmem:[%s4852 + $0x10] sm:$0xff]
        %v4856 = vld [vmem:[%s4852 + $0x18] sm:$0xff]
        %v4857 = vld [vmem:[%s4852 + $0x20] sm:$0xff]
        %v4858 = vld [vmem:[%s4852 + $0x28] sm:$0x3]
        %s4859 = scalar_lea.vmem %s7, 256
        %v4860 = vld [vmem:[%s4859] sm:$0xff]
        %v4861 = vld [vmem:[%s4859 + $0x8] sm:$0xff]
        %v4862 = vld [vmem:[%s4859 + $0x10] sm:$0xff]
        %v4863 = vld [vmem:[%s4859 + $0x18] sm:$0xff]
        %v4864 = vld [vmem:[%s4852 + $0x1] sm:$0xff]
        %v4865 = vld [vmem:[%s4852 + $0x9] sm:$0xff]
        %v4866 = vld [vmem:[%s4852 + $0x11] sm:$0xff]
        %v4867 = vld [vmem:[%s4852 + $0x19] sm:$0xff]
        %v4868 = vld [vmem:[%s4852 + $0x21] sm:$0xff]
        %v4869 = vld [vmem:[%s4852 + $0x29] sm:$0x3]
        %s4870 = scalar_lea.vmem %s7, 192
        %v4871 = vld [vmem:[%s4870] sm:$0xff]
        %v4872 = vld [vmem:[%s4870 + $0x8] sm:$0xff]
        %v4873 = vld [vmem:[%s4870 + $0x10] sm:$0xff]
        %v4874 = vld [vmem:[%s4870 + $0x18] sm:$0xff]
        %v4876 = vsel %vm451, %v4864, 0
        %v4879 = vsel %vm451, %v4865, 0
        %v4882 = vsel %vm451, %v4866, 0
        %v4885 = vsel %vm451, %v4867, 0
        %v4888 = vsel %vm451, %v4868, 0
        %v4891 = vsel %vm451, %v4869, 0
        %4893 = vmatprep.subr.mxu0 0.0
        %4894 = vmatpush1.msra.mxu0 %v4871
        %4895 = vmatprep.subr.mxu0 0.0
        %4896 = vmatpush1.msra.mxu0 %v4872
        %4897 = vmatprep.subr.mxu0 0.0
        %4898 = vmatpush1.msra.mxu0 %v4873
        %4899 = vmatprep.subr.mxu0 0.0
        %4900 = vmatpush1.msra.mxu0 %v4874
        %4901 = vmatprep.subr.mxu0 0.0
        %4902 = vmatpush1.msra.mxu0 0.0
        %4903 = vmatprep.subr.mxu0 0.0
        %4904 = vmatpush1.msra.mxu0 0.0
        %4905 = vmatprep.subr.mxu0 0.0
        %4906 = vmatpush1.msra.mxu0 0.0
        %4907 = vmatprep.subr.mxu0 0.0
        %4908 = vmatpush1.msra.mxu0 0.0
        %4909 = vmatprep.subr.mxu0 0.0
        %4910 = vmatpush1.msra.mxu0 0.0
        %4911 = vmatprep.subr.mxu0 0.0
        %4912 = vmatpush1.msra.mxu0 0.0
        %4913 = vmatprep.subr.mxu0 0.0
        %4914 = vmatpush1.msra.mxu0 0.0
        %4915 = vmatprep.subr.mxu0 0.0
        %4916 = vmatpush1.msra.mxu0 0.0
        %4917 = vmatprep.subr.mxu0 0.0
        %4918 = vmatpush1.msra.mxu0 0.0
        %4919 = vmatprep.subr.mxu0 0.0
        %4920 = vmatpush1.msra.mxu0 0.0
        %4921 = vmatprep.subr.mxu0 0.0
        %4922 = vmatpush1.msra.mxu0 0.0
        %4923 = vmatprep.subr.mxu0 0.0
        %4924 = vmatpush1.msra.mxu0 0.0
        %4925 = vmatprep.subr.mxu0 0.0
        %4926 = vmatpush1.msra.mxu0 0.0
        %4927 = vmatprep.subr.mxu0 0.0
        %4928 = vmatpush1.msra.mxu0 0.0
        %4929 = vmatprep.subr.mxu0 0.0
        %4930 = vmatpush1.msra.mxu0 0.0
        %4931 = vmatprep.subr.mxu0 0.0
        %4932 = vmatpush1.msra.mxu0 0.0
        %4933 = vmatprep.subr.mxu0 0.0
        %4934 = vmatpush1.msra.mxu0 0.0
        %4935 = vmatprep.subr.mxu0 0.0
        %4936 = vmatpush1.msra.mxu0 0.0
        %4937 = vmatprep.subr.mxu0 0.0
        %4938 = vmatpush1.msra.mxu0 0.0
        %4939 = vmatprep.subr.mxu0 0.0
        %4940 = vmatpush1.msra.mxu0 0.0
        %4941 = vmatprep.subr.mxu0 0.0
        %4942 = vmatpush1.msra.mxu0 0.0
        %4943 = vmatprep.subr.mxu0 0.0
        %4944 = vmatpush1.msra.mxu0 0.0
        %4945 = vmatprep.subr.mxu0 0.0
        %4946 = vmatpush1.msra.mxu0 0.0
        %4947 = vmatprep.subr.mxu0 0.0
        %4948 = vmatpush1.msra.mxu0 0.0
        %4949 = vmatprep.subr.mxu0 0.0
        %4950 = vmatpush1.msra.mxu0 0.0
        %4951 = vmatprep.subr.mxu0 0.0
        %4952 = vmatpush1.msra.mxu0 0.0
        %4953 = vmatprep.subr.mxu0 0.0
        %4954 = vmatpush1.msra.mxu0 0.0
        %4955 = vmatprep.subr.mxu0 0.0
        %4956 = vmatpush1.msra.mxu0 0.0
        %4957 = vmatprep.mubr.f32.mxu0 0.0
        %4958 = vmatmul.mubr.f32.gmra.mrb[0].mxu0 %v4876
        %v4959 = vpop.f32.mrb[0].mxu0
        %v4960 = vadd.f32 0.0, %v4959
        %v4961 = vpop.f32.mrb[0].mxu0
        %4962 = vmatprep.mubr.f32.mxu0 0.0
        %4963 = vmatmul.mubr.f32.gmra.mrb[0].mxu0 %v4879
        %v4964 = vpop.f32.mrb[0].mxu0
        %v4965 = vadd.f32 0.0, %v4964
        %v4966 = vpop.f32.mrb[0].mxu0
        %4967 = vmatprep.mubr.f32.mxu0 0.0
        %4968 = vmatmul.mubr.f32.gmra.mrb[0].mxu0 %v4882
        %v4969 = vpop.f32.mrb[0].mxu0
        %v4970 = vadd.f32 0.0, %v4969
        %v4971 = vpop.f32.mrb[0].mxu0
        %4972 = vmatprep.mubr.f32.mxu0 0.0
        %4973 = vmatmul.mubr.f32.gmra.mrb[0].mxu0 %v4885
        %v4974 = vpop.f32.mrb[0].mxu0
        %v4975 = vadd.f32 0.0, %v4974
        %v4976 = vpop.f32.mrb[0].mxu0
        %4977 = vmatprep.mubr.f32.mxu0 0.0
        %4978 = vmatmul.mubr.f32.gmra.mrb[0].mxu0 %v4888
        %v4979 = vpop.f32.mrb[0].mxu0
        %v4980 = vadd.f32 0.0, %v4979
        %v4981 = vpop.f32.mrb[0].mxu0
        %4982 = vmatprep.mubr.f32.mxu0 0.0
        %4983 = vmatmul.mubr.f32.gmra.mrb[0].mxu0 %v4891
        %v4984 = vpop.f32.mrb[0].mxu0
        %v4985 = vadd.f32 0.0, %v4984
        %v4986 = vpop.f32.mrb[0].mxu0
        %4987 = vdwg.mxu0
        %v4989 = vsel %vm451, %v4853, 0
        %v4992 = vsel %vm451, %v4854, 0
        %v4995 = vsel %vm451, %v4855, 0
        %v4998 = vsel %vm451, %v4856, 0
        %v5001 = vsel %vm451, %v4857, 0
        %v5004 = vsel %vm451, %v4858, 0
        %5006 = vmatprep.subr.mxu0 0.0
        %5007 = vmatpush1.msra.mxu0 %v4860
        %5008 = vmatprep.subr.mxu0 0.0
        %5009 = vmatpush1.msra.mxu0 %v4861
        %5010 = vmatprep.subr.mxu0 0.0
        %5011 = vmatpush1.msra.mxu0 %v4862
        %5012 = vmatprep.subr.mxu0 0.0
        %5013 = vmatpush1.msra.mxu0 %v4863
        %5014 = vmatprep.subr.mxu0 0.0
        %5015 = vmatpush1.msra.mxu0 0.0
        %5016 = vmatprep.subr.mxu0 0.0
        %5017 = vmatpush1.msra.mxu0 0.0
        %5018 = vmatprep.subr.mxu0 0.0
        %5019 = vmatpush1.msra.mxu0 0.0
        %5020 = vmatprep.subr.mxu0 0.0
        %5021 = vmatpush1.msra.mxu0 0.0
        %5022 = vmatprep.subr.mxu0 0.0
        %5023 = vmatpush1.msra.mxu0 0.0
        %5024 = vmatprep.subr.mxu0 0.0
        %5025 = vmatpush1.msra.mxu0 0.0
        %5026 = vmatprep.subr.mxu0 0.0
        %5027 = vmatpush1.msra.mxu0 0.0
        %5028 = vmatprep.subr.mxu0 0.0
        %5029 = vmatpush1.msra.mxu0 0.0
        %5030 = vmatprep.subr.mxu0 0.0
        %5031 = vmatpush1.msra.mxu0 0.0
        %5032 = vmatprep.subr.mxu0 0.0
        %5033 = vmatpush1.msra.mxu0 0.0
        %5034 = vmatprep.subr.mxu0 0.0
        %5035 = vmatpush1.msra.mxu0 0.0
        %5036 = vmatprep.subr.mxu0 0.0
        %5037 = vmatpush1.msra.mxu0 0.0
        %5038 = vmatprep.subr.mxu0 0.0
        %5039 = vmatpush1.msra.mxu0 0.0
        %5040 = vmatprep.subr.mxu0 0.0
        %5041 = vmatpush1.msra.mxu0 0.0
        %5042 = vmatprep.subr.mxu0 0.0
        %5043 = vmatpush1.msra.mxu0 0.0
        %5044 = vmatprep.subr.mxu0 0.0
        %5045 = vmatpush1.msra.mxu0 0.0
        %5046 = vmatprep.subr.mxu0 0.0
        %5047 = vmatpush1.msra.mxu0 0.0
        %5048 = vmatprep.subr.mxu0 0.0
        %5049 = vmatpush1.msra.mxu0 0.0
        %5050 = vmatprep.subr.mxu0 0.0
        %5051 = vmatpush1.msra.mxu0 0.0
        %5052 = vmatprep.subr.mxu0 0.0
        %5053 = vmatpush1.msra.mxu0 0.0
        %5054 = vmatprep.subr.mxu0 0.0
        %5055 = vmatpush1.msra.mxu0 0.0
        %5056 = vmatprep.subr.mxu0 0.0
        %5057 = vmatpush1.msra.mxu0 0.0
        %5058 = vmatprep.subr.mxu0 0.0
        %5059 = vmatpush1.msra.mxu0 0.0
        %5060 = vmatprep.subr.mxu0 0.0
        %5061 = vmatpush1.msra.mxu0 0.0
        %5062 = vmatprep.subr.mxu0 0.0
        %5063 = vmatpush1.msra.mxu0 0.0
        %5064 = vmatprep.subr.mxu0 0.0
        %5065 = vmatpush1.msra.mxu0 0.0
        %5066 = vmatprep.subr.mxu0 0.0
        %5067 = vmatpush1.msra.mxu0 0.0
        %5068 = vmatprep.subr.mxu0 0.0
        %5069 = vmatpush1.msra.mxu0 0.0
        %5070 = vmatprep.mubr.f32.mxu0 0.0
        %5071 = vmatmul.mubr.f32.gmra.mrb[0].mxu0 %v4989
        %v5072 = vpop.f32.mrb[0].mxu0
        %v5073 = vadd.f32 %v4960, %v5072
        %v5074 = vpop.f32.mrb[0].mxu0
        %5075 = vmatprep.mubr.f32.mxu0 0.0
        %5076 = vmatmul.mubr.f32.gmra.mrb[0].mxu0 %v4992
        %v5077 = vpop.f32.mrb[0].mxu0
        %v5078 = vadd.f32 %v4965, %v5077
        %v5079 = vpop.f32.mrb[0].mxu0
        %5080 = vmatprep.mubr.f32.mxu0 0.0
        %5081 = vmatmul.mubr.f32.gmra.mrb[0].mxu0 %v4995
        %v5082 = vpop.f32.mrb[0].mxu0
        %v5083 = vadd.f32 %v4970, %v5082
        %v5084 = vpop.f32.mrb[0].mxu0
        %5085 = vmatprep.mubr.f32.mxu0 0.0
        %5086 = vmatmul.mubr.f32.gmra.mrb[0].mxu0 %v4998
        %v5087 = vpop.f32.mrb[0].mxu0
        %v5088 = vadd.f32 %v4975, %v5087
        %v5089 = vpop.f32.mrb[0].mxu0
        %5090 = vmatprep.mubr.f32.mxu0 0.0
        %5091 = vmatmul.mubr.f32.gmra.mrb[0].mxu0 %v5001
        %v5092 = vpop.f32.mrb[0].mxu0
        %v5093 = vadd.f32 %v4980, %v5092
        %v5094 = vpop.f32.mrb[0].mxu0
        %5095 = vmatprep.mubr.f32.mxu0 0.0
        %5096 = vmatmul.mubr.f32.gmra.mrb[0].mxu0 %v5004
        %v5097 = vpop.f32.mrb[0].mxu0
        %v5098 = vadd.f32 %v4985, %v5097
        %v5099 = vpop.f32.mrb[0].mxu0
        %5100 = vdwg.mxu0
        %s5101 = sadd.s32 %s4846, 1
        %s5102 = smul.u32 %s5101, 48
        %s5103 = scalar_lea.vmem [#allocation5], %s5102
        %v5104 = vld [vmem:[%s5103] sm:$0xff]
        %v5105 = vld [vmem:[%s5103 + $0x8] sm:$0xff]
        %v5106 = vld [vmem:[%s5103 + $0x10] sm:$0xff]
        %v5107 = vld [vmem:[%s5103 + $0x18] sm:$0xff]
        %v5108 = vld [vmem:[%s5103 + $0x20] sm:$0xff]
        %v5109 = vld [vmem:[%s5103 + $0x28] sm:$0x3]
        %s5110 = scalar_lea.vmem %s7, 64
        %v5111 = vld [vmem:[%s5110] sm:$0xff]
        %v5112 = vld [vmem:[%s5110 + $0x8] sm:$0xff]
        %v5113 = vld [vmem:[%s5110 + $0x10] sm:$0xff]
        %v5114 = vld [vmem:[%s5110 + $0x18] sm:$0xff]
        %v5116 = vsel %vm451, %v5104, 0
        %v5119 = vsel %vm451, %v5105, 0
        %v5122 = vsel %vm451, %v5106, 0
        %v5125 = vsel %vm451, %v5107, 0
        %v5128 = vsel %vm451, %v5108, 0
        %v5131 = vsel %vm451, %v5109, 0
        %5133 = vmatprep.subr.mxu0 0.0
        %5134 = vmatpush1.msra.mxu0 %v5111
        %5135 = vmatprep.subr.mxu0 0.0
        %5136 = vmatpush1.msra.mxu0 %v5112
        %5137 = vmatprep.subr.mxu0 0.0
        %5138 = vmatpush1.msra.mxu0 %v5113
        %5139 = vmatprep.subr.mxu0 0.0
        %5140 = vmatpush1.msra.mxu0 %v5114
        %5141 = vmatprep.subr.mxu0 0.0
        %5142 = vmatpush1.msra.mxu0 0.0
        %5143 = vmatprep.subr.mxu0 0.0
        %5144 = vmatpush1.msra.mxu0 0.0
        %5145 = vmatprep.subr.mxu0 0.0
        %5146 = vmatpush1.msra.mxu0 0.0
        %5147 = vmatprep.subr.mxu0 0.0
        %5148 = vmatpush1.msra.mxu0 0.0
        %5149 = vmatprep.subr.mxu0 0.0
        %5150 = vmatpush1.msra.mxu0 0.0
        %5151 = vmatprep.subr.mxu0 0.0
        %5152 = vmatpush1.msra.mxu0 0.0
        %5153 = vmatprep.subr.mxu0 0.0
        %5154 = vmatpush1.msra.mxu0 0.0
        %5155 = vmatprep.subr.mxu0 0.0
        %5156 = vmatpush1.msra.mxu0 0.0
        %5157 = vmatprep.subr.mxu0 0.0
        %5158 = vmatpush1.msra.mxu0 0.0
        %5159 = vmatprep.subr.mxu0 0.0
        %5160 = vmatpush1.msra.mxu0 0.0
        %5161 = vmatprep.subr.mxu0 0.0
        %5162 = vmatpush1.msra.mxu0 0.0
        %5163 = vmatprep.subr.mxu0 0.0
        %5164 = vmatpush1.msra.mxu0 0.0
        %5165 = vmatprep.subr.mxu0 0.0
        %5166 = vmatpush1.msra.mxu0 0.0
        %5167 = vmatprep.subr.mxu0 0.0
        %5168 = vmatpush1.msra.mxu0 0.0
        %5169 = vmatprep.subr.mxu0 0.0
        %5170 = vmatpush1.msra.mxu0 0.0
        %5171 = vmatprep.subr.mxu0 0.0
        %5172 = vmatpush1.msra.mxu0 0.0
        %5173 = vmatprep.subr.mxu0 0.0
        %5174 = vmatpush1.msra.mxu0 0.0
        %5175 = vmatprep.subr.mxu0 0.0
        %5176 = vmatpush1.msra.mxu0 0.0
        %5177 = vmatprep.subr.mxu0 0.0
        %5178 = vmatpush1.msra.mxu0 0.0
        %5179 = vmatprep.subr.mxu0 0.0
        %5180 = vmatpush1.msra.mxu0 0.0
        %5181 = vmatprep.subr.mxu0 0.0
        %5182 = vmatpush1.msra.mxu0 0.0
        %5183 = vmatprep.subr.mxu0 0.0
        %5184 = vmatpush1.msra.mxu0 0.0
        %5185 = vmatprep.subr.mxu0 0.0
        %5186 = vmatpush1.msra.mxu0 0.0
        %5187 = vmatprep.subr.mxu0 0.0
        %5188 = vmatpush1.msra.mxu0 0.0
        %5189 = vmatprep.subr.mxu0 0.0
        %5190 = vmatpush1.msra.mxu0 0.0
        %5191 = vmatprep.subr.mxu0 0.0
        %5192 = vmatpush1.msra.mxu0 0.0
        %5193 = vmatprep.subr.mxu0 0.0
        %5194 = vmatpush1.msra.mxu0 0.0
        %5195 = vmatprep.subr.mxu0 0.0
        %5196 = vmatpush1.msra.mxu0 0.0
        %5197 = vmatprep.mubr.f32.mxu0 0.0
        %5198 = vmatmul.mubr.f32.gmra.mrb[0].mxu0 %v5116
        %v5199 = vpop.f32.mrb[0].mxu0
        %v5200 = vadd.f32 0.0, %v5199
        %v5201 = vpop.f32.mrb[0].mxu0
        %5202 = vmatprep.mubr.f32.mxu0 0.0
        %5203 = vmatmul.mubr.f32.gmra.mrb[0].mxu0 %v5119
        %v5204 = vpop.f32.mrb[0].mxu0
        %v5205 = vadd.f32 0.0, %v5204
        %v5206 = vpop.f32.mrb[0].mxu0
        %5207 = vmatprep.mubr.f32.mxu0 0.0
        %5208 = vmatmul.mubr.f32.gmra.mrb[0].mxu0 %v5122
        %v5209 = vpop.f32.mrb[0].mxu0
        %v5210 = vadd.f32 0.0, %v5209
        %v5211 = vpop.f32.mrb[0].mxu0
        %5212 = vmatprep.mubr.f32.mxu0 0.0
        %5213 = vmatmul.mubr.f32.gmra.mrb[0].mxu0 %v5125
        %v5214 = vpop.f32.mrb[0].mxu0
        %v5215 = vadd.f32 0.0, %v5214
        %v5216 = vpop.f32.mrb[0].mxu0
        %5217 = vmatprep.mubr.f32.mxu0 0.0
        %5218 = vmatmul.mubr.f32.gmra.mrb[0].mxu0 %v5128
        %v5219 = vpop.f32.mrb[0].mxu0
        %v5220 = vadd.f32 0.0, %v5219
        %v5221 = vpop.f32.mrb[0].mxu0
        %5222 = vmatprep.mubr.f32.mxu0 0.0
        %5223 = vmatmul.mubr.f32.gmra.mrb[0].mxu0 %v5131
        %v5224 = vpop.f32.mrb[0].mxu0
        %v5225 = vadd.f32 0.0, %v5224
        %v5226 = vpop.f32.mrb[0].mxu0
        %5227 = vdwg.mxu0
        %v5228 = vadd.f32 %v5073, %v5200
        %v5229 = vadd.f32 %v5078, %v5205
        %v5230 = vadd.f32 %v5083, %v5210
        %v5231 = vadd.f32 %v5088, %v5215
        %v5232 = vadd.f32 %v5093, %v5220
        %v5233 = vadd.f32 %v5098, %v5225
        %v5234 = vld [vmem:[%s5103 + $0x1] sm:$0xff]
        %v5235 = vld [vmem:[%s5103 + $0x9] sm:$0xff]
        %v5236 = vld [vmem:[%s5103 + $0x11] sm:$0xff]
        %v5237 = vld [vmem:[%s5103 + $0x19] sm:$0xff]
        %v5238 = vld [vmem:[%s5103 + $0x21] sm:$0xff]
        %v5239 = vld [vmem:[%s5103 + $0x29] sm:$0x3]
        %v5240 = vld [vmem:[%s7] sm:$0xff]
        %v5241 = vld [vmem:[%s7 + $0x8] sm:$0xff]
        %v5242 = vld [vmem:[%s7 + $0x10] sm:$0xff]
        %v5243 = vld [vmem:[%s7 + $0x18] sm:$0xff]
        %v5245 = vsel %vm451, %v5234, 0
        %v5248 = vsel %vm451, %v5235, 0
        %v5251 = vsel %vm451, %v5236, 0
        %v5254 = vsel %vm451, %v5237, 0
        %v5257 = vsel %vm451, %v5238, 0
        %v5260 = vsel %vm451, %v5239, 0
        %5262 = vmatprep.subr.mxu0 0.0
        %5263 = vmatpush1.msra.mxu0 %v5240
        %5264 = vmatprep.subr.mxu0 0.0
        %5265 = vmatpush1.msra.mxu0 %v5241
        %5266 = vmatprep.subr.mxu0 0.0
        %5267 = vmatpush1.msra.mxu0 %v5242
        %5268 = vmatprep.subr.mxu0 0.0
        %5269 = vmatpush1.msra.mxu0 %v5243
        %5270 = vmatprep.subr.mxu0 0.0
        %5271 = vmatpush1.msra.mxu0 0.0
        %5272 = vmatprep.subr.mxu0 0.0
        %5273 = vmatpush1.msra.mxu0 0.0
        %5274 = vmatprep.subr.mxu0 0.0
        %5275 = vmatpush1.msra.mxu0 0.0
        %5276 = vmatprep.subr.mxu0 0.0
        %5277 = vmatpush1.msra.mxu0 0.0
        %5278 = vmatprep.subr.mxu0 0.0
        %5279 = vmatpush1.msra.mxu0 0.0
        %5280 = vmatprep.subr.mxu0 0.0
        %5281 = vmatpush1.msra.mxu0 0.0
        %5282 = vmatprep.subr.mxu0 0.0
        %5283 = vmatpush1.msra.mxu0 0.0
        %5284 = vmatprep.subr.mxu0 0.0
        %5285 = vmatpush1.msra.mxu0 0.0
        %5286 = vmatprep.subr.mxu0 0.0
        %5287 = vmatpush1.msra.mxu0 0.0
        %5288 = vmatprep.subr.mxu0 0.0
        %5289 = vmatpush1.msra.mxu0 0.0
        %5290 = vmatprep.subr.mxu0 0.0
        %5291 = vmatpush1.msra.mxu0 0.0
        %5292 = vmatprep.subr.mxu0 0.0
        %5293 = vmatpush1.msra.mxu0 0.0
        %5294 = vmatprep.subr.mxu0 0.0
        %5295 = vmatpush1.msra.mxu0 0.0
        %5296 = vmatprep.subr.mxu0 0.0
        %5297 = vmatpush1.msra.mxu0 0.0
        %5298 = vmatprep.subr.mxu0 0.0
        %5299 = vmatpush1.msra.mxu0 0.0
        %5300 = vmatprep.subr.mxu0 0.0
        %5301 = vmatpush1.msra.mxu0 0.0
        %5302 = vmatprep.subr.mxu0 0.0
        %5303 = vmatpush1.msra.mxu0 0.0
        %5304 = vmatprep.subr.mxu0 0.0
        %5305 = vmatpush1.msra.mxu0 0.0
        %5306 = vmatprep.subr.mxu0 0.0
        %5307 = vmatpush1.msra.mxu0 0.0
        %5308 = vmatprep.subr.mxu0 0.0
        %5309 = vmatpush1.msra.mxu0 0.0
        %5310 = vmatprep.subr.mxu0 0.0
        %5311 = vmatpush1.msra.mxu0 0.0
        %5312 = vmatprep.subr.mxu0 0.0
        %5313 = vmatpush1.msra.mxu0 0.0
        %5314 = vmatprep.subr.mxu0 0.0
        %5315 = vmatpush1.msra.mxu0 0.0
        %5316 = vmatprep.subr.mxu0 0.0
        %5317 = vmatpush1.msra.mxu0 0.0
        %5318 = vmatprep.subr.mxu0 0.0
        %5319 = vmatpush1.msra.mxu0 0.0
        %5320 = vmatprep.subr.mxu0 0.0
        %5321 = vmatpush1.msra.mxu0 0.0
        %5322 = vmatprep.subr.mxu0 0.0
        %5323 = vmatpush1.msra.mxu0 0.0
        %5324 = vmatprep.subr.mxu0 0.0
        %5325 = vmatpush1.msra.mxu0 0.0
        %5326 = vmatprep.mubr.f32.mxu0 0.0
        %5327 = vmatmul.mubr.f32.gmra.mrb[0].mxu0 %v5245
        %v5328 = vpop.f32.mrb[0].mxu0
        %v5329 = vadd.f32 0.0, %v5328
        %v5330 = vpop.f32.mrb[0].mxu0
        %5331 = vmatprep.mubr.f32.mxu0 0.0
        %5332 = vmatmul.mubr.f32.gmra.mrb[0].mxu0 %v5248
        %v5333 = vpop.f32.mrb[0].mxu0
        %v5334 = vadd.f32 0.0, %v5333
        %v5335 = vpop.f32.mrb[0].mxu0
        %5336 = vmatprep.mubr.f32.mxu0 0.0
        %5337 = vmatmul.mubr.f32.gmra.mrb[0].mxu0 %v5251
        %v5338 = vpop.f32.mrb[0].mxu0
        %v5339 = vadd.f32 0.0, %v5338
        %v5340 = vpop.f32.mrb[0].mxu0
        %5341 = vmatprep.mubr.f32.mxu0 0.0
        %5342 = vmatmul.mubr.f32.gmra.mrb[0].mxu0 %v5254
        %v5343 = vpop.f32.mrb[0].mxu0
        %v5344 = vadd.f32 0.0, %v5343
        %v5345 = vpop.f32.mrb[0].mxu0
        %5346 = vmatprep.mubr.f32.mxu0 0.0
        %5347 = vmatmul.mubr.f32.gmra.mrb[0].mxu0 %v5257
        %v5348 = vpop.f32.mrb[0].mxu0
        %v5349 = vadd.f32 0.0, %v5348
        %v5350 = vpop.f32.mrb[0].mxu0
        %5351 = vmatprep.mubr.f32.mxu0 0.0
        %5352 = vmatmul.mubr.f32.gmra.mrb[0].mxu0 %v5260
        %v5353 = vpop.f32.mrb[0].mxu0
        %v5354 = vadd.f32 0.0, %v5353
        %v5355 = vpop.f32.mrb[0].mxu0
        %5356 = vdwg.mxu0
        %v5357 = vadd.f32 %v5228, %v5329
        %v5358 = vadd.f32 %v5229, %v5334
        %v5359 = vadd.f32 %v5230, %v5339
        %v5360 = vadd.f32 %v5231, %v5344
        %v5361 = vadd.f32 %v5232, %v5349
        %v5362 = vadd.f32 %v5233, %v5354
        %s5363 = scalar_lea.vmem %s7, 224
        %v5364 = vld [vmem:[%s5363] sm:$0xff]
        %v5365 = vld [vmem:[%s5363 + $0x8] sm:$0xff]
        %v5366 = vld [vmem:[%s5363 + $0x10] sm:$0xff]
        %v5367 = vld [vmem:[%s5363 + $0x18] sm:$0xff]
        %s5368 = scalar_lea.vmem %s7, 32
        %v5369 = vld [vmem:[%s5368] sm:$0xff]
        %v5370 = vld [vmem:[%s5368 + $0x8] sm:$0xff]
        %v5371 = vld [vmem:[%s5368 + $0x10] sm:$0xff]
        %v5372 = vld [vmem:[%s5368 + $0x18] sm:$0xff]
        %5373 = vmatprep.subr.mxu0 0.0
        %5374 = vmatpush1.msra.mxu0 %v5369
        %5375 = vmatprep.subr.mxu0 0.0
        %5376 = vmatpush1.msra.mxu0 %v5370
        %5377 = vmatprep.subr.mxu0 0.0
        %5378 = vmatpush1.msra.mxu0 %v5371
        %5379 = vmatprep.subr.mxu0 0.0
        %5380 = vmatpush1.msra.mxu0 %v5372
        %5381 = vmatprep.subr.mxu0 0.0
        %5382 = vmatpush1.msra.mxu0 0.0
        %5383 = vmatprep.subr.mxu0 0.0
        %5384 = vmatpush1.msra.mxu0 0.0
        %5385 = vmatprep.subr.mxu0 0.0
        %5386 = vmatpush1.msra.mxu0 0.0
        %5387 = vmatprep.subr.mxu0 0.0
        %5388 = vmatpush1.msra.mxu0 0.0
        %5389 = vmatprep.subr.mxu0 0.0
        %5390 = vmatpush1.msra.mxu0 0.0
        %5391 = vmatprep.subr.mxu0 0.0
        %5392 = vmatpush1.msra.mxu0 0.0
        %5393 = vmatprep.subr.mxu0 0.0
        %5394 = vmatpush1.msra.mxu0 0.0
        %5395 = vmatprep.subr.mxu0 0.0
        %5396 = vmatpush1.msra.mxu0 0.0
        %5397 = vmatprep.subr.mxu0 0.0
        %5398 = vmatpush1.msra.mxu0 0.0
        %5399 = vmatprep.subr.mxu0 0.0
        %5400 = vmatpush1.msra.mxu0 0.0
        %5401 = vmatprep.subr.mxu0 0.0
        %5402 = vmatpush1.msra.mxu0 0.0
        %5403 = vmatprep.subr.mxu0 0.0
        %5404 = vmatpush1.msra.mxu0 0.0
        %5405 = vmatprep.subr.mxu0 0.0
        %5406 = vmatpush1.msra.mxu0 0.0
        %5407 = vmatprep.subr.mxu0 0.0
        %5408 = vmatpush1.msra.mxu0 0.0
        %5409 = vmatprep.subr.mxu0 0.0
        %5410 = vmatpush1.msra.mxu0 0.0
        %5411 = vmatprep.subr.mxu0 0.0
        %5412 = vmatpush1.msra.mxu0 0.0
        %5413 = vmatprep.subr.mxu0 0.0
        %5414 = vmatpush1.msra.mxu0 0.0
        %5415 = vmatprep.subr.mxu0 0.0
        %5416 = vmatpush1.msra.mxu0 0.0
        %5417 = vmatprep.subr.mxu0 0.0
        %5418 = vmatpush1.msra.mxu0 0.0
        %5419 = vmatprep.subr.mxu0 0.0
        %5420 = vmatpush1.msra.mxu0 0.0
        %5421 = vmatprep.subr.mxu0 0.0
        %5422 = vmatpush1.msra.mxu0 0.0
        %5423 = vmatprep.subr.mxu0 0.0
        %5424 = vmatpush1.msra.mxu0 0.0
        %5425 = vmatprep.subr.mxu0 0.0
        %5426 = vmatpush1.msra.mxu0 0.0
        %5427 = vmatprep.subr.mxu0 0.0
        %5428 = vmatpush1.msra.mxu0 0.0
        %5429 = vmatprep.subr.mxu0 0.0
        %5430 = vmatpush1.msra.mxu0 0.0
        %5431 = vmatprep.subr.mxu0 0.0
        %5432 = vmatpush1.msra.mxu0 0.0
        %5433 = vmatprep.subr.mxu0 0.0
        %5434 = vmatpush1.msra.mxu0 0.0
        %5435 = vmatprep.subr.mxu0 0.0
        %5436 = vmatpush1.msra.mxu0 0.0
        %5437 = vmatprep.mubr.f32.mxu0 0.0
        %5438 = vmatmul.mubr.f32.gmra.mrb[0].mxu0 %v5245
        %v5439 = vpop.f32.mrb[0].mxu0
        %v5440 = vadd.f32 0.0, %v5439
        %v5441 = vpop.f32.mrb[0].mxu0
        %5442 = vmatprep.mubr.f32.mxu0 0.0
        %5443 = vmatmul.mubr.f32.gmra.mrb[0].mxu0 %v5248
        %v5444 = vpop.f32.mrb[0].mxu0
        %v5445 = vadd.f32 0.0, %v5444
        %v5446 = vpop.f32.mrb[0].mxu0
        %5447 = vmatprep.mubr.f32.mxu0 0.0
        %5448 = vmatmul.mubr.f32.gmra.mrb[0].mxu0 %v5251
        %v5449 = vpop.f32.mrb[0].mxu0
        %v5450 = vadd.f32 0.0, %v5449
        %v5451 = vpop.f32.mrb[0].mxu0
        %5452 = vmatprep.mubr.f32.mxu0 0.0
        %5453 = vmatmul.mubr.f32.gmra.mrb[0].mxu0 %v5254
        %v5454 = vpop.f32.mrb[0].mxu0
        %v5455 = vadd.f32 0.0, %v5454
        %v5456 = vpop.f32.mrb[0].mxu0
        %5457 = vmatprep.mubr.f32.mxu0 0.0
        %5458 = vmatmul.mubr.f32.gmra.mrb[0].mxu0 %v5257
        %v5459 = vpop.f32.mrb[0].mxu0
        %v5460 = vadd.f32 0.0, %v5459
        %v5461 = vpop.f32.mrb[0].mxu0
        %5462 = vmatprep.mubr.f32.mxu0 0.0
        %5463 = vmatmul.mubr.f32.gmra.mrb[0].mxu0 %v5260
        %v5464 = vpop.f32.mrb[0].mxu0
        %v5465 = vadd.f32 0.0, %v5464
        %v5466 = vpop.f32.mrb[0].mxu0
        %5467 = vdwg.mxu0
        %5468 = vmatprep.subr.mxu0 0.0
        %5469 = vmatpush1.msra.mxu0 %v5364
        %5470 = vmatprep.subr.mxu0 0.0
        %5471 = vmatpush1.msra.mxu0 %v5365
        %5472 = vmatprep.subr.mxu0 0.0
        %5473 = vmatpush1.msra.mxu0 %v5366
        %5474 = vmatprep.subr.mxu0 0.0
        %5475 = vmatpush1.msra.mxu0 %v5367
        %5476 = vmatprep.subr.mxu0 0.0
        %5477 = vmatpush1.msra.mxu0 0.0
        %5478 = vmatprep.subr.mxu0 0.0
        %5479 = vmatpush1.msra.mxu0 0.0
        %5480 = vmatprep.subr.mxu0 0.0
        %5481 = vmatpush1.msra.mxu0 0.0
        %5482 = vmatprep.subr.mxu0 0.0
        %5483 = vmatpush1.msra.mxu0 0.0
        %5484 = vmatprep.subr.mxu0 0.0
        %5485 = vmatpush1.msra.mxu0 0.0
        %5486 = vmatprep.subr.mxu0 0.0
        %5487 = vmatpush1.msra.mxu0 0.0
        %5488 = vmatprep.subr.mxu0 0.0
        %5489 = vmatpush1.msra.mxu0 0.0
        %5490 = vmatprep.subr.mxu0 0.0
        %5491 = vmatpush1.msra.mxu0 0.0
        %5492 = vmatprep.subr.mxu0 0.0
        %5493 = vmatpush1.msra.mxu0 0.0
        %5494 = vmatprep.subr.mxu0 0.0
        %5495 = vmatpush1.msra.mxu0 0.0
        %5496 = vmatprep.subr.mxu0 0.0
        %5497 = vmatpush1.msra.mxu0 0.0
        %5498 = vmatprep.subr.mxu0 0.0
        %5499 = vmatpush1.msra.mxu0 0.0
        %5500 = vmatprep.subr.mxu0 0.0
        %5501 = vmatpush1.msra.mxu0 0.0
        %5502 = vmatprep.subr.mxu0 0.0
        %5503 = vmatpush1.msra.mxu0 0.0
        %5504 = vmatprep.subr.mxu0 0.0
        %5505 = vmatpush1.msra.mxu0 0.0
        %5506 = vmatprep.subr.mxu0 0.0
        %5507 = vmatpush1.msra.mxu0 0.0
        %5508 = vmatprep.subr.mxu0 0.0
        %5509 = vmatpush1.msra.mxu0 0.0
        %5510 = vmatprep.subr.mxu0 0.0
        %5511 = vmatpush1.msra.mxu0 0.0
        %5512 = vmatprep.subr.mxu0 0.0
        %5513 = vmatpush1.msra.mxu0 0.0
        %5514 = vmatprep.subr.mxu0 0.0
        %5515 = vmatpush1.msra.mxu0 0.0
        %5516 = vmatprep.subr.mxu0 0.0
        %5517 = vmatpush1.msra.mxu0 0.0
        %5518 = vmatprep.subr.mxu0 0.0
        %5519 = vmatpush1.msra.mxu0 0.0
        %5520 = vmatprep.subr.mxu0 0.0
        %5521 = vmatpush1.msra.mxu0 0.0
        %5522 = vmatprep.subr.mxu0 0.0
        %5523 = vmatpush1.msra.mxu0 0.0
        %5524 = vmatprep.subr.mxu0 0.0
        %5525 = vmatpush1.msra.mxu0 0.0
        %5526 = vmatprep.subr.mxu0 0.0
        %5527 = vmatpush1.msra.mxu0 0.0
        %5528 = vmatprep.subr.mxu0 0.0
        %5529 = vmatpush1.msra.mxu0 0.0
        %5530 = vmatprep.subr.mxu0 0.0
        %5531 = vmatpush1.msra.mxu0 0.0
        %5532 = vmatprep.mubr.f32.mxu0 0.0
        %5533 = vmatmul.mubr.f32.gmra.mrb[0].mxu0 %v4876
        %v5534 = vpop.f32.mrb[0].mxu0
        %v5535 = vadd.f32 %v5440, %v5534
        %v5536 = vpop.f32.mrb[0].mxu0
        %5537 = vmatprep.mubr.f32.mxu0 0.0
        %5538 = vmatmul.mubr.f32.gmra.mrb[0].mxu0 %v4879
        %v5539 = vpop.f32.mrb[0].mxu0
        %v5540 = vadd.f32 %v5445, %v5539
        %v5541 = vpop.f32.mrb[0].mxu0
        %5542 = vmatprep.mubr.f32.mxu0 0.0
        %5543 = vmatmul.mubr.f32.gmra.mrb[0].mxu0 %v4882
        %v5544 = vpop.f32.mrb[0].mxu0
        %v5545 = vadd.f32 %v5450, %v5544
        %v5546 = vpop.f32.mrb[0].mxu0
        %5547 = vmatprep.mubr.f32.mxu0 0.0
        %5548 = vmatmul.mubr.f32.gmra.mrb[0].mxu0 %v4885
        %v5549 = vpop.f32.mrb[0].mxu0
        %v5550 = vadd.f32 %v5455, %v5549
        %v5551 = vpop.f32.mrb[0].mxu0
        %5552 = vmatprep.mubr.f32.mxu0 0.0
        %5553 = vmatmul.mubr.f32.gmra.mrb[0].mxu0 %v4888
        %v5554 = vpop.f32.mrb[0].mxu0
        %v5555 = vadd.f32 %v5460, %v5554
        %v5556 = vpop.f32.mrb[0].mxu0
        %5557 = vmatprep.mubr.f32.mxu0 0.0
        %5558 = vmatmul.mubr.f32.gmra.mrb[0].mxu0 %v4891
        %v5559 = vpop.f32.mrb[0].mxu0
        %v5560 = vadd.f32 %v5465, %v5559
        %v5561 = vpop.f32.mrb[0].mxu0
        %5562 = vdwg.mxu0
        %s5563 = scalar_lea.vmem %s7, 160
        %v5564 = vld [vmem:[%s5563] sm:$0xff]
        %v5565 = vld [vmem:[%s5563 + $0x8] sm:$0xff]
        %v5566 = vld [vmem:[%s5563 + $0x10] sm:$0xff]
        %v5567 = vld [vmem:[%s5563 + $0x18] sm:$0xff]
        %s5568 = scalar_lea.vmem %s7, 96
        %v5569 = vld [vmem:[%s5568] sm:$0xff]
        %v5570 = vld [vmem:[%s5568 + $0x8] sm:$0xff]
        %v5571 = vld [vmem:[%s5568 + $0x10] sm:$0xff]
        %v5572 = vld [vmem:[%s5568 + $0x18] sm:$0xff]
        %5573 = vmatprep.subr.mxu0 0.0
        %5574 = vmatpush1.msra.mxu0 %v5569
        %5575 = vmatprep.subr.mxu0 0.0
        %5576 = vmatpush1.msra.mxu0 %v5570
        %5577 = vmatprep.subr.mxu0 0.0
        %5578 = vmatpush1.msra.mxu0 %v5571
        %5579 = vmatprep.subr.mxu0 0.0
        %5580 = vmatpush1.msra.mxu0 %v5572
        %5581 = vmatprep.subr.mxu0 0.0
        %5582 = vmatpush1.msra.mxu0 0.0
        %5583 = vmatprep.subr.mxu0 0.0
        %5584 = vmatpush1.msra.mxu0 0.0
        %5585 = vmatprep.subr.mxu0 0.0
        %5586 = vmatpush1.msra.mxu0 0.0
        %5587 = vmatprep.subr.mxu0 0.0
        %5588 = vmatpush1.msra.mxu0 0.0
        %5589 = vmatprep.subr.mxu0 0.0
        %5590 = vmatpush1.msra.mxu0 0.0
        %5591 = vmatprep.subr.mxu0 0.0
        %5592 = vmatpush1.msra.mxu0 0.0
        %5593 = vmatprep.subr.mxu0 0.0
        %5594 = vmatpush1.msra.mxu0 0.0
        %5595 = vmatprep.subr.mxu0 0.0
        %5596 = vmatpush1.msra.mxu0 0.0
        %5597 = vmatprep.subr.mxu0 0.0
        %5598 = vmatpush1.msra.mxu0 0.0
        %5599 = vmatprep.subr.mxu0 0.0
        %5600 = vmatpush1.msra.mxu0 0.0
        %5601 = vmatprep.subr.mxu0 0.0
        %5602 = vmatpush1.msra.mxu0 0.0
        %5603 = vmatprep.subr.mxu0 0.0
        %5604 = vmatpush1.msra.mxu0 0.0
        %5605 = vmatprep.subr.mxu0 0.0
        %5606 = vmatpush1.msra.mxu0 0.0
        %5607 = vmatprep.subr.mxu0 0.0
        %5608 = vmatpush1.msra.mxu0 0.0
        %5609 = vmatprep.subr.mxu0 0.0
        %5610 = vmatpush1.msra.mxu0 0.0
        %5611 = vmatprep.subr.mxu0 0.0
        %5612 = vmatpush1.msra.mxu0 0.0
        %5613 = vmatprep.subr.mxu0 0.0
        %5614 = vmatpush1.msra.mxu0 0.0
        %5615 = vmatprep.subr.mxu0 0.0
        %5616 = vmatpush1.msra.mxu0 0.0
        %5617 = vmatprep.subr.mxu0 0.0
        %5618 = vmatpush1.msra.mxu0 0.0
        %5619 = vmatprep.subr.mxu0 0.0
        %5620 = vmatpush1.msra.mxu0 0.0
        %5621 = vmatprep.subr.mxu0 0.0
        %5622 = vmatpush1.msra.mxu0 0.0
        %5623 = vmatprep.subr.mxu0 0.0
        %5624 = vmatpush1.msra.mxu0 0.0
        %5625 = vmatprep.subr.mxu0 0.0
        %5626 = vmatpush1.msra.mxu0 0.0
        %5627 = vmatprep.subr.mxu0 0.0
        %5628 = vmatpush1.msra.mxu0 0.0
        %5629 = vmatprep.subr.mxu0 0.0
        %5630 = vmatpush1.msra.mxu0 0.0
        %5631 = vmatprep.subr.mxu0 0.0
        %5632 = vmatpush1.msra.mxu0 0.0
        %5633 = vmatprep.subr.mxu0 0.0
        %5634 = vmatpush1.msra.mxu0 0.0
        %5635 = vmatprep.subr.mxu0 0.0
        %5636 = vmatpush1.msra.mxu0 0.0
        %5637 = vmatprep.mubr.f32.mxu0 0.0
        %5638 = vmatmul.mubr.f32.gmra.mrb[0].mxu0 %v5245
        %v5639 = vpop.f32.mrb[0].mxu0
        %v5640 = vadd.f32 0.0, %v5639
        %v5641 = vpop.f32.mrb[0].mxu0
        %5642 = vmatprep.mubr.f32.mxu0 0.0
        %5643 = vmatmul.mubr.f32.gmra.mrb[0].mxu0 %v5248
        %v5644 = vpop.f32.mrb[0].mxu0
        %v5645 = vadd.f32 0.0, %v5644
        %v5646 = vpop.f32.mrb[0].mxu0
        %5647 = vmatprep.mubr.f32.mxu0 0.0
        %5648 = vmatmul.mubr.f32.gmra.mrb[0].mxu0 %v5251
        %v5649 = vpop.f32.mrb[0].mxu0
        %v5650 = vadd.f32 0.0, %v5649
        %v5651 = vpop.f32.mrb[0].mxu0
        %5652 = vmatprep.mubr.f32.mxu0 0.0
        %5653 = vmatmul.mubr.f32.gmra.mrb[0].mxu0 %v5254
        %v5654 = vpop.f32.mrb[0].mxu0
        %v5655 = vadd.f32 0.0, %v5654
        %v5656 = vpop.f32.mrb[0].mxu0
        %5657 = vmatprep.mubr.f32.mxu0 0.0
        %5658 = vmatmul.mubr.f32.gmra.mrb[0].mxu0 %v5257
        %v5659 = vpop.f32.mrb[0].mxu0
        %v5660 = vadd.f32 0.0, %v5659
        %v5661 = vpop.f32.mrb[0].mxu0
        %5662 = vmatprep.mubr.f32.mxu0 0.0
        %5663 = vmatmul.mubr.f32.gmra.mrb[0].mxu0 %v5260
        %v5664 = vpop.f32.mrb[0].mxu0
        %v5665 = vadd.f32 0.0, %v5664
        %v5666 = vpop.f32.mrb[0].mxu0
        %5667 = vdwg.mxu0
        %5668 = vmatprep.subr.mxu0 0.0
        %5669 = vmatpush1.msra.mxu0 %v5564
        %5670 = vmatprep.subr.mxu0 0.0
        %5671 = vmatpush1.msra.mxu0 %v5565
        %5672 = vmatprep.subr.mxu0 0.0
        %5673 = vmatpush1.msra.mxu0 %v5566
        %5674 = vmatprep.subr.mxu0 0.0
        %5675 = vmatpush1.msra.mxu0 %v5567
        %5676 = vmatprep.subr.mxu0 0.0
        %5677 = vmatpush1.msra.mxu0 0.0
        %5678 = vmatprep.subr.mxu0 0.0
        %5679 = vmatpush1.msra.mxu0 0.0
        %5680 = vmatprep.subr.mxu0 0.0
        %5681 = vmatpush1.msra.mxu0 0.0
        %5682 = vmatprep.subr.mxu0 0.0
        %5683 = vmatpush1.msra.mxu0 0.0
        %5684 = vmatprep.subr.mxu0 0.0
        %5685 = vmatpush1.msra.mxu0 0.0
        %5686 = vmatprep.subr.mxu0 0.0
        %5687 = vmatpush1.msra.mxu0 0.0
        %5688 = vmatprep.subr.mxu0 0.0
        %5689 = vmatpush1.msra.mxu0 0.0
        %5690 = vmatprep.subr.mxu0 0.0
        %5691 = vmatpush1.msra.mxu0 0.0
        %5692 = vmatprep.subr.mxu0 0.0
        %5693 = vmatpush1.msra.mxu0 0.0
        %5694 = vmatprep.subr.mxu0 0.0
        %5695 = vmatpush1.msra.mxu0 0.0
        %5696 = vmatprep.subr.mxu0 0.0
        %5697 = vmatpush1.msra.mxu0 0.0
        %5698 = vmatprep.subr.mxu0 0.0
        %5699 = vmatpush1.msra.mxu0 0.0
        %5700 = vmatprep.subr.mxu0 0.0
        %5701 = vmatpush1.msra.mxu0 0.0
        %5702 = vmatprep.subr.mxu0 0.0
        %5703 = vmatpush1.msra.mxu0 0.0
        %5704 = vmatprep.subr.mxu0 0.0
        %5705 = vmatpush1.msra.mxu0 0.0
        %5706 = vmatprep.subr.mxu0 0.0
        %5707 = vmatpush1.msra.mxu0 0.0
        %5708 = vmatprep.subr.mxu0 0.0
        %5709 = vmatpush1.msra.mxu0 0.0
        %5710 = vmatprep.subr.mxu0 0.0
        %5711 = vmatpush1.msra.mxu0 0.0
        %5712 = vmatprep.subr.mxu0 0.0
        %5713 = vmatpush1.msra.mxu0 0.0
        %5714 = vmatprep.subr.mxu0 0.0
        %5715 = vmatpush1.msra.mxu0 0.0
        %5716 = vmatprep.subr.mxu0 0.0
        %5717 = vmatpush1.msra.mxu0 0.0
        %5718 = vmatprep.subr.mxu0 0.0
        %5719 = vmatpush1.msra.mxu0 0.0
        %5720 = vmatprep.subr.mxu0 0.0
        %5721 = vmatpush1.msra.mxu0 0.0
        %5722 = vmatprep.subr.mxu0 0.0
        %5723 = vmatpush1.msra.mxu0 0.0
        %5724 = vmatprep.subr.mxu0 0.0
        %5725 = vmatpush1.msra.mxu0 0.0
        %5726 = vmatprep.subr.mxu0 0.0
        %5727 = vmatpush1.msra.mxu0 0.0
        %5728 = vmatprep.subr.mxu0 0.0
        %5729 = vmatpush1.msra.mxu0 0.0
        %5730 = vmatprep.subr.mxu0 0.0
        %5731 = vmatpush1.msra.mxu0 0.0
        %5732 = vmatprep.mubr.f32.mxu0 0.0
        %5733 = vmatmul.mubr.f32.gmra.mrb[0].mxu0 %v5116
        %v5734 = vpop.f32.mrb[0].mxu0
        %v5735 = vadd.f32 %v5640, %v5734
        %v5736 = vpop.f32.mrb[0].mxu0
        %5737 = vmatprep.mubr.f32.mxu0 0.0
        %5738 = vmatmul.mubr.f32.gmra.mrb[0].mxu0 %v5119
        %v5739 = vpop.f32.mrb[0].mxu0
        %v5740 = vadd.f32 %v5645, %v5739
        %v5741 = vpop.f32.mrb[0].mxu0
        %5742 = vmatprep.mubr.f32.mxu0 0.0
        %5743 = vmatmul.mubr.f32.gmra.mrb[0].mxu0 %v5122
        %v5744 = vpop.f32.mrb[0].mxu0
        %v5745 = vadd.f32 %v5650, %v5744
        %v5746 = vpop.f32.mrb[0].mxu0
        %5747 = vmatprep.mubr.f32.mxu0 0.0
        %5748 = vmatmul.mubr.f32.gmra.mrb[0].mxu0 %v5125
        %v5749 = vpop.f32.mrb[0].mxu0
        %v5750 = vadd.f32 %v5655, %v5749
        %v5751 = vpop.f32.mrb[0].mxu0
        %5752 = vmatprep.mubr.f32.mxu0 0.0
        %5753 = vmatmul.mubr.f32.gmra.mrb[0].mxu0 %v5128
        %v5754 = vpop.f32.mrb[0].mxu0
        %v5755 = vadd.f32 %v5660, %v5754
        %v5756 = vpop.f32.mrb[0].mxu0
        %5757 = vmatprep.mubr.f32.mxu0 0.0
        %5758 = vmatmul.mubr.f32.gmra.mrb[0].mxu0 %v5131
        %v5759 = vpop.f32.mrb[0].mxu0
        %v5760 = vadd.f32 %v5665, %v5759
        %v5761 = vpop.f32.mrb[0].mxu0
        %5762 = vdwg.mxu0
        %s5763 = scalar_lea.vmem %s7, 128
        %v5764 = vld [vmem:[%s5763] sm:$0xff]
        %v5765 = vld [vmem:[%s5763 + $0x8] sm:$0xff]
        %v5766 = vld [vmem:[%s5763 + $0x10] sm:$0xff]
        %v5767 = vld [vmem:[%s5763 + $0x18] sm:$0xff]
        %v5769 = vlaneseq
        %v5770 = vshrl.u32 %v5769, 7
        %v5771 = vsub.s32 0, %v5770
        %v5772 = vrot.slane %v4844, %v5771
        %v5774 = vadd.f32 %v5357, %v5772
        %v5775 = vadd.f32 %v5358, %v5772
        %v5776 = vadd.f32 %v5359, %v5772
        %v5777 = vadd.f32 %v5360, %v5772
        %v5778 = vadd.f32 %v5361, %v5772
        %v5779 = vadd.f32 %v5362, %v5772
        %v5780 = vsub.f32 0.0, %v5774
        %v5781 = vsub.f32 0.0, %v5775
        %v5782 = vsub.f32 0.0, %v5776
        %v5783 = vsub.f32 0.0, %v5777
        %v5784 = vsub.f32 0.0, %v5778
        %v5785 = vsub.f32 0.0, %v5779
        %v5786 = vmul.f32 %v5780, 1.442695
        %v5787 = vpow.pop %v5786
        %v5788 = vmul.f32 %v5781, 1.442695
        %v5789 = vpow.pop %v5788
        %v5790 = vmul.f32 %v5782, 1.442695
        %v5791 = vpow.pop %v5790
        %v5792 = vmul.f32 %v5783, 1.442695
        %v5793 = vpow.pop %v5792
        %v5794 = vmul.f32 %v5784, 1.442695
        %v5795 = vpow.pop %v5794
        %v5796 = vmul.f32 %v5785, 1.442695
        %v5797 = vpow.pop %v5796
        %v5798 = vadd.f32 %v5787, 1.0
        %v5799 = vadd.f32 %v5789, 1.0
        %v5800 = vadd.f32 %v5791, 1.0
        %v5801 = vadd.f32 %v5793, 1.0
        %v5802 = vadd.f32 %v5795, 1.0
        %v5803 = vadd.f32 %v5797, 1.0
        %v5804 = vrcp.pop %v5798
        %v5805 = vmul.f32 1.0, %v5804
        %v5806 = vrcp.pop %v5799
        %v5807 = vmul.f32 1.0, %v5806
        %v5808 = vrcp.pop %v5800
        %v5809 = vmul.f32 1.0, %v5808
        %v5810 = vrcp.pop %v5801
        %v5811 = vmul.f32 1.0, %v5810
        %v5812 = vrcp.pop %v5802
        %v5813 = vmul.f32 1.0, %v5812
        %v5814 = vrcp.pop %v5803
        %v5815 = vmul.f32 1.0, %v5814
        %s5816 = scalar_lea.vmem %s435, %s4851
        %vm5817 = vcmask 23552
        %5818 = vst.msk [vmem:[%s5816] sm:$0xff] %vm5817, %v5805
        %5819 = vst.msk [vmem:[%s5816 + $0x8] sm:$0xff] %vm5817, %v5807
        %5820 = vst.msk [vmem:[%s5816 + $0x10] sm:$0xff] %vm5817, %v5809
        %5821 = vst.msk [vmem:[%s5816 + $0x18] sm:$0xff] %vm5817, %v5811
        %5822 = vst.msk [vmem:[%s5816 + $0x20] sm:$0xff] %vm5817, %v5813
        %vm5823 = vcmask 17408
        %5824 = vst.msk [vmem:[%s5816 + $0x28] sm:$0x3] %vm5823, %v5815
        %v5825 = vadd.f32 %v5535, %v5772
        %v5826 = vadd.f32 %v5540, %v5772
        %v5827 = vadd.f32 %v5545, %v5772
        %v5828 = vadd.f32 %v5550, %v5772
        %v5829 = vadd.f32 %v5555, %v5772
        %v5830 = vadd.f32 %v5560, %v5772
        %v5831 = vsub.f32 0.0, %v5825
        %v5832 = vsub.f32 0.0, %v5826
        %v5833 = vsub.f32 0.0, %v5827
        %v5834 = vsub.f32 0.0, %v5828
        %v5835 = vsub.f32 0.0, %v5829
        %v5836 = vsub.f32 0.0, %v5830
        %v5837 = vmul.f32 %v5831, 1.442695
        %v5838 = vpow.pop %v5837
        %v5839 = vmul.f32 %v5832, 1.442695
        %v5840 = vpow.pop %v5839
        %v5841 = vmul.f32 %v5833, 1.442695
        %v5842 = vpow.pop %v5841
        %v5843 = vmul.f32 %v5834, 1.442695
        %v5844 = vpow.pop %v5843
        %v5845 = vmul.f32 %v5835, 1.442695
        %v5846 = vpow.pop %v5845
        %v5847 = vmul.f32 %v5836, 1.442695
        %v5848 = vpow.pop %v5847
        %v5849 = vadd.f32 %v5838, 1.0
        %v5850 = vadd.f32 %v5840, 1.0
        %v5851 = vadd.f32 %v5842, 1.0
        %v5852 = vadd.f32 %v5844, 1.0
        %v5853 = vadd.f32 %v5846, 1.0
        %v5854 = vadd.f32 %v5848, 1.0
        %v5855 = vrcp.pop %v5849
        %v5856 = vmul.f32 1.0, %v5855
        %v5857 = vrcp.pop %v5850
        %v5858 = vmul.f32 1.0, %v5857
        %v5859 = vrcp.pop %v5851
        %v5860 = vmul.f32 1.0, %v5859
        %v5861 = vrcp.pop %v5852
        %v5862 = vmul.f32 1.0, %v5861
        %v5863 = vrcp.pop %v5853
        %v5864 = vmul.f32 1.0, %v5863
        %v5865 = vrcp.pop %v5854
        %v5866 = vmul.f32 1.0, %v5865
        %s5867 = scalar_lea.vmem %s440, %s4851
        %5868 = vst.msk [vmem:[%s5867] sm:$0xff] %vm5817, %v5856
        %5869 = vst.msk [vmem:[%s5867 + $0x8] sm:$0xff] %vm5817, %v5858
        %5870 = vst.msk [vmem:[%s5867 + $0x10] sm:$0xff] %vm5817, %v5860
        %5871 = vst.msk [vmem:[%s5867 + $0x18] sm:$0xff] %vm5817, %v5862
        %5872 = vst.msk [vmem:[%s5867 + $0x20] sm:$0xff] %vm5817, %v5864
        %5873 = vst.msk [vmem:[%s5867 + $0x28] sm:$0x3] %vm5823, %v5866
        %v5874 = vadd.f32 %v5735, %v5772
        %v5875 = vadd.f32 %v5740, %v5772
        %v5876 = vadd.f32 %v5745, %v5772
        %v5877 = vadd.f32 %v5750, %v5772
        %v5878 = vadd.f32 %v5755, %v5772
        %v5879 = vadd.f32 %v5760, %v5772
        %v5880 = vsub.f32 0.0, %v5874
        %v5881 = vsub.f32 0.0, %v5875
        %v5882 = vsub.f32 0.0, %v5876
        %v5883 = vsub.f32 0.0, %v5877
        %v5884 = vsub.f32 0.0, %v5878
        %v5885 = vsub.f32 0.0, %v5879
        %v5886 = vmul.f32 %v5880, 1.442695
        %v5887 = vpow.pop %v5886
        %v5888 = vmul.f32 %v5881, 1.442695
        %v5889 = vpow.pop %v5888
        %v5890 = vmul.f32 %v5882, 1.442695
        %v5891 = vpow.pop %v5890
        %v5892 = vmul.f32 %v5883, 1.442695
        %v5893 = vpow.pop %v5892
        %v5894 = vmul.f32 %v5884, 1.442695
        %v5895 = vpow.pop %v5894
        %v5896 = vmul.f32 %v5885, 1.442695
        %v5897 = vpow.pop %v5896
        %v5898 = vadd.f32 %v5887, 1.0
        %v5899 = vadd.f32 %v5889, 1.0
        %v5900 = vadd.f32 %v5891, 1.0
        %v5901 = vadd.f32 %v5893, 1.0
        %v5902 = vadd.f32 %v5895, 1.0
        %v5903 = vadd.f32 %v5897, 1.0
        %v5904 = vrcp.pop %v5898
        %v5905 = vmul.f32 1.0, %v5904
        %v5906 = vrcp.pop %v5899
        %v5907 = vmul.f32 1.0, %v5906
        %v5908 = vrcp.pop %v5900
        %v5909 = vmul.f32 1.0, %v5908
        %v5910 = vrcp.pop %v5901
        %v5911 = vmul.f32 1.0, %v5910
        %v5912 = vrcp.pop %v5902
        %v5913 = vmul.f32 1.0, %v5912
        %v5914 = vrcp.pop %v5903
        %v5915 = vmul.f32 1.0, %v5914
        %s5916 = scalar_lea.vmem %s445, %s4851
        %5917 = vst.msk [vmem:[%s5916] sm:$0xff] %vm5817, %v5905
        %5918 = vst.msk [vmem:[%s5916 + $0x8] sm:$0xff] %vm5817, %v5907
        %5919 = vst.msk [vmem:[%s5916 + $0x10] sm:$0xff] %vm5817, %v5909
        %5920 = vst.msk [vmem:[%s5916 + $0x18] sm:$0xff] %vm5817, %v5911
        %5921 = vst.msk [vmem:[%s5916 + $0x20] sm:$0xff] %vm5817, %v5913
        %5922 = vst.msk [vmem:[%s5916 + $0x28] sm:$0x3] %vm5823, %v5915
        %5923 = vmatprep.subr.mxu0 0.0
        %5924 = vmatpush1.msra.mxu0 %v5764
        %5925 = vmatprep.subr.mxu0 0.0
        %5926 = vmatpush1.msra.mxu0 %v5765
        %5927 = vmatprep.subr.mxu0 0.0
        %5928 = vmatpush1.msra.mxu0 %v5766
        %5929 = vmatprep.subr.mxu0 0.0
        %5930 = vmatpush1.msra.mxu0 %v5767
        %5931 = vmatprep.subr.mxu0 0.0
        %5932 = vmatpush1.msra.mxu0 0.0
        %5933 = vmatprep.subr.mxu0 0.0
        %5934 = vmatpush1.msra.mxu0 0.0
        %5935 = vmatprep.subr.mxu0 0.0
        %5936 = vmatpush1.msra.mxu0 0.0
        %5937 = vmatprep.subr.mxu0 0.0
        %5938 = vmatpush1.msra.mxu0 0.0
        %5939 = vmatprep.subr.mxu0 0.0
        %5940 = vmatpush1.msra.mxu0 0.0
        %5941 = vmatprep.subr.mxu0 0.0
        %5942 = vmatpush1.msra.mxu0 0.0
        %5943 = vmatprep.subr.mxu0 0.0
        %5944 = vmatpush1.msra.mxu0 0.0
        %5945 = vmatprep.subr.mxu0 0.0
        %5946 = vmatpush1.msra.mxu0 0.0
        %5947 = vmatprep.subr.mxu0 0.0
        %5948 = vmatpush1.msra.mxu0 0.0
        %5949 = vmatprep.subr.mxu0 0.0
        %5950 = vmatpush1.msra.mxu0 0.0
        %5951 = vmatprep.subr.mxu0 0.0
        %5952 = vmatpush1.msra.mxu0 0.0
        %5953 = vmatprep.subr.mxu0 0.0
        %5954 = vmatpush1.msra.mxu0 0.0
        %5955 = vmatprep.subr.mxu0 0.0
        %5956 = vmatpush1.msra.mxu0 0.0
        %5957 = vmatprep.subr.mxu0 0.0
        %5958 = vmatpush1.msra.mxu0 0.0
        %5959 = vmatprep.subr.mxu0 0.0
        %5960 = vmatpush1.msra.mxu0 0.0
        %5961 = vmatprep.subr.mxu0 0.0
        %5962 = vmatpush1.msra.mxu0 0.0
        %5963 = vmatprep.subr.mxu0 0.0
        %5964 = vmatpush1.msra.mxu0 0.0
        %5965 = vmatprep.subr.mxu0 0.0
        %5966 = vmatpush1.msra.mxu0 0.0
        %5967 = vmatprep.subr.mxu0 0.0
        %5968 = vmatpush1.msra.mxu0 0.0
        %5969 = vmatprep.subr.mxu0 0.0
        %5970 = vmatpush1.msra.mxu0 0.0
        %5971 = vmatprep.subr.mxu0 0.0
        %5972 = vmatpush1.msra.mxu0 0.0
        %5973 = vmatprep.subr.mxu0 0.0
        %5974 = vmatpush1.msra.mxu0 0.0
        %5975 = vmatprep.subr.mxu0 0.0
        %5976 = vmatpush1.msra.mxu0 0.0
        %5977 = vmatprep.subr.mxu0 0.0
        %5978 = vmatpush1.msra.mxu0 0.0
        %5979 = vmatprep.subr.mxu0 0.0
        %5980 = vmatpush1.msra.mxu0 0.0
        %5981 = vmatprep.subr.mxu0 0.0
        %5982 = vmatpush1.msra.mxu0 0.0
        %5983 = vmatprep.subr.mxu0 0.0
        %5984 = vmatpush1.msra.mxu0 0.0
        %5985 = vmatprep.subr.mxu0 0.0
        %5986 = vmatpush1.msra.mxu0 0.0
        %5987 = vmatprep.mubr.f32.mxu0 0.0
        %5988 = vmatmul.mubr.f32.gmra.mrb[0].mxu0 %v5245
        %v5989 = vpop.f32.mrb[0].mxu0
        %v5990 = vadd.f32 %v5772, %v5989
        %v5991 = vpop.f32.mrb[0].mxu0
        %5992 = vmatprep.mubr.f32.mxu0 0.0
        %5993 = vmatmul.mubr.f32.gmra.mrb[0].mxu0 %v5248
        %v5994 = vpop.f32.mrb[0].mxu0
        %v5995 = vadd.f32 %v5772, %v5994
        %v5996 = vpop.f32.mrb[0].mxu0
        %5997 = vmatprep.mubr.f32.mxu0 0.0
        %5998 = vmatmul.mubr.f32.gmra.mrb[0].mxu0 %v5251
        %v5999 = vpop.f32.mrb[0].mxu0
        %v6000 = vadd.f32 %v5772, %v5999
        %v6001 = vpop.f32.mrb[0].mxu0
        %6002 = vmatprep.mubr.f32.mxu0 0.0
        %6003 = vmatmul.mubr.f32.gmra.mrb[0].mxu0 %v5254
        %v6004 = vpop.f32.mrb[0].mxu0
        %v6005 = vadd.f32 %v5772, %v6004
        %v6006 = vpop.f32.mrb[0].mxu0
        %6007 = vmatprep.mubr.f32.mxu0 0.0
        %6008 = vmatmul.mubr.f32.gmra.mrb[0].mxu0 %v5257
        %v6009 = vpop.f32.mrb[0].mxu0
        %v6010 = vadd.f32 %v5772, %v6009
        %v6011 = vpop.f32.mrb[0].mxu0
        %6012 = vmatprep.mubr.f32.mxu0 0.0
        %6013 = vmatmul.mubr.f32.gmra.mrb[0].mxu0 %v5260
        %v6014 = vpop.f32.mrb[0].mxu0
        %v6015 = vadd.f32 %v5772, %v6014
        %v6016 = vpop.f32.mrb[0].mxu0
        %6017 = vdwg.mxu0
        %v6018 = vsub.f32 0.0, %v5990
        %v6019 = vsub.f32 0.0, %v5995
        %v6020 = vsub.f32 0.0, %v6000
        %v6021 = vsub.f32 0.0, %v6005
        %v6022 = vsub.f32 0.0, %v6010
        %v6023 = vsub.f32 0.0, %v6015
        %v6024 = vmul.f32 %v6018, 1.442695
        %v6025 = vpow.pop %v6024
        %v6026 = vmul.f32 %v6019, 1.442695
        %v6027 = vpow.pop %v6026
        %v6028 = vmul.f32 %v6020, 1.442695
        %v6029 = vpow.pop %v6028
        %v6030 = vmul.f32 %v6021, 1.442695
        %v6031 = vpow.pop %v6030
        %v6032 = vmul.f32 %v6022, 1.442695
        %v6033 = vpow.pop %v6032
        %v6034 = vmul.f32 %v6023, 1.442695
        %v6035 = vpow.pop %v6034
        %v6036 = vadd.f32 %v6025, 1.0
        %v6037 = vadd.f32 %v6027, 1.0
        %v6038 = vadd.f32 %v6029, 1.0
        %v6039 = vadd.f32 %v6031, 1.0
        %v6040 = vadd.f32 %v6033, 1.0
        %v6041 = vadd.f32 %v6035, 1.0
        %v6042 = vrcp.pop %v6036
        %v6043 = vmul.f32 1.0, %v6042
        %v6044 = vrcp.pop %v6037
        %v6045 = vmul.f32 1.0, %v6044
        %v6046 = vrcp.pop %v6038
        %v6047 = vmul.f32 1.0, %v6046
        %v6048 = vrcp.pop %v6039
        %v6049 = vmul.f32 1.0, %v6048
        %v6050 = vrcp.pop %v6040
        %v6051 = vmul.f32 1.0, %v6050
        %v6052 = vrcp.pop %v6041
        %v6053 = vmul.f32 1.0, %v6052
        %s6054 = scalar_lea.vmem %s450, %s4851
        %6055 = vst.msk [vmem:[%s6054] sm:$0xff] %vm5817, %v6043
        %6056 = vst.msk [vmem:[%s6054 + $0x8] sm:$0xff] %vm5817, %v6045
        %6057 = vst.msk [vmem:[%s6054 + $0x10] sm:$0xff] %vm5817, %v6047
        %6058 = vst.msk [vmem:[%s6054 + $0x18] sm:$0xff] %vm5817, %v6049
        %6059 = vst.msk [vmem:[%s6054 + $0x20] sm:$0xff] %vm5817, %v6051
        %6060 = vst.msk [vmem:[%s6054 + $0x28] sm:$0x3] %vm5823, %v6053
      $region89: #{decoder_forward.3} parent=55 // loop_footer
        %s4850 = sadd.s32 1, %s4846
      $region90: #{decoder_forward.3} parent=55 // loop_footer_branch
        %4845 = sbr.rel target = $region86
      $region91: #{decoder_forward.3} parent=55 // loop_exit
        _
      %p6061 = scmp.lt.s32.totalorder %s24, 1
      %s6062 = scalar_select %p6061, %s24, 1
      %s6063 = smul.addr %s6062, 252
      %s6064 = smul.addr %s6063, 8
      %s6065 = scalar_lea.vmem %s9, %s6064
      %p6066 = scmp.lt.s32.totalorder %s24, 1
      %s6067 = scalar_select %p6066, %s24, 1
      %s6068 = smul.addr %s6067, 252
      %s6069 = smul.addr %s6068, 8
      %s6070 = scalar_lea.vmem %s10, %s6069
      %p6071 = scmp.lt.s32.totalorder %s24, 1
      %s6072 = scalar_select %p6071, %s24, 1
      %s6073 = smul.addr %s6072, 252
      %s6074 = smul.addr %s6073, 8
      %s6075 = scalar_lea.vmem %s11, %s6074
      %p6076 = scmp.lt.s32.totalorder %s24, 1
      %s6077 = scalar_select %p6076, %s24, 1
      %s6078 = smul.addr %s6077, 252
      %s6079 = smul.addr %s6078, 8
      %s6080 = scalar_lea.vmem %s12, %s6079
      // Predicated region
      $region92: #{decoder_forward.3} parent=55 // pred_check
        %p6081 = pneg %p236
      $region93: #{decoder_forward.3} parent=55 // pred_check_branch
        %6083 = sbr.rel (%p6081) target = $region95
      $region94: #{decoder_forward.3} parent=55 // pred_region
        _
      $region95: #{decoder_forward.3} parent=55 // pred_fallthru
        _
      // Predicated region
      $region96: #{decoder_forward.3} parent=55 // pred_check
        %p6084 = pneg %p262
      $region97: #{decoder_forward.3} parent=55 // pred_check_branch
        %6086 = sbr.rel (%p6084) target = $region99
      $region98: #{decoder_forward.3} parent=55 // pred_region
        _
      $region99: #{decoder_forward.3} parent=55 // pred_fallthru
        _
      // Predicated region
      $region100: #{decoder_forward.3} parent=55 // pred_check
        %p6087 = pneg %p288
      $region101: #{decoder_forward.3} parent=55 // pred_check_branch
        %6089 = sbr.rel (%p6087) target = $region103
      $region102: #{decoder_forward.3} parent=55 // pred_region
        _
      $region103: #{decoder_forward.3} parent=55 // pred_fallthru
        _
      // Predicated region
      $region104: #{decoder_forward.3} parent=55 // pred_check
        %p6090 = pneg %p314
      $region105: #{decoder_forward.3} parent=55 // pred_check_branch
        %6092 = sbr.rel (%p6090) target = $region107
      $region106: #{decoder_forward.3} parent=55 // pred_region
        _
      $region107: #{decoder_forward.3} parent=55 // pred_fallthru
        _
    $region56: #{decoder_forward.3} parent=5 // pred_fallthru
      _
    %p6093 = scmp.le.s32.totalorder 2, %s19
    // Predicated region
    $region108: #{decoder_forward.3} parent=5 // pred_check
      %p6094 = pneg %p6093
    $region109: #{decoder_forward.3} parent=5 // pred_check_branch
      %6096 = sbr.rel (%p6094) target = $region111
    $region110: #{decoder_forward.3} parent=5 // pred_region
      %s6097 = ssub.s32 %s19, 2
      // Predicated region
      $region112: #{decoder_forward.3} parent=110 // pred_check
        %p6098 = pneg %p242
      $region113: #{decoder_forward.3} parent=110 // pred_check_branch
        %6100 = sbr.rel (%p6098) target = $region115
      $region114: #{decoder_forward.3} parent=110 // pred_region
        %p6101 = scmp.lt.s32.totalorder %s25, 1
        %s6102 = scalar_select %p6101, %s25, 1
        %s6103 = smul.addr %s6102, 252
        %s6104 = smul.addr %s6103, 8
        %s6105 = scalar_lea.vmem %s9, %s6104
      $region115: #{decoder_forward.3} parent=110 // pred_fallthru
        _
      // Predicated region
      $region116: #{decoder_forward.3} parent=110 // pred_check
        %p6106 = pneg %p268
      $region117: #{decoder_forward.3} parent=110 // pred_check_branch
        %6108 = sbr.rel (%p6106) target = $region119
      $region118: #{decoder_forward.3} parent=110 // pred_region
        %p6109 = scmp.lt.s32.totalorder %s25, 1
        %s6110 = scalar_select %p6109, %s25, 1
        %s6111 = smul.addr %s6110, 252
        %s6112 = smul.addr %s6111, 8
        %s6113 = scalar_lea.vmem %s10, %s6112
      $region119: #{decoder_forward.3} parent=110 // pred_fallthru
        _
      // Predicated region
      $region120: #{decoder_forward.3} parent=110 // pred_check
        %p6114 = pneg %p294
      $region121: #{decoder_forward.3} parent=110 // pred_check_branch
        %6116 = sbr.rel (%p6114) target = $region123
      $region122: #{decoder_forward.3} parent=110 // pred_region
        %p6117 = scmp.lt.s32.totalorder %s25, 1
        %s6118 = scalar_select %p6117, %s25, 1
        %s6119 = smul.addr %s6118, 252
        %s6120 = smul.addr %s6119, 8
        %s6121 = scalar_lea.vmem %s11, %s6120
      $region123: #{decoder_forward.3} parent=110 // pred_fallthru
        _
      // Predicated region
      $region124: #{decoder_forward.3} parent=110 // pred_check
        %p6122 = pneg %p320
      $region125: #{decoder_forward.3} parent=110 // pred_check_branch
        %6124 = sbr.rel (%p6122) target = $region127
      $region126: #{decoder_forward.3} parent=110 // pred_region
        %p6125 = scmp.lt.s32.totalorder %s25, 1
        %s6126 = scalar_select %p6125, %s25, 1
        %s6127 = smul.addr %s6126, 252
        %s6128 = smul.addr %s6127, 8
        %s6129 = scalar_lea.vmem %s12, %s6128
      $region127: #{decoder_forward.3} parent=110 // pred_fallthru
        _
    $region111: #{decoder_forward.3} parent=5 // pred_fallthru
      _
  $region6: #{decoder_forward.3} parent=0 // loop_footer
    %s23 = sadd.s32 1, %s19
  $region7: #{decoder_forward.3} parent=0 // loop_footer_branch
    %18 = sbr.rel target = $region3
  $region8: #{decoder_forward.3} parent=0 // loop_exit
    _

</llo_original>
